<compile_context>
chip_gen: v6e
topology: v6e:2x2x1
jax: 0.10.0
libtpu: 0.0.40
codegen_flags: <defaults>
</compile_context>

<pallas_src>
import numpy as np
import jax
import jax.numpy as jnp
from jax.experimental import pallas as pl

# ----------------------------- model sizes (small test config) ---------------
NUM_CLASS = 32
EMB_SIZE = 16
HID_SIZE = 32
HID_LAYERS = 2
LATENT = 8
COND = 4
SEQ_LEN = 8
BATCH = 2
SOS_IDX = 0              # unused in eval-mode forward (kept for parity)
WORD_DROPOUT_RATE = 0.0  # forward() raises if != 0.0, so we keep it 0
LANE = 128               # lane width; logits are stored lane-dense at this width


# ----------------------------- packed-slab layout ------------------------------
def _ceil8(n):
    return -(-n // 8) * 8


def _build_layouts():
    """Static row offsets of every parameter inside the two packed slabs."""
    w_entries = [("emb", NUM_CLASS, EMB_SIZE)]
    for pre in ("enc", "dec"):
        for l in range(HID_LAYERS):
            din = EMB_SIZE if l == 0 else HID_SIZE
            w_entries.append((f"{pre}{l}_wih", din, 3 * HID_SIZE))
            w_entries.append((f"{pre}{l}_whh", HID_SIZE, 3 * HID_SIZE))
    w_entries += [
        ("head_w", HID_LAYERS * HID_SIZE, 2 * LATENT),     # [mean_w | logvar_w]
        ("l2h_w", LATENT + COND, HID_LAYERS * HID_SIZE),
        ("out_w", HID_SIZE, LANE),                          # N padded to 128 lanes
    ]
    w_layout, off = {}, 0
    for name, r, c in w_entries:
        w_layout[name] = (off, r, c)
        off += _ceil8(r)
    w_rows = off

    b_names = []
    for pre in ("enc", "dec"):
        for l in range(HID_LAYERS):
            b_names.append((f"{pre}{l}_bc", 3 * HID_SIZE))   # folded [bir+bhr | biz+bhz | bin]
            b_names.append((f"{pre}{l}_bhn", HID_SIZE))      # b_hh_n stays inside r*(...)
    b_names += [("head_b", 2 * LATENT), ("l2h_b", HID_LAYERS * HID_SIZE), ("out_b", LANE)]
    b_layout = {name: (i, c) for i, (name, c) in enumerate(b_names)}
    b_rows = _ceil8(len(b_names))
    return w_layout, w_rows, b_layout, b_rows


W_LAYOUT, W_ROWS, B_LAYOUT, B_ROWS = _build_layouts()


# ----------------------------- fused Pallas kernel ----------------------------
def cond_vae_fused_kernel(ids_ref, cond_ref, noise_ref, w_ref, b_ref,
                          logits_ref, mean_ref, logvar_ref):
    """Entire CondVAE forward in one kernel invocation (no grid).

    ids     (S*B, 1) int32   token ids, time-major flattened (row = t*B + b)
    cond    (B, COND) f32    condition, already transposed (== cond.T)
    noise   (B, LATENT) f32  reparameterization noise
    w_ref   (W_ROWS, 128) f32  packed weight slab
    b_ref   (B_ROWS, 128) f32  packed bias slab
    out: logits (S*B, 128) f32 (real classes in lanes [0, NUM_CLASS)),
         mean (B, LAT) f32, log_var (B, LAT) f32
    """
    SB = ids_ref.shape[0]
    B = noise_ref.shape[0]
    S = SB // B
    H = HID_SIZE
    L = HID_LAYERS

    def dot32(x, w):
        return jnp.dot(x, w, preferred_element_type=jnp.float32)

    def w_at(name):
        off, r, c = W_LAYOUT[name]
        return w_ref[off:off + r, 0:c]

    biases = b_ref[...]                       # one small load; slices are register ops

    def b_at(name):
        row, c = B_LAYOUT[name]
        return biases[row:row + 1, 0:c]

    # ---- embedding lookup as one-hot @ emb (off the recurrent chain) ----
    ids = ids_ref[...]                                               # (SB, 1) int32
    classes = jax.lax.broadcasted_iota(jnp.int32, (SB, NUM_CLASS), 1)
    onehot = jnp.where(ids == classes, 1.0, 0.0).astype(jnp.float32)
    embedded = dot32(onehot, w_at("emb"))                            # (SB, E) f32
    # NOTE: embedding / GRU inter-layer / word dropout are identity in eval mode.

    def load_layer(prefix, l):
        bc = b_at(f"{prefix}{l}_bc")                                 # (1, 3H)
        return {
            "wih": w_at(f"{prefix}{l}_wih"),
            "whh": w_at(f"{prefix}{l}_whh"),
            "bc": bc,                                                # used once, hoisted path
            "bc_b": jnp.broadcast_to(bc, (B, 3 * H)),                # pre-broadcast (per layer)
            "bhn_b": jnp.broadcast_to(b_at(f"{prefix}{l}_bhn"), (B, H)),
        }

    def gru_cell(p, gi, h_prev_l):
        gh = dot32(h_prev_l, p["whh"])                               # (B, 3H)
        r = jax.nn.sigmoid(gi[:, 0:H] + gh[:, 0:H])
        zg = jax.nn.sigmoid(gi[:, H:2 * H] + gh[:, H:2 * H])
        n = jnp.tanh(gi[:, 2 * H:3 * H] + r * (gh[:, 2 * H:3 * H] + p["bhn_b"]))
        return (1.0 - zg) * n + zg * h_prev_l

    def gru_stack(x_flat, h0_list, params, collect_last):
        """Wavefront-interleaved stacked GRU: at step k, layer l handles t = k - l.

        All updates at a wavefront step depend only on previous-step state, so
        the dependent chain is S + L - 1 instead of L * S.
        """
        # layer-0 input path hoisted over the whole sequence (one matmul)
        gi0_all = dot32(x_flat, params[0]["wih"]) + params[0]["bc"]  # (SB, 3H)
        h = list(h0_list)
        outs_last = []
        for k in range(S + L - 1):
            h_prev = list(h)                                         # snapshot previous step
            for l in range(L):
                t = k - l
                if 0 <= t < S:
                    p = params[l]
                    if l == 0:
                        gi = gi0_all[t * B:(t + 1) * B, :]
                    else:
                        # input = layer (l-1) output at time t == h_prev[l-1]
                        gi = dot32(h_prev[l - 1], p["wih"]) + p["bc_b"]
                    h_new = gru_cell(p, gi, h_prev[l])
                    h[l] = h_new
                    if collect_last and l == L - 1:
                        outs_last.append(h_new)
        return h, outs_last

    # ---- encoder GRU stack (only final hidden states needed) ----
    enc_params = [load_layer("enc", l) for l in range(L)]
    h0 = jnp.zeros((B, H), jnp.float32)
    h_finals, _ = gru_stack(embedded, [h0] * L, enc_params, collect_last=False)

    # ---- fused mean/logvar heads ----
    hidden = jnp.concatenate(h_finals, axis=1)                       # (B, L*H), layer-major
    ml = dot32(hidden, w_at("head_w")) + b_at("head_b")              # (B, 2*LAT)
    mean = ml[:, 0:LATENT]
    log_var = ml[:, LATENT:2 * LATENT]

    # ---- reparameterization + latent -> decoder initial hidden (one matmul) ----
    z = mean + noise_ref[...] * jnp.exp(0.5 * log_var)
    latent = jnp.concatenate([z, cond_ref[...]], axis=1)             # (B, LAT+COND)
    hid_dec = dot32(latent, w_at("l2h_w")) + b_at("l2h_b")           # (B, L*H)

    # ---- decoder GRU stack (teacher forcing, word_dropout_rate == 0) ----
    dec_params = [load_layer("dec", l) for l in range(L)]
    dec_h0 = [hid_dec[:, l * H:(l + 1) * H] for l in range(L)]
    _, dec_outs = gru_stack(embedded, dec_h0, dec_params, collect_last=True)
    dec_seq = jnp.concatenate(dec_outs, axis=0)                      # (S*B, H) time-major

    # ---- output projection (lane-dense, padded classes have -1e9 bias) + log_softmax ----
    logits = dot32(dec_seq, w_at("out_w")) + b_at("out_b")           # (SB, 128)
    m = jnp.max(logits, axis=-1, keepdims=True)
    shifted = logits - m
    lse = jnp.log(jnp.sum(jnp.exp(shifted), axis=-1, keepdims=True))
    logits_ref[...] = (shifted - lse).astype(logits_ref.dtype)
    mean_ref[...] = mean.astype(mean_ref.dtype)
    logvar_ref[...] = log_var.astype(logvar_ref.dtype)


# ----------------------------- wrapper -----------------------------------------
def cond_vae_forward(params, input_data, cond, noise):
    """Mirror of CondVAEModel.forward(input_data, cond) with z=None (eval mode).

    input_data: (seq_len, batch) int32 token ids
    cond:       (cond_size, batch) f32   (the torch code uses cond.T)
    noise:      (batch, latent) f32      (stand-in for torch.randn_like(mean))
    """
    S, B = input_data.shape
    ids = input_data.reshape(S * B, 1).astype(jnp.int32)
    cond_t = jnp.transpose(cond).astype(jnp.float32)                 # (B, COND)

    logits_pad, mean, log_var = pl.pallas_call(
        cond_vae_fused_kernel,
        out_shape=(jax.ShapeDtypeStruct((S * B, LANE), jnp.float32),
                   jax.ShapeDtypeStruct((B, LATENT), jnp.float32),
                   jax.ShapeDtypeStruct((B, LATENT), jnp.float32)),
    )(ids, cond_t, noise, params["w"], params["b"])
    logits = logits_pad[:, :NUM_CLASS].reshape(S, B, NUM_CLASS)
    return logits, mean, log_var


# ----------------------------- parameters ---------------------------------------
def init_raw_params(key):
    """PyTorch-layout parameters (per-gate GRU weights, un-folded biases)."""
    keys = jax.random.split(key, 64)
    it = iter(keys)

    def rnd(shape, scale=0.1):
        return scale * jax.random.normal(next(it), shape, dtype=jnp.float32)

    def gru_raw(in_dim):
        return {"w_ih": rnd((3, in_dim, HID_SIZE)),   # gate order [r, z, n], x @ W form
                "w_hh": rnd((3, HID_SIZE, HID_SIZE)),
                "b_ih": rnd((3, HID_SIZE)),
                "b_hh": rnd((3, HID_SIZE))}

    return {
        "emb": rnd((NUM_CLASS, EMB_SIZE), 1.0),
        "enc": [gru_raw(EMB_SIZE if l == 0 else HID_SIZE) for l in range(HID_LAYERS)],
        "dec": [gru_raw(EMB_SIZE if l == 0 else HID_SIZE) for l in range(HID_LAYERS)],
        "mean_w": rnd((HID_SIZE * HID_LAYERS, LATENT)), "mean_b": rnd((LATENT,)),
        "logvar_w": rnd((HID_SIZE * HID_LAYERS, LATENT)), "logvar_b": rnd((LATENT,)),
        "l2h_w": rnd((LATENT + COND, HID_LAYERS * HID_SIZE)),
        "l2h_b": rnd((HID_LAYERS * HID_SIZE,)),
        "out_w": rnd((HID_SIZE, NUM_CLASS)), "out_b": rnd((NUM_CLASS,)),
    }


def pack_params(raw):
    """Pack all parameters into two f32 slabs (weights + biases) with static offsets."""
    w_slab = np.zeros((W_ROWS, LANE), np.float32)
    b_slab = np.zeros((B_ROWS, LANE), np.float32)

    def put_w(name, arr):
        off, r, c = W_LAYOUT[name]
        w_slab[off:off + r, 0:c] = np.asarray(arr, np.float32)

    def put_b(name, arr):
        row, c = B_LAYOUT[name]
        b_slab[row, 0:c] = np.asarray(arr, np.float32).reshape(-1)

    put_w("emb", raw["emb"])
    for pre in ("enc", "dec"):
        for l in range(HID_LAYERS):
            p = raw[pre][l]
            w_ih = np.concatenate([np.asarray(p["w_ih"][g]) for g in range(3)], axis=1)
            w_hh = np.concatenate([np.asarray(p["w_hh"][g]) for g in range(3)], axis=1)
            # fold b_ih_r+b_hh_r and b_ih_z+b_hh_z; keep b_hh_n separate (it must stay
            # inside the r-multiplied term to match the PyTorch GRU equations).
            b_c = np.concatenate([np.asarray(p["b_ih"][0]) + np.asarray(p["b_hh"][0]),
                                  np.asarray(p["b_ih"][1]) + np.asarray(p["b_hh"][1]),
                                  np.asarray(p["b_ih"][2])], axis=0)
            put_w(f"{pre}{l}_wih", w_ih)
            put_w(f"{pre}{l}_whh", w_hh)
            put_b(f"{pre}{l}_bc", b_c)
            put_b(f"{pre}{l}_bhn", p["b_hh"][2])

    head_w = np.concatenate([np.asarray(raw["mean_w"]), np.asarray(raw["logvar_w"])], axis=1)
    head_b = np.concatenate([np.asarray(raw["mean_b"]), np.asarray(raw["logvar_b"])], axis=0)
    put_w("head_w", head_w)
    put_b("head_b", head_b)
    put_w("l2h_w", raw["l2h_w"])
    put_b("l2h_b", raw["l2h_b"])

    out_w_pad = np.zeros((HID_SIZE, LANE), np.float32)
    out_w_pad[:, :NUM_CLASS] = np.asarray(raw["out_w"], np.float32)
    out_b_pad = np.full((LANE,), -1e9, np.float32)       # pad classes -> exp() == 0
    out_b_pad[:NUM_CLASS] = np.asarray(raw["out_b"], np.float32)
    put_w("out_w", out_w_pad)
    put_b("out_b", out_b_pad)

    return {"w": jnp.asarray(w_slab), "b": jnp.asarray(b_slab)}


# ----------------------------- pure-JAX reference --------------------------------
def reference_forward(raw, input_data, cond, noise):
    """Un-fused, PyTorch-style f32 reference (validates fusion / bias folding / wavefront)."""
    S, B = input_data.shape
    embedded = jnp.take(raw["emb"], input_data, axis=0)              # (S, B, E)

    def dot(x, w):
        return jnp.dot(x, w, preferred_element_type=jnp.float32)

    def gru_layer(x, h0, p):
        h = h0
        outs = []
        for t in range(S):
            x_t = x[t]
            gi_r = dot(x_t, p["w_ih"][0]) + p["b_ih"][0]
            gi_z = dot(x_t, p["w_ih"][1]) + p["b_ih"][1]
            gi_n = dot(x_t, p["w_ih"][2]) + p["b_ih"][2]
            gh_r = dot(h, p["w_hh"][0]) + p["b_hh"][0]
            gh_z = dot(h, p["w_hh"][1]) + p["b_hh"][1]
            gh_n = dot(h, p["w_hh"][2]) + p["b_hh"][2]
            r = jax.nn.sigmoid(gi_r + gh_r)
            z = jax.nn.sigmoid(gi_z + gh_z)
            n = jnp.tanh(gi_n + r * gh_n)
            h = (1.0 - z) * n + z * h
            outs.append(h)
        return jnp.stack(outs, axis=0), h

    x = embedded
    h_fin = []
    for l in range(HID_LAYERS):
        x, hT = gru_layer(x, jnp.zeros((B, HID_SIZE), jnp.float32), raw["enc"][l])
        h_fin.append(hT)
    hidden = jnp.concatenate(h_fin, axis=1)                          # (B, L*H)

    mean = dot(hidden, raw["mean_w"]) + raw["mean_b"]
    log_var = dot(hidden, raw["logvar_w"]) + raw["logvar_b"]
    z = mean + noise * jnp.exp(0.5 * log_var)

    latent = jnp.concatenate([z, cond.T], axis=1)
    hid_dec = dot(latent, raw["l2h_w"]) + raw["l2h_b"]
    hid_dec = hid_dec.reshape(B, HID_LAYERS, HID_SIZE).transpose(1, 0, 2)

    x = embedded
    for l in range(HID_LAYERS):
        x, _ = gru_layer(x, hid_dec[l], raw["dec"][l])

    logits = dot(x.reshape(S * B, HID_SIZE), raw["out_w"]) + raw["out_b"]
    logits = jax.nn.log_softmax(logits, axis=-1).reshape(S, B, NUM_CLASS)
    return logits, mean, log_var


# ----------------------------- main ----------------------------------------------
if __name__ == "__main__":
    key = jax.random.PRNGKey(0)
    k_param, k_data, k_cond, k_noise = jax.random.split(key, 4)

    raw = init_raw_params(k_param)
    packed = pack_params(raw)

    input_data = jax.random.randint(k_data, (SEQ_LEN, BATCH), 0, NUM_CLASS, dtype=jnp.int32)
    cond_ids = jax.random.randint(k_cond, (BATCH,), 0, COND, dtype=jnp.int32)
    cond = jax.nn.one_hot(cond_ids, COND, dtype=jnp.float32).T       # (cond_size, batch)
    noise = jax.random.normal(k_noise, (BATCH, LATENT), dtype=jnp.float32)

    fwd = jax.jit(cond_vae_forward)
    logits, mean, log_var = fwd(packed, input_data, cond, noise)
    jax.block_until_ready((logits, mean, log_var))

    assert logits.shape == (SEQ_LEN, BATCH, NUM_CLASS)
    assert mean.shape == (BATCH, LATENT)
    assert log_var.shape == (BATCH, LATENT)

    # log_softmax rows must exponentiate-sum to 1
    probs_sum = np.exp(np.asarray(logits)).sum(axis=-1)
    assert np.allclose(probs_sum, 1.0, atol=1e-4), probs_sum

    # compare the fused kernel against an un-fused PyTorch-style pure-JAX reference
    ref_logits, ref_mean, ref_logvar = jax.jit(reference_forward)(raw, input_data, cond, noise)
    np.testing.assert_allclose(np.asarray(logits), np.asarray(ref_logits), rtol=1e-2, atol=1e-2)
    np.testing.assert_allclose(np.asarray(mean), np.asarray(ref_mean), rtol=1e-2, atol=1e-2)
    np.testing.assert_allclose(np.asarray(log_var), np.asarray(ref_logvar), rtol=1e-2, atol=1e-2)

    print("KERNEL_OK")
</pallas_src>

<mosaic_0001>
module attributes {stable_mosaic.version = 11 : i64} {
  func.func @cond_vae_fused_kernel(%arg0: memref<16x1xi32, #tpu.memory_space<vmem>>, %arg1: memref<2x4xf32, #tpu.memory_space<vmem>>, %arg2: memref<2x8xf32, #tpu.memory_space<vmem>>, %arg3: memref<368x128xf32, #tpu.memory_space<vmem>>, %arg4: memref<16x128xf32, #tpu.memory_space<vmem>>, %arg5: memref<16x128xf32, #tpu.memory_space<vmem>>, %arg6: memref<2x8xf32, #tpu.memory_space<vmem>>, %arg7: memref<2x8xf32, #tpu.memory_space<vmem>>) attributes {dimension_semantics = [], scalar_prefetch = 0 : i64, scratch_operands = 0 : i64, tpu.core_type = #tpu.core_type<tc>} {
    %c0 = arith.constant 0 : index
    %c0_0 = arith.constant 0 : index
    %0 = vector.load %arg4[%c0, %c0_0] : memref<16x128xf32, #tpu.memory_space<vmem>>, vector<16x128xf32>
    %c0_1 = arith.constant 0 : index
    %c0_2 = arith.constant 0 : index
    %1 = vector.load %arg0[%c0_1, %c0_2] : memref<16x1xi32, #tpu.memory_space<vmem>>, vector<16x1xi32>
    %2 = tpu.iota {dimensions = array<i32: 1>} : vector<16x32xi32>
    %3 = vector.broadcast %1 : vector<16x1xi32> to vector<16x32xi32>
    %4 = arith.cmpi eq, %3, %2 : vector<16x32xi32>
    %cst = arith.constant 1.000000e+00 : f32
    %cst_3 = arith.constant 0.000000e+00 : f32
    %5 = vector.broadcast %cst : f32 to vector<16x32xf32>
    %6 = vector.broadcast %cst_3 : f32 to vector<16x32xf32>
    %7 = arith.select %4, %5, %6 : vector<16x32xi1>, vector<16x32xf32>
    %c0_4 = arith.constant 0 : index
    %c0_5 = arith.constant 0 : index
    %8 = vector.load %arg3[%c0_4, %c0_5] : memref<368x128xf32, #tpu.memory_space<vmem>>, vector<32x16xf32>
    %cst_6 = arith.constant dense<0.000000e+00> : vector<16x16xf32>
    %9 = tpu.matmul %7, %8, %cst_6 {dimension_numbers = #tpu.dot_dimension_numbers<[1], [0], [0], [1], [0, 0, 1, 1], [], []>} : vector<16x32xf32>, vector<32x16xf32>, vector<16x16xf32> -> vector<16x16xf32>
    %10 = vector.extract_strided_slice %0 {offsets = [0, 0], sizes = [1, 96], strides = [1, 1]} : vector<16x128xf32> to vector<1x96xf32>
    %c32 = arith.constant 32 : index
    %c0_7 = arith.constant 0 : index
    %11 = vector.load %arg3[%c32, %c0_7] : memref<368x128xf32, #tpu.memory_space<vmem>>, vector<16x96xf32>
    %c48 = arith.constant 48 : index
    %c0_8 = arith.constant 0 : index
    %12 = vector.load %arg3[%c48, %c0_8] : memref<368x128xf32, #tpu.memory_space<vmem>>, vector<32x96xf32>
    %13 = vector.extract_strided_slice %0 {offsets = [1, 0], sizes = [1, 32], strides = [1, 1]} : vector<16x128xf32> to vector<1x32xf32>
    %14 = vector.shape_cast %13 : vector<1x32xf32> to vector<1x32xf32>
    %15 = vector.broadcast %14 : vector<1x32xf32> to vector<2x32xf32>
    %16 = vector.extract_strided_slice %0 {offsets = [2, 0], sizes = [1, 96], strides = [1, 1]} : vector<16x128xf32> to vector<1x96xf32>
    %c80 = arith.constant 80 : index
    %c0_9 = arith.constant 0 : index
    %17 = vector.load %arg3[%c80, %c0_9] : memref<368x128xf32, #tpu.memory_space<vmem>>, vector<32x96xf32>
    %c112 = arith.constant 112 : index
    %c0_10 = arith.constant 0 : index
    %18 = vector.load %arg3[%c112, %c0_10] : memref<368x128xf32, #tpu.memory_space<vmem>>, vector<32x96xf32>
    %19 = vector.shape_cast %16 : vector<1x96xf32> to vector<1x96xf32>
    %20 = vector.broadcast %19 : vector<1x96xf32> to vector<2x96xf32>
    %21 = vector.extract_strided_slice %0 {offsets = [3, 0], sizes = [1, 32], strides = [1, 1]} : vector<16x128xf32> to vector<1x32xf32>
    %22 = vector.shape_cast %21 : vector<1x32xf32> to vector<1x32xf32>
    %23 = vector.broadcast %22 : vector<1x32xf32> to vector<2x32xf32>
    %cst_11 = arith.constant 0.000000e+00 : f32
    %24 = vector.broadcast %cst_11 : f32 to vector<2x32xf32>
    %cst_12 = arith.constant dense<0.000000e+00> : vector<16x96xf32>
    %25 = tpu.matmul %9, %11, %cst_12 {dimension_numbers = #tpu.dot_dimension_numbers<[1], [0], [0], [1], [0, 0, 1, 1], [], []>} : vector<16x16xf32>, vector<16x96xf32>, vector<16x96xf32> -> vector<16x96xf32>
    %26 = vector.broadcast %10 : vector<1x96xf32> to vector<16x96xf32>
    %27 = arith.addf %25, %26 : vector<16x96xf32>
    %28 = vector.extract_strided_slice %27 {offsets = [0, 0], sizes = [2, 96], strides = [1, 1]} : vector<16x96xf32> to vector<2x96xf32>
    %cst_13 = arith.constant dense<0.000000e+00> : vector<2x96xf32>
    %29 = tpu.matmul %24, %12, %cst_13 {dimension_numbers = #tpu.dot_dimension_numbers<[1], [0], [0], [1], [0, 0, 1, 1], [], []>} : vector<2x32xf32>, vector<32x96xf32>, vector<2x96xf32> -> vector<2x96xf32>
    %30 = vector.extract_strided_slice %28 {offsets = [0, 0], sizes = [2, 32], strides = [1, 1]} : vector<2x96xf32> to vector<2x32xf32>
    %31 = vector.extract_strided_slice %29 {offsets = [0, 0], sizes = [2, 32], strides = [1, 1]} : vector<2x96xf32> to vector<2x32xf32>
    %32 = arith.addf %30, %31 : vector<2x32xf32>
    %33 = arith.negf %32 : vector<2x32xf32>
    %34 = math.exp %33 : vector<2x32xf32>
    %cst_14 = arith.constant 1.000000e+00 : f32
    %35 = vector.broadcast %cst_14 : f32 to vector<2x32xf32>
    %36 = arith.addf %35, %34 : vector<2x32xf32>
    %37 = arith.divf %35, %36 : vector<2x32xf32>
    %38 = vector.extract_strided_slice %28 {offsets = [0, 32], sizes = [2, 32], strides = [1, 1]} : vector<2x96xf32> to vector<2x32xf32>
    %39 = vector.extract_strided_slice %29 {offsets = [0, 32], sizes = [2, 32], strides = [1, 1]} : vector<2x96xf32> to vector<2x32xf32>
    %40 = arith.addf %38, %39 : vector<2x32xf32>
    %41 = arith.negf %40 : vector<2x32xf32>
    %42 = math.exp %41 : vector<2x32xf32>
    %cst_15 = arith.constant 1.000000e+00 : f32
    %43 = vector.broadcast %cst_15 : f32 to vector<2x32xf32>
    %44 = arith.addf %43, %42 : vector<2x32xf32>
    %45 = arith.divf %43, %44 : vector<2x32xf32>
    %46 = vector.extract_strided_slice %28 {offsets = [0, 64], sizes = [2, 32], strides = [1, 1]} : vector<2x96xf32> to vector<2x32xf32>
    %47 = vector.extract_strided_slice %29 {offsets = [0, 64], sizes = [2, 32], strides = [1, 1]} : vector<2x96xf32> to vector<2x32xf32>
    %48 = arith.addf %47, %15 : vector<2x32xf32>
    %49 = arith.mulf %37, %48 : vector<2x32xf32>
    %50 = arith.addf %46, %49 : vector<2x32xf32>
    %51 = math.tanh %50 : vector<2x32xf32>
    %cst_16 = arith.constant 1.000000e+00 : f32
    %52 = vector.broadcast %cst_16 : f32 to vector<2x32xf32>
    %53 = arith.subf %52, %45 : vector<2x32xf32>
    %54 = arith.mulf %53, %51 : vector<2x32xf32>
    %55 = arith.mulf %45, %24 : vector<2x32xf32>
    %56 = arith.addf %54, %55 : vector<2x32xf32>
    %57 = vector.extract_strided_slice %27 {offsets = [2, 0], sizes = [2, 96], strides = [1, 1]} : vector<16x96xf32> to vector<2x96xf32>
    %cst_17 = arith.constant dense<0.000000e+00> : vector<2x96xf32>
    %58 = tpu.matmul %56, %12, %cst_17 {dimension_numbers = #tpu.dot_dimension_numbers<[1], [0], [0], [1], [0, 0, 1, 1], [], []>} : vector<2x32xf32>, vector<32x96xf32>, vector<2x96xf32> -> vector<2x96xf32>
    %59 = vector.extract_strided_slice %57 {offsets = [0, 0], sizes = [2, 32], strides = [1, 1]} : vector<2x96xf32> to vector<2x32xf32>
    %60 = vector.extract_strided_slice %58 {offsets = [0, 0], sizes = [2, 32], strides = [1, 1]} : vector<2x96xf32> to vector<2x32xf32>
    %61 = arith.addf %59, %60 : vector<2x32xf32>
    %62 = arith.negf %61 : vector<2x32xf32>
    %63 = math.exp %62 : vector<2x32xf32>
    %cst_18 = arith.constant 1.000000e+00 : f32
    %64 = vector.broadcast %cst_18 : f32 to vector<2x32xf32>
    %65 = arith.addf %64, %63 : vector<2x32xf32>
    %66 = arith.divf %64, %65 : vector<2x32xf32>
    %67 = vector.extract_strided_slice %57 {offsets = [0, 32], sizes = [2, 32], strides = [1, 1]} : vector<2x96xf32> to vector<2x32xf32>
    %68 = vector.extract_strided_slice %58 {offsets = [0, 32], sizes = [2, 32], strides = [1, 1]} : vector<2x96xf32> to vector<2x32xf32>
    %69 = arith.addf %67, %68 : vector<2x32xf32>
    %70 = arith.negf %69 : vector<2x32xf32>
    %71 = math.exp %70 : vector<2x32xf32>
    %cst_19 = arith.constant 1.000000e+00 : f32
    %72 = vector.broadcast %cst_19 : f32 to vector<2x32xf32>
    %73 = arith.addf %72, %71 : vector<2x32xf32>
    %74 = arith.divf %72, %73 : vector<2x32xf32>
    %75 = vector.extract_strided_slice %57 {offsets = [0, 64], sizes = [2, 32], strides = [1, 1]} : vector<2x96xf32> to vector<2x32xf32>
    %76 = vector.extract_strided_slice %58 {offsets = [0, 64], sizes = [2, 32], strides = [1, 1]} : vector<2x96xf32> to vector<2x32xf32>
    %77 = arith.addf %76, %15 : vector<2x32xf32>
    %78 = arith.mulf %66, %77 : vector<2x32xf32>
    %79 = arith.addf %75, %78 : vector<2x32xf32>
    %80 = math.tanh %79 : vector<2x32xf32>
    %cst_20 = arith.constant 1.000000e+00 : f32
    %81 = vector.broadcast %cst_20 : f32 to vector<2x32xf32>
    %82 = arith.subf %81, %74 : vector<2x32xf32>
    %83 = arith.mulf %82, %80 : vector<2x32xf32>
    %84 = arith.mulf %74, %56 : vector<2x32xf32>
    %85 = arith.addf %83, %84 : vector<2x32xf32>
    %cst_21 = arith.constant dense<0.000000e+00> : vector<2x96xf32>
    %86 = tpu.matmul %56, %17, %cst_21 {dimension_numbers = #tpu.dot_dimension_numbers<[1], [0], [0], [1], [0, 0, 1, 1], [], []>} : vector<2x32xf32>, vector<32x96xf32>, vector<2x96xf32> -> vector<2x96xf32>
    %87 = arith.addf %86, %20 : vector<2x96xf32>
    %cst_22 = arith.constant dense<0.000000e+00> : vector<2x96xf32>
    %88 = tpu.matmul %24, %18, %cst_22 {dimension_numbers = #tpu.dot_dimension_numbers<[1], [0], [0], [1], [0, 0, 1, 1], [], []>} : vector<2x32xf32>, vector<32x96xf32>, vector<2x96xf32> -> vector<2x96xf32>
    %89 = vector.extract_strided_slice %87 {offsets = [0, 0], sizes = [2, 32], strides = [1, 1]} : vector<2x96xf32> to vector<2x32xf32>
    %90 = vector.extract_strided_slice %88 {offsets = [0, 0], sizes = [2, 32], strides = [1, 1]} : vector<2x96xf32> to vector<2x32xf32>
    %91 = arith.addf %89, %90 : vector<2x32xf32>
    %92 = arith.negf %91 : vector<2x32xf32>
    %93 = math.exp %92 : vector<2x32xf32>
    %cst_23 = arith.constant 1.000000e+00 : f32
    %94 = vector.broadcast %cst_23 : f32 to vector<2x32xf32>
    %95 = arith.addf %94, %93 : vector<2x32xf32>
    %96 = arith.divf %94, %95 : vector<2x32xf32>
    %97 = vector.extract_strided_slice %87 {offsets = [0, 32], sizes = [2, 32], strides = [1, 1]} : vector<2x96xf32> to vector<2x32xf32>
    %98 = vector.extract_strided_slice %88 {offsets = [0, 32], sizes = [2, 32], strides = [1, 1]} : vector<2x96xf32> to vector<2x32xf32>
    %99 = arith.addf %97, %98 : vector<2x32xf32>
    %100 = arith.negf %99 : vector<2x32xf32>
    %101 = math.exp %100 : vector<2x32xf32>
    %cst_24 = arith.constant 1.000000e+00 : f32
    %102 = vector.broadcast %cst_24 : f32 to vector<2x32xf32>
    %103 = arith.addf %102, %101 : vector<2x32xf32>
    %104 = arith.divf %102, %103 : vector<2x32xf32>
    %105 = vector.extract_strided_slice %87 {offsets = [0, 64], sizes = [2, 32], strides = [1, 1]} : vector<2x96xf32> to vector<2x32xf32>
    %106 = vector.extract_strided_slice %88 {offsets = [0, 64], sizes = [2, 32], strides = [1, 1]} : vector<2x96xf32> to vector<2x32xf32>
    %107 = arith.addf %106, %23 : vector<2x32xf32>
    %108 = arith.mulf %96, %107 : vector<2x32xf32>
    %109 = arith.addf %105, %108 : vector<2x32xf32>
    %110 = math.tanh %109 : vector<2x32xf32>
    %cst_25 = arith.constant 1.000000e+00 : f32
    %111 = vector.broadcast %cst_25 : f32 to vector<2x32xf32>
    %112 = arith.subf %111, %104 : vector<2x32xf32>
    %113 = arith.mulf %112, %110 : vector<2x32xf32>
    %114 = arith.mulf %104, %24 : vector<2x32xf32>
    %115 = arith.addf %113, %114 : vector<2x32xf32>
    %116 = vector.extract_strided_slice %27 {offsets = [4, 0], sizes = [2, 96], strides = [1, 1]} : vector<16x96xf32> to vector<2x96xf32>
    %cst_26 = arith.constant dense<0.000000e+00> : vector<2x96xf32>
    %117 = tpu.matmul %85, %12, %cst_26 {dimension_numbers = #tpu.dot_dimension_numbers<[1], [0], [0], [1], [0, 0, 1, 1], [], []>} : vector<2x32xf32>, vector<32x96xf32>, vector<2x96xf32> -> vector<2x96xf32>
    %118 = vector.extract_strided_slice %116 {offsets = [0, 0], sizes = [2, 32], strides = [1, 1]} : vector<2x96xf32> to vector<2x32xf32>
    %119 = vector.extract_strided_slice %117 {offsets = [0, 0], sizes = [2, 32], strides = [1, 1]} : vector<2x96xf32> to vector<2x32xf32>
    %120 = arith.addf %118, %119 : vector<2x32xf32>
    %121 = arith.negf %120 : vector<2x32xf32>
    %122 = math.exp %121 : vector<2x32xf32>
    %cst_27 = arith.constant 1.000000e+00 : f32
    %123 = vector.broadcast %cst_27 : f32 to vector<2x32xf32>
    %124 = arith.addf %123, %122 : vector<2x32xf32>
    %125 = arith.divf %123, %124 : vector<2x32xf32>
    %126 = vector.extract_strided_slice %116 {offsets = [0, 32], sizes = [2, 32], strides = [1, 1]} : vector<2x96xf32> to vector<2x32xf32>
    %127 = vector.extract_strided_slice %117 {offsets = [0, 32], sizes = [2, 32], strides = [1, 1]} : vector<2x96xf32> to vector<2x32xf32>
    %128 = arith.addf %126, %127 : vector<2x32xf32>
    %129 = arith.negf %128 : vector<2x32xf32>
    %130 = math.exp %129 : vector<2x32xf32>
    %cst_28 = arith.constant 1.000000e+00 : f32
    %131 = vector.broadcast %cst_28 : f32 to vector<2x32xf32>
    %132 = arith.addf %131, %130 : vector<2x32xf32>
    %133 = arith.divf %131, %132 : vector<2x32xf32>
    %134 = vector.extract_strided_slice %116 {offsets = [0, 64], sizes = [2, 32], strides = [1, 1]} : vector<2x96xf32> to vector<2x32xf32>
    %135 = vector.extract_strided_slice %117 {offsets = [0, 64], sizes = [2, 32], strides = [1, 1]} : vector<2x96xf32> to vector<2x32xf32>
    %136 = arith.addf %135, %15 : vector<2x32xf32>
    %137 = arith.mulf %125, %136 : vector<2x32xf32>
    %138 = arith.addf %134, %137 : vector<2x32xf32>
    %139 = math.tanh %138 : vector<2x32xf32>
    %cst_29 = arith.constant 1.000000e+00 : f32
    %140 = vector.broadcast %cst_29 : f32 to vector<2x32xf32>
    %141 = arith.subf %140, %133 : vector<2x32xf32>
    %142 = arith.mulf %141, %139 : vector<2x32xf32>
    %143 = arith.mulf %133, %85 : vector<2x32xf32>
    %144 = arith.addf %142, %143 : vector<2x32xf32>
    %cst_30 = arith.constant dense<0.000000e+00> : vector<2x96xf32>
    %145 = tpu.matmul %85, %17, %cst_30 {dimension_numbers = #tpu.dot_dimension_numbers<[1], [0], [0], [1], [0, 0, 1, 1], [], []>} : vector<2x32xf32>, vector<32x96xf32>, vector<2x96xf32> -> vector<2x96xf32>
    %146 = arith.addf %145, %20 : vector<2x96xf32>
    %cst_31 = arith.constant dense<0.000000e+00> : vector<2x96xf32>
    %147 = tpu.matmul %115, %18, %cst_31 {dimension_numbers = #tpu.dot_dimension_numbers<[1], [0], [0], [1], [0, 0, 1, 1], [], []>} : vector<2x32xf32>, vector<32x96xf32>, vector<2x96xf32> -> vector<2x96xf32>
    %148 = vector.extract_strided_slice %146 {offsets = [0, 0], sizes = [2, 32], strides = [1, 1]} : vector<2x96xf32> to vector<2x32xf32>
    %149 = vector.extract_strided_slice %147 {offsets = [0, 0], sizes = [2, 32], strides = [1, 1]} : vector<2x96xf32> to vector<2x32xf32>
    %150 = arith.addf %148, %149 : vector<2x32xf32>
    %151 = arith.negf %150 : vector<2x32xf32>
    %152 = math.exp %151 : vector<2x32xf32>
    %cst_32 = arith.constant 1.000000e+00 : f32
    %153 = vector.broadcast %cst_32 : f32 to vector<2x32xf32>
    %154 = arith.addf %153, %152 : vector<2x32xf32>
    %155 = arith.divf %153, %154 : vector<2x32xf32>
    %156 = vector.extract_strided_slice %146 {offsets = [0, 32], sizes = [2, 32], strides = [1, 1]} : vector<2x96xf32> to vector<2x32xf32>
    %157 = vector.extract_strided_slice %147 {offsets = [0, 32], sizes = [2, 32], strides = [1, 1]} : vector<2x96xf32> to vector<2x32xf32>
    %158 = arith.addf %156, %157 : vector<2x32xf32>
    %159 = arith.negf %158 : vector<2x32xf32>
    %160 = math.exp %159 : vector<2x32xf32>
    %cst_33 = arith.constant 1.000000e+00 : f32
    %161 = vector.broadcast %cst_33 : f32 to vector<2x32xf32>
    %162 = arith.addf %161, %160 : vector<2x32xf32>
    %163 = arith.divf %161, %162 : vector<2x32xf32>
    %164 = vector.extract_strided_slice %146 {offsets = [0, 64], sizes = [2, 32], strides = [1, 1]} : vector<2x96xf32> to vector<2x32xf32>
    %165 = vector.extract_strided_slice %147 {offsets = [0, 64], sizes = [2, 32], strides = [1, 1]} : vector<2x96xf32> to vector<2x32xf32>
    %166 = arith.addf %165, %23 : vector<2x32xf32>
    %167 = arith.mulf %155, %166 : vector<2x32xf32>
    %168 = arith.addf %164, %167 : vector<2x32xf32>
    %169 = math.tanh %168 : vector<2x32xf32>
    %cst_34 = arith.constant 1.000000e+00 : f32
    %170 = vector.broadcast %cst_34 : f32 to vector<2x32xf32>
    %171 = arith.subf %170, %163 : vector<2x32xf32>
    %172 = arith.mulf %171, %169 : vector<2x32xf32>
    %173 = arith.mulf %163, %115 : vector<2x32xf32>
    %174 = arith.addf %172, %173 : vector<2x32xf32>
    %175 = vector.extract_strided_slice %27 {offsets = [6, 0], sizes = [2, 96], strides = [1, 1]} : vector<16x96xf32> to vector<2x96xf32>
    %cst_35 = arith.constant dense<0.000000e+00> : vector<2x96xf32>
    %176 = tpu.matmul %144, %12, %cst_35 {dimension_numbers = #tpu.dot_dimension_numbers<[1], [0], [0], [1], [0, 0, 1, 1], [], []>} : vector<2x32xf32>, vector<32x96xf32>, vector<2x96xf32> -> vector<2x96xf32>
    %177 = vector.extract_strided_slice %175 {offsets = [0, 0], sizes = [2, 32], strides = [1, 1]} : vector<2x96xf32> to vector<2x32xf32>
    %178 = vector.extract_strided_slice %176 {offsets = [0, 0], sizes = [2, 32], strides = [1, 1]} : vector<2x96xf32> to vector<2x32xf32>
    %179 = arith.addf %177, %178 : vector<2x32xf32>
    %180 = arith.negf %179 : vector<2x32xf32>
    %181 = math.exp %180 : vector<2x32xf32>
    %cst_36 = arith.constant 1.000000e+00 : f32
    %182 = vector.broadcast %cst_36 : f32 to vector<2x32xf32>
    %183 = arith.addf %182, %181 : vector<2x32xf32>
    %184 = arith.divf %182, %183 : vector<2x32xf32>
    %185 = vector.extract_strided_slice %175 {offsets = [0, 32], sizes = [2, 32], strides = [1, 1]} : vector<2x96xf32> to vector<2x32xf32>
    %186 = vector.extract_strided_slice %176 {offsets = [0, 32], sizes = [2, 32], strides = [1, 1]} : vector<2x96xf32> to vector<2x32xf32>
    %187 = arith.addf %185, %186 : vector<2x32xf32>
    %188 = arith.negf %187 : vector<2x32xf32>
    %189 = math.exp %188 : vector<2x32xf32>
    %cst_37 = arith.constant 1.000000e+00 : f32
    %190 = vector.broadcast %cst_37 : f32 to vector<2x32xf32>
    %191 = arith.addf %190, %189 : vector<2x32xf32>
    %192 = arith.divf %190, %191 : vector<2x32xf32>
    %193 = vector.extract_strided_slice %175 {offsets = [0, 64], sizes = [2, 32], strides = [1, 1]} : vector<2x96xf32> to vector<2x32xf32>
    %194 = vector.extract_strided_slice %176 {offsets = [0, 64], sizes = [2, 32], strides = [1, 1]} : vector<2x96xf32> to vector<2x32xf32>
    %195 = arith.addf %194, %15 : vector<2x32xf32>
    %196 = arith.mulf %184, %195 : vector<2x32xf32>
    %197 = arith.addf %193, %196 : vector<2x32xf32>
    %198 = math.tanh %197 : vector<2x32xf32>
    %cst_38 = arith.constant 1.000000e+00 : f32
    %199 = vector.broadcast %cst_38 : f32 to vector<2x32xf32>
    %200 = arith.subf %199, %192 : vector<2x32xf32>
    %201 = arith.mulf %200, %198 : vector<2x32xf32>
    %202 = arith.mulf %192, %144 : vector<2x32xf32>
    %203 = arith.addf %201, %202 : vector<2x32xf32>
    %cst_39 = arith.constant dense<0.000000e+00> : vector<2x96xf32>
    %204 = tpu.matmul %144, %17, %cst_39 {dimension_numbers = #tpu.dot_dimension_numbers<[1], [0], [0], [1], [0, 0, 1, 1], [], []>} : vector<2x32xf32>, vector<32x96xf32>, vector<2x96xf32> -> vector<2x96xf32>
    %205 = arith.addf %204, %20 : vector<2x96xf32>
    %cst_40 = arith.constant dense<0.000000e+00> : vector<2x96xf32>
    %206 = tpu.matmul %174, %18, %cst_40 {dimension_numbers = #tpu.dot_dimension_numbers<[1], [0], [0], [1], [0, 0, 1, 1], [], []>} : vector<2x32xf32>, vector<32x96xf32>, vector<2x96xf32> -> vector<2x96xf32>
    %207 = vector.extract_strided_slice %205 {offsets = [0, 0], sizes = [2, 32], strides = [1, 1]} : vector<2x96xf32> to vector<2x32xf32>
    %208 = vector.extract_strided_slice %206 {offsets = [0, 0], sizes = [2, 32], strides = [1, 1]} : vector<2x96xf32> to vector<2x32xf32>
    %209 = arith.addf %207, %208 : vector<2x32xf32>
    %210 = arith.negf %209 : vector<2x32xf32>
    %211 = math.exp %210 : vector<2x32xf32>
    %cst_41 = arith.constant 1.000000e+00 : f32
    %212 = vector.broadcast %cst_41 : f32 to vector<2x32xf32>
    %213 = arith.addf %212, %211 : vector<2x32xf32>
    %214 = arith.divf %212, %213 : vector<2x32xf32>
    %215 = vector.extract_strided_slice %205 {offsets = [0, 32], sizes = [2, 32], strides = [1, 1]} : vector<2x96xf32> to vector<2x32xf32>
    %216 = vector.extract_strided_slice %206 {offsets = [0, 32], sizes = [2, 32], strides = [1, 1]} : vector<2x96xf32> to vector<2x32xf32>
    %217 = arith.addf %215, %216 : vector<2x32xf32>
    %218 = arith.negf %217 : vector<2x32xf32>
    %219 = math.exp %218 : vector<2x32xf32>
    %cst_42 = arith.constant 1.000000e+00 : f32
    %220 = vector.broadcast %cst_42 : f32 to vector<2x32xf32>
    %221 = arith.addf %220, %219 : vector<2x32xf32>
    %222 = arith.divf %220, %221 : vector<2x32xf32>
    %223 = vector.extract_strided_slice %205 {offsets = [0, 64], sizes = [2, 32], strides = [1, 1]} : vector<2x96xf32> to vector<2x32xf32>
    %224 = vector.extract_strided_slice %206 {offsets = [0, 64], sizes = [2, 32], strides = [1, 1]} : vector<2x96xf32> to vector<2x32xf32>
    %225 = arith.addf %224, %23 : vector<2x32xf32>
    %226 = arith.mulf %214, %225 : vector<2x32xf32>
    %227 = arith.addf %223, %226 : vector<2x32xf32>
    %228 = math.tanh %227 : vector<2x32xf32>
    %cst_43 = arith.constant 1.000000e+00 : f32
    %229 = vector.broadcast %cst_43 : f32 to vector<2x32xf32>
    %230 = arith.subf %229, %222 : vector<2x32xf32>
    %231 = arith.mulf %230, %228 : vector<2x32xf32>
    %232 = arith.mulf %222, %174 : vector<2x32xf32>
    %233 = arith.addf %231, %232 : vector<2x32xf32>
    %234 = vector.extract_strided_slice %27 {offsets = [8, 0], sizes = [2, 96], strides = [1, 1]} : vector<16x96xf32> to vector<2x96xf32>
    %cst_44 = arith.constant dense<0.000000e+00> : vector<2x96xf32>
    %235 = tpu.matmul %203, %12, %cst_44 {dimension_numbers = #tpu.dot_dimension_numbers<[1], [0], [0], [1], [0, 0, 1, 1], [], []>} : vector<2x32xf32>, vector<32x96xf32>, vector<2x96xf32> -> vector<2x96xf32>
    %236 = vector.extract_strided_slice %234 {offsets = [0, 0], sizes = [2, 32], strides = [1, 1]} : vector<2x96xf32> to vector<2x32xf32>
    %237 = vector.extract_strided_slice %235 {offsets = [0, 0], sizes = [2, 32], strides = [1, 1]} : vector<2x96xf32> to vector<2x32xf32>
    %238 = arith.addf %236, %237 : vector<2x32xf32>
    %239 = arith.negf %238 : vector<2x32xf32>
    %240 = math.exp %239 : vector<2x32xf32>
    %cst_45 = arith.constant 1.000000e+00 : f32
    %241 = vector.broadcast %cst_45 : f32 to vector<2x32xf32>
    %242 = arith.addf %241, %240 : vector<2x32xf32>
    %243 = arith.divf %241, %242 : vector<2x32xf32>
    %244 = vector.extract_strided_slice %234 {offsets = [0, 32], sizes = [2, 32], strides = [1, 1]} : vector<2x96xf32> to vector<2x32xf32>
    %245 = vector.extract_strided_slice %235 {offsets = [0, 32], sizes = [2, 32], strides = [1, 1]} : vector<2x96xf32> to vector<2x32xf32>
    %246 = arith.addf %244, %245 : vector<2x32xf32>
    %247 = arith.negf %246 : vector<2x32xf32>
    %248 = math.exp %247 : vector<2x32xf32>
    %cst_46 = arith.constant 1.000000e+00 : f32
    %249 = vector.broadcast %cst_46 : f32 to vector<2x32xf32>
    %250 = arith.addf %249, %248 : vector<2x32xf32>
    %251 = arith.divf %249, %250 : vector<2x32xf32>
    %252 = vector.extract_strided_slice %234 {offsets = [0, 64], sizes = [2, 32], strides = [1, 1]} : vector<2x96xf32> to vector<2x32xf32>
    %253 = vector.extract_strided_slice %235 {offsets = [0, 64], sizes = [2, 32], strides = [1, 1]} : vector<2x96xf32> to vector<2x32xf32>
    %254 = arith.addf %253, %15 : vector<2x32xf32>
    %255 = arith.mulf %243, %254 : vector<2x32xf32>
    %256 = arith.addf %252, %255 : vector<2x32xf32>
    %257 = math.tanh %256 : vector<2x32xf32>
    %cst_47 = arith.constant 1.000000e+00 : f32
    %258 = vector.broadcast %cst_47 : f32 to vector<2x32xf32>
    %259 = arith.subf %258, %251 : vector<2x32xf32>
    %260 = arith.mulf %259, %257 : vector<2x32xf32>
    %261 = arith.mulf %251, %203 : vector<2x32xf32>
    %262 = arith.addf %260, %261 : vector<2x32xf32>
    %cst_48 = arith.constant dense<0.000000e+00> : vector<2x96xf32>
    %263 = tpu.matmul %203, %17, %cst_48 {dimension_numbers = #tpu.dot_dimension_numbers<[1], [0], [0], [1], [0, 0, 1, 1], [], []>} : vector<2x32xf32>, vector<32x96xf32>, vector<2x96xf32> -> vector<2x96xf32>
    %264 = arith.addf %263, %20 : vector<2x96xf32>
    %cst_49 = arith.constant dense<0.000000e+00> : vector<2x96xf32>
    %265 = tpu.matmul %233, %18, %cst_49 {dimension_numbers = #tpu.dot_dimension_numbers<[1], [0], [0], [1], [0, 0, 1, 1], [], []>} : vector<2x32xf32>, vector<32x96xf32>, vector<2x96xf32> -> vector<2x96xf32>
    %266 = vector.extract_strided_slice %264 {offsets = [0, 0], sizes = [2, 32], strides = [1, 1]} : vector<2x96xf32> to vector<2x32xf32>
    %267 = vector.extract_strided_slice %265 {offsets = [0, 0], sizes = [2, 32], strides = [1, 1]} : vector<2x96xf32> to vector<2x32xf32>
    %268 = arith.addf %266, %267 : vector<2x32xf32>
    %269 = arith.negf %268 : vector<2x32xf32>
    %270 = math.exp %269 : vector<2x32xf32>
    %cst_50 = arith.constant 1.000000e+00 : f32
    %271 = vector.broadcast %cst_50 : f32 to vector<2x32xf32>
    %272 = arith.addf %271, %270 : vector<2x32xf32>
    %273 = arith.divf %271, %272 : vector<2x32xf32>
    %274 = vector.extract_strided_slice %264 {offsets = [0, 32], sizes = [2, 32], strides = [1, 1]} : vector<2x96xf32> to vector<2x32xf32>
    %275 = vector.extract_strided_slice %265 {offsets = [0, 32], sizes = [2, 32], strides = [1, 1]} : vector<2x96xf32> to vector<2x32xf32>
    %276 = arith.addf %274, %275 : vector<2x32xf32>
    %277 = arith.negf %276 : vector<2x32xf32>
    %278 = math.exp %277 : vector<2x32xf32>
    %cst_51 = arith.constant 1.000000e+00 : f32
    %279 = vector.broadcast %cst_51 : f32 to vector<2x32xf32>
    %280 = arith.addf %279, %278 : vector<2x32xf32>
    %281 = arith.divf %279, %280 : vector<2x32xf32>
    %282 = vector.extract_strided_slice %264 {offsets = [0, 64], sizes = [2, 32], strides = [1, 1]} : vector<2x96xf32> to vector<2x32xf32>
    %283 = vector.extract_strided_slice %265 {offsets = [0, 64], sizes = [2, 32], strides = [1, 1]} : vector<2x96xf32> to vector<2x32xf32>
    %284 = arith.addf %283, %23 : vector<2x32xf32>
    %285 = arith.mulf %273, %284 : vector<2x32xf32>
    %286 = arith.addf %282, %285 : vector<2x32xf32>
    %287 = math.tanh %286 : vector<2x32xf32>
    %cst_52 = arith.constant 1.000000e+00 : f32
    %288 = vector.broadcast %cst_52 : f32 to vector<2x32xf32>
    %289 = arith.subf %288, %281 : vector<2x32xf32>
    %290 = arith.mulf %289, %287 : vector<2x32xf32>
    %291 = arith.mulf %281, %233 : vector<2x32xf32>
    %292 = arith.addf %290, %291 : vector<2x32xf32>
    %293 = vector.extract_strided_slice %27 {offsets = [10, 0], sizes = [2, 96], strides = [1, 1]} : vector<16x96xf32> to vector<2x96xf32>
    %cst_53 = arith.constant dense<0.000000e+00> : vector<2x96xf32>
    %294 = tpu.matmul %262, %12, %cst_53 {dimension_numbers = #tpu.dot_dimension_numbers<[1], [0], [0], [1], [0, 0, 1, 1], [], []>} : vector<2x32xf32>, vector<32x96xf32>, vector<2x96xf32> -> vector<2x96xf32>
    %295 = vector.extract_strided_slice %293 {offsets = [0, 0], sizes = [2, 32], strides = [1, 1]} : vector<2x96xf32> to vector<2x32xf32>
    %296 = vector.extract_strided_slice %294 {offsets = [0, 0], sizes = [2, 32], strides = [1, 1]} : vector<2x96xf32> to vector<2x32xf32>
    %297 = arith.addf %295, %296 : vector<2x32xf32>
    %298 = arith.negf %297 : vector<2x32xf32>
    %299 = math.exp %298 : vector<2x32xf32>
    %cst_54 = arith.constant 1.000000e+00 : f32
    %300 = vector.broadcast %cst_54 : f32 to vector<2x32xf32>
    %301 = arith.addf %300, %299 : vector<2x32xf32>
    %302 = arith.divf %300, %301 : vector<2x32xf32>
    %303 = vector.extract_strided_slice %293 {offsets = [0, 32], sizes = [2, 32], strides = [1, 1]} : vector<2x96xf32> to vector<2x32xf32>
    %304 = vector.extract_strided_slice %294 {offsets = [0, 32], sizes = [2, 32], strides = [1, 1]} : vector<2x96xf32> to vector<2x32xf32>
    %305 = arith.addf %303, %304 : vector<2x32xf32>
    %306 = arith.negf %305 : vector<2x32xf32>
    %307 = math.exp %306 : vector<2x32xf32>
    %cst_55 = arith.constant 1.000000e+00 : f32
    %308 = vector.broadcast %cst_55 : f32 to vector<2x32xf32>
    %309 = arith.addf %308, %307 : vector<2x32xf32>
    %310 = arith.divf %308, %309 : vector<2x32xf32>
    %311 = vector.extract_strided_slice %293 {offsets = [0, 64], sizes = [2, 32], strides = [1, 1]} : vector<2x96xf32> to vector<2x32xf32>
    %312 = vector.extract_strided_slice %294 {offsets = [0, 64], sizes = [2, 32], strides = [1, 1]} : vector<2x96xf32> to vector<2x32xf32>
    %313 = arith.addf %312, %15 : vector<2x32xf32>
    %314 = arith.mulf %302, %313 : vector<2x32xf32>
    %315 = arith.addf %311, %314 : vector<2x32xf32>
    %316 = math.tanh %315 : vector<2x32xf32>
    %cst_56 = arith.constant 1.000000e+00 : f32
    %317 = vector.broadcast %cst_56 : f32 to vector<2x32xf32>
    %318 = arith.subf %317, %310 : vector<2x32xf32>
    %319 = arith.mulf %318, %316 : vector<2x32xf32>
    %320 = arith.mulf %310, %262 : vector<2x32xf32>
    %321 = arith.addf %319, %320 : vector<2x32xf32>
    %cst_57 = arith.constant dense<0.000000e+00> : vector<2x96xf32>
    %322 = tpu.matmul %262, %17, %cst_57 {dimension_numbers = #tpu.dot_dimension_numbers<[1], [0], [0], [1], [0, 0, 1, 1], [], []>} : vector<2x32xf32>, vector<32x96xf32>, vector<2x96xf32> -> vector<2x96xf32>
    %323 = arith.addf %322, %20 : vector<2x96xf32>
    %cst_58 = arith.constant dense<0.000000e+00> : vector<2x96xf32>
    %324 = tpu.matmul %292, %18, %cst_58 {dimension_numbers = #tpu.dot_dimension_numbers<[1], [0], [0], [1], [0, 0, 1, 1], [], []>} : vector<2x32xf32>, vector<32x96xf32>, vector<2x96xf32> -> vector<2x96xf32>
    %325 = vector.extract_strided_slice %323 {offsets = [0, 0], sizes = [2, 32], strides = [1, 1]} : vector<2x96xf32> to vector<2x32xf32>
    %326 = vector.extract_strided_slice %324 {offsets = [0, 0], sizes = [2, 32], strides = [1, 1]} : vector<2x96xf32> to vector<2x32xf32>
    %327 = arith.addf %325, %326 : vector<2x32xf32>
    %328 = arith.negf %327 : vector<2x32xf32>
    %329 = math.exp %328 : vector<2x32xf32>
    %cst_59 = arith.constant 1.000000e+00 : f32
    %330 = vector.broadcast %cst_59 : f32 to vector<2x32xf32>
    %331 = arith.addf %330, %329 : vector<2x32xf32>
    %332 = arith.divf %330, %331 : vector<2x32xf32>
    %333 = vector.extract_strided_slice %323 {offsets = [0, 32], sizes = [2, 32], strides = [1, 1]} : vector<2x96xf32> to vector<2x32xf32>
    %334 = vector.extract_strided_slice %324 {offsets = [0, 32], sizes = [2, 32], strides = [1, 1]} : vector<2x96xf32> to vector<2x32xf32>
    %335 = arith.addf %333, %334 : vector<2x32xf32>
    %336 = arith.negf %335 : vector<2x32xf32>
    %337 = math.exp %336 : vector<2x32xf32>
    %cst_60 = arith.constant 1.000000e+00 : f32
    %338 = vector.broadcast %cst_60 : f32 to vector<2x32xf32>
    %339 = arith.addf %338, %337 : vector<2x32xf32>
    %340 = arith.divf %338, %339 : vector<2x32xf32>
    %341 = vector.extract_strided_slice %323 {offsets = [0, 64], sizes = [2, 32], strides = [1, 1]} : vector<2x96xf32> to vector<2x32xf32>
    %342 = vector.extract_strided_slice %324 {offsets = [0, 64], sizes = [2, 32], strides = [1, 1]} : vector<2x96xf32> to vector<2x32xf32>
    %343 = arith.addf %342, %23 : vector<2x32xf32>
    %344 = arith.mulf %332, %343 : vector<2x32xf32>
    %345 = arith.addf %341, %344 : vector<2x32xf32>
    %346 = math.tanh %345 : vector<2x32xf32>
    %cst_61 = arith.constant 1.000000e+00 : f32
    %347 = vector.broadcast %cst_61 : f32 to vector<2x32xf32>
    %348 = arith.subf %347, %340 : vector<2x32xf32>
    %349 = arith.mulf %348, %346 : vector<2x32xf32>
    %350 = arith.mulf %340, %292 : vector<2x32xf32>
    %351 = arith.addf %349, %350 : vector<2x32xf32>
    %352 = vector.extract_strided_slice %27 {offsets = [12, 0], sizes = [2, 96], strides = [1, 1]} : vector<16x96xf32> to vector<2x96xf32>
    %cst_62 = arith.constant dense<0.000000e+00> : vector<2x96xf32>
    %353 = tpu.matmul %321, %12, %cst_62 {dimension_numbers = #tpu.dot_dimension_numbers<[1], [0], [0], [1], [0, 0, 1, 1], [], []>} : vector<2x32xf32>, vector<32x96xf32>, vector<2x96xf32> -> vector<2x96xf32>
    %354 = vector.extract_strided_slice %352 {offsets = [0, 0], sizes = [2, 32], strides = [1, 1]} : vector<2x96xf32> to vector<2x32xf32>
    %355 = vector.extract_strided_slice %353 {offsets = [0, 0], sizes = [2, 32], strides = [1, 1]} : vector<2x96xf32> to vector<2x32xf32>
    %356 = arith.addf %354, %355 : vector<2x32xf32>
    %357 = arith.negf %356 : vector<2x32xf32>
    %358 = math.exp %357 : vector<2x32xf32>
    %cst_63 = arith.constant 1.000000e+00 : f32
    %359 = vector.broadcast %cst_63 : f32 to vector<2x32xf32>
    %360 = arith.addf %359, %358 : vector<2x32xf32>
    %361 = arith.divf %359, %360 : vector<2x32xf32>
    %362 = vector.extract_strided_slice %352 {offsets = [0, 32], sizes = [2, 32], strides = [1, 1]} : vector<2x96xf32> to vector<2x32xf32>
    %363 = vector.extract_strided_slice %353 {offsets = [0, 32], sizes = [2, 32], strides = [1, 1]} : vector<2x96xf32> to vector<2x32xf32>
    %364 = arith.addf %362, %363 : vector<2x32xf32>
    %365 = arith.negf %364 : vector<2x32xf32>
    %366 = math.exp %365 : vector<2x32xf32>
    %cst_64 = arith.constant 1.000000e+00 : f32
    %367 = vector.broadcast %cst_64 : f32 to vector<2x32xf32>
    %368 = arith.addf %367, %366 : vector<2x32xf32>
    %369 = arith.divf %367, %368 : vector<2x32xf32>
    %370 = vector.extract_strided_slice %352 {offsets = [0, 64], sizes = [2, 32], strides = [1, 1]} : vector<2x96xf32> to vector<2x32xf32>
    %371 = vector.extract_strided_slice %353 {offsets = [0, 64], sizes = [2, 32], strides = [1, 1]} : vector<2x96xf32> to vector<2x32xf32>
    %372 = arith.addf %371, %15 : vector<2x32xf32>
    %373 = arith.mulf %361, %372 : vector<2x32xf32>
    %374 = arith.addf %370, %373 : vector<2x32xf32>
    %375 = math.tanh %374 : vector<2x32xf32>
    %cst_65 = arith.constant 1.000000e+00 : f32
    %376 = vector.broadcast %cst_65 : f32 to vector<2x32xf32>
    %377 = arith.subf %376, %369 : vector<2x32xf32>
    %378 = arith.mulf %377, %375 : vector<2x32xf32>
    %379 = arith.mulf %369, %321 : vector<2x32xf32>
    %380 = arith.addf %378, %379 : vector<2x32xf32>
    %cst_66 = arith.constant dense<0.000000e+00> : vector<2x96xf32>
    %381 = tpu.matmul %321, %17, %cst_66 {dimension_numbers = #tpu.dot_dimension_numbers<[1], [0], [0], [1], [0, 0, 1, 1], [], []>} : vector<2x32xf32>, vector<32x96xf32>, vector<2x96xf32> -> vector<2x96xf32>
    %382 = arith.addf %381, %20 : vector<2x96xf32>
    %cst_67 = arith.constant dense<0.000000e+00> : vector<2x96xf32>
    %383 = tpu.matmul %351, %18, %cst_67 {dimension_numbers = #tpu.dot_dimension_numbers<[1], [0], [0], [1], [0, 0, 1, 1], [], []>} : vector<2x32xf32>, vector<32x96xf32>, vector<2x96xf32> -> vector<2x96xf32>
    %384 = vector.extract_strided_slice %382 {offsets = [0, 0], sizes = [2, 32], strides = [1, 1]} : vector<2x96xf32> to vector<2x32xf32>
    %385 = vector.extract_strided_slice %383 {offsets = [0, 0], sizes = [2, 32], strides = [1, 1]} : vector<2x96xf32> to vector<2x32xf32>
    %386 = arith.addf %384, %385 : vector<2x32xf32>
    %387 = arith.negf %386 : vector<2x32xf32>
    %388 = math.exp %387 : vector<2x32xf32>
    %cst_68 = arith.constant 1.000000e+00 : f32
    %389 = vector.broadcast %cst_68 : f32 to vector<2x32xf32>
    %390 = arith.addf %389, %388 : vector<2x32xf32>
    %391 = arith.divf %389, %390 : vector<2x32xf32>
    %392 = vector.extract_strided_slice %382 {offsets = [0, 32], sizes = [2, 32], strides = [1, 1]} : vector<2x96xf32> to vector<2x32xf32>
    %393 = vector.extract_strided_slice %383 {offsets = [0, 32], sizes = [2, 32], strides = [1, 1]} : vector<2x96xf32> to vector<2x32xf32>
    %394 = arith.addf %392, %393 : vector<2x32xf32>
    %395 = arith.negf %394 : vector<2x32xf32>
    %396 = math.exp %395 : vector<2x32xf32>
    %cst_69 = arith.constant 1.000000e+00 : f32
    %397 = vector.broadcast %cst_69 : f32 to vector<2x32xf32>
    %398 = arith.addf %397, %396 : vector<2x32xf32>
    %399 = arith.divf %397, %398 : vector<2x32xf32>
    %400 = vector.extract_strided_slice %382 {offsets = [0, 64], sizes = [2, 32], strides = [1, 1]} : vector<2x96xf32> to vector<2x32xf32>
    %401 = vector.extract_strided_slice %383 {offsets = [0, 64], sizes = [2, 32], strides = [1, 1]} : vector<2x96xf32> to vector<2x32xf32>
    %402 = arith.addf %401, %23 : vector<2x32xf32>
    %403 = arith.mulf %391, %402 : vector<2x32xf32>
    %404 = arith.addf %400, %403 : vector<2x32xf32>
    %405 = math.tanh %404 : vector<2x32xf32>
    %cst_70 = arith.constant 1.000000e+00 : f32
    %406 = vector.broadcast %cst_70 : f32 to vector<2x32xf32>
    %407 = arith.subf %406, %399 : vector<2x32xf32>
    %408 = arith.mulf %407, %405 : vector<2x32xf32>
    %409 = arith.mulf %399, %351 : vector<2x32xf32>
    %410 = arith.addf %408, %409 : vector<2x32xf32>
    %411 = vector.extract_strided_slice %27 {offsets = [14, 0], sizes = [2, 96], strides = [1, 1]} : vector<16x96xf32> to vector<2x96xf32>
    %cst_71 = arith.constant dense<0.000000e+00> : vector<2x96xf32>
    %412 = tpu.matmul %380, %12, %cst_71 {dimension_numbers = #tpu.dot_dimension_numbers<[1], [0], [0], [1], [0, 0, 1, 1], [], []>} : vector<2x32xf32>, vector<32x96xf32>, vector<2x96xf32> -> vector<2x96xf32>
    %413 = vector.extract_strided_slice %411 {offsets = [0, 0], sizes = [2, 32], strides = [1, 1]} : vector<2x96xf32> to vector<2x32xf32>
    %414 = vector.extract_strided_slice %412 {offsets = [0, 0], sizes = [2, 32], strides = [1, 1]} : vector<2x96xf32> to vector<2x32xf32>
    %415 = arith.addf %413, %414 : vector<2x32xf32>
    %416 = arith.negf %415 : vector<2x32xf32>
    %417 = math.exp %416 : vector<2x32xf32>
    %cst_72 = arith.constant 1.000000e+00 : f32
    %418 = vector.broadcast %cst_72 : f32 to vector<2x32xf32>
    %419 = arith.addf %418, %417 : vector<2x32xf32>
    %420 = arith.divf %418, %419 : vector<2x32xf32>
    %421 = vector.extract_strided_slice %411 {offsets = [0, 32], sizes = [2, 32], strides = [1, 1]} : vector<2x96xf32> to vector<2x32xf32>
    %422 = vector.extract_strided_slice %412 {offsets = [0, 32], sizes = [2, 32], strides = [1, 1]} : vector<2x96xf32> to vector<2x32xf32>
    %423 = arith.addf %421, %422 : vector<2x32xf32>
    %424 = arith.negf %423 : vector<2x32xf32>
    %425 = math.exp %424 : vector<2x32xf32>
    %cst_73 = arith.constant 1.000000e+00 : f32
    %426 = vector.broadcast %cst_73 : f32 to vector<2x32xf32>
    %427 = arith.addf %426, %425 : vector<2x32xf32>
    %428 = arith.divf %426, %427 : vector<2x32xf32>
    %429 = vector.extract_strided_slice %411 {offsets = [0, 64], sizes = [2, 32], strides = [1, 1]} : vector<2x96xf32> to vector<2x32xf32>
    %430 = vector.extract_strided_slice %412 {offsets = [0, 64], sizes = [2, 32], strides = [1, 1]} : vector<2x96xf32> to vector<2x32xf32>
    %431 = arith.addf %430, %15 : vector<2x32xf32>
    %432 = arith.mulf %420, %431 : vector<2x32xf32>
    %433 = arith.addf %429, %432 : vector<2x32xf32>
    %434 = math.tanh %433 : vector<2x32xf32>
    %cst_74 = arith.constant 1.000000e+00 : f32
    %435 = vector.broadcast %cst_74 : f32 to vector<2x32xf32>
    %436 = arith.subf %435, %428 : vector<2x32xf32>
    %437 = arith.mulf %436, %434 : vector<2x32xf32>
    %438 = arith.mulf %428, %380 : vector<2x32xf32>
    %439 = arith.addf %437, %438 : vector<2x32xf32>
    %cst_75 = arith.constant dense<0.000000e+00> : vector<2x96xf32>
    %440 = tpu.matmul %380, %17, %cst_75 {dimension_numbers = #tpu.dot_dimension_numbers<[1], [0], [0], [1], [0, 0, 1, 1], [], []>} : vector<2x32xf32>, vector<32x96xf32>, vector<2x96xf32> -> vector<2x96xf32>
    %441 = arith.addf %440, %20 : vector<2x96xf32>
    %cst_76 = arith.constant dense<0.000000e+00> : vector<2x96xf32>
    %442 = tpu.matmul %410, %18, %cst_76 {dimension_numbers = #tpu.dot_dimension_numbers<[1], [0], [0], [1], [0, 0, 1, 1], [], []>} : vector<2x32xf32>, vector<32x96xf32>, vector<2x96xf32> -> vector<2x96xf32>
    %443 = vector.extract_strided_slice %441 {offsets = [0, 0], sizes = [2, 32], strides = [1, 1]} : vector<2x96xf32> to vector<2x32xf32>
    %444 = vector.extract_strided_slice %442 {offsets = [0, 0], sizes = [2, 32], strides = [1, 1]} : vector<2x96xf32> to vector<2x32xf32>
    %445 = arith.addf %443, %444 : vector<2x32xf32>
    %446 = arith.negf %445 : vector<2x32xf32>
    %447 = math.exp %446 : vector<2x32xf32>
    %cst_77 = arith.constant 1.000000e+00 : f32
    %448 = vector.broadcast %cst_77 : f32 to vector<2x32xf32>
    %449 = arith.addf %448, %447 : vector<2x32xf32>
    %450 = arith.divf %448, %449 : vector<2x32xf32>
    %451 = vector.extract_strided_slice %441 {offsets = [0, 32], sizes = [2, 32], strides = [1, 1]} : vector<2x96xf32> to vector<2x32xf32>
    %452 = vector.extract_strided_slice %442 {offsets = [0, 32], sizes = [2, 32], strides = [1, 1]} : vector<2x96xf32> to vector<2x32xf32>
    %453 = arith.addf %451, %452 : vector<2x32xf32>
    %454 = arith.negf %453 : vector<2x32xf32>
    %455 = math.exp %454 : vector<2x32xf32>
    %cst_78 = arith.constant 1.000000e+00 : f32
    %456 = vector.broadcast %cst_78 : f32 to vector<2x32xf32>
    %457 = arith.addf %456, %455 : vector<2x32xf32>
    %458 = arith.divf %456, %457 : vector<2x32xf32>
    %459 = vector.extract_strided_slice %441 {offsets = [0, 64], sizes = [2, 32], strides = [1, 1]} : vector<2x96xf32> to vector<2x32xf32>
    %460 = vector.extract_strided_slice %442 {offsets = [0, 64], sizes = [2, 32], strides = [1, 1]} : vector<2x96xf32> to vector<2x32xf32>
    %461 = arith.addf %460, %23 : vector<2x32xf32>
    %462 = arith.mulf %450, %461 : vector<2x32xf32>
    %463 = arith.addf %459, %462 : vector<2x32xf32>
    %464 = math.tanh %463 : vector<2x32xf32>
    %cst_79 = arith.constant 1.000000e+00 : f32
    %465 = vector.broadcast %cst_79 : f32 to vector<2x32xf32>
    %466 = arith.subf %465, %458 : vector<2x32xf32>
    %467 = arith.mulf %466, %464 : vector<2x32xf32>
    %468 = arith.mulf %458, %410 : vector<2x32xf32>
    %469 = arith.addf %467, %468 : vector<2x32xf32>
    %cst_80 = arith.constant dense<0.000000e+00> : vector<2x96xf32>
    %470 = tpu.matmul %439, %17, %cst_80 {dimension_numbers = #tpu.dot_dimension_numbers<[1], [0], [0], [1], [0, 0, 1, 1], [], []>} : vector<2x32xf32>, vector<32x96xf32>, vector<2x96xf32> -> vector<2x96xf32>
    %471 = arith.addf %470, %20 : vector<2x96xf32>
    %cst_81 = arith.constant dense<0.000000e+00> : vector<2x96xf32>
    %472 = tpu.matmul %469, %18, %cst_81 {dimension_numbers = #tpu.dot_dimension_numbers<[1], [0], [0], [1], [0, 0, 1, 1], [], []>} : vector<2x32xf32>, vector<32x96xf32>, vector<2x96xf32> -> vector<2x96xf32>
    %473 = vector.extract_strided_slice %471 {offsets = [0, 0], sizes = [2, 32], strides = [1, 1]} : vector<2x96xf32> to vector<2x32xf32>
    %474 = vector.extract_strided_slice %472 {offsets = [0, 0], sizes = [2, 32], strides = [1, 1]} : vector<2x96xf32> to vector<2x32xf32>
    %475 = arith.addf %473, %474 : vector<2x32xf32>
    %476 = arith.negf %475 : vector<2x32xf32>
    %477 = math.exp %476 : vector<2x32xf32>
    %cst_82 = arith.constant 1.000000e+00 : f32
    %478 = vector.broadcast %cst_82 : f32 to vector<2x32xf32>
    %479 = arith.addf %478, %477 : vector<2x32xf32>
    %480 = arith.divf %478, %479 : vector<2x32xf32>
    %481 = vector.extract_strided_slice %471 {offsets = [0, 32], sizes = [2, 32], strides = [1, 1]} : vector<2x96xf32> to vector<2x32xf32>
    %482 = vector.extract_strided_slice %472 {offsets = [0, 32], sizes = [2, 32], strides = [1, 1]} : vector<2x96xf32> to vector<2x32xf32>
    %483 = arith.addf %481, %482 : vector<2x32xf32>
    %484 = arith.negf %483 : vector<2x32xf32>
    %485 = math.exp %484 : vector<2x32xf32>
    %cst_83 = arith.constant 1.000000e+00 : f32
    %486 = vector.broadcast %cst_83 : f32 to vector<2x32xf32>
    %487 = arith.addf %486, %485 : vector<2x32xf32>
    %488 = arith.divf %486, %487 : vector<2x32xf32>
    %489 = vector.extract_strided_slice %471 {offsets = [0, 64], sizes = [2, 32], strides = [1, 1]} : vector<2x96xf32> to vector<2x32xf32>
    %490 = vector.extract_strided_slice %472 {offsets = [0, 64], sizes = [2, 32], strides = [1, 1]} : vector<2x96xf32> to vector<2x32xf32>
    %491 = arith.addf %490, %23 : vector<2x32xf32>
    %492 = arith.mulf %480, %491 : vector<2x32xf32>
    %493 = arith.addf %489, %492 : vector<2x32xf32>
    %494 = math.tanh %493 : vector<2x32xf32>
    %cst_84 = arith.constant 1.000000e+00 : f32
    %495 = vector.broadcast %cst_84 : f32 to vector<2x32xf32>
    %496 = arith.subf %495, %488 : vector<2x32xf32>
    %497 = arith.mulf %496, %494 : vector<2x32xf32>
    %498 = arith.mulf %488, %469 : vector<2x32xf32>
    %499 = arith.addf %497, %498 : vector<2x32xf32>
    %500 = tpu.concatenate %439, %499 in 1 : vector<2x32xf32>, vector<2x32xf32> -> vector<2x64xf32>
    %c256 = arith.constant 256 : index
    %c0_85 = arith.constant 0 : index
    %501 = vector.load %arg3[%c256, %c0_85] : memref<368x128xf32, #tpu.memory_space<vmem>>, vector<64x16xf32>
    %cst_86 = arith.constant dense<0.000000e+00> : vector<2x16xf32>
    %502 = tpu.matmul %500, %501, %cst_86 {dimension_numbers = #tpu.dot_dimension_numbers<[1], [0], [0], [1], [0, 0, 1, 1], [], []>} : vector<2x64xf32>, vector<64x16xf32>, vector<2x16xf32> -> vector<2x16xf32>
    %503 = vector.extract_strided_slice %0 {offsets = [8, 0], sizes = [1, 16], strides = [1, 1]} : vector<16x128xf32> to vector<1x16xf32>
    %504 = vector.broadcast %503 : vector<1x16xf32> to vector<2x16xf32>
    %505 = arith.addf %502, %504 : vector<2x16xf32>
    %506 = vector.extract_strided_slice %505 {offsets = [0, 0], sizes = [2, 8], strides = [1, 1]} : vector<2x16xf32> to vector<2x8xf32>
    %507 = vector.extract_strided_slice %505 {offsets = [0, 8], sizes = [2, 8], strides = [1, 1]} : vector<2x16xf32> to vector<2x8xf32>
    %c0_87 = arith.constant 0 : index
    %c0_88 = arith.constant 0 : index
    %508 = vector.load %arg2[%c0_87, %c0_88] : memref<2x8xf32, #tpu.memory_space<vmem>>, vector<2x8xf32>
    %cst_89 = arith.constant 5.000000e-01 : f32
    %509 = vector.broadcast %cst_89 : f32 to vector<2x8xf32>
    %510 = arith.mulf %509, %507 : vector<2x8xf32>
    %511 = math.exp %510 : vector<2x8xf32>
    %512 = arith.mulf %508, %511 : vector<2x8xf32>
    %513 = arith.addf %506, %512 : vector<2x8xf32>
    %c0_90 = arith.constant 0 : index
    %c0_91 = arith.constant 0 : index
    %514 = vector.load %arg1[%c0_90, %c0_91] : memref<2x4xf32, #tpu.memory_space<vmem>>, vector<2x4xf32>
    %515 = tpu.concatenate %513, %514 in 1 : vector<2x8xf32>, vector<2x4xf32> -> vector<2x12xf32>
    %c320 = arith.constant 320 : index
    %c0_92 = arith.constant 0 : index
    %516 = vector.load %arg3[%c320, %c0_92] : memref<368x128xf32, #tpu.memory_space<vmem>>, vector<12x64xf32>
    %cst_93 = arith.constant dense<0.000000e+00> : vector<2x64xf32>
    %517 = tpu.matmul %515, %516, %cst_93 {dimension_numbers = #tpu.dot_dimension_numbers<[1], [0], [0], [1], [0, 0, 1, 1], [], []>} : vector<2x12xf32>, vector<12x64xf32>, vector<2x64xf32> -> vector<2x64xf32>
    %518 = vector.extract_strided_slice %0 {offsets = [9, 0], sizes = [1, 64], strides = [1, 1]} : vector<16x128xf32> to vector<1x64xf32>
    %519 = vector.broadcast %518 : vector<1x64xf32> to vector<2x64xf32>
    %520 = arith.addf %517, %519 : vector<2x64xf32>
    %521 = vector.extract_strided_slice %0 {offsets = [4, 0], sizes = [1, 96], strides = [1, 1]} : vector<16x128xf32> to vector<1x96xf32>
    %c144 = arith.constant 144 : index
    %c0_94 = arith.constant 0 : index
    %522 = vector.load %arg3[%c144, %c0_94] : memref<368x128xf32, #tpu.memory_space<vmem>>, vector<16x96xf32>
    %c160 = arith.constant 160 : index
    %c0_95 = arith.constant 0 : index
    %523 = vector.load %arg3[%c160, %c0_95] : memref<368x128xf32, #tpu.memory_space<vmem>>, vector<32x96xf32>
    %524 = vector.extract_strided_slice %0 {offsets = [5, 0], sizes = [1, 32], strides = [1, 1]} : vector<16x128xf32> to vector<1x32xf32>
    %525 = vector.shape_cast %524 : vector<1x32xf32> to vector<1x32xf32>
    %526 = vector.broadcast %525 : vector<1x32xf32> to vector<2x32xf32>
    %527 = vector.extract_strided_slice %0 {offsets = [6, 0], sizes = [1, 96], strides = [1, 1]} : vector<16x128xf32> to vector<1x96xf32>
    %c192 = arith.constant 192 : index
    %c0_96 = arith.constant 0 : index
    %528 = vector.load %arg3[%c192, %c0_96] : memref<368x128xf32, #tpu.memory_space<vmem>>, vector<32x96xf32>
    %c224 = arith.constant 224 : index
    %c0_97 = arith.constant 0 : index
    %529 = vector.load %arg3[%c224, %c0_97] : memref<368x128xf32, #tpu.memory_space<vmem>>, vector<32x96xf32>
    %530 = vector.shape_cast %527 : vector<1x96xf32> to vector<1x96xf32>
    %531 = vector.broadcast %530 : vector<1x96xf32> to vector<2x96xf32>
    %532 = vector.extract_strided_slice %0 {offsets = [7, 0], sizes = [1, 32], strides = [1, 1]} : vector<16x128xf32> to vector<1x32xf32>
    %533 = vector.shape_cast %532 : vector<1x32xf32> to vector<1x32xf32>
    %534 = vector.broadcast %533 : vector<1x32xf32> to vector<2x32xf32>
    %535 = vector.extract_strided_slice %520 {offsets = [0, 0], sizes = [2, 32], strides = [1, 1]} : vector<2x64xf32> to vector<2x32xf32>
    %536 = vector.extract_strided_slice %520 {offsets = [0, 32], sizes = [2, 32], strides = [1, 1]} : vector<2x64xf32> to vector<2x32xf32>
    %cst_98 = arith.constant dense<0.000000e+00> : vector<16x96xf32>
    %537 = tpu.matmul %9, %522, %cst_98 {dimension_numbers = #tpu.dot_dimension_numbers<[1], [0], [0], [1], [0, 0, 1, 1], [], []>} : vector<16x16xf32>, vector<16x96xf32>, vector<16x96xf32> -> vector<16x96xf32>
    %538 = vector.broadcast %521 : vector<1x96xf32> to vector<16x96xf32>
    %539 = arith.addf %537, %538 : vector<16x96xf32>
    %540 = vector.extract_strided_slice %539 {offsets = [0, 0], sizes = [2, 96], strides = [1, 1]} : vector<16x96xf32> to vector<2x96xf32>
    %cst_99 = arith.constant dense<0.000000e+00> : vector<2x96xf32>
    %541 = tpu.matmul %535, %523, %cst_99 {dimension_numbers = #tpu.dot_dimension_numbers<[1], [0], [0], [1], [0, 0, 1, 1], [], []>} : vector<2x32xf32>, vector<32x96xf32>, vector<2x96xf32> -> vector<2x96xf32>
    %542 = vector.extract_strided_slice %540 {offsets = [0, 0], sizes = [2, 32], strides = [1, 1]} : vector<2x96xf32> to vector<2x32xf32>
    %543 = vector.extract_strided_slice %541 {offsets = [0, 0], sizes = [2, 32], strides = [1, 1]} : vector<2x96xf32> to vector<2x32xf32>
    %544 = arith.addf %542, %543 : vector<2x32xf32>
    %545 = arith.negf %544 : vector<2x32xf32>
    %546 = math.exp %545 : vector<2x32xf32>
    %cst_100 = arith.constant 1.000000e+00 : f32
    %547 = vector.broadcast %cst_100 : f32 to vector<2x32xf32>
    %548 = arith.addf %547, %546 : vector<2x32xf32>
    %549 = arith.divf %547, %548 : vector<2x32xf32>
    %550 = vector.extract_strided_slice %540 {offsets = [0, 32], sizes = [2, 32], strides = [1, 1]} : vector<2x96xf32> to vector<2x32xf32>
    %551 = vector.extract_strided_slice %541 {offsets = [0, 32], sizes = [2, 32], strides = [1, 1]} : vector<2x96xf32> to vector<2x32xf32>
    %552 = arith.addf %550, %551 : vector<2x32xf32>
    %553 = arith.negf %552 : vector<2x32xf32>
    %554 = math.exp %553 : vector<2x32xf32>
    %cst_101 = arith.constant 1.000000e+00 : f32
    %555 = vector.broadcast %cst_101 : f32 to vector<2x32xf32>
    %556 = arith.addf %555, %554 : vector<2x32xf32>
    %557 = arith.divf %555, %556 : vector<2x32xf32>
    %558 = vector.extract_strided_slice %540 {offsets = [0, 64], sizes = [2, 32], strides = [1, 1]} : vector<2x96xf32> to vector<2x32xf32>
    %559 = vector.extract_strided_slice %541 {offsets = [0, 64], sizes = [2, 32], strides = [1, 1]} : vector<2x96xf32> to vector<2x32xf32>
    %560 = arith.addf %559, %526 : vector<2x32xf32>
    %561 = arith.mulf %549, %560 : vector<2x32xf32>
    %562 = arith.addf %558, %561 : vector<2x32xf32>
    %563 = math.tanh %562 : vector<2x32xf32>
    %cst_102 = arith.constant 1.000000e+00 : f32
    %564 = vector.broadcast %cst_102 : f32 to vector<2x32xf32>
    %565 = arith.subf %564, %557 : vector<2x32xf32>
    %566 = arith.mulf %565, %563 : vector<2x32xf32>
    %567 = arith.mulf %557, %535 : vector<2x32xf32>
    %568 = arith.addf %566, %567 : vector<2x32xf32>
    %569 = vector.extract_strided_slice %539 {offsets = [2, 0], sizes = [2, 96], strides = [1, 1]} : vector<16x96xf32> to vector<2x96xf32>
    %cst_103 = arith.constant dense<0.000000e+00> : vector<2x96xf32>
    %570 = tpu.matmul %568, %523, %cst_103 {dimension_numbers = #tpu.dot_dimension_numbers<[1], [0], [0], [1], [0, 0, 1, 1], [], []>} : vector<2x32xf32>, vector<32x96xf32>, vector<2x96xf32> -> vector<2x96xf32>
    %571 = vector.extract_strided_slice %569 {offsets = [0, 0], sizes = [2, 32], strides = [1, 1]} : vector<2x96xf32> to vector<2x32xf32>
    %572 = vector.extract_strided_slice %570 {offsets = [0, 0], sizes = [2, 32], strides = [1, 1]} : vector<2x96xf32> to vector<2x32xf32>
    %573 = arith.addf %571, %572 : vector<2x32xf32>
    %574 = arith.negf %573 : vector<2x32xf32>
    %575 = math.exp %574 : vector<2x32xf32>
    %cst_104 = arith.constant 1.000000e+00 : f32
    %576 = vector.broadcast %cst_104 : f32 to vector<2x32xf32>
    %577 = arith.addf %576, %575 : vector<2x32xf32>
    %578 = arith.divf %576, %577 : vector<2x32xf32>
    %579 = vector.extract_strided_slice %569 {offsets = [0, 32], sizes = [2, 32], strides = [1, 1]} : vector<2x96xf32> to vector<2x32xf32>
    %580 = vector.extract_strided_slice %570 {offsets = [0, 32], sizes = [2, 32], strides = [1, 1]} : vector<2x96xf32> to vector<2x32xf32>
    %581 = arith.addf %579, %580 : vector<2x32xf32>
    %582 = arith.negf %581 : vector<2x32xf32>
    %583 = math.exp %582 : vector<2x32xf32>
    %cst_105 = arith.constant 1.000000e+00 : f32
    %584 = vector.broadcast %cst_105 : f32 to vector<2x32xf32>
    %585 = arith.addf %584, %583 : vector<2x32xf32>
    %586 = arith.divf %584, %585 : vector<2x32xf32>
    %587 = vector.extract_strided_slice %569 {offsets = [0, 64], sizes = [2, 32], strides = [1, 1]} : vector<2x96xf32> to vector<2x32xf32>
    %588 = vector.extract_strided_slice %570 {offsets = [0, 64], sizes = [2, 32], strides = [1, 1]} : vector<2x96xf32> to vector<2x32xf32>
    %589 = arith.addf %588, %526 : vector<2x32xf32>
    %590 = arith.mulf %578, %589 : vector<2x32xf32>
    %591 = arith.addf %587, %590 : vector<2x32xf32>
    %592 = math.tanh %591 : vector<2x32xf32>
    %cst_106 = arith.constant 1.000000e+00 : f32
    %593 = vector.broadcast %cst_106 : f32 to vector<2x32xf32>
    %594 = arith.subf %593, %586 : vector<2x32xf32>
    %595 = arith.mulf %594, %592 : vector<2x32xf32>
    %596 = arith.mulf %586, %568 : vector<2x32xf32>
    %597 = arith.addf %595, %596 : vector<2x32xf32>
    %cst_107 = arith.constant dense<0.000000e+00> : vector<2x96xf32>
    %598 = tpu.matmul %568, %528, %cst_107 {dimension_numbers = #tpu.dot_dimension_numbers<[1], [0], [0], [1], [0, 0, 1, 1], [], []>} : vector<2x32xf32>, vector<32x96xf32>, vector<2x96xf32> -> vector<2x96xf32>
    %599 = arith.addf %598, %531 : vector<2x96xf32>
    %cst_108 = arith.constant dense<0.000000e+00> : vector<2x96xf32>
    %600 = tpu.matmul %536, %529, %cst_108 {dimension_numbers = #tpu.dot_dimension_numbers<[1], [0], [0], [1], [0, 0, 1, 1], [], []>} : vector<2x32xf32>, vector<32x96xf32>, vector<2x96xf32> -> vector<2x96xf32>
    %601 = vector.extract_strided_slice %599 {offsets = [0, 0], sizes = [2, 32], strides = [1, 1]} : vector<2x96xf32> to vector<2x32xf32>
    %602 = vector.extract_strided_slice %600 {offsets = [0, 0], sizes = [2, 32], strides = [1, 1]} : vector<2x96xf32> to vector<2x32xf32>
    %603 = arith.addf %601, %602 : vector<2x32xf32>
    %604 = arith.negf %603 : vector<2x32xf32>
    %605 = math.exp %604 : vector<2x32xf32>
    %cst_109 = arith.constant 1.000000e+00 : f32
    %606 = vector.broadcast %cst_109 : f32 to vector<2x32xf32>
    %607 = arith.addf %606, %605 : vector<2x32xf32>
    %608 = arith.divf %606, %607 : vector<2x32xf32>
    %609 = vector.extract_strided_slice %599 {offsets = [0, 32], sizes = [2, 32], strides = [1, 1]} : vector<2x96xf32> to vector<2x32xf32>
    %610 = vector.extract_strided_slice %600 {offsets = [0, 32], sizes = [2, 32], strides = [1, 1]} : vector<2x96xf32> to vector<2x32xf32>
    %611 = arith.addf %609, %610 : vector<2x32xf32>
    %612 = arith.negf %611 : vector<2x32xf32>
    %613 = math.exp %612 : vector<2x32xf32>
    %cst_110 = arith.constant 1.000000e+00 : f32
    %614 = vector.broadcast %cst_110 : f32 to vector<2x32xf32>
    %615 = arith.addf %614, %613 : vector<2x32xf32>
    %616 = arith.divf %614, %615 : vector<2x32xf32>
    %617 = vector.extract_strided_slice %599 {offsets = [0, 64], sizes = [2, 32], strides = [1, 1]} : vector<2x96xf32> to vector<2x32xf32>
    %618 = vector.extract_strided_slice %600 {offsets = [0, 64], sizes = [2, 32], strides = [1, 1]} : vector<2x96xf32> to vector<2x32xf32>
    %619 = arith.addf %618, %534 : vector<2x32xf32>
    %620 = arith.mulf %608, %619 : vector<2x32xf32>
    %621 = arith.addf %617, %620 : vector<2x32xf32>
    %622 = math.tanh %621 : vector<2x32xf32>
    %cst_111 = arith.constant 1.000000e+00 : f32
    %623 = vector.broadcast %cst_111 : f32 to vector<2x32xf32>
    %624 = arith.subf %623, %616 : vector<2x32xf32>
    %625 = arith.mulf %624, %622 : vector<2x32xf32>
    %626 = arith.mulf %616, %536 : vector<2x32xf32>
    %627 = arith.addf %625, %626 : vector<2x32xf32>
    %628 = vector.extract_strided_slice %539 {offsets = [4, 0], sizes = [2, 96], strides = [1, 1]} : vector<16x96xf32> to vector<2x96xf32>
    %cst_112 = arith.constant dense<0.000000e+00> : vector<2x96xf32>
    %629 = tpu.matmul %597, %523, %cst_112 {dimension_numbers = #tpu.dot_dimension_numbers<[1], [0], [0], [1], [0, 0, 1, 1], [], []>} : vector<2x32xf32>, vector<32x96xf32>, vector<2x96xf32> -> vector<2x96xf32>
    %630 = vector.extract_strided_slice %628 {offsets = [0, 0], sizes = [2, 32], strides = [1, 1]} : vector<2x96xf32> to vector<2x32xf32>
    %631 = vector.extract_strided_slice %629 {offsets = [0, 0], sizes = [2, 32], strides = [1, 1]} : vector<2x96xf32> to vector<2x32xf32>
    %632 = arith.addf %630, %631 : vector<2x32xf32>
    %633 = arith.negf %632 : vector<2x32xf32>
    %634 = math.exp %633 : vector<2x32xf32>
    %cst_113 = arith.constant 1.000000e+00 : f32
    %635 = vector.broadcast %cst_113 : f32 to vector<2x32xf32>
    %636 = arith.addf %635, %634 : vector<2x32xf32>
    %637 = arith.divf %635, %636 : vector<2x32xf32>
    %638 = vector.extract_strided_slice %628 {offsets = [0, 32], sizes = [2, 32], strides = [1, 1]} : vector<2x96xf32> to vector<2x32xf32>
    %639 = vector.extract_strided_slice %629 {offsets = [0, 32], sizes = [2, 32], strides = [1, 1]} : vector<2x96xf32> to vector<2x32xf32>
    %640 = arith.addf %638, %639 : vector<2x32xf32>
    %641 = arith.negf %640 : vector<2x32xf32>
    %642 = math.exp %641 : vector<2x32xf32>
    %cst_114 = arith.constant 1.000000e+00 : f32
    %643 = vector.broadcast %cst_114 : f32 to vector<2x32xf32>
    %644 = arith.addf %643, %642 : vector<2x32xf32>
    %645 = arith.divf %643, %644 : vector<2x32xf32>
    %646 = vector.extract_strided_slice %628 {offsets = [0, 64], sizes = [2, 32], strides = [1, 1]} : vector<2x96xf32> to vector<2x32xf32>
    %647 = vector.extract_strided_slice %629 {offsets = [0, 64], sizes = [2, 32], strides = [1, 1]} : vector<2x96xf32> to vector<2x32xf32>
    %648 = arith.addf %647, %526 : vector<2x32xf32>
    %649 = arith.mulf %637, %648 : vector<2x32xf32>
    %650 = arith.addf %646, %649 : vector<2x32xf32>
    %651 = math.tanh %650 : vector<2x32xf32>
    %cst_115 = arith.constant 1.000000e+00 : f32
    %652 = vector.broadcast %cst_115 : f32 to vector<2x32xf32>
    %653 = arith.subf %652, %645 : vector<2x32xf32>
    %654 = arith.mulf %653, %651 : vector<2x32xf32>
    %655 = arith.mulf %645, %597 : vector<2x32xf32>
    %656 = arith.addf %654, %655 : vector<2x32xf32>
    %cst_116 = arith.constant dense<0.000000e+00> : vector<2x96xf32>
    %657 = tpu.matmul %597, %528, %cst_116 {dimension_numbers = #tpu.dot_dimension_numbers<[1], [0], [0], [1], [0, 0, 1, 1], [], []>} : vector<2x32xf32>, vector<32x96xf32>, vector<2x96xf32> -> vector<2x96xf32>
    %658 = arith.addf %657, %531 : vector<2x96xf32>
    %cst_117 = arith.constant dense<0.000000e+00> : vector<2x96xf32>
    %659 = tpu.matmul %627, %529, %cst_117 {dimension_numbers = #tpu.dot_dimension_numbers<[1], [0], [0], [1], [0, 0, 1, 1], [], []>} : vector<2x32xf32>, vector<32x96xf32>, vector<2x96xf32> -> vector<2x96xf32>
    %660 = vector.extract_strided_slice %658 {offsets = [0, 0], sizes = [2, 32], strides = [1, 1]} : vector<2x96xf32> to vector<2x32xf32>
    %661 = vector.extract_strided_slice %659 {offsets = [0, 0], sizes = [2, 32], strides = [1, 1]} : vector<2x96xf32> to vector<2x32xf32>
    %662 = arith.addf %660, %661 : vector<2x32xf32>
    %663 = arith.negf %662 : vector<2x32xf32>
    %664 = math.exp %663 : vector<2x32xf32>
    %cst_118 = arith.constant 1.000000e+00 : f32
    %665 = vector.broadcast %cst_118 : f32 to vector<2x32xf32>
    %666 = arith.addf %665, %664 : vector<2x32xf32>
    %667 = arith.divf %665, %666 : vector<2x32xf32>
    %668 = vector.extract_strided_slice %658 {offsets = [0, 32], sizes = [2, 32], strides = [1, 1]} : vector<2x96xf32> to vector<2x32xf32>
    %669 = vector.extract_strided_slice %659 {offsets = [0, 32], sizes = [2, 32], strides = [1, 1]} : vector<2x96xf32> to vector<2x32xf32>
    %670 = arith.addf %668, %669 : vector<2x32xf32>
    %671 = arith.negf %670 : vector<2x32xf32>
    %672 = math.exp %671 : vector<2x32xf32>
    %cst_119 = arith.constant 1.000000e+00 : f32
    %673 = vector.broadcast %cst_119 : f32 to vector<2x32xf32>
    %674 = arith.addf %673, %672 : vector<2x32xf32>
    %675 = arith.divf %673, %674 : vector<2x32xf32>
    %676 = vector.extract_strided_slice %658 {offsets = [0, 64], sizes = [2, 32], strides = [1, 1]} : vector<2x96xf32> to vector<2x32xf32>
    %677 = vector.extract_strided_slice %659 {offsets = [0, 64], sizes = [2, 32], strides = [1, 1]} : vector<2x96xf32> to vector<2x32xf32>
    %678 = arith.addf %677, %534 : vector<2x32xf32>
    %679 = arith.mulf %667, %678 : vector<2x32xf32>
    %680 = arith.addf %676, %679 : vector<2x32xf32>
    %681 = math.tanh %680 : vector<2x32xf32>
    %cst_120 = arith.constant 1.000000e+00 : f32
    %682 = vector.broadcast %cst_120 : f32 to vector<2x32xf32>
    %683 = arith.subf %682, %675 : vector<2x32xf32>
    %684 = arith.mulf %683, %681 : vector<2x32xf32>
    %685 = arith.mulf %675, %627 : vector<2x32xf32>
    %686 = arith.addf %684, %685 : vector<2x32xf32>
    %687 = vector.extract_strided_slice %539 {offsets = [6, 0], sizes = [2, 96], strides = [1, 1]} : vector<16x96xf32> to vector<2x96xf32>
    %cst_121 = arith.constant dense<0.000000e+00> : vector<2x96xf32>
    %688 = tpu.matmul %656, %523, %cst_121 {dimension_numbers = #tpu.dot_dimension_numbers<[1], [0], [0], [1], [0, 0, 1, 1], [], []>} : vector<2x32xf32>, vector<32x96xf32>, vector<2x96xf32> -> vector<2x96xf32>
    %689 = vector.extract_strided_slice %687 {offsets = [0, 0], sizes = [2, 32], strides = [1, 1]} : vector<2x96xf32> to vector<2x32xf32>
    %690 = vector.extract_strided_slice %688 {offsets = [0, 0], sizes = [2, 32], strides = [1, 1]} : vector<2x96xf32> to vector<2x32xf32>
    %691 = arith.addf %689, %690 : vector<2x32xf32>
    %692 = arith.negf %691 : vector<2x32xf32>
    %693 = math.exp %692 : vector<2x32xf32>
    %cst_122 = arith.constant 1.000000e+00 : f32
    %694 = vector.broadcast %cst_122 : f32 to vector<2x32xf32>
    %695 = arith.addf %694, %693 : vector<2x32xf32>
    %696 = arith.divf %694, %695 : vector<2x32xf32>
    %697 = vector.extract_strided_slice %687 {offsets = [0, 32], sizes = [2, 32], strides = [1, 1]} : vector<2x96xf32> to vector<2x32xf32>
    %698 = vector.extract_strided_slice %688 {offsets = [0, 32], sizes = [2, 32], strides = [1, 1]} : vector<2x96xf32> to vector<2x32xf32>
    %699 = arith.addf %697, %698 : vector<2x32xf32>
    %700 = arith.negf %699 : vector<2x32xf32>
    %701 = math.exp %700 : vector<2x32xf32>
    %cst_123 = arith.constant 1.000000e+00 : f32
    %702 = vector.broadcast %cst_123 : f32 to vector<2x32xf32>
    %703 = arith.addf %702, %701 : vector<2x32xf32>
    %704 = arith.divf %702, %703 : vector<2x32xf32>
    %705 = vector.extract_strided_slice %687 {offsets = [0, 64], sizes = [2, 32], strides = [1, 1]} : vector<2x96xf32> to vector<2x32xf32>
    %706 = vector.extract_strided_slice %688 {offsets = [0, 64], sizes = [2, 32], strides = [1, 1]} : vector<2x96xf32> to vector<2x32xf32>
    %707 = arith.addf %706, %526 : vector<2x32xf32>
    %708 = arith.mulf %696, %707 : vector<2x32xf32>
    %709 = arith.addf %705, %708 : vector<2x32xf32>
    %710 = math.tanh %709 : vector<2x32xf32>
    %cst_124 = arith.constant 1.000000e+00 : f32
    %711 = vector.broadcast %cst_124 : f32 to vector<2x32xf32>
    %712 = arith.subf %711, %704 : vector<2x32xf32>
    %713 = arith.mulf %712, %710 : vector<2x32xf32>
    %714 = arith.mulf %704, %656 : vector<2x32xf32>
    %715 = arith.addf %713, %714 : vector<2x32xf32>
    %cst_125 = arith.constant dense<0.000000e+00> : vector<2x96xf32>
    %716 = tpu.matmul %656, %528, %cst_125 {dimension_numbers = #tpu.dot_dimension_numbers<[1], [0], [0], [1], [0, 0, 1, 1], [], []>} : vector<2x32xf32>, vector<32x96xf32>, vector<2x96xf32> -> vector<2x96xf32>
    %717 = arith.addf %716, %531 : vector<2x96xf32>
    %cst_126 = arith.constant dense<0.000000e+00> : vector<2x96xf32>
    %718 = tpu.matmul %686, %529, %cst_126 {dimension_numbers = #tpu.dot_dimension_numbers<[1], [0], [0], [1], [0, 0, 1, 1], [], []>} : vector<2x32xf32>, vector<32x96xf32>, vector<2x96xf32> -> vector<2x96xf32>
    %719 = vector.extract_strided_slice %717 {offsets = [0, 0], sizes = [2, 32], strides = [1, 1]} : vector<2x96xf32> to vector<2x32xf32>
    %720 = vector.extract_strided_slice %718 {offsets = [0, 0], sizes = [2, 32], strides = [1, 1]} : vector<2x96xf32> to vector<2x32xf32>
    %721 = arith.addf %719, %720 : vector<2x32xf32>
    %722 = arith.negf %721 : vector<2x32xf32>
    %723 = math.exp %722 : vector<2x32xf32>
    %cst_127 = arith.constant 1.000000e+00 : f32
    %724 = vector.broadcast %cst_127 : f32 to vector<2x32xf32>
    %725 = arith.addf %724, %723 : vector<2x32xf32>
    %726 = arith.divf %724, %725 : vector<2x32xf32>
    %727 = vector.extract_strided_slice %717 {offsets = [0, 32], sizes = [2, 32], strides = [1, 1]} : vector<2x96xf32> to vector<2x32xf32>
    %728 = vector.extract_strided_slice %718 {offsets = [0, 32], sizes = [2, 32], strides = [1, 1]} : vector<2x96xf32> to vector<2x32xf32>
    %729 = arith.addf %727, %728 : vector<2x32xf32>
    %730 = arith.negf %729 : vector<2x32xf32>
    %731 = math.exp %730 : vector<2x32xf32>
    %cst_128 = arith.constant 1.000000e+00 : f32
    %732 = vector.broadcast %cst_128 : f32 to vector<2x32xf32>
    %733 = arith.addf %732, %731 : vector<2x32xf32>
    %734 = arith.divf %732, %733 : vector<2x32xf32>
    %735 = vector.extract_strided_slice %717 {offsets = [0, 64], sizes = [2, 32], strides = [1, 1]} : vector<2x96xf32> to vector<2x32xf32>
    %736 = vector.extract_strided_slice %718 {offsets = [0, 64], sizes = [2, 32], strides = [1, 1]} : vector<2x96xf32> to vector<2x32xf32>
    %737 = arith.addf %736, %534 : vector<2x32xf32>
    %738 = arith.mulf %726, %737 : vector<2x32xf32>
    %739 = arith.addf %735, %738 : vector<2x32xf32>
    %740 = math.tanh %739 : vector<2x32xf32>
    %cst_129 = arith.constant 1.000000e+00 : f32
    %741 = vector.broadcast %cst_129 : f32 to vector<2x32xf32>
    %742 = arith.subf %741, %734 : vector<2x32xf32>
    %743 = arith.mulf %742, %740 : vector<2x32xf32>
    %744 = arith.mulf %734, %686 : vector<2x32xf32>
    %745 = arith.addf %743, %744 : vector<2x32xf32>
    %746 = vector.extract_strided_slice %539 {offsets = [8, 0], sizes = [2, 96], strides = [1, 1]} : vector<16x96xf32> to vector<2x96xf32>
    %cst_130 = arith.constant dense<0.000000e+00> : vector<2x96xf32>
    %747 = tpu.matmul %715, %523, %cst_130 {dimension_numbers = #tpu.dot_dimension_numbers<[1], [0], [0], [1], [0, 0, 1, 1], [], []>} : vector<2x32xf32>, vector<32x96xf32>, vector<2x96xf32> -> vector<2x96xf32>
    %748 = vector.extract_strided_slice %746 {offsets = [0, 0], sizes = [2, 32], strides = [1, 1]} : vector<2x96xf32> to vector<2x32xf32>
    %749 = vector.extract_strided_slice %747 {offsets = [0, 0], sizes = [2, 32], strides = [1, 1]} : vector<2x96xf32> to vector<2x32xf32>
    %750 = arith.addf %748, %749 : vector<2x32xf32>
    %751 = arith.negf %750 : vector<2x32xf32>
    %752 = math.exp %751 : vector<2x32xf32>
    %cst_131 = arith.constant 1.000000e+00 : f32
    %753 = vector.broadcast %cst_131 : f32 to vector<2x32xf32>
    %754 = arith.addf %753, %752 : vector<2x32xf32>
    %755 = arith.divf %753, %754 : vector<2x32xf32>
    %756 = vector.extract_strided_slice %746 {offsets = [0, 32], sizes = [2, 32], strides = [1, 1]} : vector<2x96xf32> to vector<2x32xf32>
    %757 = vector.extract_strided_slice %747 {offsets = [0, 32], sizes = [2, 32], strides = [1, 1]} : vector<2x96xf32> to vector<2x32xf32>
    %758 = arith.addf %756, %757 : vector<2x32xf32>
    %759 = arith.negf %758 : vector<2x32xf32>
    %760 = math.exp %759 : vector<2x32xf32>
    %cst_132 = arith.constant 1.000000e+00 : f32
    %761 = vector.broadcast %cst_132 : f32 to vector<2x32xf32>
    %762 = arith.addf %761, %760 : vector<2x32xf32>
    %763 = arith.divf %761, %762 : vector<2x32xf32>
    %764 = vector.extract_strided_slice %746 {offsets = [0, 64], sizes = [2, 32], strides = [1, 1]} : vector<2x96xf32> to vector<2x32xf32>
    %765 = vector.extract_strided_slice %747 {offsets = [0, 64], sizes = [2, 32], strides = [1, 1]} : vector<2x96xf32> to vector<2x32xf32>
    %766 = arith.addf %765, %526 : vector<2x32xf32>
    %767 = arith.mulf %755, %766 : vector<2x32xf32>
    %768 = arith.addf %764, %767 : vector<2x32xf32>
    %769 = math.tanh %768 : vector<2x32xf32>
    %cst_133 = arith.constant 1.000000e+00 : f32
    %770 = vector.broadcast %cst_133 : f32 to vector<2x32xf32>
    %771 = arith.subf %770, %763 : vector<2x32xf32>
    %772 = arith.mulf %771, %769 : vector<2x32xf32>
    %773 = arith.mulf %763, %715 : vector<2x32xf32>
    %774 = arith.addf %772, %773 : vector<2x32xf32>
    %cst_134 = arith.constant dense<0.000000e+00> : vector<2x96xf32>
    %775 = tpu.matmul %715, %528, %cst_134 {dimension_numbers = #tpu.dot_dimension_numbers<[1], [0], [0], [1], [0, 0, 1, 1], [], []>} : vector<2x32xf32>, vector<32x96xf32>, vector<2x96xf32> -> vector<2x96xf32>
    %776 = arith.addf %775, %531 : vector<2x96xf32>
    %cst_135 = arith.constant dense<0.000000e+00> : vector<2x96xf32>
    %777 = tpu.matmul %745, %529, %cst_135 {dimension_numbers = #tpu.dot_dimension_numbers<[1], [0], [0], [1], [0, 0, 1, 1], [], []>} : vector<2x32xf32>, vector<32x96xf32>, vector<2x96xf32> -> vector<2x96xf32>
    %778 = vector.extract_strided_slice %776 {offsets = [0, 0], sizes = [2, 32], strides = [1, 1]} : vector<2x96xf32> to vector<2x32xf32>
    %779 = vector.extract_strided_slice %777 {offsets = [0, 0], sizes = [2, 32], strides = [1, 1]} : vector<2x96xf32> to vector<2x32xf32>
    %780 = arith.addf %778, %779 : vector<2x32xf32>
    %781 = arith.negf %780 : vector<2x32xf32>
    %782 = math.exp %781 : vector<2x32xf32>
    %cst_136 = arith.constant 1.000000e+00 : f32
    %783 = vector.broadcast %cst_136 : f32 to vector<2x32xf32>
    %784 = arith.addf %783, %782 : vector<2x32xf32>
    %785 = arith.divf %783, %784 : vector<2x32xf32>
    %786 = vector.extract_strided_slice %776 {offsets = [0, 32], sizes = [2, 32], strides = [1, 1]} : vector<2x96xf32> to vector<2x32xf32>
    %787 = vector.extract_strided_slice %777 {offsets = [0, 32], sizes = [2, 32], strides = [1, 1]} : vector<2x96xf32> to vector<2x32xf32>
    %788 = arith.addf %786, %787 : vector<2x32xf32>
    %789 = arith.negf %788 : vector<2x32xf32>
    %790 = math.exp %789 : vector<2x32xf32>
    %cst_137 = arith.constant 1.000000e+00 : f32
    %791 = vector.broadcast %cst_137 : f32 to vector<2x32xf32>
    %792 = arith.addf %791, %790 : vector<2x32xf32>
    %793 = arith.divf %791, %792 : vector<2x32xf32>
    %794 = vector.extract_strided_slice %776 {offsets = [0, 64], sizes = [2, 32], strides = [1, 1]} : vector<2x96xf32> to vector<2x32xf32>
    %795 = vector.extract_strided_slice %777 {offsets = [0, 64], sizes = [2, 32], strides = [1, 1]} : vector<2x96xf32> to vector<2x32xf32>
    %796 = arith.addf %795, %534 : vector<2x32xf32>
    %797 = arith.mulf %785, %796 : vector<2x32xf32>
    %798 = arith.addf %794, %797 : vector<2x32xf32>
    %799 = math.tanh %798 : vector<2x32xf32>
    %cst_138 = arith.constant 1.000000e+00 : f32
    %800 = vector.broadcast %cst_138 : f32 to vector<2x32xf32>
    %801 = arith.subf %800, %793 : vector<2x32xf32>
    %802 = arith.mulf %801, %799 : vector<2x32xf32>
    %803 = arith.mulf %793, %745 : vector<2x32xf32>
    %804 = arith.addf %802, %803 : vector<2x32xf32>
    %805 = vector.extract_strided_slice %539 {offsets = [10, 0], sizes = [2, 96], strides = [1, 1]} : vector<16x96xf32> to vector<2x96xf32>
    %cst_139 = arith.constant dense<0.000000e+00> : vector<2x96xf32>
    %806 = tpu.matmul %774, %523, %cst_139 {dimension_numbers = #tpu.dot_dimension_numbers<[1], [0], [0], [1], [0, 0, 1, 1], [], []>} : vector<2x32xf32>, vector<32x96xf32>, vector<2x96xf32> -> vector<2x96xf32>
    %807 = vector.extract_strided_slice %805 {offsets = [0, 0], sizes = [2, 32], strides = [1, 1]} : vector<2x96xf32> to vector<2x32xf32>
    %808 = vector.extract_strided_slice %806 {offsets = [0, 0], sizes = [2, 32], strides = [1, 1]} : vector<2x96xf32> to vector<2x32xf32>
    %809 = arith.addf %807, %808 : vector<2x32xf32>
    %810 = arith.negf %809 : vector<2x32xf32>
    %811 = math.exp %810 : vector<2x32xf32>
    %cst_140 = arith.constant 1.000000e+00 : f32
    %812 = vector.broadcast %cst_140 : f32 to vector<2x32xf32>
    %813 = arith.addf %812, %811 : vector<2x32xf32>
    %814 = arith.divf %812, %813 : vector<2x32xf32>
    %815 = vector.extract_strided_slice %805 {offsets = [0, 32], sizes = [2, 32], strides = [1, 1]} : vector<2x96xf32> to vector<2x32xf32>
    %816 = vector.extract_strided_slice %806 {offsets = [0, 32], sizes = [2, 32], strides = [1, 1]} : vector<2x96xf32> to vector<2x32xf32>
    %817 = arith.addf %815, %816 : vector<2x32xf32>
    %818 = arith.negf %817 : vector<2x32xf32>
    %819 = math.exp %818 : vector<2x32xf32>
    %cst_141 = arith.constant 1.000000e+00 : f32
    %820 = vector.broadcast %cst_141 : f32 to vector<2x32xf32>
    %821 = arith.addf %820, %819 : vector<2x32xf32>
    %822 = arith.divf %820, %821 : vector<2x32xf32>
    %823 = vector.extract_strided_slice %805 {offsets = [0, 64], sizes = [2, 32], strides = [1, 1]} : vector<2x96xf32> to vector<2x32xf32>
    %824 = vector.extract_strided_slice %806 {offsets = [0, 64], sizes = [2, 32], strides = [1, 1]} : vector<2x96xf32> to vector<2x32xf32>
    %825 = arith.addf %824, %526 : vector<2x32xf32>
    %826 = arith.mulf %814, %825 : vector<2x32xf32>
    %827 = arith.addf %823, %826 : vector<2x32xf32>
    %828 = math.tanh %827 : vector<2x32xf32>
    %cst_142 = arith.constant 1.000000e+00 : f32
    %829 = vector.broadcast %cst_142 : f32 to vector<2x32xf32>
    %830 = arith.subf %829, %822 : vector<2x32xf32>
    %831 = arith.mulf %830, %828 : vector<2x32xf32>
    %832 = arith.mulf %822, %774 : vector<2x32xf32>
    %833 = arith.addf %831, %832 : vector<2x32xf32>
    %cst_143 = arith.constant dense<0.000000e+00> : vector<2x96xf32>
    %834 = tpu.matmul %774, %528, %cst_143 {dimension_numbers = #tpu.dot_dimension_numbers<[1], [0], [0], [1], [0, 0, 1, 1], [], []>} : vector<2x32xf32>, vector<32x96xf32>, vector<2x96xf32> -> vector<2x96xf32>
    %835 = arith.addf %834, %531 : vector<2x96xf32>
    %cst_144 = arith.constant dense<0.000000e+00> : vector<2x96xf32>
    %836 = tpu.matmul %804, %529, %cst_144 {dimension_numbers = #tpu.dot_dimension_numbers<[1], [0], [0], [1], [0, 0, 1, 1], [], []>} : vector<2x32xf32>, vector<32x96xf32>, vector<2x96xf32> -> vector<2x96xf32>
    %837 = vector.extract_strided_slice %835 {offsets = [0, 0], sizes = [2, 32], strides = [1, 1]} : vector<2x96xf32> to vector<2x32xf32>
    %838 = vector.extract_strided_slice %836 {offsets = [0, 0], sizes = [2, 32], strides = [1, 1]} : vector<2x96xf32> to vector<2x32xf32>
    %839 = arith.addf %837, %838 : vector<2x32xf32>
    %840 = arith.negf %839 : vector<2x32xf32>
    %841 = math.exp %840 : vector<2x32xf32>
    %cst_145 = arith.constant 1.000000e+00 : f32
    %842 = vector.broadcast %cst_145 : f32 to vector<2x32xf32>
    %843 = arith.addf %842, %841 : vector<2x32xf32>
    %844 = arith.divf %842, %843 : vector<2x32xf32>
    %845 = vector.extract_strided_slice %835 {offsets = [0, 32], sizes = [2, 32], strides = [1, 1]} : vector<2x96xf32> to vector<2x32xf32>
    %846 = vector.extract_strided_slice %836 {offsets = [0, 32], sizes = [2, 32], strides = [1, 1]} : vector<2x96xf32> to vector<2x32xf32>
    %847 = arith.addf %845, %846 : vector<2x32xf32>
    %848 = arith.negf %847 : vector<2x32xf32>
    %849 = math.exp %848 : vector<2x32xf32>
    %cst_146 = arith.constant 1.000000e+00 : f32
    %850 = vector.broadcast %cst_146 : f32 to vector<2x32xf32>
    %851 = arith.addf %850, %849 : vector<2x32xf32>
    %852 = arith.divf %850, %851 : vector<2x32xf32>
    %853 = vector.extract_strided_slice %835 {offsets = [0, 64], sizes = [2, 32], strides = [1, 1]} : vector<2x96xf32> to vector<2x32xf32>
    %854 = vector.extract_strided_slice %836 {offsets = [0, 64], sizes = [2, 32], strides = [1, 1]} : vector<2x96xf32> to vector<2x32xf32>
    %855 = arith.addf %854, %534 : vector<2x32xf32>
    %856 = arith.mulf %844, %855 : vector<2x32xf32>
    %857 = arith.addf %853, %856 : vector<2x32xf32>
    %858 = math.tanh %857 : vector<2x32xf32>
    %cst_147 = arith.constant 1.000000e+00 : f32
    %859 = vector.broadcast %cst_147 : f32 to vector<2x32xf32>
    %860 = arith.subf %859, %852 : vector<2x32xf32>
    %861 = arith.mulf %860, %858 : vector<2x32xf32>
    %862 = arith.mulf %852, %804 : vector<2x32xf32>
    %863 = arith.addf %861, %862 : vector<2x32xf32>
    %864 = vector.extract_strided_slice %539 {offsets = [12, 0], sizes = [2, 96], strides = [1, 1]} : vector<16x96xf32> to vector<2x96xf32>
    %cst_148 = arith.constant dense<0.000000e+00> : vector<2x96xf32>
    %865 = tpu.matmul %833, %523, %cst_148 {dimension_numbers = #tpu.dot_dimension_numbers<[1], [0], [0], [1], [0, 0, 1, 1], [], []>} : vector<2x32xf32>, vector<32x96xf32>, vector<2x96xf32> -> vector<2x96xf32>
    %866 = vector.extract_strided_slice %864 {offsets = [0, 0], sizes = [2, 32], strides = [1, 1]} : vector<2x96xf32> to vector<2x32xf32>
    %867 = vector.extract_strided_slice %865 {offsets = [0, 0], sizes = [2, 32], strides = [1, 1]} : vector<2x96xf32> to vector<2x32xf32>
    %868 = arith.addf %866, %867 : vector<2x32xf32>
    %869 = arith.negf %868 : vector<2x32xf32>
    %870 = math.exp %869 : vector<2x32xf32>
    %cst_149 = arith.constant 1.000000e+00 : f32
    %871 = vector.broadcast %cst_149 : f32 to vector<2x32xf32>
    %872 = arith.addf %871, %870 : vector<2x32xf32>
    %873 = arith.divf %871, %872 : vector<2x32xf32>
    %874 = vector.extract_strided_slice %864 {offsets = [0, 32], sizes = [2, 32], strides = [1, 1]} : vector<2x96xf32> to vector<2x32xf32>
    %875 = vector.extract_strided_slice %865 {offsets = [0, 32], sizes = [2, 32], strides = [1, 1]} : vector<2x96xf32> to vector<2x32xf32>
    %876 = arith.addf %874, %875 : vector<2x32xf32>
    %877 = arith.negf %876 : vector<2x32xf32>
    %878 = math.exp %877 : vector<2x32xf32>
    %cst_150 = arith.constant 1.000000e+00 : f32
    %879 = vector.broadcast %cst_150 : f32 to vector<2x32xf32>
    %880 = arith.addf %879, %878 : vector<2x32xf32>
    %881 = arith.divf %879, %880 : vector<2x32xf32>
    %882 = vector.extract_strided_slice %864 {offsets = [0, 64], sizes = [2, 32], strides = [1, 1]} : vector<2x96xf32> to vector<2x32xf32>
    %883 = vector.extract_strided_slice %865 {offsets = [0, 64], sizes = [2, 32], strides = [1, 1]} : vector<2x96xf32> to vector<2x32xf32>
    %884 = arith.addf %883, %526 : vector<2x32xf32>
    %885 = arith.mulf %873, %884 : vector<2x32xf32>
    %886 = arith.addf %882, %885 : vector<2x32xf32>
    %887 = math.tanh %886 : vector<2x32xf32>
    %cst_151 = arith.constant 1.000000e+00 : f32
    %888 = vector.broadcast %cst_151 : f32 to vector<2x32xf32>
    %889 = arith.subf %888, %881 : vector<2x32xf32>
    %890 = arith.mulf %889, %887 : vector<2x32xf32>
    %891 = arith.mulf %881, %833 : vector<2x32xf32>
    %892 = arith.addf %890, %891 : vector<2x32xf32>
    %cst_152 = arith.constant dense<0.000000e+00> : vector<2x96xf32>
    %893 = tpu.matmul %833, %528, %cst_152 {dimension_numbers = #tpu.dot_dimension_numbers<[1], [0], [0], [1], [0, 0, 1, 1], [], []>} : vector<2x32xf32>, vector<32x96xf32>, vector<2x96xf32> -> vector<2x96xf32>
    %894 = arith.addf %893, %531 : vector<2x96xf32>
    %cst_153 = arith.constant dense<0.000000e+00> : vector<2x96xf32>
    %895 = tpu.matmul %863, %529, %cst_153 {dimension_numbers = #tpu.dot_dimension_numbers<[1], [0], [0], [1], [0, 0, 1, 1], [], []>} : vector<2x32xf32>, vector<32x96xf32>, vector<2x96xf32> -> vector<2x96xf32>
    %896 = vector.extract_strided_slice %894 {offsets = [0, 0], sizes = [2, 32], strides = [1, 1]} : vector<2x96xf32> to vector<2x32xf32>
    %897 = vector.extract_strided_slice %895 {offsets = [0, 0], sizes = [2, 32], strides = [1, 1]} : vector<2x96xf32> to vector<2x32xf32>
    %898 = arith.addf %896, %897 : vector<2x32xf32>
    %899 = arith.negf %898 : vector<2x32xf32>
    %900 = math.exp %899 : vector<2x32xf32>
    %cst_154 = arith.constant 1.000000e+00 : f32
    %901 = vector.broadcast %cst_154 : f32 to vector<2x32xf32>
    %902 = arith.addf %901, %900 : vector<2x32xf32>
    %903 = arith.divf %901, %902 : vector<2x32xf32>
    %904 = vector.extract_strided_slice %894 {offsets = [0, 32], sizes = [2, 32], strides = [1, 1]} : vector<2x96xf32> to vector<2x32xf32>
    %905 = vector.extract_strided_slice %895 {offsets = [0, 32], sizes = [2, 32], strides = [1, 1]} : vector<2x96xf32> to vector<2x32xf32>
    %906 = arith.addf %904, %905 : vector<2x32xf32>
    %907 = arith.negf %906 : vector<2x32xf32>
    %908 = math.exp %907 : vector<2x32xf32>
    %cst_155 = arith.constant 1.000000e+00 : f32
    %909 = vector.broadcast %cst_155 : f32 to vector<2x32xf32>
    %910 = arith.addf %909, %908 : vector<2x32xf32>
    %911 = arith.divf %909, %910 : vector<2x32xf32>
    %912 = vector.extract_strided_slice %894 {offsets = [0, 64], sizes = [2, 32], strides = [1, 1]} : vector<2x96xf32> to vector<2x32xf32>
    %913 = vector.extract_strided_slice %895 {offsets = [0, 64], sizes = [2, 32], strides = [1, 1]} : vector<2x96xf32> to vector<2x32xf32>
    %914 = arith.addf %913, %534 : vector<2x32xf32>
    %915 = arith.mulf %903, %914 : vector<2x32xf32>
    %916 = arith.addf %912, %915 : vector<2x32xf32>
    %917 = math.tanh %916 : vector<2x32xf32>
    %cst_156 = arith.constant 1.000000e+00 : f32
    %918 = vector.broadcast %cst_156 : f32 to vector<2x32xf32>
    %919 = arith.subf %918, %911 : vector<2x32xf32>
    %920 = arith.mulf %919, %917 : vector<2x32xf32>
    %921 = arith.mulf %911, %863 : vector<2x32xf32>
    %922 = arith.addf %920, %921 : vector<2x32xf32>
    %923 = vector.extract_strided_slice %539 {offsets = [14, 0], sizes = [2, 96], strides = [1, 1]} : vector<16x96xf32> to vector<2x96xf32>
    %cst_157 = arith.constant dense<0.000000e+00> : vector<2x96xf32>
    %924 = tpu.matmul %892, %523, %cst_157 {dimension_numbers = #tpu.dot_dimension_numbers<[1], [0], [0], [1], [0, 0, 1, 1], [], []>} : vector<2x32xf32>, vector<32x96xf32>, vector<2x96xf32> -> vector<2x96xf32>
    %925 = vector.extract_strided_slice %923 {offsets = [0, 0], sizes = [2, 32], strides = [1, 1]} : vector<2x96xf32> to vector<2x32xf32>
    %926 = vector.extract_strided_slice %924 {offsets = [0, 0], sizes = [2, 32], strides = [1, 1]} : vector<2x96xf32> to vector<2x32xf32>
    %927 = arith.addf %925, %926 : vector<2x32xf32>
    %928 = arith.negf %927 : vector<2x32xf32>
    %929 = math.exp %928 : vector<2x32xf32>
    %cst_158 = arith.constant 1.000000e+00 : f32
    %930 = vector.broadcast %cst_158 : f32 to vector<2x32xf32>
    %931 = arith.addf %930, %929 : vector<2x32xf32>
    %932 = arith.divf %930, %931 : vector<2x32xf32>
    %933 = vector.extract_strided_slice %923 {offsets = [0, 32], sizes = [2, 32], strides = [1, 1]} : vector<2x96xf32> to vector<2x32xf32>
    %934 = vector.extract_strided_slice %924 {offsets = [0, 32], sizes = [2, 32], strides = [1, 1]} : vector<2x96xf32> to vector<2x32xf32>
    %935 = arith.addf %933, %934 : vector<2x32xf32>
    %936 = arith.negf %935 : vector<2x32xf32>
    %937 = math.exp %936 : vector<2x32xf32>
    %cst_159 = arith.constant 1.000000e+00 : f32
    %938 = vector.broadcast %cst_159 : f32 to vector<2x32xf32>
    %939 = arith.addf %938, %937 : vector<2x32xf32>
    %940 = arith.divf %938, %939 : vector<2x32xf32>
    %941 = vector.extract_strided_slice %923 {offsets = [0, 64], sizes = [2, 32], strides = [1, 1]} : vector<2x96xf32> to vector<2x32xf32>
    %942 = vector.extract_strided_slice %924 {offsets = [0, 64], sizes = [2, 32], strides = [1, 1]} : vector<2x96xf32> to vector<2x32xf32>
    %943 = arith.addf %942, %526 : vector<2x32xf32>
    %944 = arith.mulf %932, %943 : vector<2x32xf32>
    %945 = arith.addf %941, %944 : vector<2x32xf32>
    %946 = math.tanh %945 : vector<2x32xf32>
    %cst_160 = arith.constant 1.000000e+00 : f32
    %947 = vector.broadcast %cst_160 : f32 to vector<2x32xf32>
    %948 = arith.subf %947, %940 : vector<2x32xf32>
    %949 = arith.mulf %948, %946 : vector<2x32xf32>
    %950 = arith.mulf %940, %892 : vector<2x32xf32>
    %951 = arith.addf %949, %950 : vector<2x32xf32>
    %cst_161 = arith.constant dense<0.000000e+00> : vector<2x96xf32>
    %952 = tpu.matmul %892, %528, %cst_161 {dimension_numbers = #tpu.dot_dimension_numbers<[1], [0], [0], [1], [0, 0, 1, 1], [], []>} : vector<2x32xf32>, vector<32x96xf32>, vector<2x96xf32> -> vector<2x96xf32>
    %953 = arith.addf %952, %531 : vector<2x96xf32>
    %cst_162 = arith.constant dense<0.000000e+00> : vector<2x96xf32>
    %954 = tpu.matmul %922, %529, %cst_162 {dimension_numbers = #tpu.dot_dimension_numbers<[1], [0], [0], [1], [0, 0, 1, 1], [], []>} : vector<2x32xf32>, vector<32x96xf32>, vector<2x96xf32> -> vector<2x96xf32>
    %955 = vector.extract_strided_slice %953 {offsets = [0, 0], sizes = [2, 32], strides = [1, 1]} : vector<2x96xf32> to vector<2x32xf32>
    %956 = vector.extract_strided_slice %954 {offsets = [0, 0], sizes = [2, 32], strides = [1, 1]} : vector<2x96xf32> to vector<2x32xf32>
    %957 = arith.addf %955, %956 : vector<2x32xf32>
    %958 = arith.negf %957 : vector<2x32xf32>
    %959 = math.exp %958 : vector<2x32xf32>
    %cst_163 = arith.constant 1.000000e+00 : f32
    %960 = vector.broadcast %cst_163 : f32 to vector<2x32xf32>
    %961 = arith.addf %960, %959 : vector<2x32xf32>
    %962 = arith.divf %960, %961 : vector<2x32xf32>
    %963 = vector.extract_strided_slice %953 {offsets = [0, 32], sizes = [2, 32], strides = [1, 1]} : vector<2x96xf32> to vector<2x32xf32>
    %964 = vector.extract_strided_slice %954 {offsets = [0, 32], sizes = [2, 32], strides = [1, 1]} : vector<2x96xf32> to vector<2x32xf32>
    %965 = arith.addf %963, %964 : vector<2x32xf32>
    %966 = arith.negf %965 : vector<2x32xf32>
    %967 = math.exp %966 : vector<2x32xf32>
    %cst_164 = arith.constant 1.000000e+00 : f32
    %968 = vector.broadcast %cst_164 : f32 to vector<2x32xf32>
    %969 = arith.addf %968, %967 : vector<2x32xf32>
    %970 = arith.divf %968, %969 : vector<2x32xf32>
    %971 = vector.extract_strided_slice %953 {offsets = [0, 64], sizes = [2, 32], strides = [1, 1]} : vector<2x96xf32> to vector<2x32xf32>
    %972 = vector.extract_strided_slice %954 {offsets = [0, 64], sizes = [2, 32], strides = [1, 1]} : vector<2x96xf32> to vector<2x32xf32>
    %973 = arith.addf %972, %534 : vector<2x32xf32>
    %974 = arith.mulf %962, %973 : vector<2x32xf32>
    %975 = arith.addf %971, %974 : vector<2x32xf32>
    %976 = math.tanh %975 : vector<2x32xf32>
    %cst_165 = arith.constant 1.000000e+00 : f32
    %977 = vector.broadcast %cst_165 : f32 to vector<2x32xf32>
    %978 = arith.subf %977, %970 : vector<2x32xf32>
    %979 = arith.mulf %978, %976 : vector<2x32xf32>
    %980 = arith.mulf %970, %922 : vector<2x32xf32>
    %981 = arith.addf %979, %980 : vector<2x32xf32>
    %cst_166 = arith.constant dense<0.000000e+00> : vector<2x96xf32>
    %982 = tpu.matmul %951, %528, %cst_166 {dimension_numbers = #tpu.dot_dimension_numbers<[1], [0], [0], [1], [0, 0, 1, 1], [], []>} : vector<2x32xf32>, vector<32x96xf32>, vector<2x96xf32> -> vector<2x96xf32>
    %983 = arith.addf %982, %531 : vector<2x96xf32>
    %cst_167 = arith.constant dense<0.000000e+00> : vector<2x96xf32>
    %984 = tpu.matmul %981, %529, %cst_167 {dimension_numbers = #tpu.dot_dimension_numbers<[1], [0], [0], [1], [0, 0, 1, 1], [], []>} : vector<2x32xf32>, vector<32x96xf32>, vector<2x96xf32> -> vector<2x96xf32>
    %985 = vector.extract_strided_slice %983 {offsets = [0, 0], sizes = [2, 32], strides = [1, 1]} : vector<2x96xf32> to vector<2x32xf32>
    %986 = vector.extract_strided_slice %984 {offsets = [0, 0], sizes = [2, 32], strides = [1, 1]} : vector<2x96xf32> to vector<2x32xf32>
    %987 = arith.addf %985, %986 : vector<2x32xf32>
    %988 = arith.negf %987 : vector<2x32xf32>
    %989 = math.exp %988 : vector<2x32xf32>
    %cst_168 = arith.constant 1.000000e+00 : f32
    %990 = vector.broadcast %cst_168 : f32 to vector<2x32xf32>
    %991 = arith.addf %990, %989 : vector<2x32xf32>
    %992 = arith.divf %990, %991 : vector<2x32xf32>
    %993 = vector.extract_strided_slice %983 {offsets = [0, 32], sizes = [2, 32], strides = [1, 1]} : vector<2x96xf32> to vector<2x32xf32>
    %994 = vector.extract_strided_slice %984 {offsets = [0, 32], sizes = [2, 32], strides = [1, 1]} : vector<2x96xf32> to vector<2x32xf32>
    %995 = arith.addf %993, %994 : vector<2x32xf32>
    %996 = arith.negf %995 : vector<2x32xf32>
    %997 = math.exp %996 : vector<2x32xf32>
    %cst_169 = arith.constant 1.000000e+00 : f32
    %998 = vector.broadcast %cst_169 : f32 to vector<2x32xf32>
    %999 = arith.addf %998, %997 : vector<2x32xf32>
    %1000 = arith.divf %998, %999 : vector<2x32xf32>
    %1001 = vector.extract_strided_slice %983 {offsets = [0, 64], sizes = [2, 32], strides = [1, 1]} : vector<2x96xf32> to vector<2x32xf32>
    %1002 = vector.extract_strided_slice %984 {offsets = [0, 64], sizes = [2, 32], strides = [1, 1]} : vector<2x96xf32> to vector<2x32xf32>
    %1003 = arith.addf %1002, %534 : vector<2x32xf32>
    %1004 = arith.mulf %992, %1003 : vector<2x32xf32>
    %1005 = arith.addf %1001, %1004 : vector<2x32xf32>
    %1006 = math.tanh %1005 : vector<2x32xf32>
    %cst_170 = arith.constant 1.000000e+00 : f32
    %1007 = vector.broadcast %cst_170 : f32 to vector<2x32xf32>
    %1008 = arith.subf %1007, %1000 : vector<2x32xf32>
    %1009 = arith.mulf %1008, %1006 : vector<2x32xf32>
    %1010 = arith.mulf %1000, %981 : vector<2x32xf32>
    %1011 = arith.addf %1009, %1010 : vector<2x32xf32>
    %1012 = tpu.concatenate %627, %686, %745, %804, %863, %922, %981, %1011 in 0 : vector<2x32xf32>, vector<2x32xf32>, vector<2x32xf32>, vector<2x32xf32>, vector<2x32xf32>, vector<2x32xf32>, vector<2x32xf32>, vector<2x32xf32> -> vector<16x32xf32>
    %c336 = arith.constant 336 : index
    %c0_171 = arith.constant 0 : index
    %1013 = vector.load %arg3[%c336, %c0_171] : memref<368x128xf32, #tpu.memory_space<vmem>>, vector<32x128xf32>
    %cst_172 = arith.constant dense<0.000000e+00> : vector<16x128xf32>
    %1014 = tpu.matmul %1012, %1013, %cst_172 {dimension_numbers = #tpu.dot_dimension_numbers<[1], [0], [0], [1], [0, 0, 1, 1], [], []>} : vector<16x32xf32>, vector<32x128xf32>, vector<16x128xf32> -> vector<16x128xf32>
    %1015 = vector.extract_strided_slice %0 {offsets = [10, 0], sizes = [1, 128], strides = [1, 1]} : vector<16x128xf32> to vector<1x128xf32>
    %1016 = vector.broadcast %1015 : vector<1x128xf32> to vector<16x128xf32>
    %1017 = arith.addf %1014, %1016 : vector<16x128xf32>
    %cst_173 = arith.constant dense<0xFF800000> : vector<16xf32>
    %1018 = vector.multi_reduction <maximumf>, %1017, %cst_173 [1] : vector<16x128xf32> to vector<16xf32>
    %1019 = vector.shape_cast %1018 : vector<16xf32> to vector<16x1xf32>
    %1020 = vector.broadcast %1019 : vector<16x1xf32> to vector<16x128xf32>
    %1021 = arith.subf %1017, %1020 : vector<16x128xf32>
    %1022 = math.exp %1021 : vector<16x128xf32>
    %cst_174 = arith.constant dense<0.000000e+00> : vector<16xf32>
    %1023 = vector.multi_reduction <add>, %1022, %cst_174 [1] : vector<16x128xf32> to vector<16xf32>
    %1024 = vector.shape_cast %1023 : vector<16xf32> to vector<16x1xf32>
    %1025 = math.log %1024 : vector<16x1xf32>
    %1026 = vector.broadcast %1025 : vector<16x1xf32> to vector<16x128xf32>
    %1027 = arith.subf %1021, %1026 : vector<16x128xf32>
    %c0_175 = arith.constant 0 : index
    %c0_176 = arith.constant 0 : index
    %1028 = vector.load %arg5[%c0_175, %c0_176] : memref<16x128xf32, #tpu.memory_space<vmem>>, vector<16x128xf32>
    tpu.vector_store %arg5[%c0_175, %c0_176], %1027 {strides = array<i32>} : memref<16x128xf32, #tpu.memory_space<vmem>>, vector<16x128xf32>,
    %c0_177 = arith.constant 0 : index
    %c0_178 = arith.constant 0 : index
    %1029 = vector.load %arg6[%c0_177, %c0_178] : memref<2x8xf32, #tpu.memory_space<vmem>>, vector<2x8xf32>
    tpu.vector_store %arg6[%c0_177, %c0_178], %506 {strides = array<i32>} : memref<2x8xf32, #tpu.memory_space<vmem>>, vector<2x8xf32>,
    %c0_179 = arith.constant 0 : index
    %c0_180 = arith.constant 0 : index
    %1030 = vector.load %arg7[%c0_179, %c0_180] : memref<2x8xf32, #tpu.memory_space<vmem>>, vector<2x8xf32>
    tpu.vector_store %arg7[%c0_179, %c0_180], %507 {strides = array<i32>} : memref<2x8xf32, #tpu.memory_space<vmem>>, vector<2x8xf32>,
    return
  }
}

</mosaic_0001>

<llo_original>
// kernel: cond_vae_forward.1
$region0: #{cond_vae_forward.1}
  #allocation0 [shape = 'u32[]', space=smem, size = 0x4, offset = 0x4, fixed_abs, tag = 'smem constant byte address 0x4 - core index']
  #allocation1 [shape = 'u32[144,128]{1,0:T(1,128)}', space=vmem, size = 0x12000, scoped, tag = 'internal scratch']
  %s0 = inlined_call_operand.vmem [shape: s32[16,1], index: 0, kind: input, shape index: {}]
  %s1 = inlined_call_operand.vmem [shape: f32[2,4], index: 1, kind: input, shape index: {}]
  %s2 = inlined_call_operand.vmem [shape: f32[2,8], index: 2, kind: input, shape index: {}]
  %s3 = inlined_call_operand.hbm [shape: f32[368,128], index: 3, kind: input, shape index: {}]
  %s4 = inlined_call_operand.vmem [shape: f32[16,128], index: 4, kind: input, shape index: {}]
  %s5 = inlined_call_operand.hbm [shape: f32[16,128], index: 5, kind: output, shape index: {0}]
  %s6 = inlined_call_operand.hbm [shape: f32[2,8], index: 6, kind: output, shape index: {1}]
  %s7 = inlined_call_operand.hbm [shape: f32[2,8], index: 7, kind: output, shape index: {2}]
  %8 = xla_tuple %s5, %s6, %s7
  %s9 = sld [smem:[#allocation0]]
  $region50: #{cond_vae_forward.1} parent=0
    _
  %s11 = ssub.s32 1, %s9
  %s12 = scalar_select 0, %s11, %s9
  $region1: #{cond_vae_forward.1} parent=0
    #allocation2 [shape = 'u8[188416]{0}', space=vmem, size = 0x2e000, scoped, tag = 'input window, operand 3, single buffered']
    #allocation3 [shape = 's32[1]{0}', space=sflag, size = 0x4, scoped, tag = 'scoped memory for cond_vae_forward.1']
    #allocation4 [shape = 's32[1]{0}', space=sflag, size = 0x4, scoped, tag = 'scoped memory for cond_vae_forward.1']
    #allocation5 [shape = 'u8[8192]{0}', space=vmem, size = 0x2000, scoped, tag = 'output window, operand 0, single buffered']
    #allocation6 [shape = 'u8[1024]{0}', space=vmem, size = 0x400, scoped, tag = 'output window, operand 1, single buffered']
    #allocation7 [shape = 's32[1]{0}', space=sflag, size = 0x4, scoped, tag = 'scoped memory for cond_vae_forward.1']
    #allocation8 [shape = 'u8[1024]{0}', space=vmem, size = 0x400, scoped, tag = 'output window, operand 2, single buffered']
    %13 = vsyncpa [#allocation3], 0
    %14 = vsyncpa [#allocation4], 0
    %15 = vsyncpa [#allocation7], 0
    // Predicated region
    $region2: #{cond_vae_forward.1} parent=1 // pred_check
      _
    $region3: #{cond_vae_forward.1} parent=1 // pred_check_branch
      %17 = sbr.rel (0) target = $region5
    $region4: #{cond_vae_forward.1} parent=1 // pred_region
      _
    $region5: #{cond_vae_forward.1} parent=1 // pred_fallthru
      _
    // Predicated region
    $region6: #{cond_vae_forward.1} parent=1 // pred_check
      _
    $region7: #{cond_vae_forward.1} parent=1 // pred_check_branch
      %19 = sbr.rel (0) target = $region9
    $region8: #{cond_vae_forward.1} parent=1 // pred_region
      _
    $region9: #{cond_vae_forward.1} parent=1 // pred_fallthru
      _
    // Predicated region
    $region10: #{cond_vae_forward.1} parent=1 // pred_check
      _
    $region11: #{cond_vae_forward.1} parent=1 // pred_check_branch
      %21 = sbr.rel (0) target = $region13
    $region12: #{cond_vae_forward.1} parent=1 // pred_region
      _
    $region13: #{cond_vae_forward.1} parent=1 // pred_fallthru
      _
    // Predicated region
    $region14: #{cond_vae_forward.1} parent=1 // pred_check
      _
    $region15: #{cond_vae_forward.1} parent=1 // pred_check_branch
      %23 = sbr.rel (0) target = $region17
    $region16: #{cond_vae_forward.1} parent=1 // pred_region
      %s25 = ssub.s32 5888, 5888
      %26 = vsyncadd [#allocation3], %s25
      %s27 = sshll.u32 [#allocation2], 4
      %s28 = int_to_ptr.vmem [resolvable:$true] %s27
      %33 = dma.hbm_to_vmem [thread:$0]  %s3, 5888, %s28, [#allocation3], 128, 128, 8
    $region17: #{cond_vae_forward.1} parent=1 // pred_fallthru
      _
    // Predicated region
    $region18: #{cond_vae_forward.1} parent=1 // pred_check
      _
    $region19: #{cond_vae_forward.1} parent=1 // pred_check_branch
      %35 = sbr.rel (0) target = $region21
    $region20: #{cond_vae_forward.1} parent=1 // pred_region
      _
    $region21: #{cond_vae_forward.1} parent=1 // pred_fallthru
      _
    // Predicated region
    $region22: #{cond_vae_forward.1} parent=1 // pred_check
      _
    $region23: #{cond_vae_forward.1} parent=1 // pred_check_branch
      %37 = sbr.rel (0) target = $region25
    $region24: #{cond_vae_forward.1} parent=1 // pred_region
      %38 = dma.done [#allocation3], 5888
    $region25: #{cond_vae_forward.1} parent=1 // pred_fallthru
      _
    %v39 = vld [vmem:[%s4] sm:$0xff]
    %v40 = vld [vmem:[%s4 + $0x8] sm:$0xff]
    %v41 = vld [vmem:[%s0] sm:$0xff]
    %v42 = vld [vmem:[%s0 + $0x8] sm:$0xff]
    %v43 = vlaneseq
    %v44 = vand.u32 %v43, 127
    %45 = vset.pattern.permute.xlu0 0
    %46 = vperm.xlu0 %45, %v41
    %v47 = vpop.permute.xlu0 %46
    %48 = vset.pattern.permute.xlu0 0
    %49 = vperm.xlu0 %48, %v42
    %v50 = vpop.permute.xlu0 %49
    %vm51 = vcmp.eq.s32.totalorder %v47, %v44
    %vm52 = vcmp.eq.s32.totalorder %v50, %v44
    %v53 = vsel %vm51, 1.0, 0.0
    %v54 = vsel %vm52, 1.0, 0.0
    %v55 = vld [vmem:[#allocation2] sm:$0xff]
    %v56 = vld [vmem:[#allocation2 + $0x8] sm:$0xff]
    %v57 = vld [vmem:[#allocation2 + $0x10] sm:$0xff]
    %v58 = vld [vmem:[#allocation2 + $0x18] sm:$0xff]
    %vm59 = vcmask 261120
    %v61 = vsel %vm59, %v53, 0
    %v64 = vsel %vm59, %v54, 0
    %66 = vmatprep.subr.mxu0 0.0
    %67 = vmatpush1.msra.mxu0 0.0
    %68 = vmatprep.subr.mxu0 0.0
    %69 = vmatpush1.msra.mxu0 0.0
    %70 = vmatprep.subr.mxu0 0.0
    %71 = vmatpush1.msra.mxu0 0.0
    %72 = vmatprep.subr.mxu0 0.0
    %73 = vmatpush1.msra.mxu0 0.0
    %74 = vmatprep.subr.mxu0 0.0
    %75 = vmatpush1.msra.mxu0 0.0
    %76 = vmatprep.subr.mxu0 0.0
    %77 = vmatpush1.msra.mxu0 0.0
    %78 = vmatprep.subr.mxu0 0.0
    %79 = vmatpush1.msra.mxu0 0.0
    %80 = vmatprep.subr.mxu0 0.0
    %81 = vmatpush1.msra.mxu0 0.0
    %82 = vmatprep.subr.mxu0 0.0
    %83 = vmatpush1.msra.mxu0 0.0
    %84 = vmatprep.subr.mxu0 0.0
    %85 = vmatpush1.msra.mxu0 0.0
    %86 = vmatprep.subr.mxu0 0.0
    %87 = vmatpush1.msra.mxu0 0.0
    %88 = vmatprep.subr.mxu0 0.0
    %89 = vmatpush1.msra.mxu0 0.0
    %90 = vmatprep.subr.mxu0 0.0
    %91 = vmatpush1.msra.mxu0 %v58
    %92 = vmatprep.subr.mxu0 0.0
    %93 = vmatpush1.msra.mxu0 %v57
    %94 = vmatprep.subr.mxu0 0.0
    %95 = vmatpush1.msra.mxu0 %v56
    %96 = vmatprep.subr.mxu0 0.0
    %97 = vmatpush1.msra.mxu0 %v55
    %98 = vmatprep.subr.mxu0 0.0
    %99 = vmatpush2.msra.mxu0 0.0
    %100 = vmatprep.subr.mxu0 0.0
    %101 = vmatpush2.msra.mxu0 0.0
    %102 = vmatprep.subr.mxu0 0.0
    %103 = vmatpush2.msra.mxu0 0.0
    %104 = vmatprep.subr.mxu0 0.0
    %105 = vmatpush2.msra.mxu0 0.0
    %106 = vmatprep.subr.mxu0 0.0
    %107 = vmatpush2.msra.mxu0 0.0
    %108 = vmatprep.subr.mxu0 0.0
    %109 = vmatpush2.msra.mxu0 0.0
    %110 = vmatprep.subr.mxu0 0.0
    %111 = vmatpush2.msra.mxu0 0.0
    %112 = vmatprep.subr.mxu0 0.0
    %113 = vmatpush2.msra.mxu0 0.0
    %114 = vmatprep.subr.mxu0 0.0
    %115 = vmatpush2.msra.mxu0 0.0
    %116 = vmatprep.subr.mxu0 0.0
    %117 = vmatpush2.msra.mxu0 0.0
    %118 = vmatprep.subr.mxu0 0.0
    %119 = vmatpush2.msra.mxu0 0.0
    %120 = vmatprep.subr.mxu0 0.0
    %121 = vmatpush2.msra.mxu0 0.0
    %122 = vmatprep.subr.mxu0 0.0
    %123 = vmatpush2.msra.mxu0 0.0
    %124 = vmatprep.subr.mxu0 0.0
    %125 = vmatpush2.msra.mxu0 0.0
    %126 = vmatprep.subr.mxu0 0.0
    %127 = vmatpush2.msra.mxu0 0.0
    %128 = vmatprep.subr.mxu0 0.0
    %129 = vmatpush2.msra.mxu0 0.0
    %130 = vmatprep.mubr.f32.mxu0 0.0
    %131 = vmatmul.mubr.f32.gmra.mxu0 %v61
    %v132 = vpop.f32.mrf.mxu0
    %v133 = vadd.f32 0.0, %v132
    %v134 = vpop.f32.mrf.mxu0
    %135 = vmatprep.mubr.f32.mxu0 0.0
    %136 = vmatmul.mubr.f32.gmra.mxu0 %v64
    %v137 = vpop.f32.mrf.mxu0
    %v138 = vadd.f32 0.0, %v137
    %v139 = vpop.f32.mrf.mxu0
    %140 = vdwg.mxu0
    %v141 = vld [vmem:[#allocation2 + $0x20] sm:$0xff]
    %v142 = vld [vmem:[#allocation2 + $0x28] sm:$0xff]
    %v143 = vld [vmem:[#allocation2 + $0x30] sm:$0xff]
    %v144 = vld [vmem:[#allocation2 + $0x38] sm:$0xff]
    %v145 = vld [vmem:[#allocation2 + $0x40] sm:$0xff]
    %v146 = vld [vmem:[#allocation2 + $0x48] sm:$0xff]
    %v147 = vlaneseq
    %v148 = vshrl.u32 %v147, 7
    %v149 = vsub.s32 1, %v148
    %v150 = vrot.slane %v39, %v149
    %v151 = vld [vmem:[#allocation2 + $0x50] sm:$0xff]
    %v152 = vld [vmem:[#allocation2 + $0x58] sm:$0xff]
    %v153 = vld [vmem:[#allocation2 + $0x60] sm:$0xff]
    %v154 = vld [vmem:[#allocation2 + $0x68] sm:$0xff]
    %v155 = vld [vmem:[#allocation2 + $0x70] sm:$0xff]
    %v156 = vld [vmem:[#allocation2 + $0x78] sm:$0xff]
    %v157 = vld [vmem:[#allocation2 + $0x80] sm:$0xff]
    %v158 = vld [vmem:[#allocation2 + $0x88] sm:$0xff]
    %v159 = vlaneseq
    %v160 = vshrl.u32 %v159, 7
    %v161 = vsub.s32 2, %v160
    %v162 = vrot.slane %v39, %v161
    %v163 = vlaneseq
    %v164 = vshrl.u32 %v163, 7
    %v165 = vsub.s32 3, %v164
    %v166 = vrot.slane %v39, %v165
    %v167 = vlaneseq
    %v168 = vshrl.u32 %v167, 7
    %v169 = vsub.s32 0, %v168
    %v170 = vrot.slane %v39, %v169
    %vm171 = vcmask 130048
    %v173 = vsel %vm171, %v133, 0
    %v176 = vsel %vm171, %v138, 0
    %178 = vmatprep.subr.mxu0 0.0
    %179 = vmatpush1.msra.mxu0 0.0
    %180 = vmatprep.subr.mxu0 0.0
    %181 = vmatpush1.msra.mxu0 0.0
    %182 = vmatprep.subr.mxu0 0.0
    %183 = vmatpush1.msra.mxu0 0.0
    %184 = vmatprep.subr.mxu0 0.0
    %185 = vmatpush1.msra.mxu0 0.0
    %186 = vmatprep.subr.mxu0 0.0
    %187 = vmatpush1.msra.mxu0 0.0
    %188 = vmatprep.subr.mxu0 0.0
    %189 = vmatpush1.msra.mxu0 0.0
    %190 = vmatprep.subr.mxu0 0.0
    %191 = vmatpush1.msra.mxu0 0.0
    %192 = vmatprep.subr.mxu0 0.0
    %193 = vmatpush1.msra.mxu0 0.0
    %194 = vmatprep.subr.mxu0 0.0
    %195 = vmatpush1.msra.mxu0 0.0
    %196 = vmatprep.subr.mxu0 0.0
    %197 = vmatpush1.msra.mxu0 0.0
    %198 = vmatprep.subr.mxu0 0.0
    %199 = vmatpush1.msra.mxu0 0.0
    %200 = vmatprep.subr.mxu0 0.0
    %201 = vmatpush1.msra.mxu0 0.0
    %202 = vmatprep.subr.mxu0 0.0
    %203 = vmatpush1.msra.mxu0 0.0
    %204 = vmatprep.subr.mxu0 0.0
    %205 = vmatpush1.msra.mxu0 0.0
    %206 = vmatprep.subr.mxu0 0.0
    %207 = vmatpush1.msra.mxu0 %v142
    %208 = vmatprep.subr.mxu0 0.0
    %209 = vmatpush1.msra.mxu0 %v141
    %210 = vmatprep.subr.mxu0 0.0
    %211 = vmatpush2.msra.mxu0 0.0
    %212 = vmatprep.subr.mxu0 0.0
    %213 = vmatpush2.msra.mxu0 0.0
    %214 = vmatprep.subr.mxu0 0.0
    %215 = vmatpush2.msra.mxu0 0.0
    %216 = vmatprep.subr.mxu0 0.0
    %217 = vmatpush2.msra.mxu0 0.0
    %218 = vmatprep.subr.mxu0 0.0
    %219 = vmatpush2.msra.mxu0 0.0
    %220 = vmatprep.subr.mxu0 0.0
    %221 = vmatpush2.msra.mxu0 0.0
    %222 = vmatprep.subr.mxu0 0.0
    %223 = vmatpush2.msra.mxu0 0.0
    %224 = vmatprep.subr.mxu0 0.0
    %225 = vmatpush2.msra.mxu0 0.0
    %226 = vmatprep.subr.mxu0 0.0
    %227 = vmatpush2.msra.mxu0 0.0
    %228 = vmatprep.subr.mxu0 0.0
    %229 = vmatpush2.msra.mxu0 0.0
    %230 = vmatprep.subr.mxu0 0.0
    %231 = vmatpush2.msra.mxu0 0.0
    %232 = vmatprep.subr.mxu0 0.0
    %233 = vmatpush2.msra.mxu0 0.0
    %234 = vmatprep.subr.mxu0 0.0
    %235 = vmatpush2.msra.mxu0 0.0
    %236 = vmatprep.subr.mxu0 0.0
    %237 = vmatpush2.msra.mxu0 0.0
    %238 = vmatprep.subr.mxu0 0.0
    %239 = vmatpush2.msra.mxu0 0.0
    %240 = vmatprep.subr.mxu0 0.0
    %241 = vmatpush2.msra.mxu0 0.0
    %242 = vmatprep.mubr.f32.mxu0 0.0
    %243 = vmatmul.mubr.f32.gmra.mxu0 %v173
    %v244 = vpop.f32.mrf.mxu0
    %v245 = vadd.f32 %v170, %v244
    %v246 = vpop.f32.mrf.mxu0
    %247 = vmatprep.mubr.f32.mxu0 0.0
    %248 = vmatmul.mubr.f32.gmra.mxu0 %v176
    %v249 = vpop.f32.mrf.mxu0
    %v250 = vadd.f32 %v170, %v249
    %v251 = vpop.f32.mrf.mxu0
    %252 = vdwg.mxu0
    %v254 = vsel %vm59, 0.0, 0
    %256 = vmatprep.subr.mxu0 0.0
    %257 = vmatpush1.msra.mxu0 0.0
    %258 = vmatprep.subr.mxu0 0.0
    %259 = vmatpush1.msra.mxu0 0.0
    %260 = vmatprep.subr.mxu0 0.0
    %261 = vmatpush1.msra.mxu0 0.0
    %262 = vmatprep.subr.mxu0 0.0
    %263 = vmatpush1.msra.mxu0 0.0
    %264 = vmatprep.subr.mxu0 0.0
    %265 = vmatpush1.msra.mxu0 0.0
    %266 = vmatprep.subr.mxu0 0.0
    %267 = vmatpush1.msra.mxu0 0.0
    %268 = vmatprep.subr.mxu0 0.0
    %269 = vmatpush1.msra.mxu0 0.0
    %270 = vmatprep.subr.mxu0 0.0
    %271 = vmatpush1.msra.mxu0 0.0
    %272 = vmatprep.subr.mxu0 0.0
    %273 = vmatpush1.msra.mxu0 0.0
    %274 = vmatprep.subr.mxu0 0.0
    %275 = vmatpush1.msra.mxu0 0.0
    %276 = vmatprep.subr.mxu0 0.0
    %277 = vmatpush1.msra.mxu0 0.0
    %278 = vmatprep.subr.mxu0 0.0
    %279 = vmatpush1.msra.mxu0 0.0
    %280 = vmatprep.subr.mxu0 0.0
    %281 = vmatpush1.msra.mxu0 %v146
    %282 = vmatprep.subr.mxu0 0.0
    %283 = vmatpush1.msra.mxu0 %v145
    %284 = vmatprep.subr.mxu0 0.0
    %285 = vmatpush1.msra.mxu0 %v144
    %286 = vmatprep.subr.mxu0 0.0
    %287 = vmatpush1.msra.mxu0 %v143
    %288 = vmatprep.subr.mxu0 0.0
    %289 = vmatpush2.msra.mxu0 0.0
    %290 = vmatprep.subr.mxu0 0.0
    %291 = vmatpush2.msra.mxu0 0.0
    %292 = vmatprep.subr.mxu0 0.0
    %293 = vmatpush2.msra.mxu0 0.0
    %294 = vmatprep.subr.mxu0 0.0
    %295 = vmatpush2.msra.mxu0 0.0
    %296 = vmatprep.subr.mxu0 0.0
    %297 = vmatpush2.msra.mxu0 0.0
    %298 = vmatprep.subr.mxu0 0.0
    %299 = vmatpush2.msra.mxu0 0.0
    %300 = vmatprep.subr.mxu0 0.0
    %301 = vmatpush2.msra.mxu0 0.0
    %302 = vmatprep.subr.mxu0 0.0
    %303 = vmatpush2.msra.mxu0 0.0
    %304 = vmatprep.subr.mxu0 0.0
    %305 = vmatpush2.msra.mxu0 0.0
    %306 = vmatprep.subr.mxu0 0.0
    %307 = vmatpush2.msra.mxu0 0.0
    %308 = vmatprep.subr.mxu0 0.0
    %309 = vmatpush2.msra.mxu0 0.0
    %310 = vmatprep.subr.mxu0 0.0
    %311 = vmatpush2.msra.mxu0 0.0
    %312 = vmatprep.subr.mxu0 0.0
    %313 = vmatpush2.msra.mxu0 0.0
    %314 = vmatprep.subr.mxu0 0.0
    %315 = vmatpush2.msra.mxu0 0.0
    %316 = vmatprep.subr.mxu0 0.0
    %317 = vmatpush2.msra.mxu0 0.0
    %318 = vmatprep.subr.mxu0 0.0
    %319 = vmatpush2.msra.mxu0 0.0
    %320 = vmatprep.mubr.f32.mxu0 0.0
    %321 = vmatmul.mubr.f32.gmra.mxu0 %v254
    %v322 = vpop.f32.mrf.mxu0
    %v323 = vadd.f32 0.0, %v322
    %v324 = vpop.f32.mrf.mxu0
    %325 = vdwg.mxu0
    %v326 = vadd.f32 %v245, %v323
    %v327 = vxor.u32 %v326, 2147483648
    %v328 = vmul.f32 %v327, 1.442695
    %v329 = vpow.pop %v328
    %v330 = vadd.f32 %v329, 1.0
    %v331 = vrcp.pop %v330
    %v332 = vmul.f32 1.0, %v331
    %334 = vrot.lane.b32.xlu0 %v150, 64
    %v335 = vpop.permute.xlu0 %334
    %v337 = vadd.f32 %v323, %v335
    %339 = vrot.lane.b32.xlu0 %v337, 64
    %v340 = vpop.permute.xlu0 %339
    %v342 = vmul.f32 %v332, %v340
    %344 = vrot.lane.b32.xlu0 %v342, 64
    %v345 = vpop.permute.xlu0 %344
    %v347 = vadd.f32 %v245, %v345
    %v348 = vtanh.pop %v347
    %v349 = vsub.f32 1.0, %v332
    %351 = vrot.lane.b32.xlu0 %v348, 96
    %v352 = vpop.permute.xlu0 %351
    %v354 = vmul.f32 %v349, %v352
    %v355 = vmul.f32 %v332, 0.0
    %v356 = vadd.f32 %v354, %v355
    %358 = vrot.lane.b32.xlu0 %v356, 96
    %v359 = vpop.permute.xlu0 %358
    %v360 = vsel %vm59, %v359, 0
    %362 = vmatprep.subr.mxu0 0.0
    %363 = vmatpush1.msra.mxu0 0.0
    %364 = vmatprep.subr.mxu0 0.0
    %365 = vmatpush1.msra.mxu0 0.0
    %366 = vmatprep.subr.mxu0 0.0
    %367 = vmatpush1.msra.mxu0 0.0
    %368 = vmatprep.subr.mxu0 0.0
    %369 = vmatpush1.msra.mxu0 0.0
    %370 = vmatprep.subr.mxu0 0.0
    %371 = vmatpush1.msra.mxu0 0.0
    %372 = vmatprep.subr.mxu0 0.0
    %373 = vmatpush1.msra.mxu0 0.0
    %374 = vmatprep.subr.mxu0 0.0
    %375 = vmatpush1.msra.mxu0 0.0
    %376 = vmatprep.subr.mxu0 0.0
    %377 = vmatpush1.msra.mxu0 0.0
    %378 = vmatprep.subr.mxu0 0.0
    %379 = vmatpush1.msra.mxu0 0.0
    %380 = vmatprep.subr.mxu0 0.0
    %381 = vmatpush1.msra.mxu0 0.0
    %382 = vmatprep.subr.mxu0 0.0
    %383 = vmatpush1.msra.mxu0 0.0
    %384 = vmatprep.subr.mxu0 0.0
    %385 = vmatpush1.msra.mxu0 0.0
    %386 = vmatprep.subr.mxu0 0.0
    %387 = vmatpush1.msra.mxu0 %v146
    %388 = vmatprep.subr.mxu0 0.0
    %389 = vmatpush1.msra.mxu0 %v145
    %390 = vmatprep.subr.mxu0 0.0
    %391 = vmatpush1.msra.mxu0 %v144
    %392 = vmatprep.subr.mxu0 0.0
    %393 = vmatpush1.msra.mxu0 %v143
    %394 = vmatprep.subr.mxu0 0.0
    %395 = vmatpush2.msra.mxu0 0.0
    %396 = vmatprep.subr.mxu0 0.0
    %397 = vmatpush2.msra.mxu0 0.0
    %398 = vmatprep.subr.mxu0 0.0
    %399 = vmatpush2.msra.mxu0 0.0
    %400 = vmatprep.subr.mxu0 0.0
    %401 = vmatpush2.msra.mxu0 0.0
    %402 = vmatprep.subr.mxu0 0.0
    %403 = vmatpush2.msra.mxu0 0.0
    %404 = vmatprep.subr.mxu0 0.0
    %405 = vmatpush2.msra.mxu0 0.0
    %406 = vmatprep.subr.mxu0 0.0
    %407 = vmatpush2.msra.mxu0 0.0
    %408 = vmatprep.subr.mxu0 0.0
    %409 = vmatpush2.msra.mxu0 0.0
    %410 = vmatprep.subr.mxu0 0.0
    %411 = vmatpush2.msra.mxu0 0.0
    %412 = vmatprep.subr.mxu0 0.0
    %413 = vmatpush2.msra.mxu0 0.0
    %414 = vmatprep.subr.mxu0 0.0
    %415 = vmatpush2.msra.mxu0 0.0
    %416 = vmatprep.subr.mxu0 0.0
    %417 = vmatpush2.msra.mxu0 0.0
    %418 = vmatprep.subr.mxu0 0.0
    %419 = vmatpush2.msra.mxu0 0.0
    %420 = vmatprep.subr.mxu0 0.0
    %421 = vmatpush2.msra.mxu0 0.0
    %422 = vmatprep.subr.mxu0 0.0
    %423 = vmatpush2.msra.mxu0 0.0
    %424 = vmatprep.subr.mxu0 0.0
    %425 = vmatpush2.msra.mxu0 0.0
    %426 = vmatprep.mubr.f32.mxu0 0.0
    %427 = vmatmul.mubr.f32.gmra.mxu0 %v360
    %v428 = vpop.f32.mrf.mxu0
    %v429 = vadd.f32 0.0, %v428
    %v430 = vpop.f32.mrf.mxu0
    %431 = vdwg.mxu0
    %v433 = vrot.slane %v429, 6
    %v435 = vadd.f32 %v245, %v433
    %v436 = vxor.u32 %v435, 2147483648
    %v437 = vmul.f32 %v436, 1.442695
    %v438 = vpow.pop %v437
    %v439 = vadd.f32 %v438, 1.0
    %v440 = vrcp.pop %v439
    %v441 = vmul.f32 1.0, %v440
    %v442 = vadd.f32 %v429, %v335
    %v444 = vrot.slane %v442, 6
    %445 = vrot.lane.b32.xlu0 %v444, 64
    %v446 = vpop.permute.xlu0 %445
    %v448 = vmul.f32 %v441, %v446
    %450 = vrot.lane.b32.xlu0 %v448, 64
    %v451 = vpop.permute.xlu0 %450
    %v453 = vadd.f32 %v245, %v451
    %v454 = vtanh.pop %v453
    %v455 = vsub.f32 1.0, %v441
    %457 = vrot.lane.b32.xlu0 %v454, 96
    %v458 = vpop.permute.xlu0 %457
    %v460 = vmul.f32 %v455, %v458
    %v461 = vrot.slane %v356, 6
    %v463 = vmul.f32 %v441, %v461
    %v464 = vadd.f32 %v460, %v463
    %465 = vmatprep.subr.mxu0 0.0
    %466 = vmatpush1.msra.mxu0 0.0
    %467 = vmatprep.subr.mxu0 0.0
    %468 = vmatpush1.msra.mxu0 0.0
    %469 = vmatprep.subr.mxu0 0.0
    %470 = vmatpush1.msra.mxu0 0.0
    %471 = vmatprep.subr.mxu0 0.0
    %472 = vmatpush1.msra.mxu0 0.0
    %473 = vmatprep.subr.mxu0 0.0
    %474 = vmatpush1.msra.mxu0 0.0
    %475 = vmatprep.subr.mxu0 0.0
    %476 = vmatpush1.msra.mxu0 0.0
    %477 = vmatprep.subr.mxu0 0.0
    %478 = vmatpush1.msra.mxu0 0.0
    %479 = vmatprep.subr.mxu0 0.0
    %480 = vmatpush1.msra.mxu0 0.0
    %481 = vmatprep.subr.mxu0 0.0
    %482 = vmatpush1.msra.mxu0 0.0
    %483 = vmatprep.subr.mxu0 0.0
    %484 = vmatpush1.msra.mxu0 0.0
    %485 = vmatprep.subr.mxu0 0.0
    %486 = vmatpush1.msra.mxu0 0.0
    %487 = vmatprep.subr.mxu0 0.0
    %488 = vmatpush1.msra.mxu0 0.0
    %489 = vmatprep.subr.mxu0 0.0
    %490 = vmatpush1.msra.mxu0 %v154
    %491 = vmatprep.subr.mxu0 0.0
    %492 = vmatpush1.msra.mxu0 %v153
    %493 = vmatprep.subr.mxu0 0.0
    %494 = vmatpush1.msra.mxu0 %v152
    %495 = vmatprep.subr.mxu0 0.0
    %496 = vmatpush1.msra.mxu0 %v151
    %497 = vmatprep.subr.mxu0 0.0
    %498 = vmatpush2.msra.mxu0 0.0
    %499 = vmatprep.subr.mxu0 0.0
    %500 = vmatpush2.msra.mxu0 0.0
    %501 = vmatprep.subr.mxu0 0.0
    %502 = vmatpush2.msra.mxu0 0.0
    %503 = vmatprep.subr.mxu0 0.0
    %504 = vmatpush2.msra.mxu0 0.0
    %505 = vmatprep.subr.mxu0 0.0
    %506 = vmatpush2.msra.mxu0 0.0
    %507 = vmatprep.subr.mxu0 0.0
    %508 = vmatpush2.msra.mxu0 0.0
    %509 = vmatprep.subr.mxu0 0.0
    %510 = vmatpush2.msra.mxu0 0.0
    %511 = vmatprep.subr.mxu0 0.0
    %512 = vmatpush2.msra.mxu0 0.0
    %513 = vmatprep.subr.mxu0 0.0
    %514 = vmatpush2.msra.mxu0 0.0
    %515 = vmatprep.subr.mxu0 0.0
    %516 = vmatpush2.msra.mxu0 0.0
    %517 = vmatprep.subr.mxu0 0.0
    %518 = vmatpush2.msra.mxu0 0.0
    %519 = vmatprep.subr.mxu0 0.0
    %520 = vmatpush2.msra.mxu0 0.0
    %521 = vmatprep.subr.mxu0 0.0
    %522 = vmatpush2.msra.mxu0 0.0
    %523 = vmatprep.subr.mxu0 0.0
    %524 = vmatpush2.msra.mxu0 0.0
    %525 = vmatprep.subr.mxu0 0.0
    %526 = vmatpush2.msra.mxu0 0.0
    %527 = vmatprep.subr.mxu0 0.0
    %528 = vmatpush2.msra.mxu0 0.0
    %529 = vmatprep.mubr.f32.mxu0 0.0
    %530 = vmatmul.mubr.f32.gmra.mxu0 %v360
    %v531 = vpop.f32.mrf.mxu0
    %v532 = vadd.f32 %v162, %v531
    %v533 = vpop.f32.mrf.mxu0
    %534 = vdwg.mxu0
    %535 = vmatprep.subr.mxu0 0.0
    %536 = vmatpush1.msra.mxu0 0.0
    %537 = vmatprep.subr.mxu0 0.0
    %538 = vmatpush1.msra.mxu0 0.0
    %539 = vmatprep.subr.mxu0 0.0
    %540 = vmatpush1.msra.mxu0 0.0
    %541 = vmatprep.subr.mxu0 0.0
    %542 = vmatpush1.msra.mxu0 0.0
    %543 = vmatprep.subr.mxu0 0.0
    %544 = vmatpush1.msra.mxu0 0.0
    %545 = vmatprep.subr.mxu0 0.0
    %546 = vmatpush1.msra.mxu0 0.0
    %547 = vmatprep.subr.mxu0 0.0
    %548 = vmatpush1.msra.mxu0 0.0
    %549 = vmatprep.subr.mxu0 0.0
    %550 = vmatpush1.msra.mxu0 0.0
    %551 = vmatprep.subr.mxu0 0.0
    %552 = vmatpush1.msra.mxu0 0.0
    %553 = vmatprep.subr.mxu0 0.0
    %554 = vmatpush1.msra.mxu0 0.0
    %555 = vmatprep.subr.mxu0 0.0
    %556 = vmatpush1.msra.mxu0 0.0
    %557 = vmatprep.subr.mxu0 0.0
    %558 = vmatpush1.msra.mxu0 0.0
    %559 = vmatprep.subr.mxu0 0.0
    %560 = vmatpush1.msra.mxu0 %v158
    %561 = vmatprep.subr.mxu0 0.0
    %562 = vmatpush1.msra.mxu0 %v157
    %563 = vmatprep.subr.mxu0 0.0
    %564 = vmatpush1.msra.mxu0 %v156
    %565 = vmatprep.subr.mxu0 0.0
    %566 = vmatpush1.msra.mxu0 %v155
    %567 = vmatprep.subr.mxu0 0.0
    %568 = vmatpush2.msra.mxu0 0.0
    %569 = vmatprep.subr.mxu0 0.0
    %570 = vmatpush2.msra.mxu0 0.0
    %571 = vmatprep.subr.mxu0 0.0
    %572 = vmatpush2.msra.mxu0 0.0
    %573 = vmatprep.subr.mxu0 0.0
    %574 = vmatpush2.msra.mxu0 0.0
    %575 = vmatprep.subr.mxu0 0.0
    %576 = vmatpush2.msra.mxu0 0.0
    %577 = vmatprep.subr.mxu0 0.0
    %578 = vmatpush2.msra.mxu0 0.0
    %579 = vmatprep.subr.mxu0 0.0
    %580 = vmatpush2.msra.mxu0 0.0
    %581 = vmatprep.subr.mxu0 0.0
    %582 = vmatpush2.msra.mxu0 0.0
    %583 = vmatprep.subr.mxu0 0.0
    %584 = vmatpush2.msra.mxu0 0.0
    %585 = vmatprep.subr.mxu0 0.0
    %586 = vmatpush2.msra.mxu0 0.0
    %587 = vmatprep.subr.mxu0 0.0
    %588 = vmatpush2.msra.mxu0 0.0
    %589 = vmatprep.subr.mxu0 0.0
    %590 = vmatpush2.msra.mxu0 0.0
    %591 = vmatprep.subr.mxu0 0.0
    %592 = vmatpush2.msra.mxu0 0.0
    %593 = vmatprep.subr.mxu0 0.0
    %594 = vmatpush2.msra.mxu0 0.0
    %595 = vmatprep.subr.mxu0 0.0
    %596 = vmatpush2.msra.mxu0 0.0
    %597 = vmatprep.subr.mxu0 0.0
    %598 = vmatpush2.msra.mxu0 0.0
    %599 = vmatprep.mubr.f32.mxu0 0.0
    %600 = vmatmul.mubr.f32.gmra.mxu0 %v254
    %v601 = vpop.f32.mrf.mxu0
    %v602 = vadd.f32 0.0, %v601
    %v603 = vpop.f32.mrf.mxu0
    %604 = vdwg.mxu0
    %v605 = vadd.f32 %v532, %v602
    %v606 = vxor.u32 %v605, 2147483648
    %v607 = vmul.f32 %v606, 1.442695
    %v608 = vpow.pop %v607
    %v609 = vadd.f32 %v608, 1.0
    %v610 = vrcp.pop %v609
    %v611 = vmul.f32 1.0, %v610
    %613 = vrot.lane.b32.xlu0 %v166, 64
    %v614 = vpop.permute.xlu0 %613
    %v616 = vadd.f32 %v602, %v614
    %618 = vrot.lane.b32.xlu0 %v616, 64
    %v619 = vpop.permute.xlu0 %618
    %v621 = vmul.f32 %v611, %v619
    %623 = vrot.lane.b32.xlu0 %v621, 64
    %v624 = vpop.permute.xlu0 %623
    %v626 = vadd.f32 %v532, %v624
    %v627 = vtanh.pop %v626
    %v628 = vsub.f32 1.0, %v611
    %630 = vrot.lane.b32.xlu0 %v627, 96
    %v631 = vpop.permute.xlu0 %630
    %v633 = vmul.f32 %v628, %v631
    %v634 = vmul.f32 %v611, 0.0
    %v635 = vadd.f32 %v633, %v634
    %v637 = vrot.slane %v464, 2
    %638 = vrot.lane.b32.xlu0 %v637, 96
    %v639 = vpop.permute.xlu0 %638
    %v640 = vsel %vm59, %v639, 0
    %642 = vmatprep.subr.mxu0 0.0
    %643 = vmatpush1.msra.mxu0 0.0
    %644 = vmatprep.subr.mxu0 0.0
    %645 = vmatpush1.msra.mxu0 0.0
    %646 = vmatprep.subr.mxu0 0.0
    %647 = vmatpush1.msra.mxu0 0.0
    %648 = vmatprep.subr.mxu0 0.0
    %649 = vmatpush1.msra.mxu0 0.0
    %650 = vmatprep.subr.mxu0 0.0
    %651 = vmatpush1.msra.mxu0 0.0
    %652 = vmatprep.subr.mxu0 0.0
    %653 = vmatpush1.msra.mxu0 0.0
    %654 = vmatprep.subr.mxu0 0.0
    %655 = vmatpush1.msra.mxu0 0.0
    %656 = vmatprep.subr.mxu0 0.0
    %657 = vmatpush1.msra.mxu0 0.0
    %658 = vmatprep.subr.mxu0 0.0
    %659 = vmatpush1.msra.mxu0 0.0
    %660 = vmatprep.subr.mxu0 0.0
    %661 = vmatpush1.msra.mxu0 0.0
    %662 = vmatprep.subr.mxu0 0.0
    %663 = vmatpush1.msra.mxu0 0.0
    %664 = vmatprep.subr.mxu0 0.0
    %665 = vmatpush1.msra.mxu0 0.0
    %666 = vmatprep.subr.mxu0 0.0
    %667 = vmatpush1.msra.mxu0 %v146
    %668 = vmatprep.subr.mxu0 0.0
    %669 = vmatpush1.msra.mxu0 %v145
    %670 = vmatprep.subr.mxu0 0.0
    %671 = vmatpush1.msra.mxu0 %v144
    %672 = vmatprep.subr.mxu0 0.0
    %673 = vmatpush1.msra.mxu0 %v143
    %674 = vmatprep.subr.mxu0 0.0
    %675 = vmatpush2.msra.mxu0 0.0
    %676 = vmatprep.subr.mxu0 0.0
    %677 = vmatpush2.msra.mxu0 0.0
    %678 = vmatprep.subr.mxu0 0.0
    %679 = vmatpush2.msra.mxu0 0.0
    %680 = vmatprep.subr.mxu0 0.0
    %681 = vmatpush2.msra.mxu0 0.0
    %682 = vmatprep.subr.mxu0 0.0
    %683 = vmatpush2.msra.mxu0 0.0
    %684 = vmatprep.subr.mxu0 0.0
    %685 = vmatpush2.msra.mxu0 0.0
    %686 = vmatprep.subr.mxu0 0.0
    %687 = vmatpush2.msra.mxu0 0.0
    %688 = vmatprep.subr.mxu0 0.0
    %689 = vmatpush2.msra.mxu0 0.0
    %690 = vmatprep.subr.mxu0 0.0
    %691 = vmatpush2.msra.mxu0 0.0
    %692 = vmatprep.subr.mxu0 0.0
    %693 = vmatpush2.msra.mxu0 0.0
    %694 = vmatprep.subr.mxu0 0.0
    %695 = vmatpush2.msra.mxu0 0.0
    %696 = vmatprep.subr.mxu0 0.0
    %697 = vmatpush2.msra.mxu0 0.0
    %698 = vmatprep.subr.mxu0 0.0
    %699 = vmatpush2.msra.mxu0 0.0
    %700 = vmatprep.subr.mxu0 0.0
    %701 = vmatpush2.msra.mxu0 0.0
    %702 = vmatprep.subr.mxu0 0.0
    %703 = vmatpush2.msra.mxu0 0.0
    %704 = vmatprep.subr.mxu0 0.0
    %705 = vmatpush2.msra.mxu0 0.0
    %706 = vmatprep.mubr.f32.mxu0 0.0
    %707 = vmatmul.mubr.f32.gmra.mxu0 %v640
    %v708 = vpop.f32.mrf.mxu0
    %v709 = vadd.f32 0.0, %v708
    %v710 = vpop.f32.mrf.mxu0
    %711 = vdwg.mxu0
    %v713 = vrot.slane %v709, 4
    %v715 = vadd.f32 %v245, %v713
    %v716 = vxor.u32 %v715, 2147483648
    %v717 = vmul.f32 %v716, 1.442695
    %v718 = vpow.pop %v717
    %v719 = vadd.f32 %v718, 1.0
    %v720 = vrcp.pop %v719
    %v721 = vmul.f32 1.0, %v720
    %v722 = vadd.f32 %v709, %v335
    %v724 = vrot.slane %v722, 4
    %725 = vrot.lane.b32.xlu0 %v724, 64
    %v726 = vpop.permute.xlu0 %725
    %v728 = vmul.f32 %v721, %v726
    %730 = vrot.lane.b32.xlu0 %v728, 64
    %v731 = vpop.permute.xlu0 %730
    %v733 = vadd.f32 %v245, %v731
    %v734 = vtanh.pop %v733
    %v735 = vsub.f32 1.0, %v721
    %737 = vrot.lane.b32.xlu0 %v734, 96
    %v738 = vpop.permute.xlu0 %737
    %v740 = vmul.f32 %v735, %v738
    %v741 = vrot.slane %v464, 6
    %v743 = vmul.f32 %v721, %v741
    %v744 = vadd.f32 %v740, %v743
    %745 = vmatprep.subr.mxu0 0.0
    %746 = vmatpush1.msra.mxu0 0.0
    %747 = vmatprep.subr.mxu0 0.0
    %748 = vmatpush1.msra.mxu0 0.0
    %749 = vmatprep.subr.mxu0 0.0
    %750 = vmatpush1.msra.mxu0 0.0
    %751 = vmatprep.subr.mxu0 0.0
    %752 = vmatpush1.msra.mxu0 0.0
    %753 = vmatprep.subr.mxu0 0.0
    %754 = vmatpush1.msra.mxu0 0.0
    %755 = vmatprep.subr.mxu0 0.0
    %756 = vmatpush1.msra.mxu0 0.0
    %757 = vmatprep.subr.mxu0 0.0
    %758 = vmatpush1.msra.mxu0 0.0
    %759 = vmatprep.subr.mxu0 0.0
    %760 = vmatpush1.msra.mxu0 0.0
    %761 = vmatprep.subr.mxu0 0.0
    %762 = vmatpush1.msra.mxu0 0.0
    %763 = vmatprep.subr.mxu0 0.0
    %764 = vmatpush1.msra.mxu0 0.0
    %765 = vmatprep.subr.mxu0 0.0
    %766 = vmatpush1.msra.mxu0 0.0
    %767 = vmatprep.subr.mxu0 0.0
    %768 = vmatpush1.msra.mxu0 0.0
    %769 = vmatprep.subr.mxu0 0.0
    %770 = vmatpush1.msra.mxu0 %v154
    %771 = vmatprep.subr.mxu0 0.0
    %772 = vmatpush1.msra.mxu0 %v153
    %773 = vmatprep.subr.mxu0 0.0
    %774 = vmatpush1.msra.mxu0 %v152
    %775 = vmatprep.subr.mxu0 0.0
    %776 = vmatpush1.msra.mxu0 %v151
    %777 = vmatprep.subr.mxu0 0.0
    %778 = vmatpush2.msra.mxu0 0.0
    %779 = vmatprep.subr.mxu0 0.0
    %780 = vmatpush2.msra.mxu0 0.0
    %781 = vmatprep.subr.mxu0 0.0
    %782 = vmatpush2.msra.mxu0 0.0
    %783 = vmatprep.subr.mxu0 0.0
    %784 = vmatpush2.msra.mxu0 0.0
    %785 = vmatprep.subr.mxu0 0.0
    %786 = vmatpush2.msra.mxu0 0.0
    %787 = vmatprep.subr.mxu0 0.0
    %788 = vmatpush2.msra.mxu0 0.0
    %789 = vmatprep.subr.mxu0 0.0
    %790 = vmatpush2.msra.mxu0 0.0
    %791 = vmatprep.subr.mxu0 0.0
    %792 = vmatpush2.msra.mxu0 0.0
    %793 = vmatprep.subr.mxu0 0.0
    %794 = vmatpush2.msra.mxu0 0.0
    %795 = vmatprep.subr.mxu0 0.0
    %796 = vmatpush2.msra.mxu0 0.0
    %797 = vmatprep.subr.mxu0 0.0
    %798 = vmatpush2.msra.mxu0 0.0
    %799 = vmatprep.subr.mxu0 0.0
    %800 = vmatpush2.msra.mxu0 0.0
    %801 = vmatprep.subr.mxu0 0.0
    %802 = vmatpush2.msra.mxu0 0.0
    %803 = vmatprep.subr.mxu0 0.0
    %804 = vmatpush2.msra.mxu0 0.0
    %805 = vmatprep.subr.mxu0 0.0
    %806 = vmatpush2.msra.mxu0 0.0
    %807 = vmatprep.subr.mxu0 0.0
    %808 = vmatpush2.msra.mxu0 0.0
    %809 = vmatprep.mubr.f32.mxu0 0.0
    %810 = vmatmul.mubr.f32.gmra.mxu0 %v640
    %v811 = vpop.f32.mrf.mxu0
    %v812 = vadd.f32 %v162, %v811
    %v813 = vpop.f32.mrf.mxu0
    %814 = vdwg.mxu0
    %816 = vrot.lane.b32.xlu0 %v635, 96
    %v817 = vpop.permute.xlu0 %816
    %v818 = vsel %vm59, %v817, 0
    %820 = vmatprep.subr.mxu0 0.0
    %821 = vmatpush1.msra.mxu0 0.0
    %822 = vmatprep.subr.mxu0 0.0
    %823 = vmatpush1.msra.mxu0 0.0
    %824 = vmatprep.subr.mxu0 0.0
    %825 = vmatpush1.msra.mxu0 0.0
    %826 = vmatprep.subr.mxu0 0.0
    %827 = vmatpush1.msra.mxu0 0.0
    %828 = vmatprep.subr.mxu0 0.0
    %829 = vmatpush1.msra.mxu0 0.0
    %830 = vmatprep.subr.mxu0 0.0
    %831 = vmatpush1.msra.mxu0 0.0
    %832 = vmatprep.subr.mxu0 0.0
    %833 = vmatpush1.msra.mxu0 0.0
    %834 = vmatprep.subr.mxu0 0.0
    %835 = vmatpush1.msra.mxu0 0.0
    %836 = vmatprep.subr.mxu0 0.0
    %837 = vmatpush1.msra.mxu0 0.0
    %838 = vmatprep.subr.mxu0 0.0
    %839 = vmatpush1.msra.mxu0 0.0
    %840 = vmatprep.subr.mxu0 0.0
    %841 = vmatpush1.msra.mxu0 0.0
    %842 = vmatprep.subr.mxu0 0.0
    %843 = vmatpush1.msra.mxu0 0.0
    %844 = vmatprep.subr.mxu0 0.0
    %845 = vmatpush1.msra.mxu0 %v158
    %846 = vmatprep.subr.mxu0 0.0
    %847 = vmatpush1.msra.mxu0 %v157
    %848 = vmatprep.subr.mxu0 0.0
    %849 = vmatpush1.msra.mxu0 %v156
    %850 = vmatprep.subr.mxu0 0.0
    %851 = vmatpush1.msra.mxu0 %v155
    %852 = vmatprep.subr.mxu0 0.0
    %853 = vmatpush2.msra.mxu0 0.0
    %854 = vmatprep.subr.mxu0 0.0
    %855 = vmatpush2.msra.mxu0 0.0
    %856 = vmatprep.subr.mxu0 0.0
    %857 = vmatpush2.msra.mxu0 0.0
    %858 = vmatprep.subr.mxu0 0.0
    %859 = vmatpush2.msra.mxu0 0.0
    %860 = vmatprep.subr.mxu0 0.0
    %861 = vmatpush2.msra.mxu0 0.0
    %862 = vmatprep.subr.mxu0 0.0
    %863 = vmatpush2.msra.mxu0 0.0
    %864 = vmatprep.subr.mxu0 0.0
    %865 = vmatpush2.msra.mxu0 0.0
    %866 = vmatprep.subr.mxu0 0.0
    %867 = vmatpush2.msra.mxu0 0.0
    %868 = vmatprep.subr.mxu0 0.0
    %869 = vmatpush2.msra.mxu0 0.0
    %870 = vmatprep.subr.mxu0 0.0
    %871 = vmatpush2.msra.mxu0 0.0
    %872 = vmatprep.subr.mxu0 0.0
    %873 = vmatpush2.msra.mxu0 0.0
    %874 = vmatprep.subr.mxu0 0.0
    %875 = vmatpush2.msra.mxu0 0.0
    %876 = vmatprep.subr.mxu0 0.0
    %877 = vmatpush2.msra.mxu0 0.0
    %878 = vmatprep.subr.mxu0 0.0
    %879 = vmatpush2.msra.mxu0 0.0
    %880 = vmatprep.subr.mxu0 0.0
    %881 = vmatpush2.msra.mxu0 0.0
    %882 = vmatprep.subr.mxu0 0.0
    %883 = vmatpush2.msra.mxu0 0.0
    %884 = vmatprep.mubr.f32.mxu0 0.0
    %885 = vmatmul.mubr.f32.gmra.mxu0 %v818
    %v886 = vpop.f32.mrf.mxu0
    %v887 = vadd.f32 0.0, %v886
    %v888 = vpop.f32.mrf.mxu0
    %889 = vdwg.mxu0
    %v890 = vadd.f32 %v812, %v887
    %v891 = vxor.u32 %v890, 2147483648
    %v892 = vmul.f32 %v891, 1.442695
    %v893 = vpow.pop %v892
    %v894 = vadd.f32 %v893, 1.0
    %v895 = vrcp.pop %v894
    %v896 = vmul.f32 1.0, %v895
    %v897 = vadd.f32 %v887, %v614
    %899 = vrot.lane.b32.xlu0 %v897, 64
    %v900 = vpop.permute.xlu0 %899
    %v902 = vmul.f32 %v896, %v900
    %904 = vrot.lane.b32.xlu0 %v902, 64
    %v905 = vpop.permute.xlu0 %904
    %v907 = vadd.f32 %v812, %v905
    %v908 = vtanh.pop %v907
    %v909 = vsub.f32 1.0, %v896
    %911 = vrot.lane.b32.xlu0 %v908, 96
    %v912 = vpop.permute.xlu0 %911
    %v914 = vmul.f32 %v909, %v912
    %v915 = vmul.f32 %v896, %v635
    %v916 = vadd.f32 %v914, %v915
    %v918 = vrot.slane %v744, 4
    %919 = vrot.lane.b32.xlu0 %v918, 96
    %v920 = vpop.permute.xlu0 %919
    %v921 = vsel %vm59, %v920, 0
    %923 = vmatprep.subr.mxu0 0.0
    %924 = vmatpush1.msra.mxu0 0.0
    %925 = vmatprep.subr.mxu0 0.0
    %926 = vmatpush1.msra.mxu0 0.0
    %927 = vmatprep.subr.mxu0 0.0
    %928 = vmatpush1.msra.mxu0 0.0
    %929 = vmatprep.subr.mxu0 0.0
    %930 = vmatpush1.msra.mxu0 0.0
    %931 = vmatprep.subr.mxu0 0.0
    %932 = vmatpush1.msra.mxu0 0.0
    %933 = vmatprep.subr.mxu0 0.0
    %934 = vmatpush1.msra.mxu0 0.0
    %935 = vmatprep.subr.mxu0 0.0
    %936 = vmatpush1.msra.mxu0 0.0
    %937 = vmatprep.subr.mxu0 0.0
    %938 = vmatpush1.msra.mxu0 0.0
    %939 = vmatprep.subr.mxu0 0.0
    %940 = vmatpush1.msra.mxu0 0.0
    %941 = vmatprep.subr.mxu0 0.0
    %942 = vmatpush1.msra.mxu0 0.0
    %943 = vmatprep.subr.mxu0 0.0
    %944 = vmatpush1.msra.mxu0 0.0
    %945 = vmatprep.subr.mxu0 0.0
    %946 = vmatpush1.msra.mxu0 0.0
    %947 = vmatprep.subr.mxu0 0.0
    %948 = vmatpush1.msra.mxu0 %v146
    %949 = vmatprep.subr.mxu0 0.0
    %950 = vmatpush1.msra.mxu0 %v145
    %951 = vmatprep.subr.mxu0 0.0
    %952 = vmatpush1.msra.mxu0 %v144
    %953 = vmatprep.subr.mxu0 0.0
    %954 = vmatpush1.msra.mxu0 %v143
    %955 = vmatprep.subr.mxu0 0.0
    %956 = vmatpush2.msra.mxu0 0.0
    %957 = vmatprep.subr.mxu0 0.0
    %958 = vmatpush2.msra.mxu0 0.0
    %959 = vmatprep.subr.mxu0 0.0
    %960 = vmatpush2.msra.mxu0 0.0
    %961 = vmatprep.subr.mxu0 0.0
    %962 = vmatpush2.msra.mxu0 0.0
    %963 = vmatprep.subr.mxu0 0.0
    %964 = vmatpush2.msra.mxu0 0.0
    %965 = vmatprep.subr.mxu0 0.0
    %966 = vmatpush2.msra.mxu0 0.0
    %967 = vmatprep.subr.mxu0 0.0
    %968 = vmatpush2.msra.mxu0 0.0
    %969 = vmatprep.subr.mxu0 0.0
    %970 = vmatpush2.msra.mxu0 0.0
    %971 = vmatprep.subr.mxu0 0.0
    %972 = vmatpush2.msra.mxu0 0.0
    %973 = vmatprep.subr.mxu0 0.0
    %974 = vmatpush2.msra.mxu0 0.0
    %975 = vmatprep.subr.mxu0 0.0
    %976 = vmatpush2.msra.mxu0 0.0
    %977 = vmatprep.subr.mxu0 0.0
    %978 = vmatpush2.msra.mxu0 0.0
    %979 = vmatprep.subr.mxu0 0.0
    %980 = vmatpush2.msra.mxu0 0.0
    %981 = vmatprep.subr.mxu0 0.0
    %982 = vmatpush2.msra.mxu0 0.0
    %983 = vmatprep.subr.mxu0 0.0
    %984 = vmatpush2.msra.mxu0 0.0
    %985 = vmatprep.subr.mxu0 0.0
    %986 = vmatpush2.msra.mxu0 0.0
    %987 = vmatprep.mubr.f32.mxu0 0.0
    %988 = vmatmul.mubr.f32.gmra.mxu0 %v921
    %v989 = vpop.f32.mrf.mxu0
    %v990 = vadd.f32 0.0, %v989
    %v991 = vpop.f32.mrf.mxu0
    %992 = vdwg.mxu0
    %v994 = vrot.slane %v990, 2
    %v996 = vadd.f32 %v245, %v994
    %v997 = vxor.u32 %v996, 2147483648
    %v998 = vmul.f32 %v997, 1.442695
    %v999 = vpow.pop %v998
    %v1000 = vadd.f32 %v999, 1.0
    %v1001 = vrcp.pop %v1000
    %v1002 = vmul.f32 1.0, %v1001
    %v1003 = vadd.f32 %v990, %v335
    %v1005 = vrot.slane %v1003, 2
    %1006 = vrot.lane.b32.xlu0 %v1005, 64
    %v1007 = vpop.permute.xlu0 %1006
    %v1009 = vmul.f32 %v1002, %v1007
    %1011 = vrot.lane.b32.xlu0 %v1009, 64
    %v1012 = vpop.permute.xlu0 %1011
    %v1014 = vadd.f32 %v245, %v1012
    %v1015 = vtanh.pop %v1014
    %v1016 = vsub.f32 1.0, %v1002
    %1018 = vrot.lane.b32.xlu0 %v1015, 96
    %v1019 = vpop.permute.xlu0 %1018
    %v1021 = vmul.f32 %v1016, %v1019
    %v1022 = vrot.slane %v744, 6
    %v1024 = vmul.f32 %v1002, %v1022
    %v1025 = vadd.f32 %v1021, %v1024
    %1026 = vmatprep.subr.mxu0 0.0
    %1027 = vmatpush1.msra.mxu0 0.0
    %1028 = vmatprep.subr.mxu0 0.0
    %1029 = vmatpush1.msra.mxu0 0.0
    %1030 = vmatprep.subr.mxu0 0.0
    %1031 = vmatpush1.msra.mxu0 0.0
    %1032 = vmatprep.subr.mxu0 0.0
    %1033 = vmatpush1.msra.mxu0 0.0
    %1034 = vmatprep.subr.mxu0 0.0
    %1035 = vmatpush1.msra.mxu0 0.0
    %1036 = vmatprep.subr.mxu0 0.0
    %1037 = vmatpush1.msra.mxu0 0.0
    %1038 = vmatprep.subr.mxu0 0.0
    %1039 = vmatpush1.msra.mxu0 0.0
    %1040 = vmatprep.subr.mxu0 0.0
    %1041 = vmatpush1.msra.mxu0 0.0
    %1042 = vmatprep.subr.mxu0 0.0
    %1043 = vmatpush1.msra.mxu0 0.0
    %1044 = vmatprep.subr.mxu0 0.0
    %1045 = vmatpush1.msra.mxu0 0.0
    %1046 = vmatprep.subr.mxu0 0.0
    %1047 = vmatpush1.msra.mxu0 0.0
    %1048 = vmatprep.subr.mxu0 0.0
    %1049 = vmatpush1.msra.mxu0 0.0
    %1050 = vmatprep.subr.mxu0 0.0
    %1051 = vmatpush1.msra.mxu0 %v154
    %1052 = vmatprep.subr.mxu0 0.0
    %1053 = vmatpush1.msra.mxu0 %v153
    %1054 = vmatprep.subr.mxu0 0.0
    %1055 = vmatpush1.msra.mxu0 %v152
    %1056 = vmatprep.subr.mxu0 0.0
    %1057 = vmatpush1.msra.mxu0 %v151
    %1058 = vmatprep.subr.mxu0 0.0
    %1059 = vmatpush2.msra.mxu0 0.0
    %1060 = vmatprep.subr.mxu0 0.0
    %1061 = vmatpush2.msra.mxu0 0.0
    %1062 = vmatprep.subr.mxu0 0.0
    %1063 = vmatpush2.msra.mxu0 0.0
    %1064 = vmatprep.subr.mxu0 0.0
    %1065 = vmatpush2.msra.mxu0 0.0
    %1066 = vmatprep.subr.mxu0 0.0
    %1067 = vmatpush2.msra.mxu0 0.0
    %1068 = vmatprep.subr.mxu0 0.0
    %1069 = vmatpush2.msra.mxu0 0.0
    %1070 = vmatprep.subr.mxu0 0.0
    %1071 = vmatpush2.msra.mxu0 0.0
    %1072 = vmatprep.subr.mxu0 0.0
    %1073 = vmatpush2.msra.mxu0 0.0
    %1074 = vmatprep.subr.mxu0 0.0
    %1075 = vmatpush2.msra.mxu0 0.0
    %1076 = vmatprep.subr.mxu0 0.0
    %1077 = vmatpush2.msra.mxu0 0.0
    %1078 = vmatprep.subr.mxu0 0.0
    %1079 = vmatpush2.msra.mxu0 0.0
    %1080 = vmatprep.subr.mxu0 0.0
    %1081 = vmatpush2.msra.mxu0 0.0
    %1082 = vmatprep.subr.mxu0 0.0
    %1083 = vmatpush2.msra.mxu0 0.0
    %1084 = vmatprep.subr.mxu0 0.0
    %1085 = vmatpush2.msra.mxu0 0.0
    %1086 = vmatprep.subr.mxu0 0.0
    %1087 = vmatpush2.msra.mxu0 0.0
    %1088 = vmatprep.subr.mxu0 0.0
    %1089 = vmatpush2.msra.mxu0 0.0
    %1090 = vmatprep.mubr.f32.mxu0 0.0
    %1091 = vmatmul.mubr.f32.gmra.mxu0 %v921
    %v1092 = vpop.f32.mrf.mxu0
    %v1093 = vadd.f32 %v162, %v1092
    %v1094 = vpop.f32.mrf.mxu0
    %1095 = vdwg.mxu0
    %1097 = vrot.lane.b32.xlu0 %v916, 96
    %v1098 = vpop.permute.xlu0 %1097
    %v1099 = vsel %vm59, %v1098, 0
    %1101 = vmatprep.subr.mxu0 0.0
    %1102 = vmatpush1.msra.mxu0 0.0
    %1103 = vmatprep.subr.mxu0 0.0
    %1104 = vmatpush1.msra.mxu0 0.0
    %1105 = vmatprep.subr.mxu0 0.0
    %1106 = vmatpush1.msra.mxu0 0.0
    %1107 = vmatprep.subr.mxu0 0.0
    %1108 = vmatpush1.msra.mxu0 0.0
    %1109 = vmatprep.subr.mxu0 0.0
    %1110 = vmatpush1.msra.mxu0 0.0
    %1111 = vmatprep.subr.mxu0 0.0
    %1112 = vmatpush1.msra.mxu0 0.0
    %1113 = vmatprep.subr.mxu0 0.0
    %1114 = vmatpush1.msra.mxu0 0.0
    %1115 = vmatprep.subr.mxu0 0.0
    %1116 = vmatpush1.msra.mxu0 0.0
    %1117 = vmatprep.subr.mxu0 0.0
    %1118 = vmatpush1.msra.mxu0 0.0
    %1119 = vmatprep.subr.mxu0 0.0
    %1120 = vmatpush1.msra.mxu0 0.0
    %1121 = vmatprep.subr.mxu0 0.0
    %1122 = vmatpush1.msra.mxu0 0.0
    %1123 = vmatprep.subr.mxu0 0.0
    %1124 = vmatpush1.msra.mxu0 0.0
    %1125 = vmatprep.subr.mxu0 0.0
    %1126 = vmatpush1.msra.mxu0 %v158
    %1127 = vmatprep.subr.mxu0 0.0
    %1128 = vmatpush1.msra.mxu0 %v157
    %1129 = vmatprep.subr.mxu0 0.0
    %1130 = vmatpush1.msra.mxu0 %v156
    %1131 = vmatprep.subr.mxu0 0.0
    %1132 = vmatpush1.msra.mxu0 %v155
    %1133 = vmatprep.subr.mxu0 0.0
    %1134 = vmatpush2.msra.mxu0 0.0
    %1135 = vmatprep.subr.mxu0 0.0
    %1136 = vmatpush2.msra.mxu0 0.0
    %1137 = vmatprep.subr.mxu0 0.0
    %1138 = vmatpush2.msra.mxu0 0.0
    %1139 = vmatprep.subr.mxu0 0.0
    %1140 = vmatpush2.msra.mxu0 0.0
    %1141 = vmatprep.subr.mxu0 0.0
    %1142 = vmatpush2.msra.mxu0 0.0
    %1143 = vmatprep.subr.mxu0 0.0
    %1144 = vmatpush2.msra.mxu0 0.0
    %1145 = vmatprep.subr.mxu0 0.0
    %1146 = vmatpush2.msra.mxu0 0.0
    %1147 = vmatprep.subr.mxu0 0.0
    %1148 = vmatpush2.msra.mxu0 0.0
    %1149 = vmatprep.subr.mxu0 0.0
    %1150 = vmatpush2.msra.mxu0 0.0
    %1151 = vmatprep.subr.mxu0 0.0
    %1152 = vmatpush2.msra.mxu0 0.0
    %1153 = vmatprep.subr.mxu0 0.0
    %1154 = vmatpush2.msra.mxu0 0.0
    %1155 = vmatprep.subr.mxu0 0.0
    %1156 = vmatpush2.msra.mxu0 0.0
    %1157 = vmatprep.subr.mxu0 0.0
    %1158 = vmatpush2.msra.mxu0 0.0
    %1159 = vmatprep.subr.mxu0 0.0
    %1160 = vmatpush2.msra.mxu0 0.0
    %1161 = vmatprep.subr.mxu0 0.0
    %1162 = vmatpush2.msra.mxu0 0.0
    %1163 = vmatprep.subr.mxu0 0.0
    %1164 = vmatpush2.msra.mxu0 0.0
    %1165 = vmatprep.mubr.f32.mxu0 0.0
    %1166 = vmatmul.mubr.f32.gmra.mxu0 %v1099
    %v1167 = vpop.f32.mrf.mxu0
    %v1168 = vadd.f32 0.0, %v1167
    %v1169 = vpop.f32.mrf.mxu0
    %1170 = vdwg.mxu0
    %v1171 = vadd.f32 %v1093, %v1168
    %v1172 = vxor.u32 %v1171, 2147483648
    %v1173 = vmul.f32 %v1172, 1.442695
    %v1174 = vpow.pop %v1173
    %v1175 = vadd.f32 %v1174, 1.0
    %v1176 = vrcp.pop %v1175
    %v1177 = vmul.f32 1.0, %v1176
    %v1178 = vadd.f32 %v1168, %v614
    %1180 = vrot.lane.b32.xlu0 %v1178, 64
    %v1181 = vpop.permute.xlu0 %1180
    %v1183 = vmul.f32 %v1177, %v1181
    %1185 = vrot.lane.b32.xlu0 %v1183, 64
    %v1186 = vpop.permute.xlu0 %1185
    %v1188 = vadd.f32 %v1093, %v1186
    %v1189 = vtanh.pop %v1188
    %v1190 = vsub.f32 1.0, %v1177
    %1192 = vrot.lane.b32.xlu0 %v1189, 96
    %v1193 = vpop.permute.xlu0 %1192
    %v1195 = vmul.f32 %v1190, %v1193
    %v1196 = vmul.f32 %v1177, %v916
    %v1197 = vadd.f32 %v1195, %v1196
    %v1199 = vrot.slane %v1025, 6
    %1200 = vrot.lane.b32.xlu0 %v1199, 96
    %v1201 = vpop.permute.xlu0 %1200
    %v1202 = vsel %vm59, %v1201, 0
    %1204 = vmatprep.subr.mxu0 0.0
    %1205 = vmatpush1.msra.mxu0 0.0
    %1206 = vmatprep.subr.mxu0 0.0
    %1207 = vmatpush1.msra.mxu0 0.0
    %1208 = vmatprep.subr.mxu0 0.0
    %1209 = vmatpush1.msra.mxu0 0.0
    %1210 = vmatprep.subr.mxu0 0.0
    %1211 = vmatpush1.msra.mxu0 0.0
    %1212 = vmatprep.subr.mxu0 0.0
    %1213 = vmatpush1.msra.mxu0 0.0
    %1214 = vmatprep.subr.mxu0 0.0
    %1215 = vmatpush1.msra.mxu0 0.0
    %1216 = vmatprep.subr.mxu0 0.0
    %1217 = vmatpush1.msra.mxu0 0.0
    %1218 = vmatprep.subr.mxu0 0.0
    %1219 = vmatpush1.msra.mxu0 0.0
    %1220 = vmatprep.subr.mxu0 0.0
    %1221 = vmatpush1.msra.mxu0 0.0
    %1222 = vmatprep.subr.mxu0 0.0
    %1223 = vmatpush1.msra.mxu0 0.0
    %1224 = vmatprep.subr.mxu0 0.0
    %1225 = vmatpush1.msra.mxu0 0.0
    %1226 = vmatprep.subr.mxu0 0.0
    %1227 = vmatpush1.msra.mxu0 0.0
    %1228 = vmatprep.subr.mxu0 0.0
    %1229 = vmatpush1.msra.mxu0 %v146
    %1230 = vmatprep.subr.mxu0 0.0
    %1231 = vmatpush1.msra.mxu0 %v145
    %1232 = vmatprep.subr.mxu0 0.0
    %1233 = vmatpush1.msra.mxu0 %v144
    %1234 = vmatprep.subr.mxu0 0.0
    %1235 = vmatpush1.msra.mxu0 %v143
    %1236 = vmatprep.subr.mxu0 0.0
    %1237 = vmatpush2.msra.mxu0 0.0
    %1238 = vmatprep.subr.mxu0 0.0
    %1239 = vmatpush2.msra.mxu0 0.0
    %1240 = vmatprep.subr.mxu0 0.0
    %1241 = vmatpush2.msra.mxu0 0.0
    %1242 = vmatprep.subr.mxu0 0.0
    %1243 = vmatpush2.msra.mxu0 0.0
    %1244 = vmatprep.subr.mxu0 0.0
    %1245 = vmatpush2.msra.mxu0 0.0
    %1246 = vmatprep.subr.mxu0 0.0
    %1247 = vmatpush2.msra.mxu0 0.0
    %1248 = vmatprep.subr.mxu0 0.0
    %1249 = vmatpush2.msra.mxu0 0.0
    %1250 = vmatprep.subr.mxu0 0.0
    %1251 = vmatpush2.msra.mxu0 0.0
    %1252 = vmatprep.subr.mxu0 0.0
    %1253 = vmatpush2.msra.mxu0 0.0
    %1254 = vmatprep.subr.mxu0 0.0
    %1255 = vmatpush2.msra.mxu0 0.0
    %1256 = vmatprep.subr.mxu0 0.0
    %1257 = vmatpush2.msra.mxu0 0.0
    %1258 = vmatprep.subr.mxu0 0.0
    %1259 = vmatpush2.msra.mxu0 0.0
    %1260 = vmatprep.subr.mxu0 0.0
    %1261 = vmatpush2.msra.mxu0 0.0
    %1262 = vmatprep.subr.mxu0 0.0
    %1263 = vmatpush2.msra.mxu0 0.0
    %1264 = vmatprep.subr.mxu0 0.0
    %1265 = vmatpush2.msra.mxu0 0.0
    %1266 = vmatprep.subr.mxu0 0.0
    %1267 = vmatpush2.msra.mxu0 0.0
    %1268 = vmatprep.mubr.f32.mxu0 0.0
    %1269 = vmatmul.mubr.f32.gmra.mxu0 %v1202
    %v1270 = vpop.f32.mrf.mxu0
    %v1271 = vadd.f32 0.0, %v1270
    %v1272 = vpop.f32.mrf.mxu0
    %1273 = vdwg.mxu0
    %v1274 = vadd.f32 %v250, %v1271
    %v1275 = vxor.u32 %v1274, 2147483648
    %v1276 = vmul.f32 %v1275, 1.442695
    %v1277 = vpow.pop %v1276
    %v1278 = vadd.f32 %v1277, 1.0
    %v1279 = vrcp.pop %v1278
    %v1280 = vmul.f32 1.0, %v1279
    %v1281 = vadd.f32 %v1271, %v335
    %1283 = vrot.lane.b32.xlu0 %v1281, 64
    %v1284 = vpop.permute.xlu0 %1283
    %v1286 = vmul.f32 %v1280, %v1284
    %1288 = vrot.lane.b32.xlu0 %v1286, 64
    %v1289 = vpop.permute.xlu0 %1288
    %v1291 = vadd.f32 %v250, %v1289
    %v1292 = vtanh.pop %v1291
    %v1293 = vsub.f32 1.0, %v1280
    %1295 = vrot.lane.b32.xlu0 %v1292, 96
    %v1296 = vpop.permute.xlu0 %1295
    %v1298 = vmul.f32 %v1293, %v1296
    %v1300 = vmul.f32 %v1280, %v1199
    %v1301 = vadd.f32 %v1298, %v1300
    %1302 = vmatprep.subr.mxu0 0.0
    %1303 = vmatpush1.msra.mxu0 0.0
    %1304 = vmatprep.subr.mxu0 0.0
    %1305 = vmatpush1.msra.mxu0 0.0
    %1306 = vmatprep.subr.mxu0 0.0
    %1307 = vmatpush1.msra.mxu0 0.0
    %1308 = vmatprep.subr.mxu0 0.0
    %1309 = vmatpush1.msra.mxu0 0.0
    %1310 = vmatprep.subr.mxu0 0.0
    %1311 = vmatpush1.msra.mxu0 0.0
    %1312 = vmatprep.subr.mxu0 0.0
    %1313 = vmatpush1.msra.mxu0 0.0
    %1314 = vmatprep.subr.mxu0 0.0
    %1315 = vmatpush1.msra.mxu0 0.0
    %1316 = vmatprep.subr.mxu0 0.0
    %1317 = vmatpush1.msra.mxu0 0.0
    %1318 = vmatprep.subr.mxu0 0.0
    %1319 = vmatpush1.msra.mxu0 0.0
    %1320 = vmatprep.subr.mxu0 0.0
    %1321 = vmatpush1.msra.mxu0 0.0
    %1322 = vmatprep.subr.mxu0 0.0
    %1323 = vmatpush1.msra.mxu0 0.0
    %1324 = vmatprep.subr.mxu0 0.0
    %1325 = vmatpush1.msra.mxu0 0.0
    %1326 = vmatprep.subr.mxu0 0.0
    %1327 = vmatpush1.msra.mxu0 %v154
    %1328 = vmatprep.subr.mxu0 0.0
    %1329 = vmatpush1.msra.mxu0 %v153
    %1330 = vmatprep.subr.mxu0 0.0
    %1331 = vmatpush1.msra.mxu0 %v152
    %1332 = vmatprep.subr.mxu0 0.0
    %1333 = vmatpush1.msra.mxu0 %v151
    %1334 = vmatprep.subr.mxu0 0.0
    %1335 = vmatpush2.msra.mxu0 0.0
    %1336 = vmatprep.subr.mxu0 0.0
    %1337 = vmatpush2.msra.mxu0 0.0
    %1338 = vmatprep.subr.mxu0 0.0
    %1339 = vmatpush2.msra.mxu0 0.0
    %1340 = vmatprep.subr.mxu0 0.0
    %1341 = vmatpush2.msra.mxu0 0.0
    %1342 = vmatprep.subr.mxu0 0.0
    %1343 = vmatpush2.msra.mxu0 0.0
    %1344 = vmatprep.subr.mxu0 0.0
    %1345 = vmatpush2.msra.mxu0 0.0
    %1346 = vmatprep.subr.mxu0 0.0
    %1347 = vmatpush2.msra.mxu0 0.0
    %1348 = vmatprep.subr.mxu0 0.0
    %1349 = vmatpush2.msra.mxu0 0.0
    %1350 = vmatprep.subr.mxu0 0.0
    %1351 = vmatpush2.msra.mxu0 0.0
    %1352 = vmatprep.subr.mxu0 0.0
    %1353 = vmatpush2.msra.mxu0 0.0
    %1354 = vmatprep.subr.mxu0 0.0
    %1355 = vmatpush2.msra.mxu0 0.0
    %1356 = vmatprep.subr.mxu0 0.0
    %1357 = vmatpush2.msra.mxu0 0.0
    %1358 = vmatprep.subr.mxu0 0.0
    %1359 = vmatpush2.msra.mxu0 0.0
    %1360 = vmatprep.subr.mxu0 0.0
    %1361 = vmatpush2.msra.mxu0 0.0
    %1362 = vmatprep.subr.mxu0 0.0
    %1363 = vmatpush2.msra.mxu0 0.0
    %1364 = vmatprep.subr.mxu0 0.0
    %1365 = vmatpush2.msra.mxu0 0.0
    %1366 = vmatprep.mubr.f32.mxu0 0.0
    %1367 = vmatmul.mubr.f32.gmra.mxu0 %v1202
    %v1368 = vpop.f32.mrf.mxu0
    %v1369 = vadd.f32 %v162, %v1368
    %v1370 = vpop.f32.mrf.mxu0
    %1371 = vdwg.mxu0
    %1373 = vrot.lane.b32.xlu0 %v1197, 96
    %v1374 = vpop.permute.xlu0 %1373
    %v1375 = vsel %vm59, %v1374, 0
    %1377 = vmatprep.subr.mxu0 0.0
    %1378 = vmatpush1.msra.mxu0 0.0
    %1379 = vmatprep.subr.mxu0 0.0
    %1380 = vmatpush1.msra.mxu0 0.0
    %1381 = vmatprep.subr.mxu0 0.0
    %1382 = vmatpush1.msra.mxu0 0.0
    %1383 = vmatprep.subr.mxu0 0.0
    %1384 = vmatpush1.msra.mxu0 0.0
    %1385 = vmatprep.subr.mxu0 0.0
    %1386 = vmatpush1.msra.mxu0 0.0
    %1387 = vmatprep.subr.mxu0 0.0
    %1388 = vmatpush1.msra.mxu0 0.0
    %1389 = vmatprep.subr.mxu0 0.0
    %1390 = vmatpush1.msra.mxu0 0.0
    %1391 = vmatprep.subr.mxu0 0.0
    %1392 = vmatpush1.msra.mxu0 0.0
    %1393 = vmatprep.subr.mxu0 0.0
    %1394 = vmatpush1.msra.mxu0 0.0
    %1395 = vmatprep.subr.mxu0 0.0
    %1396 = vmatpush1.msra.mxu0 0.0
    %1397 = vmatprep.subr.mxu0 0.0
    %1398 = vmatpush1.msra.mxu0 0.0
    %1399 = vmatprep.subr.mxu0 0.0
    %1400 = vmatpush1.msra.mxu0 0.0
    %1401 = vmatprep.subr.mxu0 0.0
    %1402 = vmatpush1.msra.mxu0 %v158
    %1403 = vmatprep.subr.mxu0 0.0
    %1404 = vmatpush1.msra.mxu0 %v157
    %1405 = vmatprep.subr.mxu0 0.0
    %1406 = vmatpush1.msra.mxu0 %v156
    %1407 = vmatprep.subr.mxu0 0.0
    %1408 = vmatpush1.msra.mxu0 %v155
    %1409 = vmatprep.subr.mxu0 0.0
    %1410 = vmatpush2.msra.mxu0 0.0
    %1411 = vmatprep.subr.mxu0 0.0
    %1412 = vmatpush2.msra.mxu0 0.0
    %1413 = vmatprep.subr.mxu0 0.0
    %1414 = vmatpush2.msra.mxu0 0.0
    %1415 = vmatprep.subr.mxu0 0.0
    %1416 = vmatpush2.msra.mxu0 0.0
    %1417 = vmatprep.subr.mxu0 0.0
    %1418 = vmatpush2.msra.mxu0 0.0
    %1419 = vmatprep.subr.mxu0 0.0
    %1420 = vmatpush2.msra.mxu0 0.0
    %1421 = vmatprep.subr.mxu0 0.0
    %1422 = vmatpush2.msra.mxu0 0.0
    %1423 = vmatprep.subr.mxu0 0.0
    %1424 = vmatpush2.msra.mxu0 0.0
    %1425 = vmatprep.subr.mxu0 0.0
    %1426 = vmatpush2.msra.mxu0 0.0
    %1427 = vmatprep.subr.mxu0 0.0
    %1428 = vmatpush2.msra.mxu0 0.0
    %1429 = vmatprep.subr.mxu0 0.0
    %1430 = vmatpush2.msra.mxu0 0.0
    %1431 = vmatprep.subr.mxu0 0.0
    %1432 = vmatpush2.msra.mxu0 0.0
    %1433 = vmatprep.subr.mxu0 0.0
    %1434 = vmatpush2.msra.mxu0 0.0
    %1435 = vmatprep.subr.mxu0 0.0
    %1436 = vmatpush2.msra.mxu0 0.0
    %1437 = vmatprep.subr.mxu0 0.0
    %1438 = vmatpush2.msra.mxu0 0.0
    %1439 = vmatprep.subr.mxu0 0.0
    %1440 = vmatpush2.msra.mxu0 0.0
    %1441 = vmatprep.mubr.f32.mxu0 0.0
    %1442 = vmatmul.mubr.f32.gmra.mxu0 %v1375
    %v1443 = vpop.f32.mrf.mxu0
    %v1444 = vadd.f32 0.0, %v1443
    %v1445 = vpop.f32.mrf.mxu0
    %1446 = vdwg.mxu0
    %v1447 = vadd.f32 %v1369, %v1444
    %v1448 = vxor.u32 %v1447, 2147483648
    %v1449 = vmul.f32 %v1448, 1.442695
    %v1450 = vpow.pop %v1449
    %v1451 = vadd.f32 %v1450, 1.0
    %v1452 = vrcp.pop %v1451
    %v1453 = vmul.f32 1.0, %v1452
    %v1454 = vadd.f32 %v1444, %v614
    %1456 = vrot.lane.b32.xlu0 %v1454, 64
    %v1457 = vpop.permute.xlu0 %1456
    %v1459 = vmul.f32 %v1453, %v1457
    %1461 = vrot.lane.b32.xlu0 %v1459, 64
    %v1462 = vpop.permute.xlu0 %1461
    %v1464 = vadd.f32 %v1369, %v1462
    %v1465 = vtanh.pop %v1464
    %v1466 = vsub.f32 1.0, %v1453
    %1468 = vrot.lane.b32.xlu0 %v1465, 96
    %v1469 = vpop.permute.xlu0 %1468
    %v1471 = vmul.f32 %v1466, %v1469
    %v1472 = vmul.f32 %v1453, %v1197
    %v1473 = vadd.f32 %v1471, %v1472
    %1475 = vrot.lane.b32.xlu0 %v1301, 96
    %v1476 = vpop.permute.xlu0 %1475
    %v1477 = vsel %vm59, %v1476, 0
    %1479 = vmatprep.subr.mxu0 0.0
    %1480 = vmatpush1.msra.mxu0 0.0
    %1481 = vmatprep.subr.mxu0 0.0
    %1482 = vmatpush1.msra.mxu0 0.0
    %1483 = vmatprep.subr.mxu0 0.0
    %1484 = vmatpush1.msra.mxu0 0.0
    %1485 = vmatprep.subr.mxu0 0.0
    %1486 = vmatpush1.msra.mxu0 0.0
    %1487 = vmatprep.subr.mxu0 0.0
    %1488 = vmatpush1.msra.mxu0 0.0
    %1489 = vmatprep.subr.mxu0 0.0
    %1490 = vmatpush1.msra.mxu0 0.0
    %1491 = vmatprep.subr.mxu0 0.0
    %1492 = vmatpush1.msra.mxu0 0.0
    %1493 = vmatprep.subr.mxu0 0.0
    %1494 = vmatpush1.msra.mxu0 0.0
    %1495 = vmatprep.subr.mxu0 0.0
    %1496 = vmatpush1.msra.mxu0 0.0
    %1497 = vmatprep.subr.mxu0 0.0
    %1498 = vmatpush1.msra.mxu0 0.0
    %1499 = vmatprep.subr.mxu0 0.0
    %1500 = vmatpush1.msra.mxu0 0.0
    %1501 = vmatprep.subr.mxu0 0.0
    %1502 = vmatpush1.msra.mxu0 0.0
    %1503 = vmatprep.subr.mxu0 0.0
    %1504 = vmatpush1.msra.mxu0 %v146
    %1505 = vmatprep.subr.mxu0 0.0
    %1506 = vmatpush1.msra.mxu0 %v145
    %1507 = vmatprep.subr.mxu0 0.0
    %1508 = vmatpush1.msra.mxu0 %v144
    %1509 = vmatprep.subr.mxu0 0.0
    %1510 = vmatpush1.msra.mxu0 %v143
    %1511 = vmatprep.subr.mxu0 0.0
    %1512 = vmatpush2.msra.mxu0 0.0
    %1513 = vmatprep.subr.mxu0 0.0
    %1514 = vmatpush2.msra.mxu0 0.0
    %1515 = vmatprep.subr.mxu0 0.0
    %1516 = vmatpush2.msra.mxu0 0.0
    %1517 = vmatprep.subr.mxu0 0.0
    %1518 = vmatpush2.msra.mxu0 0.0
    %1519 = vmatprep.subr.mxu0 0.0
    %1520 = vmatpush2.msra.mxu0 0.0
    %1521 = vmatprep.subr.mxu0 0.0
    %1522 = vmatpush2.msra.mxu0 0.0
    %1523 = vmatprep.subr.mxu0 0.0
    %1524 = vmatpush2.msra.mxu0 0.0
    %1525 = vmatprep.subr.mxu0 0.0
    %1526 = vmatpush2.msra.mxu0 0.0
    %1527 = vmatprep.subr.mxu0 0.0
    %1528 = vmatpush2.msra.mxu0 0.0
    %1529 = vmatprep.subr.mxu0 0.0
    %1530 = vmatpush2.msra.mxu0 0.0
    %1531 = vmatprep.subr.mxu0 0.0
    %1532 = vmatpush2.msra.mxu0 0.0
    %1533 = vmatprep.subr.mxu0 0.0
    %1534 = vmatpush2.msra.mxu0 0.0
    %1535 = vmatprep.subr.mxu0 0.0
    %1536 = vmatpush2.msra.mxu0 0.0
    %1537 = vmatprep.subr.mxu0 0.0
    %1538 = vmatpush2.msra.mxu0 0.0
    %1539 = vmatprep.subr.mxu0 0.0
    %1540 = vmatpush2.msra.mxu0 0.0
    %1541 = vmatprep.subr.mxu0 0.0
    %1542 = vmatpush2.msra.mxu0 0.0
    %1543 = vmatprep.mubr.f32.mxu0 0.0
    %1544 = vmatmul.mubr.f32.gmra.mxu0 %v1477
    %v1545 = vpop.f32.mrf.mxu0
    %v1546 = vadd.f32 0.0, %v1545
    %v1547 = vpop.f32.mrf.mxu0
    %1548 = vdwg.mxu0
    %v1550 = vrot.slane %v1546, 6
    %v1552 = vadd.f32 %v250, %v1550
    %v1553 = vxor.u32 %v1552, 2147483648
    %v1554 = vmul.f32 %v1553, 1.442695
    %v1555 = vpow.pop %v1554
    %v1556 = vadd.f32 %v1555, 1.0
    %v1557 = vrcp.pop %v1556
    %v1558 = vmul.f32 1.0, %v1557
    %v1559 = vadd.f32 %v1546, %v335
    %v1561 = vrot.slane %v1559, 6
    %1562 = vrot.lane.b32.xlu0 %v1561, 64
    %v1563 = vpop.permute.xlu0 %1562
    %v1565 = vmul.f32 %v1558, %v1563
    %1567 = vrot.lane.b32.xlu0 %v1565, 64
    %v1568 = vpop.permute.xlu0 %1567
    %v1570 = vadd.f32 %v250, %v1568
    %v1571 = vtanh.pop %v1570
    %v1572 = vsub.f32 1.0, %v1558
    %1574 = vrot.lane.b32.xlu0 %v1571, 96
    %v1575 = vpop.permute.xlu0 %1574
    %v1577 = vmul.f32 %v1572, %v1575
    %v1578 = vrot.slane %v1301, 6
    %v1580 = vmul.f32 %v1558, %v1578
    %v1581 = vadd.f32 %v1577, %v1580
    %1582 = vmatprep.subr.mxu0 0.0
    %1583 = vmatpush1.msra.mxu0 0.0
    %1584 = vmatprep.subr.mxu0 0.0
    %1585 = vmatpush1.msra.mxu0 0.0
    %1586 = vmatprep.subr.mxu0 0.0
    %1587 = vmatpush1.msra.mxu0 0.0
    %1588 = vmatprep.subr.mxu0 0.0
    %1589 = vmatpush1.msra.mxu0 0.0
    %1590 = vmatprep.subr.mxu0 0.0
    %1591 = vmatpush1.msra.mxu0 0.0
    %1592 = vmatprep.subr.mxu0 0.0
    %1593 = vmatpush1.msra.mxu0 0.0
    %1594 = vmatprep.subr.mxu0 0.0
    %1595 = vmatpush1.msra.mxu0 0.0
    %1596 = vmatprep.subr.mxu0 0.0
    %1597 = vmatpush1.msra.mxu0 0.0
    %1598 = vmatprep.subr.mxu0 0.0
    %1599 = vmatpush1.msra.mxu0 0.0
    %1600 = vmatprep.subr.mxu0 0.0
    %1601 = vmatpush1.msra.mxu0 0.0
    %1602 = vmatprep.subr.mxu0 0.0
    %1603 = vmatpush1.msra.mxu0 0.0
    %1604 = vmatprep.subr.mxu0 0.0
    %1605 = vmatpush1.msra.mxu0 0.0
    %1606 = vmatprep.subr.mxu0 0.0
    %1607 = vmatpush1.msra.mxu0 %v154
    %1608 = vmatprep.subr.mxu0 0.0
    %1609 = vmatpush1.msra.mxu0 %v153
    %1610 = vmatprep.subr.mxu0 0.0
    %1611 = vmatpush1.msra.mxu0 %v152
    %1612 = vmatprep.subr.mxu0 0.0
    %1613 = vmatpush1.msra.mxu0 %v151
    %1614 = vmatprep.subr.mxu0 0.0
    %1615 = vmatpush2.msra.mxu0 0.0
    %1616 = vmatprep.subr.mxu0 0.0
    %1617 = vmatpush2.msra.mxu0 0.0
    %1618 = vmatprep.subr.mxu0 0.0
    %1619 = vmatpush2.msra.mxu0 0.0
    %1620 = vmatprep.subr.mxu0 0.0
    %1621 = vmatpush2.msra.mxu0 0.0
    %1622 = vmatprep.subr.mxu0 0.0
    %1623 = vmatpush2.msra.mxu0 0.0
    %1624 = vmatprep.subr.mxu0 0.0
    %1625 = vmatpush2.msra.mxu0 0.0
    %1626 = vmatprep.subr.mxu0 0.0
    %1627 = vmatpush2.msra.mxu0 0.0
    %1628 = vmatprep.subr.mxu0 0.0
    %1629 = vmatpush2.msra.mxu0 0.0
    %1630 = vmatprep.subr.mxu0 0.0
    %1631 = vmatpush2.msra.mxu0 0.0
    %1632 = vmatprep.subr.mxu0 0.0
    %1633 = vmatpush2.msra.mxu0 0.0
    %1634 = vmatprep.subr.mxu0 0.0
    %1635 = vmatpush2.msra.mxu0 0.0
    %1636 = vmatprep.subr.mxu0 0.0
    %1637 = vmatpush2.msra.mxu0 0.0
    %1638 = vmatprep.subr.mxu0 0.0
    %1639 = vmatpush2.msra.mxu0 0.0
    %1640 = vmatprep.subr.mxu0 0.0
    %1641 = vmatpush2.msra.mxu0 0.0
    %1642 = vmatprep.subr.mxu0 0.0
    %1643 = vmatpush2.msra.mxu0 0.0
    %1644 = vmatprep.subr.mxu0 0.0
    %1645 = vmatpush2.msra.mxu0 0.0
    %1646 = vmatprep.mubr.f32.mxu0 0.0
    %1647 = vmatmul.mubr.f32.gmra.mxu0 %v1477
    %v1648 = vpop.f32.mrf.mxu0
    %v1649 = vadd.f32 %v162, %v1648
    %v1650 = vpop.f32.mrf.mxu0
    %1651 = vdwg.mxu0
    %1653 = vrot.lane.b32.xlu0 %v1473, 96
    %v1654 = vpop.permute.xlu0 %1653
    %v1655 = vsel %vm59, %v1654, 0
    %1657 = vmatprep.subr.mxu0 0.0
    %1658 = vmatpush1.msra.mxu0 0.0
    %1659 = vmatprep.subr.mxu0 0.0
    %1660 = vmatpush1.msra.mxu0 0.0
    %1661 = vmatprep.subr.mxu0 0.0
    %1662 = vmatpush1.msra.mxu0 0.0
    %1663 = vmatprep.subr.mxu0 0.0
    %1664 = vmatpush1.msra.mxu0 0.0
    %1665 = vmatprep.subr.mxu0 0.0
    %1666 = vmatpush1.msra.mxu0 0.0
    %1667 = vmatprep.subr.mxu0 0.0
    %1668 = vmatpush1.msra.mxu0 0.0
    %1669 = vmatprep.subr.mxu0 0.0
    %1670 = vmatpush1.msra.mxu0 0.0
    %1671 = vmatprep.subr.mxu0 0.0
    %1672 = vmatpush1.msra.mxu0 0.0
    %1673 = vmatprep.subr.mxu0 0.0
    %1674 = vmatpush1.msra.mxu0 0.0
    %1675 = vmatprep.subr.mxu0 0.0
    %1676 = vmatpush1.msra.mxu0 0.0
    %1677 = vmatprep.subr.mxu0 0.0
    %1678 = vmatpush1.msra.mxu0 0.0
    %1679 = vmatprep.subr.mxu0 0.0
    %1680 = vmatpush1.msra.mxu0 0.0
    %1681 = vmatprep.subr.mxu0 0.0
    %1682 = vmatpush1.msra.mxu0 %v158
    %1683 = vmatprep.subr.mxu0 0.0
    %1684 = vmatpush1.msra.mxu0 %v157
    %1685 = vmatprep.subr.mxu0 0.0
    %1686 = vmatpush1.msra.mxu0 %v156
    %1687 = vmatprep.subr.mxu0 0.0
    %1688 = vmatpush1.msra.mxu0 %v155
    %1689 = vmatprep.subr.mxu0 0.0
    %1690 = vmatpush2.msra.mxu0 0.0
    %1691 = vmatprep.subr.mxu0 0.0
    %1692 = vmatpush2.msra.mxu0 0.0
    %1693 = vmatprep.subr.mxu0 0.0
    %1694 = vmatpush2.msra.mxu0 0.0
    %1695 = vmatprep.subr.mxu0 0.0
    %1696 = vmatpush2.msra.mxu0 0.0
    %1697 = vmatprep.subr.mxu0 0.0
    %1698 = vmatpush2.msra.mxu0 0.0
    %1699 = vmatprep.subr.mxu0 0.0
    %1700 = vmatpush2.msra.mxu0 0.0
    %1701 = vmatprep.subr.mxu0 0.0
    %1702 = vmatpush2.msra.mxu0 0.0
    %1703 = vmatprep.subr.mxu0 0.0
    %1704 = vmatpush2.msra.mxu0 0.0
    %1705 = vmatprep.subr.mxu0 0.0
    %1706 = vmatpush2.msra.mxu0 0.0
    %1707 = vmatprep.subr.mxu0 0.0
    %1708 = vmatpush2.msra.mxu0 0.0
    %1709 = vmatprep.subr.mxu0 0.0
    %1710 = vmatpush2.msra.mxu0 0.0
    %1711 = vmatprep.subr.mxu0 0.0
    %1712 = vmatpush2.msra.mxu0 0.0
    %1713 = vmatprep.subr.mxu0 0.0
    %1714 = vmatpush2.msra.mxu0 0.0
    %1715 = vmatprep.subr.mxu0 0.0
    %1716 = vmatpush2.msra.mxu0 0.0
    %1717 = vmatprep.subr.mxu0 0.0
    %1718 = vmatpush2.msra.mxu0 0.0
    %1719 = vmatprep.subr.mxu0 0.0
    %1720 = vmatpush2.msra.mxu0 0.0
    %1721 = vmatprep.mubr.f32.mxu0 0.0
    %1722 = vmatmul.mubr.f32.gmra.mxu0 %v1655
    %v1723 = vpop.f32.mrf.mxu0
    %v1724 = vadd.f32 0.0, %v1723
    %v1725 = vpop.f32.mrf.mxu0
    %1726 = vdwg.mxu0
    %v1727 = vadd.f32 %v1649, %v1724
    %v1728 = vxor.u32 %v1727, 2147483648
    %v1729 = vmul.f32 %v1728, 1.442695
    %v1730 = vpow.pop %v1729
    %v1731 = vadd.f32 %v1730, 1.0
    %v1732 = vrcp.pop %v1731
    %v1733 = vmul.f32 1.0, %v1732
    %v1734 = vadd.f32 %v1724, %v614
    %1736 = vrot.lane.b32.xlu0 %v1734, 64
    %v1737 = vpop.permute.xlu0 %1736
    %v1739 = vmul.f32 %v1733, %v1737
    %1741 = vrot.lane.b32.xlu0 %v1739, 64
    %v1742 = vpop.permute.xlu0 %1741
    %v1744 = vadd.f32 %v1649, %v1742
    %v1745 = vtanh.pop %v1744
    %v1746 = vsub.f32 1.0, %v1733
    %1748 = vrot.lane.b32.xlu0 %v1745, 96
    %v1749 = vpop.permute.xlu0 %1748
    %v1751 = vmul.f32 %v1746, %v1749
    %v1752 = vmul.f32 %v1733, %v1473
    %v1753 = vadd.f32 %v1751, %v1752
    %v1755 = vrot.slane %v1581, 2
    %1756 = vrot.lane.b32.xlu0 %v1755, 96
    %v1757 = vpop.permute.xlu0 %1756
    %v1758 = vsel %vm59, %v1757, 0
    %1760 = vmatprep.subr.mxu0 0.0
    %1761 = vmatpush1.msra.mxu0 0.0
    %1762 = vmatprep.subr.mxu0 0.0
    %1763 = vmatpush1.msra.mxu0 0.0
    %1764 = vmatprep.subr.mxu0 0.0
    %1765 = vmatpush1.msra.mxu0 0.0
    %1766 = vmatprep.subr.mxu0 0.0
    %1767 = vmatpush1.msra.mxu0 0.0
    %1768 = vmatprep.subr.mxu0 0.0
    %1769 = vmatpush1.msra.mxu0 0.0
    %1770 = vmatprep.subr.mxu0 0.0
    %1771 = vmatpush1.msra.mxu0 0.0
    %1772 = vmatprep.subr.mxu0 0.0
    %1773 = vmatpush1.msra.mxu0 0.0
    %1774 = vmatprep.subr.mxu0 0.0
    %1775 = vmatpush1.msra.mxu0 0.0
    %1776 = vmatprep.subr.mxu0 0.0
    %1777 = vmatpush1.msra.mxu0 0.0
    %1778 = vmatprep.subr.mxu0 0.0
    %1779 = vmatpush1.msra.mxu0 0.0
    %1780 = vmatprep.subr.mxu0 0.0
    %1781 = vmatpush1.msra.mxu0 0.0
    %1782 = vmatprep.subr.mxu0 0.0
    %1783 = vmatpush1.msra.mxu0 0.0
    %1784 = vmatprep.subr.mxu0 0.0
    %1785 = vmatpush1.msra.mxu0 %v146
    %1786 = vmatprep.subr.mxu0 0.0
    %1787 = vmatpush1.msra.mxu0 %v145
    %1788 = vmatprep.subr.mxu0 0.0
    %1789 = vmatpush1.msra.mxu0 %v144
    %1790 = vmatprep.subr.mxu0 0.0
    %1791 = vmatpush1.msra.mxu0 %v143
    %1792 = vmatprep.subr.mxu0 0.0
    %1793 = vmatpush2.msra.mxu0 0.0
    %1794 = vmatprep.subr.mxu0 0.0
    %1795 = vmatpush2.msra.mxu0 0.0
    %1796 = vmatprep.subr.mxu0 0.0
    %1797 = vmatpush2.msra.mxu0 0.0
    %1798 = vmatprep.subr.mxu0 0.0
    %1799 = vmatpush2.msra.mxu0 0.0
    %1800 = vmatprep.subr.mxu0 0.0
    %1801 = vmatpush2.msra.mxu0 0.0
    %1802 = vmatprep.subr.mxu0 0.0
    %1803 = vmatpush2.msra.mxu0 0.0
    %1804 = vmatprep.subr.mxu0 0.0
    %1805 = vmatpush2.msra.mxu0 0.0
    %1806 = vmatprep.subr.mxu0 0.0
    %1807 = vmatpush2.msra.mxu0 0.0
    %1808 = vmatprep.subr.mxu0 0.0
    %1809 = vmatpush2.msra.mxu0 0.0
    %1810 = vmatprep.subr.mxu0 0.0
    %1811 = vmatpush2.msra.mxu0 0.0
    %1812 = vmatprep.subr.mxu0 0.0
    %1813 = vmatpush2.msra.mxu0 0.0
    %1814 = vmatprep.subr.mxu0 0.0
    %1815 = vmatpush2.msra.mxu0 0.0
    %1816 = vmatprep.subr.mxu0 0.0
    %1817 = vmatpush2.msra.mxu0 0.0
    %1818 = vmatprep.subr.mxu0 0.0
    %1819 = vmatpush2.msra.mxu0 0.0
    %1820 = vmatprep.subr.mxu0 0.0
    %1821 = vmatpush2.msra.mxu0 0.0
    %1822 = vmatprep.subr.mxu0 0.0
    %1823 = vmatpush2.msra.mxu0 0.0
    %1824 = vmatprep.mubr.f32.mxu0 0.0
    %1825 = vmatmul.mubr.f32.gmra.mxu0 %v1758
    %v1826 = vpop.f32.mrf.mxu0
    %v1827 = vadd.f32 0.0, %v1826
    %v1828 = vpop.f32.mrf.mxu0
    %1829 = vdwg.mxu0
    %v1831 = vrot.slane %v1827, 4
    %v1833 = vadd.f32 %v250, %v1831
    %v1834 = vxor.u32 %v1833, 2147483648
    %v1835 = vmul.f32 %v1834, 1.442695
    %v1836 = vpow.pop %v1835
    %v1837 = vadd.f32 %v1836, 1.0
    %v1838 = vrcp.pop %v1837
    %v1839 = vmul.f32 1.0, %v1838
    %v1840 = vadd.f32 %v1827, %v335
    %v1842 = vrot.slane %v1840, 4
    %1843 = vrot.lane.b32.xlu0 %v1842, 64
    %v1844 = vpop.permute.xlu0 %1843
    %v1846 = vmul.f32 %v1839, %v1844
    %1848 = vrot.lane.b32.xlu0 %v1846, 64
    %v1849 = vpop.permute.xlu0 %1848
    %v1851 = vadd.f32 %v250, %v1849
    %v1852 = vtanh.pop %v1851
    %v1853 = vsub.f32 1.0, %v1839
    %1855 = vrot.lane.b32.xlu0 %v1852, 96
    %v1856 = vpop.permute.xlu0 %1855
    %v1858 = vmul.f32 %v1853, %v1856
    %v1859 = vrot.slane %v1581, 6
    %v1861 = vmul.f32 %v1839, %v1859
    %v1862 = vadd.f32 %v1858, %v1861
    %1863 = vmatprep.subr.mxu0 0.0
    %1864 = vmatpush1.msra.mxu0 0.0
    %1865 = vmatprep.subr.mxu0 0.0
    %1866 = vmatpush1.msra.mxu0 0.0
    %1867 = vmatprep.subr.mxu0 0.0
    %1868 = vmatpush1.msra.mxu0 0.0
    %1869 = vmatprep.subr.mxu0 0.0
    %1870 = vmatpush1.msra.mxu0 0.0
    %1871 = vmatprep.subr.mxu0 0.0
    %1872 = vmatpush1.msra.mxu0 0.0
    %1873 = vmatprep.subr.mxu0 0.0
    %1874 = vmatpush1.msra.mxu0 0.0
    %1875 = vmatprep.subr.mxu0 0.0
    %1876 = vmatpush1.msra.mxu0 0.0
    %1877 = vmatprep.subr.mxu0 0.0
    %1878 = vmatpush1.msra.mxu0 0.0
    %1879 = vmatprep.subr.mxu0 0.0
    %1880 = vmatpush1.msra.mxu0 0.0
    %1881 = vmatprep.subr.mxu0 0.0
    %1882 = vmatpush1.msra.mxu0 0.0
    %1883 = vmatprep.subr.mxu0 0.0
    %1884 = vmatpush1.msra.mxu0 0.0
    %1885 = vmatprep.subr.mxu0 0.0
    %1886 = vmatpush1.msra.mxu0 0.0
    %1887 = vmatprep.subr.mxu0 0.0
    %1888 = vmatpush1.msra.mxu0 %v154
    %1889 = vmatprep.subr.mxu0 0.0
    %1890 = vmatpush1.msra.mxu0 %v153
    %1891 = vmatprep.subr.mxu0 0.0
    %1892 = vmatpush1.msra.mxu0 %v152
    %1893 = vmatprep.subr.mxu0 0.0
    %1894 = vmatpush1.msra.mxu0 %v151
    %1895 = vmatprep.subr.mxu0 0.0
    %1896 = vmatpush2.msra.mxu0 0.0
    %1897 = vmatprep.subr.mxu0 0.0
    %1898 = vmatpush2.msra.mxu0 0.0
    %1899 = vmatprep.subr.mxu0 0.0
    %1900 = vmatpush2.msra.mxu0 0.0
    %1901 = vmatprep.subr.mxu0 0.0
    %1902 = vmatpush2.msra.mxu0 0.0
    %1903 = vmatprep.subr.mxu0 0.0
    %1904 = vmatpush2.msra.mxu0 0.0
    %1905 = vmatprep.subr.mxu0 0.0
    %1906 = vmatpush2.msra.mxu0 0.0
    %1907 = vmatprep.subr.mxu0 0.0
    %1908 = vmatpush2.msra.mxu0 0.0
    %1909 = vmatprep.subr.mxu0 0.0
    %1910 = vmatpush2.msra.mxu0 0.0
    %1911 = vmatprep.subr.mxu0 0.0
    %1912 = vmatpush2.msra.mxu0 0.0
    %1913 = vmatprep.subr.mxu0 0.0
    %1914 = vmatpush2.msra.mxu0 0.0
    %1915 = vmatprep.subr.mxu0 0.0
    %1916 = vmatpush2.msra.mxu0 0.0
    %1917 = vmatprep.subr.mxu0 0.0
    %1918 = vmatpush2.msra.mxu0 0.0
    %1919 = vmatprep.subr.mxu0 0.0
    %1920 = vmatpush2.msra.mxu0 0.0
    %1921 = vmatprep.subr.mxu0 0.0
    %1922 = vmatpush2.msra.mxu0 0.0
    %1923 = vmatprep.subr.mxu0 0.0
    %1924 = vmatpush2.msra.mxu0 0.0
    %1925 = vmatprep.subr.mxu0 0.0
    %1926 = vmatpush2.msra.mxu0 0.0
    %1927 = vmatprep.mubr.f32.mxu0 0.0
    %1928 = vmatmul.mubr.f32.gmra.mxu0 %v1758
    %v1929 = vpop.f32.mrf.mxu0
    %v1930 = vadd.f32 %v162, %v1929
    %v1931 = vpop.f32.mrf.mxu0
    %1932 = vdwg.mxu0
    %1934 = vrot.lane.b32.xlu0 %v1753, 96
    %v1935 = vpop.permute.xlu0 %1934
    %v1936 = vsel %vm59, %v1935, 0
    %1938 = vmatprep.subr.mxu0 0.0
    %1939 = vmatpush1.msra.mxu0 0.0
    %1940 = vmatprep.subr.mxu0 0.0
    %1941 = vmatpush1.msra.mxu0 0.0
    %1942 = vmatprep.subr.mxu0 0.0
    %1943 = vmatpush1.msra.mxu0 0.0
    %1944 = vmatprep.subr.mxu0 0.0
    %1945 = vmatpush1.msra.mxu0 0.0
    %1946 = vmatprep.subr.mxu0 0.0
    %1947 = vmatpush1.msra.mxu0 0.0
    %1948 = vmatprep.subr.mxu0 0.0
    %1949 = vmatpush1.msra.mxu0 0.0
    %1950 = vmatprep.subr.mxu0 0.0
    %1951 = vmatpush1.msra.mxu0 0.0
    %1952 = vmatprep.subr.mxu0 0.0
    %1953 = vmatpush1.msra.mxu0 0.0
    %1954 = vmatprep.subr.mxu0 0.0
    %1955 = vmatpush1.msra.mxu0 0.0
    %1956 = vmatprep.subr.mxu0 0.0
    %1957 = vmatpush1.msra.mxu0 0.0
    %1958 = vmatprep.subr.mxu0 0.0
    %1959 = vmatpush1.msra.mxu0 0.0
    %1960 = vmatprep.subr.mxu0 0.0
    %1961 = vmatpush1.msra.mxu0 0.0
    %1962 = vmatprep.subr.mxu0 0.0
    %1963 = vmatpush1.msra.mxu0 %v158
    %1964 = vmatprep.subr.mxu0 0.0
    %1965 = vmatpush1.msra.mxu0 %v157
    %1966 = vmatprep.subr.mxu0 0.0
    %1967 = vmatpush1.msra.mxu0 %v156
    %1968 = vmatprep.subr.mxu0 0.0
    %1969 = vmatpush1.msra.mxu0 %v155
    %1970 = vmatprep.subr.mxu0 0.0
    %1971 = vmatpush2.msra.mxu0 0.0
    %1972 = vmatprep.subr.mxu0 0.0
    %1973 = vmatpush2.msra.mxu0 0.0
    %1974 = vmatprep.subr.mxu0 0.0
    %1975 = vmatpush2.msra.mxu0 0.0
    %1976 = vmatprep.subr.mxu0 0.0
    %1977 = vmatpush2.msra.mxu0 0.0
    %1978 = vmatprep.subr.mxu0 0.0
    %1979 = vmatpush2.msra.mxu0 0.0
    %1980 = vmatprep.subr.mxu0 0.0
    %1981 = vmatpush2.msra.mxu0 0.0
    %1982 = vmatprep.subr.mxu0 0.0
    %1983 = vmatpush2.msra.mxu0 0.0
    %1984 = vmatprep.subr.mxu0 0.0
    %1985 = vmatpush2.msra.mxu0 0.0
    %1986 = vmatprep.subr.mxu0 0.0
    %1987 = vmatpush2.msra.mxu0 0.0
    %1988 = vmatprep.subr.mxu0 0.0
    %1989 = vmatpush2.msra.mxu0 0.0
    %1990 = vmatprep.subr.mxu0 0.0
    %1991 = vmatpush2.msra.mxu0 0.0
    %1992 = vmatprep.subr.mxu0 0.0
    %1993 = vmatpush2.msra.mxu0 0.0
    %1994 = vmatprep.subr.mxu0 0.0
    %1995 = vmatpush2.msra.mxu0 0.0
    %1996 = vmatprep.subr.mxu0 0.0
    %1997 = vmatpush2.msra.mxu0 0.0
    %1998 = vmatprep.subr.mxu0 0.0
    %1999 = vmatpush2.msra.mxu0 0.0
    %2000 = vmatprep.subr.mxu0 0.0
    %2001 = vmatpush2.msra.mxu0 0.0
    %2002 = vmatprep.mubr.f32.mxu0 0.0
    %2003 = vmatmul.mubr.f32.gmra.mxu0 %v1936
    %v2004 = vpop.f32.mrf.mxu0
    %v2005 = vadd.f32 0.0, %v2004
    %v2006 = vpop.f32.mrf.mxu0
    %2007 = vdwg.mxu0
    %v2008 = vadd.f32 %v1930, %v2005
    %v2009 = vxor.u32 %v2008, 2147483648
    %v2010 = vmul.f32 %v2009, 1.442695
    %v2011 = vpow.pop %v2010
    %v2012 = vadd.f32 %v2011, 1.0
    %v2013 = vrcp.pop %v2012
    %v2014 = vmul.f32 1.0, %v2013
    %v2015 = vadd.f32 %v2005, %v614
    %2017 = vrot.lane.b32.xlu0 %v2015, 64
    %v2018 = vpop.permute.xlu0 %2017
    %v2020 = vmul.f32 %v2014, %v2018
    %2022 = vrot.lane.b32.xlu0 %v2020, 64
    %v2023 = vpop.permute.xlu0 %2022
    %v2025 = vadd.f32 %v1930, %v2023
    %v2026 = vtanh.pop %v2025
    %v2027 = vsub.f32 1.0, %v2014
    %2029 = vrot.lane.b32.xlu0 %v2026, 96
    %v2030 = vpop.permute.xlu0 %2029
    %v2032 = vmul.f32 %v2027, %v2030
    %v2033 = vmul.f32 %v2014, %v1753
    %v2034 = vadd.f32 %v2032, %v2033
    %v2036 = vrot.slane %v1862, 4
    %2037 = vrot.lane.b32.xlu0 %v2036, 96
    %v2038 = vpop.permute.xlu0 %2037
    %v2039 = vsel %vm59, %v2038, 0
    %2041 = vmatprep.subr.mxu0 0.0
    %2042 = vmatpush1.msra.mxu0 0.0
    %2043 = vmatprep.subr.mxu0 0.0
    %2044 = vmatpush1.msra.mxu0 0.0
    %2045 = vmatprep.subr.mxu0 0.0
    %2046 = vmatpush1.msra.mxu0 0.0
    %2047 = vmatprep.subr.mxu0 0.0
    %2048 = vmatpush1.msra.mxu0 0.0
    %2049 = vmatprep.subr.mxu0 0.0
    %2050 = vmatpush1.msra.mxu0 0.0
    %2051 = vmatprep.subr.mxu0 0.0
    %2052 = vmatpush1.msra.mxu0 0.0
    %2053 = vmatprep.subr.mxu0 0.0
    %2054 = vmatpush1.msra.mxu0 0.0
    %2055 = vmatprep.subr.mxu0 0.0
    %2056 = vmatpush1.msra.mxu0 0.0
    %2057 = vmatprep.subr.mxu0 0.0
    %2058 = vmatpush1.msra.mxu0 0.0
    %2059 = vmatprep.subr.mxu0 0.0
    %2060 = vmatpush1.msra.mxu0 0.0
    %2061 = vmatprep.subr.mxu0 0.0
    %2062 = vmatpush1.msra.mxu0 0.0
    %2063 = vmatprep.subr.mxu0 0.0
    %2064 = vmatpush1.msra.mxu0 0.0
    %2065 = vmatprep.subr.mxu0 0.0
    %2066 = vmatpush1.msra.mxu0 %v146
    %2067 = vmatprep.subr.mxu0 0.0
    %2068 = vmatpush1.msra.mxu0 %v145
    %2069 = vmatprep.subr.mxu0 0.0
    %2070 = vmatpush1.msra.mxu0 %v144
    %2071 = vmatprep.subr.mxu0 0.0
    %2072 = vmatpush1.msra.mxu0 %v143
    %2073 = vmatprep.subr.mxu0 0.0
    %2074 = vmatpush2.msra.mxu0 0.0
    %2075 = vmatprep.subr.mxu0 0.0
    %2076 = vmatpush2.msra.mxu0 0.0
    %2077 = vmatprep.subr.mxu0 0.0
    %2078 = vmatpush2.msra.mxu0 0.0
    %2079 = vmatprep.subr.mxu0 0.0
    %2080 = vmatpush2.msra.mxu0 0.0
    %2081 = vmatprep.subr.mxu0 0.0
    %2082 = vmatpush2.msra.mxu0 0.0
    %2083 = vmatprep.subr.mxu0 0.0
    %2084 = vmatpush2.msra.mxu0 0.0
    %2085 = vmatprep.subr.mxu0 0.0
    %2086 = vmatpush2.msra.mxu0 0.0
    %2087 = vmatprep.subr.mxu0 0.0
    %2088 = vmatpush2.msra.mxu0 0.0
    %2089 = vmatprep.subr.mxu0 0.0
    %2090 = vmatpush2.msra.mxu0 0.0
    %2091 = vmatprep.subr.mxu0 0.0
    %2092 = vmatpush2.msra.mxu0 0.0
    %2093 = vmatprep.subr.mxu0 0.0
    %2094 = vmatpush2.msra.mxu0 0.0
    %2095 = vmatprep.subr.mxu0 0.0
    %2096 = vmatpush2.msra.mxu0 0.0
    %2097 = vmatprep.subr.mxu0 0.0
    %2098 = vmatpush2.msra.mxu0 0.0
    %2099 = vmatprep.subr.mxu0 0.0
    %2100 = vmatpush2.msra.mxu0 0.0
    %2101 = vmatprep.subr.mxu0 0.0
    %2102 = vmatpush2.msra.mxu0 0.0
    %2103 = vmatprep.subr.mxu0 0.0
    %2104 = vmatpush2.msra.mxu0 0.0
    %2105 = vmatprep.mubr.f32.mxu0 0.0
    %2106 = vmatmul.mubr.f32.gmra.mxu0 %v2039
    %v2107 = vpop.f32.mrf.mxu0
    %v2108 = vadd.f32 0.0, %v2107
    %v2109 = vpop.f32.mrf.mxu0
    %2110 = vdwg.mxu0
    %v2112 = vrot.slane %v2108, 2
    %v2114 = vadd.f32 %v250, %v2112
    %v2115 = vxor.u32 %v2114, 2147483648
    %v2116 = vmul.f32 %v2115, 1.442695
    %v2117 = vpow.pop %v2116
    %v2118 = vadd.f32 %v2117, 1.0
    %v2119 = vrcp.pop %v2118
    %v2120 = vmul.f32 1.0, %v2119
    %v2121 = vadd.f32 %v2108, %v335
    %v2123 = vrot.slane %v2121, 2
    %2124 = vrot.lane.b32.xlu0 %v2123, 64
    %v2125 = vpop.permute.xlu0 %2124
    %v2127 = vmul.f32 %v2120, %v2125
    %2129 = vrot.lane.b32.xlu0 %v2127, 64
    %v2130 = vpop.permute.xlu0 %2129
    %v2132 = vadd.f32 %v250, %v2130
    %v2133 = vtanh.pop %v2132
    %v2134 = vsub.f32 1.0, %v2120
    %2136 = vrot.lane.b32.xlu0 %v2133, 96
    %v2137 = vpop.permute.xlu0 %2136
    %v2139 = vmul.f32 %v2134, %v2137
    %v2140 = vrot.slane %v1862, 6
    %v2142 = vmul.f32 %v2120, %v2140
    %v2143 = vadd.f32 %v2139, %v2142
    %2144 = vmatprep.subr.mxu0 0.0
    %2145 = vmatpush1.msra.mxu0 0.0
    %2146 = vmatprep.subr.mxu0 0.0
    %2147 = vmatpush1.msra.mxu0 0.0
    %2148 = vmatprep.subr.mxu0 0.0
    %2149 = vmatpush1.msra.mxu0 0.0
    %2150 = vmatprep.subr.mxu0 0.0
    %2151 = vmatpush1.msra.mxu0 0.0
    %2152 = vmatprep.subr.mxu0 0.0
    %2153 = vmatpush1.msra.mxu0 0.0
    %2154 = vmatprep.subr.mxu0 0.0
    %2155 = vmatpush1.msra.mxu0 0.0
    %2156 = vmatprep.subr.mxu0 0.0
    %2157 = vmatpush1.msra.mxu0 0.0
    %2158 = vmatprep.subr.mxu0 0.0
    %2159 = vmatpush1.msra.mxu0 0.0
    %2160 = vmatprep.subr.mxu0 0.0
    %2161 = vmatpush1.msra.mxu0 0.0
    %2162 = vmatprep.subr.mxu0 0.0
    %2163 = vmatpush1.msra.mxu0 0.0
    %2164 = vmatprep.subr.mxu0 0.0
    %2165 = vmatpush1.msra.mxu0 0.0
    %2166 = vmatprep.subr.mxu0 0.0
    %2167 = vmatpush1.msra.mxu0 0.0
    %2168 = vmatprep.subr.mxu0 0.0
    %2169 = vmatpush1.msra.mxu0 %v154
    %2170 = vmatprep.subr.mxu0 0.0
    %2171 = vmatpush1.msra.mxu0 %v153
    %2172 = vmatprep.subr.mxu0 0.0
    %2173 = vmatpush1.msra.mxu0 %v152
    %2174 = vmatprep.subr.mxu0 0.0
    %2175 = vmatpush1.msra.mxu0 %v151
    %2176 = vmatprep.subr.mxu0 0.0
    %2177 = vmatpush2.msra.mxu0 0.0
    %2178 = vmatprep.subr.mxu0 0.0
    %2179 = vmatpush2.msra.mxu0 0.0
    %2180 = vmatprep.subr.mxu0 0.0
    %2181 = vmatpush2.msra.mxu0 0.0
    %2182 = vmatprep.subr.mxu0 0.0
    %2183 = vmatpush2.msra.mxu0 0.0
    %2184 = vmatprep.subr.mxu0 0.0
    %2185 = vmatpush2.msra.mxu0 0.0
    %2186 = vmatprep.subr.mxu0 0.0
    %2187 = vmatpush2.msra.mxu0 0.0
    %2188 = vmatprep.subr.mxu0 0.0
    %2189 = vmatpush2.msra.mxu0 0.0
    %2190 = vmatprep.subr.mxu0 0.0
    %2191 = vmatpush2.msra.mxu0 0.0
    %2192 = vmatprep.subr.mxu0 0.0
    %2193 = vmatpush2.msra.mxu0 0.0
    %2194 = vmatprep.subr.mxu0 0.0
    %2195 = vmatpush2.msra.mxu0 0.0
    %2196 = vmatprep.subr.mxu0 0.0
    %2197 = vmatpush2.msra.mxu0 0.0
    %2198 = vmatprep.subr.mxu0 0.0
    %2199 = vmatpush2.msra.mxu0 0.0
    %2200 = vmatprep.subr.mxu0 0.0
    %2201 = vmatpush2.msra.mxu0 0.0
    %2202 = vmatprep.subr.mxu0 0.0
    %2203 = vmatpush2.msra.mxu0 0.0
    %2204 = vmatprep.subr.mxu0 0.0
    %2205 = vmatpush2.msra.mxu0 0.0
    %2206 = vmatprep.subr.mxu0 0.0
    %2207 = vmatpush2.msra.mxu0 0.0
    %2208 = vmatprep.mubr.f32.mxu0 0.0
    %2209 = vmatmul.mubr.f32.gmra.mxu0 %v2039
    %v2210 = vpop.f32.mrf.mxu0
    %v2211 = vadd.f32 %v162, %v2210
    %v2212 = vpop.f32.mrf.mxu0
    %2213 = vdwg.mxu0
    %2215 = vrot.lane.b32.xlu0 %v2034, 96
    %v2216 = vpop.permute.xlu0 %2215
    %v2217 = vsel %vm59, %v2216, 0
    %2219 = vmatprep.subr.mxu0 0.0
    %2220 = vmatpush1.msra.mxu0 0.0
    %2221 = vmatprep.subr.mxu0 0.0
    %2222 = vmatpush1.msra.mxu0 0.0
    %2223 = vmatprep.subr.mxu0 0.0
    %2224 = vmatpush1.msra.mxu0 0.0
    %2225 = vmatprep.subr.mxu0 0.0
    %2226 = vmatpush1.msra.mxu0 0.0
    %2227 = vmatprep.subr.mxu0 0.0
    %2228 = vmatpush1.msra.mxu0 0.0
    %2229 = vmatprep.subr.mxu0 0.0
    %2230 = vmatpush1.msra.mxu0 0.0
    %2231 = vmatprep.subr.mxu0 0.0
    %2232 = vmatpush1.msra.mxu0 0.0
    %2233 = vmatprep.subr.mxu0 0.0
    %2234 = vmatpush1.msra.mxu0 0.0
    %2235 = vmatprep.subr.mxu0 0.0
    %2236 = vmatpush1.msra.mxu0 0.0
    %2237 = vmatprep.subr.mxu0 0.0
    %2238 = vmatpush1.msra.mxu0 0.0
    %2239 = vmatprep.subr.mxu0 0.0
    %2240 = vmatpush1.msra.mxu0 0.0
    %2241 = vmatprep.subr.mxu0 0.0
    %2242 = vmatpush1.msra.mxu0 0.0
    %2243 = vmatprep.subr.mxu0 0.0
    %2244 = vmatpush1.msra.mxu0 %v158
    %2245 = vmatprep.subr.mxu0 0.0
    %2246 = vmatpush1.msra.mxu0 %v157
    %2247 = vmatprep.subr.mxu0 0.0
    %2248 = vmatpush1.msra.mxu0 %v156
    %2249 = vmatprep.subr.mxu0 0.0
    %2250 = vmatpush1.msra.mxu0 %v155
    %2251 = vmatprep.subr.mxu0 0.0
    %2252 = vmatpush2.msra.mxu0 0.0
    %2253 = vmatprep.subr.mxu0 0.0
    %2254 = vmatpush2.msra.mxu0 0.0
    %2255 = vmatprep.subr.mxu0 0.0
    %2256 = vmatpush2.msra.mxu0 0.0
    %2257 = vmatprep.subr.mxu0 0.0
    %2258 = vmatpush2.msra.mxu0 0.0
    %2259 = vmatprep.subr.mxu0 0.0
    %2260 = vmatpush2.msra.mxu0 0.0
    %2261 = vmatprep.subr.mxu0 0.0
    %2262 = vmatpush2.msra.mxu0 0.0
    %2263 = vmatprep.subr.mxu0 0.0
    %2264 = vmatpush2.msra.mxu0 0.0
    %2265 = vmatprep.subr.mxu0 0.0
    %2266 = vmatpush2.msra.mxu0 0.0
    %2267 = vmatprep.subr.mxu0 0.0
    %2268 = vmatpush2.msra.mxu0 0.0
    %2269 = vmatprep.subr.mxu0 0.0
    %2270 = vmatpush2.msra.mxu0 0.0
    %2271 = vmatprep.subr.mxu0 0.0
    %2272 = vmatpush2.msra.mxu0 0.0
    %2273 = vmatprep.subr.mxu0 0.0
    %2274 = vmatpush2.msra.mxu0 0.0
    %2275 = vmatprep.subr.mxu0 0.0
    %2276 = vmatpush2.msra.mxu0 0.0
    %2277 = vmatprep.subr.mxu0 0.0
    %2278 = vmatpush2.msra.mxu0 0.0
    %2279 = vmatprep.subr.mxu0 0.0
    %2280 = vmatpush2.msra.mxu0 0.0
    %2281 = vmatprep.subr.mxu0 0.0
    %2282 = vmatpush2.msra.mxu0 0.0
    %2283 = vmatprep.mubr.f32.mxu0 0.0
    %2284 = vmatmul.mubr.f32.gmra.mxu0 %v2217
    %v2285 = vpop.f32.mrf.mxu0
    %v2286 = vadd.f32 0.0, %v2285
    %v2287 = vpop.f32.mrf.mxu0
    %2288 = vdwg.mxu0
    %v2289 = vadd.f32 %v2211, %v2286
    %v2290 = vxor.u32 %v2289, 2147483648
    %v2291 = vmul.f32 %v2290, 1.442695
    %v2292 = vpow.pop %v2291
    %v2293 = vadd.f32 %v2292, 1.0
    %v2294 = vrcp.pop %v2293
    %v2295 = vmul.f32 1.0, %v2294
    %v2296 = vadd.f32 %v2286, %v614
    %2298 = vrot.lane.b32.xlu0 %v2296, 64
    %v2299 = vpop.permute.xlu0 %2298
    %v2301 = vmul.f32 %v2295, %v2299
    %2303 = vrot.lane.b32.xlu0 %v2301, 64
    %v2304 = vpop.permute.xlu0 %2303
    %v2306 = vadd.f32 %v2211, %v2304
    %v2307 = vtanh.pop %v2306
    %v2308 = vsub.f32 1.0, %v2295
    %2310 = vrot.lane.b32.xlu0 %v2307, 96
    %v2311 = vpop.permute.xlu0 %2310
    %v2313 = vmul.f32 %v2308, %v2311
    %v2314 = vmul.f32 %v2295, %v2034
    %v2315 = vadd.f32 %v2313, %v2314
    %v2317 = vrot.slane %v2143, 6
    %2318 = vrot.lane.b32.xlu0 %v2317, 96
    %v2319 = vpop.permute.xlu0 %2318
    %v2320 = vsel %vm59, %v2319, 0
    %2322 = vmatprep.subr.mxu0 0.0
    %2323 = vmatpush1.msra.mxu0 0.0
    %2324 = vmatprep.subr.mxu0 0.0
    %2325 = vmatpush1.msra.mxu0 0.0
    %2326 = vmatprep.subr.mxu0 0.0
    %2327 = vmatpush1.msra.mxu0 0.0
    %2328 = vmatprep.subr.mxu0 0.0
    %2329 = vmatpush1.msra.mxu0 0.0
    %2330 = vmatprep.subr.mxu0 0.0
    %2331 = vmatpush1.msra.mxu0 0.0
    %2332 = vmatprep.subr.mxu0 0.0
    %2333 = vmatpush1.msra.mxu0 0.0
    %2334 = vmatprep.subr.mxu0 0.0
    %2335 = vmatpush1.msra.mxu0 0.0
    %2336 = vmatprep.subr.mxu0 0.0
    %2337 = vmatpush1.msra.mxu0 0.0
    %2338 = vmatprep.subr.mxu0 0.0
    %2339 = vmatpush1.msra.mxu0 0.0
    %2340 = vmatprep.subr.mxu0 0.0
    %2341 = vmatpush1.msra.mxu0 0.0
    %2342 = vmatprep.subr.mxu0 0.0
    %2343 = vmatpush1.msra.mxu0 0.0
    %2344 = vmatprep.subr.mxu0 0.0
    %2345 = vmatpush1.msra.mxu0 0.0
    %2346 = vmatprep.subr.mxu0 0.0
    %2347 = vmatpush1.msra.mxu0 %v154
    %2348 = vmatprep.subr.mxu0 0.0
    %2349 = vmatpush1.msra.mxu0 %v153
    %2350 = vmatprep.subr.mxu0 0.0
    %2351 = vmatpush1.msra.mxu0 %v152
    %2352 = vmatprep.subr.mxu0 0.0
    %2353 = vmatpush1.msra.mxu0 %v151
    %2354 = vmatprep.subr.mxu0 0.0
    %2355 = vmatpush2.msra.mxu0 0.0
    %2356 = vmatprep.subr.mxu0 0.0
    %2357 = vmatpush2.msra.mxu0 0.0
    %2358 = vmatprep.subr.mxu0 0.0
    %2359 = vmatpush2.msra.mxu0 0.0
    %2360 = vmatprep.subr.mxu0 0.0
    %2361 = vmatpush2.msra.mxu0 0.0
    %2362 = vmatprep.subr.mxu0 0.0
    %2363 = vmatpush2.msra.mxu0 0.0
    %2364 = vmatprep.subr.mxu0 0.0
    %2365 = vmatpush2.msra.mxu0 0.0
    %2366 = vmatprep.subr.mxu0 0.0
    %2367 = vmatpush2.msra.mxu0 0.0
    %2368 = vmatprep.subr.mxu0 0.0
    %2369 = vmatpush2.msra.mxu0 0.0
    %2370 = vmatprep.subr.mxu0 0.0
    %2371 = vmatpush2.msra.mxu0 0.0
    %2372 = vmatprep.subr.mxu0 0.0
    %2373 = vmatpush2.msra.mxu0 0.0
    %2374 = vmatprep.subr.mxu0 0.0
    %2375 = vmatpush2.msra.mxu0 0.0
    %2376 = vmatprep.subr.mxu0 0.0
    %2377 = vmatpush2.msra.mxu0 0.0
    %2378 = vmatprep.subr.mxu0 0.0
    %2379 = vmatpush2.msra.mxu0 0.0
    %2380 = vmatprep.subr.mxu0 0.0
    %2381 = vmatpush2.msra.mxu0 0.0
    %2382 = vmatprep.subr.mxu0 0.0
    %2383 = vmatpush2.msra.mxu0 0.0
    %2384 = vmatprep.subr.mxu0 0.0
    %2385 = vmatpush2.msra.mxu0 0.0
    %2386 = vmatprep.mubr.f32.mxu0 0.0
    %2387 = vmatmul.mubr.f32.gmra.mxu0 %v2320
    %v2388 = vpop.f32.mrf.mxu0
    %v2389 = vadd.f32 %v162, %v2388
    %v2390 = vpop.f32.mrf.mxu0
    %2391 = vdwg.mxu0
    %2393 = vrot.lane.b32.xlu0 %v2315, 96
    %v2394 = vpop.permute.xlu0 %2393
    %v2395 = vsel %vm59, %v2394, 0
    %2397 = vmatprep.subr.mxu0 0.0
    %2398 = vmatpush1.msra.mxu0 0.0
    %2399 = vmatprep.subr.mxu0 0.0
    %2400 = vmatpush1.msra.mxu0 0.0
    %2401 = vmatprep.subr.mxu0 0.0
    %2402 = vmatpush1.msra.mxu0 0.0
    %2403 = vmatprep.subr.mxu0 0.0
    %2404 = vmatpush1.msra.mxu0 0.0
    %2405 = vmatprep.subr.mxu0 0.0
    %2406 = vmatpush1.msra.mxu0 0.0
    %2407 = vmatprep.subr.mxu0 0.0
    %2408 = vmatpush1.msra.mxu0 0.0
    %2409 = vmatprep.subr.mxu0 0.0
    %2410 = vmatpush1.msra.mxu0 0.0
    %2411 = vmatprep.subr.mxu0 0.0
    %2412 = vmatpush1.msra.mxu0 0.0
    %2413 = vmatprep.subr.mxu0 0.0
    %2414 = vmatpush1.msra.mxu0 0.0
    %2415 = vmatprep.subr.mxu0 0.0
    %2416 = vmatpush1.msra.mxu0 0.0
    %2417 = vmatprep.subr.mxu0 0.0
    %2418 = vmatpush1.msra.mxu0 0.0
    %2419 = vmatprep.subr.mxu0 0.0
    %2420 = vmatpush1.msra.mxu0 0.0
    %2421 = vmatprep.subr.mxu0 0.0
    %2422 = vmatpush1.msra.mxu0 %v158
    %2423 = vmatprep.subr.mxu0 0.0
    %2424 = vmatpush1.msra.mxu0 %v157
    %2425 = vmatprep.subr.mxu0 0.0
    %2426 = vmatpush1.msra.mxu0 %v156
    %2427 = vmatprep.subr.mxu0 0.0
    %2428 = vmatpush1.msra.mxu0 %v155
    %2429 = vmatprep.subr.mxu0 0.0
    %2430 = vmatpush2.msra.mxu0 0.0
    %2431 = vmatprep.subr.mxu0 0.0
    %2432 = vmatpush2.msra.mxu0 0.0
    %2433 = vmatprep.subr.mxu0 0.0
    %2434 = vmatpush2.msra.mxu0 0.0
    %2435 = vmatprep.subr.mxu0 0.0
    %2436 = vmatpush2.msra.mxu0 0.0
    %2437 = vmatprep.subr.mxu0 0.0
    %2438 = vmatpush2.msra.mxu0 0.0
    %2439 = vmatprep.subr.mxu0 0.0
    %2440 = vmatpush2.msra.mxu0 0.0
    %2441 = vmatprep.subr.mxu0 0.0
    %2442 = vmatpush2.msra.mxu0 0.0
    %2443 = vmatprep.subr.mxu0 0.0
    %2444 = vmatpush2.msra.mxu0 0.0
    %2445 = vmatprep.subr.mxu0 0.0
    %2446 = vmatpush2.msra.mxu0 0.0
    %2447 = vmatprep.subr.mxu0 0.0
    %2448 = vmatpush2.msra.mxu0 0.0
    %2449 = vmatprep.subr.mxu0 0.0
    %2450 = vmatpush2.msra.mxu0 0.0
    %2451 = vmatprep.subr.mxu0 0.0
    %2452 = vmatpush2.msra.mxu0 0.0
    %2453 = vmatprep.subr.mxu0 0.0
    %2454 = vmatpush2.msra.mxu0 0.0
    %2455 = vmatprep.subr.mxu0 0.0
    %2456 = vmatpush2.msra.mxu0 0.0
    %2457 = vmatprep.subr.mxu0 0.0
    %2458 = vmatpush2.msra.mxu0 0.0
    %2459 = vmatprep.subr.mxu0 0.0
    %2460 = vmatpush2.msra.mxu0 0.0
    %2461 = vmatprep.mubr.f32.mxu0 0.0
    %2462 = vmatmul.mubr.f32.gmra.mxu0 %v2395
    %v2463 = vpop.f32.mrf.mxu0
    %v2464 = vadd.f32 0.0, %v2463
    %v2465 = vpop.f32.mrf.mxu0
    %2466 = vdwg.mxu0
    %v2467 = vadd.f32 %v2389, %v2464
    %v2468 = vxor.u32 %v2467, 2147483648
    %v2469 = vmul.f32 %v2468, 1.442695
    %v2470 = vpow.pop %v2469
    %v2471 = vadd.f32 %v2470, 1.0
    %v2472 = vrcp.pop %v2471
    %v2473 = vmul.f32 1.0, %v2472
    %v2474 = vadd.f32 %v2464, %v614
    %2476 = vrot.lane.b32.xlu0 %v2474, 64
    %v2477 = vpop.permute.xlu0 %2476
    %v2479 = vmul.f32 %v2473, %v2477
    %2481 = vrot.lane.b32.xlu0 %v2479, 64
    %v2482 = vpop.permute.xlu0 %2481
    %v2484 = vadd.f32 %v2389, %v2482
    %v2485 = vtanh.pop %v2484
    %v2486 = vsub.f32 1.0, %v2473
    %2488 = vrot.lane.b32.xlu0 %v2485, 96
    %v2489 = vpop.permute.xlu0 %2488
    %v2491 = vmul.f32 %v2486, %v2489
    %v2492 = vmul.f32 %v2473, %v2315
    %v2493 = vadd.f32 %v2491, %v2492
    %2494 = vrot.lane.b32.xlu0 %v2143, 96
    %v2495 = vpop.permute.xlu0 %2494
    %v2498 = vrot.slane %v2493, 2
    %v2500 = vsel %vm59, %v2495, %v2498
    %v2501 = vld [vmem:[#allocation2 + $0x100] sm:$0xff]
    %v2502 = vld [vmem:[#allocation2 + $0x108] sm:$0xff]
    %v2503 = vld [vmem:[#allocation2 + $0x110] sm:$0xff]
    %v2504 = vld [vmem:[#allocation2 + $0x118] sm:$0xff]
    %v2505 = vld [vmem:[#allocation2 + $0x120] sm:$0xff]
    %v2506 = vld [vmem:[#allocation2 + $0x128] sm:$0xff]
    %v2507 = vld [vmem:[#allocation2 + $0x130] sm:$0xff]
    %v2508 = vld [vmem:[#allocation2 + $0x138] sm:$0xff]
    %v2509 = vlaneseq
    %v2510 = vshrl.u32 %v2509, 7
    %v2511 = vsub.s32 0, %v2510
    %v2512 = vrot.slane %v40, %v2511
    %v2514 = vrot.slane %v2500, 6
    %vm2515 = vcmask 523264
    %v2516 = vsel %vm2515, %v2514, 0
    %2518 = vmatprep.subr.mxu0 0.0
    %2519 = vmatpush1.msra.mxu0 0.0
    %2520 = vmatprep.subr.mxu0 0.0
    %2521 = vmatpush1.msra.mxu0 0.0
    %2522 = vmatprep.subr.mxu0 0.0
    %2523 = vmatpush1.msra.mxu0 0.0
    %2524 = vmatprep.subr.mxu0 0.0
    %2525 = vmatpush1.msra.mxu0 0.0
    %2526 = vmatprep.subr.mxu0 0.0
    %2527 = vmatpush1.msra.mxu0 0.0
    %2528 = vmatprep.subr.mxu0 0.0
    %2529 = vmatpush1.msra.mxu0 0.0
    %2530 = vmatprep.subr.mxu0 0.0
    %2531 = vmatpush1.msra.mxu0 0.0
    %2532 = vmatprep.subr.mxu0 0.0
    %2533 = vmatpush1.msra.mxu0 0.0
    %2534 = vmatprep.subr.mxu0 0.0
    %2535 = vmatpush1.msra.mxu0 %v2508
    %2536 = vmatprep.subr.mxu0 0.0
    %2537 = vmatpush1.msra.mxu0 %v2507
    %2538 = vmatprep.subr.mxu0 0.0
    %2539 = vmatpush1.msra.mxu0 %v2506
    %2540 = vmatprep.subr.mxu0 0.0
    %2541 = vmatpush1.msra.mxu0 %v2505
    %2542 = vmatprep.subr.mxu0 0.0
    %2543 = vmatpush1.msra.mxu0 %v2504
    %2544 = vmatprep.subr.mxu0 0.0
    %2545 = vmatpush1.msra.mxu0 %v2503
    %2546 = vmatprep.subr.mxu0 0.0
    %2547 = vmatpush1.msra.mxu0 %v2502
    %2548 = vmatprep.subr.mxu0 0.0
    %2549 = vmatpush1.msra.mxu0 %v2501
    %2550 = vmatprep.subr.mxu0 0.0
    %2551 = vmatpush2.msra.mxu0 0.0
    %2552 = vmatprep.subr.mxu0 0.0
    %2553 = vmatpush2.msra.mxu0 0.0
    %2554 = vmatprep.subr.mxu0 0.0
    %2555 = vmatpush2.msra.mxu0 0.0
    %2556 = vmatprep.subr.mxu0 0.0
    %2557 = vmatpush2.msra.mxu0 0.0
    %2558 = vmatprep.subr.mxu0 0.0
    %2559 = vmatpush2.msra.mxu0 0.0
    %2560 = vmatprep.subr.mxu0 0.0
    %2561 = vmatpush2.msra.mxu0 0.0
    %2562 = vmatprep.subr.mxu0 0.0
    %2563 = vmatpush2.msra.mxu0 0.0
    %2564 = vmatprep.subr.mxu0 0.0
    %2565 = vmatpush2.msra.mxu0 0.0
    %2566 = vmatprep.subr.mxu0 0.0
    %2567 = vmatpush2.msra.mxu0 0.0
    %2568 = vmatprep.subr.mxu0 0.0
    %2569 = vmatpush2.msra.mxu0 0.0
    %2570 = vmatprep.subr.mxu0 0.0
    %2571 = vmatpush2.msra.mxu0 0.0
    %2572 = vmatprep.subr.mxu0 0.0
    %2573 = vmatpush2.msra.mxu0 0.0
    %2574 = vmatprep.subr.mxu0 0.0
    %2575 = vmatpush2.msra.mxu0 0.0
    %2576 = vmatprep.subr.mxu0 0.0
    %2577 = vmatpush2.msra.mxu0 0.0
    %2578 = vmatprep.subr.mxu0 0.0
    %2579 = vmatpush2.msra.mxu0 0.0
    %2580 = vmatprep.subr.mxu0 0.0
    %2581 = vmatpush2.msra.mxu0 0.0
    %2582 = vmatprep.mubr.f32.mxu0 0.0
    %2583 = vmatmul.mubr.f32.gmra.mxu0 %v2516
    %v2584 = vpop.f32.mrf.mxu0
    %v2585 = vadd.f32 %v2512, %v2584
    %v2586 = vpop.f32.mrf.mxu0
    %2587 = vdwg.mxu0
    %v2588 = vld [vmem:[%s2] sm:$0x3]
    %v2589 = vmul.f32 %v2585, 0.5
    %v2590 = vmul.f32 %v2589, 1.442695
    %v2591 = vpow.pop %v2590
    %2593 = vrot.lane.b32.xlu0 %v2591, 120
    %v2594 = vpop.permute.xlu0 %2593
    %v2596 = vmul.f32 %v2588, %v2594
    %v2597 = vadd.f32 %v2585, %v2596
    %v2598 = vld [vmem:[%s1] sm:$0x3]
    %2600 = vrot.lane.b32.xlu0 %v2598, 8
    %v2601 = vpop.permute.xlu0 %2600
    %vm2603 = vcmask 64512
    %v2604 = vsel %vm2603, %v2597, %v2601
    %v2605 = vld [vmem:[#allocation2 + $0x140] sm:$0xff]
    %v2606 = vld [vmem:[#allocation2 + $0x148] sm:$0xf]
    %v2607 = vlaneseq
    %v2608 = vshrl.u32 %v2607, 7
    %v2609 = vsub.s32 1, %v2608
    %v2610 = vrot.slane %v40, %v2609
    %vm2611 = vcmask 97280
    %v2613 = vsel %vm2611, %v2604, 0
    %vm2615 = vcmask 1043456
    %v2617 = vsel %vm2615, %v2606, 0
    %2619 = vmatprep.subr.mxu0 0.0
    %2620 = vmatpush1.msra.mxu0 0.0
    %2621 = vmatprep.subr.mxu0 0.0
    %2622 = vmatpush1.msra.mxu0 0.0
    %2623 = vmatprep.subr.mxu0 0.0
    %2624 = vmatpush1.msra.mxu0 0.0
    %2625 = vmatprep.subr.mxu0 0.0
    %2626 = vmatpush1.msra.mxu0 0.0
    %2627 = vmatprep.subr.mxu0 0.0
    %2628 = vmatpush1.msra.mxu0 0.0
    %2629 = vmatprep.subr.mxu0 0.0
    %2630 = vmatpush1.msra.mxu0 0.0
    %2631 = vmatprep.subr.mxu0 0.0
    %2632 = vmatpush1.msra.mxu0 0.0
    %2633 = vmatprep.subr.mxu0 0.0
    %2634 = vmatpush1.msra.mxu0 0.0
    %2635 = vmatprep.subr.mxu0 0.0
    %2636 = vmatpush1.msra.mxu0 0.0
    %2637 = vmatprep.subr.mxu0 0.0
    %2638 = vmatpush1.msra.mxu0 0.0
    %2639 = vmatprep.subr.mxu0 0.0
    %2640 = vmatpush1.msra.mxu0 0.0
    %2641 = vmatprep.subr.mxu0 0.0
    %2642 = vmatpush1.msra.mxu0 0.0
    %2643 = vmatprep.subr.mxu0 0.0
    %2644 = vmatpush1.msra.mxu0 0.0
    %2645 = vmatprep.subr.mxu0 0.0
    %2646 = vmatpush1.msra.mxu0 0.0
    %2647 = vmatprep.subr.mxu0 0.0
    %2648 = vmatpush1.msra.mxu0 %v2617
    %2649 = vmatprep.subr.mxu0 0.0
    %2650 = vmatpush1.msra.mxu0 %v2605
    %2651 = vmatprep.subr.mxu0 0.0
    %2652 = vmatpush2.msra.mxu0 0.0
    %2653 = vmatprep.subr.mxu0 0.0
    %2654 = vmatpush2.msra.mxu0 0.0
    %2655 = vmatprep.subr.mxu0 0.0
    %2656 = vmatpush2.msra.mxu0 0.0
    %2657 = vmatprep.subr.mxu0 0.0
    %2658 = vmatpush2.msra.mxu0 0.0
    %2659 = vmatprep.subr.mxu0 0.0
    %2660 = vmatpush2.msra.mxu0 0.0
    %2661 = vmatprep.subr.mxu0 0.0
    %2662 = vmatpush2.msra.mxu0 0.0
    %2663 = vmatprep.subr.mxu0 0.0
    %2664 = vmatpush2.msra.mxu0 0.0
    %2665 = vmatprep.subr.mxu0 0.0
    %2666 = vmatpush2.msra.mxu0 0.0
    %2667 = vmatprep.subr.mxu0 0.0
    %2668 = vmatpush2.msra.mxu0 0.0
    %2669 = vmatprep.subr.mxu0 0.0
    %2670 = vmatpush2.msra.mxu0 0.0
    %2671 = vmatprep.subr.mxu0 0.0
    %2672 = vmatpush2.msra.mxu0 0.0
    %2673 = vmatprep.subr.mxu0 0.0
    %2674 = vmatpush2.msra.mxu0 0.0
    %2675 = vmatprep.subr.mxu0 0.0
    %2676 = vmatpush2.msra.mxu0 0.0
    %2677 = vmatprep.subr.mxu0 0.0
    %2678 = vmatpush2.msra.mxu0 0.0
    %2679 = vmatprep.subr.mxu0 0.0
    %2680 = vmatpush2.msra.mxu0 0.0
    %2681 = vmatprep.subr.mxu0 0.0
    %2682 = vmatpush2.msra.mxu0 0.0
    %2683 = vmatprep.mubr.f32.mxu0 0.0
    %2684 = vmatmul.mubr.f32.gmra.mxu0 %v2613
    %v2685 = vpop.f32.mrf.mxu0
    %v2686 = vadd.f32 %v2610, %v2685
    %v2687 = vpop.f32.mrf.mxu0
    %2688 = vdwg.mxu0
    %v2689 = vld [vmem:[#allocation2 + $0x90] sm:$0xff]
    %v2690 = vld [vmem:[#allocation2 + $0x98] sm:$0xff]
    %v2691 = vld [vmem:[#allocation2 + $0xa0] sm:$0xff]
    %v2692 = vld [vmem:[#allocation2 + $0xa8] sm:$0xff]
    %v2693 = vld [vmem:[#allocation2 + $0xb0] sm:$0xff]
    %v2694 = vld [vmem:[#allocation2 + $0xb8] sm:$0xff]
    %v2695 = vlaneseq
    %v2696 = vshrl.u32 %v2695, 7
    %v2697 = vsub.s32 5, %v2696
    %v2698 = vrot.slane %v39, %v2697
    %v2699 = vld [vmem:[#allocation2 + $0xc0] sm:$0xff]
    %v2700 = vld [vmem:[#allocation2 + $0xc8] sm:$0xff]
    %v2701 = vld [vmem:[#allocation2 + $0xd0] sm:$0xff]
    %v2702 = vld [vmem:[#allocation2 + $0xd8] sm:$0xff]
    %v2703 = vld [vmem:[#allocation2 + $0xe0] sm:$0xff]
    %v2704 = vld [vmem:[#allocation2 + $0xe8] sm:$0xff]
    %v2705 = vld [vmem:[#allocation2 + $0xf0] sm:$0xff]
    %v2706 = vld [vmem:[#allocation2 + $0xf8] sm:$0xff]
    %v2707 = vlaneseq
    %v2708 = vshrl.u32 %v2707, 7
    %v2709 = vsub.s32 6, %v2708
    %v2710 = vrot.slane %v39, %v2709
    %v2711 = vlaneseq
    %v2712 = vshrl.u32 %v2711, 7
    %v2713 = vsub.s32 7, %v2712
    %v2714 = vrot.slane %v39, %v2713
    %v2715 = vlaneseq
    %v2716 = vshrl.u32 %v2715, 7
    %v2717 = vsub.s32 4, %v2716
    %v2718 = vrot.slane %v39, %v2717
    %2719 = vmatprep.subr.mxu0 0.0
    %2720 = vmatpush1.msra.mxu0 0.0
    %2721 = vmatprep.subr.mxu0 0.0
    %2722 = vmatpush1.msra.mxu0 0.0
    %2723 = vmatprep.subr.mxu0 0.0
    %2724 = vmatpush1.msra.mxu0 0.0
    %2725 = vmatprep.subr.mxu0 0.0
    %2726 = vmatpush1.msra.mxu0 0.0
    %2727 = vmatprep.subr.mxu0 0.0
    %2728 = vmatpush1.msra.mxu0 0.0
    %2729 = vmatprep.subr.mxu0 0.0
    %2730 = vmatpush1.msra.mxu0 0.0
    %2731 = vmatprep.subr.mxu0 0.0
    %2732 = vmatpush1.msra.mxu0 0.0
    %2733 = vmatprep.subr.mxu0 0.0
    %2734 = vmatpush1.msra.mxu0 0.0
    %2735 = vmatprep.subr.mxu0 0.0
    %2736 = vmatpush1.msra.mxu0 0.0
    %2737 = vmatprep.subr.mxu0 0.0
    %2738 = vmatpush1.msra.mxu0 0.0
    %2739 = vmatprep.subr.mxu0 0.0
    %2740 = vmatpush1.msra.mxu0 0.0
    %2741 = vmatprep.subr.mxu0 0.0
    %2742 = vmatpush1.msra.mxu0 0.0
    %2743 = vmatprep.subr.mxu0 0.0
    %2744 = vmatpush1.msra.mxu0 0.0
    %2745 = vmatprep.subr.mxu0 0.0
    %2746 = vmatpush1.msra.mxu0 0.0
    %2747 = vmatprep.subr.mxu0 0.0
    %2748 = vmatpush1.msra.mxu0 %v2690
    %2749 = vmatprep.subr.mxu0 0.0
    %2750 = vmatpush1.msra.mxu0 %v2689
    %2751 = vmatprep.subr.mxu0 0.0
    %2752 = vmatpush2.msra.mxu0 0.0
    %2753 = vmatprep.subr.mxu0 0.0
    %2754 = vmatpush2.msra.mxu0 0.0
    %2755 = vmatprep.subr.mxu0 0.0
    %2756 = vmatpush2.msra.mxu0 0.0
    %2757 = vmatprep.subr.mxu0 0.0
    %2758 = vmatpush2.msra.mxu0 0.0
    %2759 = vmatprep.subr.mxu0 0.0
    %2760 = vmatpush2.msra.mxu0 0.0
    %2761 = vmatprep.subr.mxu0 0.0
    %2762 = vmatpush2.msra.mxu0 0.0
    %2763 = vmatprep.subr.mxu0 0.0
    %2764 = vmatpush2.msra.mxu0 0.0
    %2765 = vmatprep.subr.mxu0 0.0
    %2766 = vmatpush2.msra.mxu0 0.0
    %2767 = vmatprep.subr.mxu0 0.0
    %2768 = vmatpush2.msra.mxu0 0.0
    %2769 = vmatprep.subr.mxu0 0.0
    %2770 = vmatpush2.msra.mxu0 0.0
    %2771 = vmatprep.subr.mxu0 0.0
    %2772 = vmatpush2.msra.mxu0 0.0
    %2773 = vmatprep.subr.mxu0 0.0
    %2774 = vmatpush2.msra.mxu0 0.0
    %2775 = vmatprep.subr.mxu0 0.0
    %2776 = vmatpush2.msra.mxu0 0.0
    %2777 = vmatprep.subr.mxu0 0.0
    %2778 = vmatpush2.msra.mxu0 0.0
    %2779 = vmatprep.subr.mxu0 0.0
    %2780 = vmatpush2.msra.mxu0 0.0
    %2781 = vmatprep.subr.mxu0 0.0
    %2782 = vmatpush2.msra.mxu0 0.0
    %2783 = vmatprep.mubr.f32.mxu0 0.0
    %2784 = vmatmul.mubr.f32.gmra.mxu0 %v173
    %v2785 = vpop.f32.mrf.mxu0
    %v2786 = vadd.f32 %v2718, %v2785
    %v2787 = vpop.f32.mrf.mxu0
    %2788 = vmatprep.mubr.f32.mxu0 0.0
    %2789 = vmatmul.mubr.f32.gmra.mxu0 %v176
    %v2790 = vpop.f32.mrf.mxu0
    %v2791 = vadd.f32 %v2718, %v2790
    %v2792 = vpop.f32.mrf.mxu0
    %2793 = vdwg.mxu0
    %v2795 = vsel %vm59, %v2686, 0
    %2797 = vmatprep.subr.mxu0 0.0
    %2798 = vmatpush1.msra.mxu0 0.0
    %2799 = vmatprep.subr.mxu0 0.0
    %2800 = vmatpush1.msra.mxu0 0.0
    %2801 = vmatprep.subr.mxu0 0.0
    %2802 = vmatpush1.msra.mxu0 0.0
    %2803 = vmatprep.subr.mxu0 0.0
    %2804 = vmatpush1.msra.mxu0 0.0
    %2805 = vmatprep.subr.mxu0 0.0
    %2806 = vmatpush1.msra.mxu0 0.0
    %2807 = vmatprep.subr.mxu0 0.0
    %2808 = vmatpush1.msra.mxu0 0.0
    %2809 = vmatprep.subr.mxu0 0.0
    %2810 = vmatpush1.msra.mxu0 0.0
    %2811 = vmatprep.subr.mxu0 0.0
    %2812 = vmatpush1.msra.mxu0 0.0
    %2813 = vmatprep.subr.mxu0 0.0
    %2814 = vmatpush1.msra.mxu0 0.0
    %2815 = vmatprep.subr.mxu0 0.0
    %2816 = vmatpush1.msra.mxu0 0.0
    %2817 = vmatprep.subr.mxu0 0.0
    %2818 = vmatpush1.msra.mxu0 0.0
    %2819 = vmatprep.subr.mxu0 0.0
    %2820 = vmatpush1.msra.mxu0 0.0
    %2821 = vmatprep.subr.mxu0 0.0
    %2822 = vmatpush1.msra.mxu0 %v2694
    %2823 = vmatprep.subr.mxu0 0.0
    %2824 = vmatpush1.msra.mxu0 %v2693
    %2825 = vmatprep.subr.mxu0 0.0
    %2826 = vmatpush1.msra.mxu0 %v2692
    %2827 = vmatprep.subr.mxu0 0.0
    %2828 = vmatpush1.msra.mxu0 %v2691
    %2829 = vmatprep.subr.mxu0 0.0
    %2830 = vmatpush2.msra.mxu0 0.0
    %2831 = vmatprep.subr.mxu0 0.0
    %2832 = vmatpush2.msra.mxu0 0.0
    %2833 = vmatprep.subr.mxu0 0.0
    %2834 = vmatpush2.msra.mxu0 0.0
    %2835 = vmatprep.subr.mxu0 0.0
    %2836 = vmatpush2.msra.mxu0 0.0
    %2837 = vmatprep.subr.mxu0 0.0
    %2838 = vmatpush2.msra.mxu0 0.0
    %2839 = vmatprep.subr.mxu0 0.0
    %2840 = vmatpush2.msra.mxu0 0.0
    %2841 = vmatprep.subr.mxu0 0.0
    %2842 = vmatpush2.msra.mxu0 0.0
    %2843 = vmatprep.subr.mxu0 0.0
    %2844 = vmatpush2.msra.mxu0 0.0
    %2845 = vmatprep.subr.mxu0 0.0
    %2846 = vmatpush2.msra.mxu0 0.0
    %2847 = vmatprep.subr.mxu0 0.0
    %2848 = vmatpush2.msra.mxu0 0.0
    %2849 = vmatprep.subr.mxu0 0.0
    %2850 = vmatpush2.msra.mxu0 0.0
    %2851 = vmatprep.subr.mxu0 0.0
    %2852 = vmatpush2.msra.mxu0 0.0
    %2853 = vmatprep.subr.mxu0 0.0
    %2854 = vmatpush2.msra.mxu0 0.0
    %2855 = vmatprep.subr.mxu0 0.0
    %2856 = vmatpush2.msra.mxu0 0.0
    %2857 = vmatprep.subr.mxu0 0.0
    %2858 = vmatpush2.msra.mxu0 0.0
    %2859 = vmatprep.subr.mxu0 0.0
    %2860 = vmatpush2.msra.mxu0 0.0
    %2861 = vmatprep.mubr.f32.mxu0 0.0
    %2862 = vmatmul.mubr.f32.gmra.mxu0 %v2795
    %v2863 = vpop.f32.mrf.mxu0
    %v2864 = vadd.f32 0.0, %v2863
    %v2865 = vpop.f32.mrf.mxu0
    %2866 = vdwg.mxu0
    %v2867 = vadd.f32 %v2786, %v2864
    %v2868 = vxor.u32 %v2867, 2147483648
    %v2869 = vmul.f32 %v2868, 1.442695
    %v2870 = vpow.pop %v2869
    %v2871 = vadd.f32 %v2870, 1.0
    %v2872 = vrcp.pop %v2871
    %v2873 = vmul.f32 1.0, %v2872
    %2875 = vrot.lane.b32.xlu0 %v2698, 64
    %v2876 = vpop.permute.xlu0 %2875
    %v2878 = vadd.f32 %v2864, %v2876
    %2880 = vrot.lane.b32.xlu0 %v2878, 64
    %v2881 = vpop.permute.xlu0 %2880
    %v2883 = vmul.f32 %v2873, %v2881
    %2885 = vrot.lane.b32.xlu0 %v2883, 64
    %v2886 = vpop.permute.xlu0 %2885
    %v2888 = vadd.f32 %v2786, %v2886
    %v2889 = vtanh.pop %v2888
    %v2890 = vsub.f32 1.0, %v2873
    %2892 = vrot.lane.b32.xlu0 %v2889, 96
    %v2893 = vpop.permute.xlu0 %2892
    %v2895 = vmul.f32 %v2890, %v2893
    %2896 = vrot.lane.b32.xlu0 %v2686, 32
    %v2897 = vpop.permute.xlu0 %2896
    %v2899 = vmul.f32 %v2873, %v2897
    %v2900 = vadd.f32 %v2895, %v2899
    %2902 = vrot.lane.b32.xlu0 %v2900, 96
    %v2903 = vpop.permute.xlu0 %2902
    %v2904 = vsel %vm59, %v2903, 0
    %2906 = vmatprep.subr.mxu0 0.0
    %2907 = vmatpush1.msra.mxu0 0.0
    %2908 = vmatprep.subr.mxu0 0.0
    %2909 = vmatpush1.msra.mxu0 0.0
    %2910 = vmatprep.subr.mxu0 0.0
    %2911 = vmatpush1.msra.mxu0 0.0
    %2912 = vmatprep.subr.mxu0 0.0
    %2913 = vmatpush1.msra.mxu0 0.0
    %2914 = vmatprep.subr.mxu0 0.0
    %2915 = vmatpush1.msra.mxu0 0.0
    %2916 = vmatprep.subr.mxu0 0.0
    %2917 = vmatpush1.msra.mxu0 0.0
    %2918 = vmatprep.subr.mxu0 0.0
    %2919 = vmatpush1.msra.mxu0 0.0
    %2920 = vmatprep.subr.mxu0 0.0
    %2921 = vmatpush1.msra.mxu0 0.0
    %2922 = vmatprep.subr.mxu0 0.0
    %2923 = vmatpush1.msra.mxu0 0.0
    %2924 = vmatprep.subr.mxu0 0.0
    %2925 = vmatpush1.msra.mxu0 0.0
    %2926 = vmatprep.subr.mxu0 0.0
    %2927 = vmatpush1.msra.mxu0 0.0
    %2928 = vmatprep.subr.mxu0 0.0
    %2929 = vmatpush1.msra.mxu0 0.0
    %2930 = vmatprep.subr.mxu0 0.0
    %2931 = vmatpush1.msra.mxu0 %v2694
    %2932 = vmatprep.subr.mxu0 0.0
    %2933 = vmatpush1.msra.mxu0 %v2693
    %2934 = vmatprep.subr.mxu0 0.0
    %2935 = vmatpush1.msra.mxu0 %v2692
    %2936 = vmatprep.subr.mxu0 0.0
    %2937 = vmatpush1.msra.mxu0 %v2691
    %2938 = vmatprep.subr.mxu0 0.0
    %2939 = vmatpush2.msra.mxu0 0.0
    %2940 = vmatprep.subr.mxu0 0.0
    %2941 = vmatpush2.msra.mxu0 0.0
    %2942 = vmatprep.subr.mxu0 0.0
    %2943 = vmatpush2.msra.mxu0 0.0
    %2944 = vmatprep.subr.mxu0 0.0
    %2945 = vmatpush2.msra.mxu0 0.0
    %2946 = vmatprep.subr.mxu0 0.0
    %2947 = vmatpush2.msra.mxu0 0.0
    %2948 = vmatprep.subr.mxu0 0.0
    %2949 = vmatpush2.msra.mxu0 0.0
    %2950 = vmatprep.subr.mxu0 0.0
    %2951 = vmatpush2.msra.mxu0 0.0
    %2952 = vmatprep.subr.mxu0 0.0
    %2953 = vmatpush2.msra.mxu0 0.0
    %2954 = vmatprep.subr.mxu0 0.0
    %2955 = vmatpush2.msra.mxu0 0.0
    %2956 = vmatprep.subr.mxu0 0.0
    %2957 = vmatpush2.msra.mxu0 0.0
    %2958 = vmatprep.subr.mxu0 0.0
    %2959 = vmatpush2.msra.mxu0 0.0
    %2960 = vmatprep.subr.mxu0 0.0
    %2961 = vmatpush2.msra.mxu0 0.0
    %2962 = vmatprep.subr.mxu0 0.0
    %2963 = vmatpush2.msra.mxu0 0.0
    %2964 = vmatprep.subr.mxu0 0.0
    %2965 = vmatpush2.msra.mxu0 0.0
    %2966 = vmatprep.subr.mxu0 0.0
    %2967 = vmatpush2.msra.mxu0 0.0
    %2968 = vmatprep.subr.mxu0 0.0
    %2969 = vmatpush2.msra.mxu0 0.0
    %2970 = vmatprep.mubr.f32.mxu0 0.0
    %2971 = vmatmul.mubr.f32.gmra.mxu0 %v2904
    %v2972 = vpop.f32.mrf.mxu0
    %v2973 = vadd.f32 0.0, %v2972
    %v2974 = vpop.f32.mrf.mxu0
    %2975 = vdwg.mxu0
    %v2977 = vrot.slane %v2973, 6
    %v2979 = vadd.f32 %v2786, %v2977
    %v2980 = vxor.u32 %v2979, 2147483648
    %v2981 = vmul.f32 %v2980, 1.442695
    %v2982 = vpow.pop %v2981
    %v2983 = vadd.f32 %v2982, 1.0
    %v2984 = vrcp.pop %v2983
    %v2985 = vmul.f32 1.0, %v2984
    %v2986 = vadd.f32 %v2973, %v2876
    %v2988 = vrot.slane %v2986, 6
    %2989 = vrot.lane.b32.xlu0 %v2988, 64
    %v2990 = vpop.permute.xlu0 %2989
    %v2992 = vmul.f32 %v2985, %v2990
    %2994 = vrot.lane.b32.xlu0 %v2992, 64
    %v2995 = vpop.permute.xlu0 %2994
    %v2997 = vadd.f32 %v2786, %v2995
    %v2998 = vtanh.pop %v2997
    %v2999 = vsub.f32 1.0, %v2985
    %3001 = vrot.lane.b32.xlu0 %v2998, 96
    %v3002 = vpop.permute.xlu0 %3001
    %v3004 = vmul.f32 %v2999, %v3002
    %v3005 = vrot.slane %v2900, 6
    %v3007 = vmul.f32 %v2985, %v3005
    %v3008 = vadd.f32 %v3004, %v3007
    %3009 = vmatprep.subr.mxu0 0.0
    %3010 = vmatpush1.msra.mxu0 0.0
    %3011 = vmatprep.subr.mxu0 0.0
    %3012 = vmatpush1.msra.mxu0 0.0
    %3013 = vmatprep.subr.mxu0 0.0
    %3014 = vmatpush1.msra.mxu0 0.0
    %3015 = vmatprep.subr.mxu0 0.0
    %3016 = vmatpush1.msra.mxu0 0.0
    %3017 = vmatprep.subr.mxu0 0.0
    %3018 = vmatpush1.msra.mxu0 0.0
    %3019 = vmatprep.subr.mxu0 0.0
    %3020 = vmatpush1.msra.mxu0 0.0
    %3021 = vmatprep.subr.mxu0 0.0
    %3022 = vmatpush1.msra.mxu0 0.0
    %3023 = vmatprep.subr.mxu0 0.0
    %3024 = vmatpush1.msra.mxu0 0.0
    %3025 = vmatprep.subr.mxu0 0.0
    %3026 = vmatpush1.msra.mxu0 0.0
    %3027 = vmatprep.subr.mxu0 0.0
    %3028 = vmatpush1.msra.mxu0 0.0
    %3029 = vmatprep.subr.mxu0 0.0
    %3030 = vmatpush1.msra.mxu0 0.0
    %3031 = vmatprep.subr.mxu0 0.0
    %3032 = vmatpush1.msra.mxu0 0.0
    %3033 = vmatprep.subr.mxu0 0.0
    %3034 = vmatpush1.msra.mxu0 %v2702
    %3035 = vmatprep.subr.mxu0 0.0
    %3036 = vmatpush1.msra.mxu0 %v2701
    %3037 = vmatprep.subr.mxu0 0.0
    %3038 = vmatpush1.msra.mxu0 %v2700
    %3039 = vmatprep.subr.mxu0 0.0
    %3040 = vmatpush1.msra.mxu0 %v2699
    %3041 = vmatprep.subr.mxu0 0.0
    %3042 = vmatpush2.msra.mxu0 0.0
    %3043 = vmatprep.subr.mxu0 0.0
    %3044 = vmatpush2.msra.mxu0 0.0
    %3045 = vmatprep.subr.mxu0 0.0
    %3046 = vmatpush2.msra.mxu0 0.0
    %3047 = vmatprep.subr.mxu0 0.0
    %3048 = vmatpush2.msra.mxu0 0.0
    %3049 = vmatprep.subr.mxu0 0.0
    %3050 = vmatpush2.msra.mxu0 0.0
    %3051 = vmatprep.subr.mxu0 0.0
    %3052 = vmatpush2.msra.mxu0 0.0
    %3053 = vmatprep.subr.mxu0 0.0
    %3054 = vmatpush2.msra.mxu0 0.0
    %3055 = vmatprep.subr.mxu0 0.0
    %3056 = vmatpush2.msra.mxu0 0.0
    %3057 = vmatprep.subr.mxu0 0.0
    %3058 = vmatpush2.msra.mxu0 0.0
    %3059 = vmatprep.subr.mxu0 0.0
    %3060 = vmatpush2.msra.mxu0 0.0
    %3061 = vmatprep.subr.mxu0 0.0
    %3062 = vmatpush2.msra.mxu0 0.0
    %3063 = vmatprep.subr.mxu0 0.0
    %3064 = vmatpush2.msra.mxu0 0.0
    %3065 = vmatprep.subr.mxu0 0.0
    %3066 = vmatpush2.msra.mxu0 0.0
    %3067 = vmatprep.subr.mxu0 0.0
    %3068 = vmatpush2.msra.mxu0 0.0
    %3069 = vmatprep.subr.mxu0 0.0
    %3070 = vmatpush2.msra.mxu0 0.0
    %3071 = vmatprep.subr.mxu0 0.0
    %3072 = vmatpush2.msra.mxu0 0.0
    %3073 = vmatprep.mubr.f32.mxu0 0.0
    %3074 = vmatmul.mubr.f32.gmra.mxu0 %v2904
    %v3075 = vpop.f32.mrf.mxu0
    %v3076 = vadd.f32 %v2710, %v3075
    %v3077 = vpop.f32.mrf.mxu0
    %3078 = vdwg.mxu0
    %3079 = vrot.lane.b32.xlu0 %v2686, 96
    %v3080 = vpop.permute.xlu0 %3079
    %v3081 = vsel %vm59, %v3080, 0
    %3083 = vmatprep.subr.mxu0 0.0
    %3084 = vmatpush1.msra.mxu0 0.0
    %3085 = vmatprep.subr.mxu0 0.0
    %3086 = vmatpush1.msra.mxu0 0.0
    %3087 = vmatprep.subr.mxu0 0.0
    %3088 = vmatpush1.msra.mxu0 0.0
    %3089 = vmatprep.subr.mxu0 0.0
    %3090 = vmatpush1.msra.mxu0 0.0
    %3091 = vmatprep.subr.mxu0 0.0
    %3092 = vmatpush1.msra.mxu0 0.0
    %3093 = vmatprep.subr.mxu0 0.0
    %3094 = vmatpush1.msra.mxu0 0.0
    %3095 = vmatprep.subr.mxu0 0.0
    %3096 = vmatpush1.msra.mxu0 0.0
    %3097 = vmatprep.subr.mxu0 0.0
    %3098 = vmatpush1.msra.mxu0 0.0
    %3099 = vmatprep.subr.mxu0 0.0
    %3100 = vmatpush1.msra.mxu0 0.0
    %3101 = vmatprep.subr.mxu0 0.0
    %3102 = vmatpush1.msra.mxu0 0.0
    %3103 = vmatprep.subr.mxu0 0.0
    %3104 = vmatpush1.msra.mxu0 0.0
    %3105 = vmatprep.subr.mxu0 0.0
    %3106 = vmatpush1.msra.mxu0 0.0
    %3107 = vmatprep.subr.mxu0 0.0
    %3108 = vmatpush1.msra.mxu0 %v2706
    %3109 = vmatprep.subr.mxu0 0.0
    %3110 = vmatpush1.msra.mxu0 %v2705
    %3111 = vmatprep.subr.mxu0 0.0
    %3112 = vmatpush1.msra.mxu0 %v2704
    %3113 = vmatprep.subr.mxu0 0.0
    %3114 = vmatpush1.msra.mxu0 %v2703
    %3115 = vmatprep.subr.mxu0 0.0
    %3116 = vmatpush2.msra.mxu0 0.0
    %3117 = vmatprep.subr.mxu0 0.0
    %3118 = vmatpush2.msra.mxu0 0.0
    %3119 = vmatprep.subr.mxu0 0.0
    %3120 = vmatpush2.msra.mxu0 0.0
    %3121 = vmatprep.subr.mxu0 0.0
    %3122 = vmatpush2.msra.mxu0 0.0
    %3123 = vmatprep.subr.mxu0 0.0
    %3124 = vmatpush2.msra.mxu0 0.0
    %3125 = vmatprep.subr.mxu0 0.0
    %3126 = vmatpush2.msra.mxu0 0.0
    %3127 = vmatprep.subr.mxu0 0.0
    %3128 = vmatpush2.msra.mxu0 0.0
    %3129 = vmatprep.subr.mxu0 0.0
    %3130 = vmatpush2.msra.mxu0 0.0
    %3131 = vmatprep.subr.mxu0 0.0
    %3132 = vmatpush2.msra.mxu0 0.0
    %3133 = vmatprep.subr.mxu0 0.0
    %3134 = vmatpush2.msra.mxu0 0.0
    %3135 = vmatprep.subr.mxu0 0.0
    %3136 = vmatpush2.msra.mxu0 0.0
    %3137 = vmatprep.subr.mxu0 0.0
    %3138 = vmatpush2.msra.mxu0 0.0
    %3139 = vmatprep.subr.mxu0 0.0
    %3140 = vmatpush2.msra.mxu0 0.0
    %3141 = vmatprep.subr.mxu0 0.0
    %3142 = vmatpush2.msra.mxu0 0.0
    %3143 = vmatprep.subr.mxu0 0.0
    %3144 = vmatpush2.msra.mxu0 0.0
    %3145 = vmatprep.subr.mxu0 0.0
    %3146 = vmatpush2.msra.mxu0 0.0
    %3147 = vmatprep.mubr.f32.mxu0 0.0
    %3148 = vmatmul.mubr.f32.gmra.mxu0 %v3081
    %v3149 = vpop.f32.mrf.mxu0
    %v3150 = vadd.f32 0.0, %v3149
    %v3151 = vpop.f32.mrf.mxu0
    %3152 = vdwg.mxu0
    %v3153 = vadd.f32 %v3076, %v3150
    %v3154 = vxor.u32 %v3153, 2147483648
    %v3155 = vmul.f32 %v3154, 1.442695
    %v3156 = vpow.pop %v3155
    %v3157 = vadd.f32 %v3156, 1.0
    %v3158 = vrcp.pop %v3157
    %v3159 = vmul.f32 1.0, %v3158
    %3161 = vrot.lane.b32.xlu0 %v2714, 64
    %v3162 = vpop.permute.xlu0 %3161
    %v3164 = vadd.f32 %v3150, %v3162
    %3166 = vrot.lane.b32.xlu0 %v3164, 64
    %v3167 = vpop.permute.xlu0 %3166
    %v3169 = vmul.f32 %v3159, %v3167
    %3171 = vrot.lane.b32.xlu0 %v3169, 64
    %v3172 = vpop.permute.xlu0 %3171
    %v3174 = vadd.f32 %v3076, %v3172
    %v3175 = vtanh.pop %v3174
    %v3176 = vsub.f32 1.0, %v3159
    %3178 = vrot.lane.b32.xlu0 %v3175, 96
    %v3179 = vpop.permute.xlu0 %3178
    %v3181 = vmul.f32 %v3176, %v3179
    %v3182 = vmul.f32 %v3159, %v2686
    %v3183 = vadd.f32 %v3181, %v3182
    %v3185 = vrot.slane %v3008, 2
    %3186 = vrot.lane.b32.xlu0 %v3185, 96
    %v3187 = vpop.permute.xlu0 %3186
    %v3188 = vsel %vm59, %v3187, 0
    %3190 = vmatprep.subr.mxu0 0.0
    %3191 = vmatpush1.msra.mxu0 0.0
    %3192 = vmatprep.subr.mxu0 0.0
    %3193 = vmatpush1.msra.mxu0 0.0
    %3194 = vmatprep.subr.mxu0 0.0
    %3195 = vmatpush1.msra.mxu0 0.0
    %3196 = vmatprep.subr.mxu0 0.0
    %3197 = vmatpush1.msra.mxu0 0.0
    %3198 = vmatprep.subr.mxu0 0.0
    %3199 = vmatpush1.msra.mxu0 0.0
    %3200 = vmatprep.subr.mxu0 0.0
    %3201 = vmatpush1.msra.mxu0 0.0
    %3202 = vmatprep.subr.mxu0 0.0
    %3203 = vmatpush1.msra.mxu0 0.0
    %3204 = vmatprep.subr.mxu0 0.0
    %3205 = vmatpush1.msra.mxu0 0.0
    %3206 = vmatprep.subr.mxu0 0.0
    %3207 = vmatpush1.msra.mxu0 0.0
    %3208 = vmatprep.subr.mxu0 0.0
    %3209 = vmatpush1.msra.mxu0 0.0
    %3210 = vmatprep.subr.mxu0 0.0
    %3211 = vmatpush1.msra.mxu0 0.0
    %3212 = vmatprep.subr.mxu0 0.0
    %3213 = vmatpush1.msra.mxu0 0.0
    %3214 = vmatprep.subr.mxu0 0.0
    %3215 = vmatpush1.msra.mxu0 %v2694
    %3216 = vmatprep.subr.mxu0 0.0
    %3217 = vmatpush1.msra.mxu0 %v2693
    %3218 = vmatprep.subr.mxu0 0.0
    %3219 = vmatpush1.msra.mxu0 %v2692
    %3220 = vmatprep.subr.mxu0 0.0
    %3221 = vmatpush1.msra.mxu0 %v2691
    %3222 = vmatprep.subr.mxu0 0.0
    %3223 = vmatpush2.msra.mxu0 0.0
    %3224 = vmatprep.subr.mxu0 0.0
    %3225 = vmatpush2.msra.mxu0 0.0
    %3226 = vmatprep.subr.mxu0 0.0
    %3227 = vmatpush2.msra.mxu0 0.0
    %3228 = vmatprep.subr.mxu0 0.0
    %3229 = vmatpush2.msra.mxu0 0.0
    %3230 = vmatprep.subr.mxu0 0.0
    %3231 = vmatpush2.msra.mxu0 0.0
    %3232 = vmatprep.subr.mxu0 0.0
    %3233 = vmatpush2.msra.mxu0 0.0
    %3234 = vmatprep.subr.mxu0 0.0
    %3235 = vmatpush2.msra.mxu0 0.0
    %3236 = vmatprep.subr.mxu0 0.0
    %3237 = vmatpush2.msra.mxu0 0.0
    %3238 = vmatprep.subr.mxu0 0.0
    %3239 = vmatpush2.msra.mxu0 0.0
    %3240 = vmatprep.subr.mxu0 0.0
    %3241 = vmatpush2.msra.mxu0 0.0
    %3242 = vmatprep.subr.mxu0 0.0
    %3243 = vmatpush2.msra.mxu0 0.0
    %3244 = vmatprep.subr.mxu0 0.0
    %3245 = vmatpush2.msra.mxu0 0.0
    %3246 = vmatprep.subr.mxu0 0.0
    %3247 = vmatpush2.msra.mxu0 0.0
    %3248 = vmatprep.subr.mxu0 0.0
    %3249 = vmatpush2.msra.mxu0 0.0
    %3250 = vmatprep.subr.mxu0 0.0
    %3251 = vmatpush2.msra.mxu0 0.0
    %3252 = vmatprep.subr.mxu0 0.0
    %3253 = vmatpush2.msra.mxu0 0.0
    %3254 = vmatprep.mubr.f32.mxu0 0.0
    %3255 = vmatmul.mubr.f32.gmra.mxu0 %v3188
    %v3256 = vpop.f32.mrf.mxu0
    %v3257 = vadd.f32 0.0, %v3256
    %v3258 = vpop.f32.mrf.mxu0
    %3259 = vdwg.mxu0
    %v3261 = vrot.slane %v3257, 4
    %v3263 = vadd.f32 %v2786, %v3261
    %v3264 = vxor.u32 %v3263, 2147483648
    %v3265 = vmul.f32 %v3264, 1.442695
    %v3266 = vpow.pop %v3265
    %v3267 = vadd.f32 %v3266, 1.0
    %v3268 = vrcp.pop %v3267
    %v3269 = vmul.f32 1.0, %v3268
    %v3270 = vadd.f32 %v3257, %v2876
    %v3272 = vrot.slane %v3270, 4
    %3273 = vrot.lane.b32.xlu0 %v3272, 64
    %v3274 = vpop.permute.xlu0 %3273
    %v3276 = vmul.f32 %v3269, %v3274
    %3278 = vrot.lane.b32.xlu0 %v3276, 64
    %v3279 = vpop.permute.xlu0 %3278
    %v3281 = vadd.f32 %v2786, %v3279
    %v3282 = vtanh.pop %v3281
    %v3283 = vsub.f32 1.0, %v3269
    %3285 = vrot.lane.b32.xlu0 %v3282, 96
    %v3286 = vpop.permute.xlu0 %3285
    %v3288 = vmul.f32 %v3283, %v3286
    %v3289 = vrot.slane %v3008, 6
    %v3291 = vmul.f32 %v3269, %v3289
    %v3292 = vadd.f32 %v3288, %v3291
    %3293 = vmatprep.subr.mxu0 0.0
    %3294 = vmatpush1.msra.mxu0 0.0
    %3295 = vmatprep.subr.mxu0 0.0
    %3296 = vmatpush1.msra.mxu0 0.0
    %3297 = vmatprep.subr.mxu0 0.0
    %3298 = vmatpush1.msra.mxu0 0.0
    %3299 = vmatprep.subr.mxu0 0.0
    %3300 = vmatpush1.msra.mxu0 0.0
    %3301 = vmatprep.subr.mxu0 0.0
    %3302 = vmatpush1.msra.mxu0 0.0
    %3303 = vmatprep.subr.mxu0 0.0
    %3304 = vmatpush1.msra.mxu0 0.0
    %3305 = vmatprep.subr.mxu0 0.0
    %3306 = vmatpush1.msra.mxu0 0.0
    %3307 = vmatprep.subr.mxu0 0.0
    %3308 = vmatpush1.msra.mxu0 0.0
    %3309 = vmatprep.subr.mxu0 0.0
    %3310 = vmatpush1.msra.mxu0 0.0
    %3311 = vmatprep.subr.mxu0 0.0
    %3312 = vmatpush1.msra.mxu0 0.0
    %3313 = vmatprep.subr.mxu0 0.0
    %3314 = vmatpush1.msra.mxu0 0.0
    %3315 = vmatprep.subr.mxu0 0.0
    %3316 = vmatpush1.msra.mxu0 0.0
    %3317 = vmatprep.subr.mxu0 0.0
    %3318 = vmatpush1.msra.mxu0 %v2702
    %3319 = vmatprep.subr.mxu0 0.0
    %3320 = vmatpush1.msra.mxu0 %v2701
    %3321 = vmatprep.subr.mxu0 0.0
    %3322 = vmatpush1.msra.mxu0 %v2700
    %3323 = vmatprep.subr.mxu0 0.0
    %3324 = vmatpush1.msra.mxu0 %v2699
    %3325 = vmatprep.subr.mxu0 0.0
    %3326 = vmatpush2.msra.mxu0 0.0
    %3327 = vmatprep.subr.mxu0 0.0
    %3328 = vmatpush2.msra.mxu0 0.0
    %3329 = vmatprep.subr.mxu0 0.0
    %3330 = vmatpush2.msra.mxu0 0.0
    %3331 = vmatprep.subr.mxu0 0.0
    %3332 = vmatpush2.msra.mxu0 0.0
    %3333 = vmatprep.subr.mxu0 0.0
    %3334 = vmatpush2.msra.mxu0 0.0
    %3335 = vmatprep.subr.mxu0 0.0
    %3336 = vmatpush2.msra.mxu0 0.0
    %3337 = vmatprep.subr.mxu0 0.0
    %3338 = vmatpush2.msra.mxu0 0.0
    %3339 = vmatprep.subr.mxu0 0.0
    %3340 = vmatpush2.msra.mxu0 0.0
    %3341 = vmatprep.subr.mxu0 0.0
    %3342 = vmatpush2.msra.mxu0 0.0
    %3343 = vmatprep.subr.mxu0 0.0
    %3344 = vmatpush2.msra.mxu0 0.0
    %3345 = vmatprep.subr.mxu0 0.0
    %3346 = vmatpush2.msra.mxu0 0.0
    %3347 = vmatprep.subr.mxu0 0.0
    %3348 = vmatpush2.msra.mxu0 0.0
    %3349 = vmatprep.subr.mxu0 0.0
    %3350 = vmatpush2.msra.mxu0 0.0
    %3351 = vmatprep.subr.mxu0 0.0
    %3352 = vmatpush2.msra.mxu0 0.0
    %3353 = vmatprep.subr.mxu0 0.0
    %3354 = vmatpush2.msra.mxu0 0.0
    %3355 = vmatprep.subr.mxu0 0.0
    %3356 = vmatpush2.msra.mxu0 0.0
    %3357 = vmatprep.mubr.f32.mxu0 0.0
    %3358 = vmatmul.mubr.f32.gmra.mxu0 %v3188
    %v3359 = vpop.f32.mrf.mxu0
    %v3360 = vadd.f32 %v2710, %v3359
    %v3361 = vpop.f32.mrf.mxu0
    %3362 = vdwg.mxu0
    %3364 = vrot.lane.b32.xlu0 %v3183, 96
    %v3365 = vpop.permute.xlu0 %3364
    %v3366 = vsel %vm59, %v3365, 0
    %3368 = vmatprep.subr.mxu0 0.0
    %3369 = vmatpush1.msra.mxu0 0.0
    %3370 = vmatprep.subr.mxu0 0.0
    %3371 = vmatpush1.msra.mxu0 0.0
    %3372 = vmatprep.subr.mxu0 0.0
    %3373 = vmatpush1.msra.mxu0 0.0
    %3374 = vmatprep.subr.mxu0 0.0
    %3375 = vmatpush1.msra.mxu0 0.0
    %3376 = vmatprep.subr.mxu0 0.0
    %3377 = vmatpush1.msra.mxu0 0.0
    %3378 = vmatprep.subr.mxu0 0.0
    %3379 = vmatpush1.msra.mxu0 0.0
    %3380 = vmatprep.subr.mxu0 0.0
    %3381 = vmatpush1.msra.mxu0 0.0
    %3382 = vmatprep.subr.mxu0 0.0
    %3383 = vmatpush1.msra.mxu0 0.0
    %3384 = vmatprep.subr.mxu0 0.0
    %3385 = vmatpush1.msra.mxu0 0.0
    %3386 = vmatprep.subr.mxu0 0.0
    %3387 = vmatpush1.msra.mxu0 0.0
    %3388 = vmatprep.subr.mxu0 0.0
    %3389 = vmatpush1.msra.mxu0 0.0
    %3390 = vmatprep.subr.mxu0 0.0
    %3391 = vmatpush1.msra.mxu0 0.0
    %3392 = vmatprep.subr.mxu0 0.0
    %3393 = vmatpush1.msra.mxu0 %v2706
    %3394 = vmatprep.subr.mxu0 0.0
    %3395 = vmatpush1.msra.mxu0 %v2705
    %3396 = vmatprep.subr.mxu0 0.0
    %3397 = vmatpush1.msra.mxu0 %v2704
    %3398 = vmatprep.subr.mxu0 0.0
    %3399 = vmatpush1.msra.mxu0 %v2703
    %3400 = vmatprep.subr.mxu0 0.0
    %3401 = vmatpush2.msra.mxu0 0.0
    %3402 = vmatprep.subr.mxu0 0.0
    %3403 = vmatpush2.msra.mxu0 0.0
    %3404 = vmatprep.subr.mxu0 0.0
    %3405 = vmatpush2.msra.mxu0 0.0
    %3406 = vmatprep.subr.mxu0 0.0
    %3407 = vmatpush2.msra.mxu0 0.0
    %3408 = vmatprep.subr.mxu0 0.0
    %3409 = vmatpush2.msra.mxu0 0.0
    %3410 = vmatprep.subr.mxu0 0.0
    %3411 = vmatpush2.msra.mxu0 0.0
    %3412 = vmatprep.subr.mxu0 0.0
    %3413 = vmatpush2.msra.mxu0 0.0
    %3414 = vmatprep.subr.mxu0 0.0
    %3415 = vmatpush2.msra.mxu0 0.0
    %3416 = vmatprep.subr.mxu0 0.0
    %3417 = vmatpush2.msra.mxu0 0.0
    %3418 = vmatprep.subr.mxu0 0.0
    %3419 = vmatpush2.msra.mxu0 0.0
    %3420 = vmatprep.subr.mxu0 0.0
    %3421 = vmatpush2.msra.mxu0 0.0
    %3422 = vmatprep.subr.mxu0 0.0
    %3423 = vmatpush2.msra.mxu0 0.0
    %3424 = vmatprep.subr.mxu0 0.0
    %3425 = vmatpush2.msra.mxu0 0.0
    %3426 = vmatprep.subr.mxu0 0.0
    %3427 = vmatpush2.msra.mxu0 0.0
    %3428 = vmatprep.subr.mxu0 0.0
    %3429 = vmatpush2.msra.mxu0 0.0
    %3430 = vmatprep.subr.mxu0 0.0
    %3431 = vmatpush2.msra.mxu0 0.0
    %3432 = vmatprep.mubr.f32.mxu0 0.0
    %3433 = vmatmul.mubr.f32.gmra.mxu0 %v3366
    %v3434 = vpop.f32.mrf.mxu0
    %v3435 = vadd.f32 0.0, %v3434
    %v3436 = vpop.f32.mrf.mxu0
    %3437 = vdwg.mxu0
    %v3438 = vadd.f32 %v3360, %v3435
    %v3439 = vxor.u32 %v3438, 2147483648
    %v3440 = vmul.f32 %v3439, 1.442695
    %v3441 = vpow.pop %v3440
    %v3442 = vadd.f32 %v3441, 1.0
    %v3443 = vrcp.pop %v3442
    %v3444 = vmul.f32 1.0, %v3443
    %v3445 = vadd.f32 %v3435, %v3162
    %3447 = vrot.lane.b32.xlu0 %v3445, 64
    %v3448 = vpop.permute.xlu0 %3447
    %v3450 = vmul.f32 %v3444, %v3448
    %3452 = vrot.lane.b32.xlu0 %v3450, 64
    %v3453 = vpop.permute.xlu0 %3452
    %v3455 = vadd.f32 %v3360, %v3453
    %v3456 = vtanh.pop %v3455
    %v3457 = vsub.f32 1.0, %v3444
    %3459 = vrot.lane.b32.xlu0 %v3456, 96
    %v3460 = vpop.permute.xlu0 %3459
    %v3462 = vmul.f32 %v3457, %v3460
    %v3463 = vmul.f32 %v3444, %v3183
    %v3464 = vadd.f32 %v3462, %v3463
    %v3466 = vrot.slane %v3292, 4
    %3467 = vrot.lane.b32.xlu0 %v3466, 96
    %v3468 = vpop.permute.xlu0 %3467
    %v3469 = vsel %vm59, %v3468, 0
    %3471 = vmatprep.subr.mxu0 0.0
    %3472 = vmatpush1.msra.mxu0 0.0
    %3473 = vmatprep.subr.mxu0 0.0
    %3474 = vmatpush1.msra.mxu0 0.0
    %3475 = vmatprep.subr.mxu0 0.0
    %3476 = vmatpush1.msra.mxu0 0.0
    %3477 = vmatprep.subr.mxu0 0.0
    %3478 = vmatpush1.msra.mxu0 0.0
    %3479 = vmatprep.subr.mxu0 0.0
    %3480 = vmatpush1.msra.mxu0 0.0
    %3481 = vmatprep.subr.mxu0 0.0
    %3482 = vmatpush1.msra.mxu0 0.0
    %3483 = vmatprep.subr.mxu0 0.0
    %3484 = vmatpush1.msra.mxu0 0.0
    %3485 = vmatprep.subr.mxu0 0.0
    %3486 = vmatpush1.msra.mxu0 0.0
    %3487 = vmatprep.subr.mxu0 0.0
    %3488 = vmatpush1.msra.mxu0 0.0
    %3489 = vmatprep.subr.mxu0 0.0
    %3490 = vmatpush1.msra.mxu0 0.0
    %3491 = vmatprep.subr.mxu0 0.0
    %3492 = vmatpush1.msra.mxu0 0.0
    %3493 = vmatprep.subr.mxu0 0.0
    %3494 = vmatpush1.msra.mxu0 0.0
    %3495 = vmatprep.subr.mxu0 0.0
    %3496 = vmatpush1.msra.mxu0 %v2694
    %3497 = vmatprep.subr.mxu0 0.0
    %3498 = vmatpush1.msra.mxu0 %v2693
    %3499 = vmatprep.subr.mxu0 0.0
    %3500 = vmatpush1.msra.mxu0 %v2692
    %3501 = vmatprep.subr.mxu0 0.0
    %3502 = vmatpush1.msra.mxu0 %v2691
    %3503 = vmatprep.subr.mxu0 0.0
    %3504 = vmatpush2.msra.mxu0 0.0
    %3505 = vmatprep.subr.mxu0 0.0
    %3506 = vmatpush2.msra.mxu0 0.0
    %3507 = vmatprep.subr.mxu0 0.0
    %3508 = vmatpush2.msra.mxu0 0.0
    %3509 = vmatprep.subr.mxu0 0.0
    %3510 = vmatpush2.msra.mxu0 0.0
    %3511 = vmatprep.subr.mxu0 0.0
    %3512 = vmatpush2.msra.mxu0 0.0
    %3513 = vmatprep.subr.mxu0 0.0
    %3514 = vmatpush2.msra.mxu0 0.0
    %3515 = vmatprep.subr.mxu0 0.0
    %3516 = vmatpush2.msra.mxu0 0.0
    %3517 = vmatprep.subr.mxu0 0.0
    %3518 = vmatpush2.msra.mxu0 0.0
    %3519 = vmatprep.subr.mxu0 0.0
    %3520 = vmatpush2.msra.mxu0 0.0
    %3521 = vmatprep.subr.mxu0 0.0
    %3522 = vmatpush2.msra.mxu0 0.0
    %3523 = vmatprep.subr.mxu0 0.0
    %3524 = vmatpush2.msra.mxu0 0.0
    %3525 = vmatprep.subr.mxu0 0.0
    %3526 = vmatpush2.msra.mxu0 0.0
    %3527 = vmatprep.subr.mxu0 0.0
    %3528 = vmatpush2.msra.mxu0 0.0
    %3529 = vmatprep.subr.mxu0 0.0
    %3530 = vmatpush2.msra.mxu0 0.0
    %3531 = vmatprep.subr.mxu0 0.0
    %3532 = vmatpush2.msra.mxu0 0.0
    %3533 = vmatprep.subr.mxu0 0.0
    %3534 = vmatpush2.msra.mxu0 0.0
    %3535 = vmatprep.mubr.f32.mxu0 0.0
    %3536 = vmatmul.mubr.f32.gmra.mxu0 %v3469
    %v3537 = vpop.f32.mrf.mxu0
    %v3538 = vadd.f32 0.0, %v3537
    %v3539 = vpop.f32.mrf.mxu0
    %3540 = vdwg.mxu0
    %v3542 = vrot.slane %v3538, 2
    %v3544 = vadd.f32 %v2786, %v3542
    %v3545 = vxor.u32 %v3544, 2147483648
    %v3546 = vmul.f32 %v3545, 1.442695
    %v3547 = vpow.pop %v3546
    %v3548 = vadd.f32 %v3547, 1.0
    %v3549 = vrcp.pop %v3548
    %v3550 = vmul.f32 1.0, %v3549
    %v3551 = vadd.f32 %v3538, %v2876
    %v3553 = vrot.slane %v3551, 2
    %3554 = vrot.lane.b32.xlu0 %v3553, 64
    %v3555 = vpop.permute.xlu0 %3554
    %v3557 = vmul.f32 %v3550, %v3555
    %3559 = vrot.lane.b32.xlu0 %v3557, 64
    %v3560 = vpop.permute.xlu0 %3559
    %v3562 = vadd.f32 %v2786, %v3560
    %v3563 = vtanh.pop %v3562
    %v3564 = vsub.f32 1.0, %v3550
    %3566 = vrot.lane.b32.xlu0 %v3563, 96
    %v3567 = vpop.permute.xlu0 %3566
    %v3569 = vmul.f32 %v3564, %v3567
    %v3570 = vrot.slane %v3292, 6
    %v3572 = vmul.f32 %v3550, %v3570
    %v3573 = vadd.f32 %v3569, %v3572
    %3574 = vmatprep.subr.mxu0 0.0
    %3575 = vmatpush1.msra.mxu0 0.0
    %3576 = vmatprep.subr.mxu0 0.0
    %3577 = vmatpush1.msra.mxu0 0.0
    %3578 = vmatprep.subr.mxu0 0.0
    %3579 = vmatpush1.msra.mxu0 0.0
    %3580 = vmatprep.subr.mxu0 0.0
    %3581 = vmatpush1.msra.mxu0 0.0
    %3582 = vmatprep.subr.mxu0 0.0
    %3583 = vmatpush1.msra.mxu0 0.0
    %3584 = vmatprep.subr.mxu0 0.0
    %3585 = vmatpush1.msra.mxu0 0.0
    %3586 = vmatprep.subr.mxu0 0.0
    %3587 = vmatpush1.msra.mxu0 0.0
    %3588 = vmatprep.subr.mxu0 0.0
    %3589 = vmatpush1.msra.mxu0 0.0
    %3590 = vmatprep.subr.mxu0 0.0
    %3591 = vmatpush1.msra.mxu0 0.0
    %3592 = vmatprep.subr.mxu0 0.0
    %3593 = vmatpush1.msra.mxu0 0.0
    %3594 = vmatprep.subr.mxu0 0.0
    %3595 = vmatpush1.msra.mxu0 0.0
    %3596 = vmatprep.subr.mxu0 0.0
    %3597 = vmatpush1.msra.mxu0 0.0
    %3598 = vmatprep.subr.mxu0 0.0
    %3599 = vmatpush1.msra.mxu0 %v2702
    %3600 = vmatprep.subr.mxu0 0.0
    %3601 = vmatpush1.msra.mxu0 %v2701
    %3602 = vmatprep.subr.mxu0 0.0
    %3603 = vmatpush1.msra.mxu0 %v2700
    %3604 = vmatprep.subr.mxu0 0.0
    %3605 = vmatpush1.msra.mxu0 %v2699
    %3606 = vmatprep.subr.mxu0 0.0
    %3607 = vmatpush2.msra.mxu0 0.0
    %3608 = vmatprep.subr.mxu0 0.0
    %3609 = vmatpush2.msra.mxu0 0.0
    %3610 = vmatprep.subr.mxu0 0.0
    %3611 = vmatpush2.msra.mxu0 0.0
    %3612 = vmatprep.subr.mxu0 0.0
    %3613 = vmatpush2.msra.mxu0 0.0
    %3614 = vmatprep.subr.mxu0 0.0
    %3615 = vmatpush2.msra.mxu0 0.0
    %3616 = vmatprep.subr.mxu0 0.0
    %3617 = vmatpush2.msra.mxu0 0.0
    %3618 = vmatprep.subr.mxu0 0.0
    %3619 = vmatpush2.msra.mxu0 0.0
    %3620 = vmatprep.subr.mxu0 0.0
    %3621 = vmatpush2.msra.mxu0 0.0
    %3622 = vmatprep.subr.mxu0 0.0
    %3623 = vmatpush2.msra.mxu0 0.0
    %3624 = vmatprep.subr.mxu0 0.0
    %3625 = vmatpush2.msra.mxu0 0.0
    %3626 = vmatprep.subr.mxu0 0.0
    %3627 = vmatpush2.msra.mxu0 0.0
    %3628 = vmatprep.subr.mxu0 0.0
    %3629 = vmatpush2.msra.mxu0 0.0
    %3630 = vmatprep.subr.mxu0 0.0
    %3631 = vmatpush2.msra.mxu0 0.0
    %3632 = vmatprep.subr.mxu0 0.0
    %3633 = vmatpush2.msra.mxu0 0.0
    %3634 = vmatprep.subr.mxu0 0.0
    %3635 = vmatpush2.msra.mxu0 0.0
    %3636 = vmatprep.subr.mxu0 0.0
    %3637 = vmatpush2.msra.mxu0 0.0
    %3638 = vmatprep.mubr.f32.mxu0 0.0
    %3639 = vmatmul.mubr.f32.gmra.mxu0 %v3469
    %v3640 = vpop.f32.mrf.mxu0
    %v3641 = vadd.f32 %v2710, %v3640
    %v3642 = vpop.f32.mrf.mxu0
    %3643 = vdwg.mxu0
    %3645 = vrot.lane.b32.xlu0 %v3464, 96
    %v3646 = vpop.permute.xlu0 %3645
    %v3647 = vsel %vm59, %v3646, 0
    %3649 = vmatprep.subr.mxu0 0.0
    %3650 = vmatpush1.msra.mxu0 0.0
    %3651 = vmatprep.subr.mxu0 0.0
    %3652 = vmatpush1.msra.mxu0 0.0
    %3653 = vmatprep.subr.mxu0 0.0
    %3654 = vmatpush1.msra.mxu0 0.0
    %3655 = vmatprep.subr.mxu0 0.0
    %3656 = vmatpush1.msra.mxu0 0.0
    %3657 = vmatprep.subr.mxu0 0.0
    %3658 = vmatpush1.msra.mxu0 0.0
    %3659 = vmatprep.subr.mxu0 0.0
    %3660 = vmatpush1.msra.mxu0 0.0
    %3661 = vmatprep.subr.mxu0 0.0
    %3662 = vmatpush1.msra.mxu0 0.0
    %3663 = vmatprep.subr.mxu0 0.0
    %3664 = vmatpush1.msra.mxu0 0.0
    %3665 = vmatprep.subr.mxu0 0.0
    %3666 = vmatpush1.msra.mxu0 0.0
    %3667 = vmatprep.subr.mxu0 0.0
    %3668 = vmatpush1.msra.mxu0 0.0
    %3669 = vmatprep.subr.mxu0 0.0
    %3670 = vmatpush1.msra.mxu0 0.0
    %3671 = vmatprep.subr.mxu0 0.0
    %3672 = vmatpush1.msra.mxu0 0.0
    %3673 = vmatprep.subr.mxu0 0.0
    %3674 = vmatpush1.msra.mxu0 %v2706
    %3675 = vmatprep.subr.mxu0 0.0
    %3676 = vmatpush1.msra.mxu0 %v2705
    %3677 = vmatprep.subr.mxu0 0.0
    %3678 = vmatpush1.msra.mxu0 %v2704
    %3679 = vmatprep.subr.mxu0 0.0
    %3680 = vmatpush1.msra.mxu0 %v2703
    %3681 = vmatprep.subr.mxu0 0.0
    %3682 = vmatpush2.msra.mxu0 0.0
    %3683 = vmatprep.subr.mxu0 0.0
    %3684 = vmatpush2.msra.mxu0 0.0
    %3685 = vmatprep.subr.mxu0 0.0
    %3686 = vmatpush2.msra.mxu0 0.0
    %3687 = vmatprep.subr.mxu0 0.0
    %3688 = vmatpush2.msra.mxu0 0.0
    %3689 = vmatprep.subr.mxu0 0.0
    %3690 = vmatpush2.msra.mxu0 0.0
    %3691 = vmatprep.subr.mxu0 0.0
    %3692 = vmatpush2.msra.mxu0 0.0
    %3693 = vmatprep.subr.mxu0 0.0
    %3694 = vmatpush2.msra.mxu0 0.0
    %3695 = vmatprep.subr.mxu0 0.0
    %3696 = vmatpush2.msra.mxu0 0.0
    %3697 = vmatprep.subr.mxu0 0.0
    %3698 = vmatpush2.msra.mxu0 0.0
    %3699 = vmatprep.subr.mxu0 0.0
    %3700 = vmatpush2.msra.mxu0 0.0
    %3701 = vmatprep.subr.mxu0 0.0
    %3702 = vmatpush2.msra.mxu0 0.0
    %3703 = vmatprep.subr.mxu0 0.0
    %3704 = vmatpush2.msra.mxu0 0.0
    %3705 = vmatprep.subr.mxu0 0.0
    %3706 = vmatpush2.msra.mxu0 0.0
    %3707 = vmatprep.subr.mxu0 0.0
    %3708 = vmatpush2.msra.mxu0 0.0
    %3709 = vmatprep.subr.mxu0 0.0
    %3710 = vmatpush2.msra.mxu0 0.0
    %3711 = vmatprep.subr.mxu0 0.0
    %3712 = vmatpush2.msra.mxu0 0.0
    %3713 = vmatprep.mubr.f32.mxu0 0.0
    %3714 = vmatmul.mubr.f32.gmra.mxu0 %v3647
    %v3715 = vpop.f32.mrf.mxu0
    %v3716 = vadd.f32 0.0, %v3715
    %v3717 = vpop.f32.mrf.mxu0
    %3718 = vdwg.mxu0
    %v3719 = vadd.f32 %v3641, %v3716
    %v3720 = vxor.u32 %v3719, 2147483648
    %v3721 = vmul.f32 %v3720, 1.442695
    %v3722 = vpow.pop %v3721
    %v3723 = vadd.f32 %v3722, 1.0
    %v3724 = vrcp.pop %v3723
    %v3725 = vmul.f32 1.0, %v3724
    %v3726 = vadd.f32 %v3716, %v3162
    %3728 = vrot.lane.b32.xlu0 %v3726, 64
    %v3729 = vpop.permute.xlu0 %3728
    %v3731 = vmul.f32 %v3725, %v3729
    %3733 = vrot.lane.b32.xlu0 %v3731, 64
    %v3734 = vpop.permute.xlu0 %3733
    %v3736 = vadd.f32 %v3641, %v3734
    %v3737 = vtanh.pop %v3736
    %v3738 = vsub.f32 1.0, %v3725
    %3740 = vrot.lane.b32.xlu0 %v3737, 96
    %v3741 = vpop.permute.xlu0 %3740
    %v3743 = vmul.f32 %v3738, %v3741
    %v3744 = vmul.f32 %v3725, %v3464
    %v3745 = vadd.f32 %v3743, %v3744
    %v3747 = vrot.slane %v3573, 6
    %3748 = vrot.lane.b32.xlu0 %v3747, 96
    %v3749 = vpop.permute.xlu0 %3748
    %v3750 = vsel %vm59, %v3749, 0
    %3752 = vmatprep.subr.mxu0 0.0
    %3753 = vmatpush1.msra.mxu0 0.0
    %3754 = vmatprep.subr.mxu0 0.0
    %3755 = vmatpush1.msra.mxu0 0.0
    %3756 = vmatprep.subr.mxu0 0.0
    %3757 = vmatpush1.msra.mxu0 0.0
    %3758 = vmatprep.subr.mxu0 0.0
    %3759 = vmatpush1.msra.mxu0 0.0
    %3760 = vmatprep.subr.mxu0 0.0
    %3761 = vmatpush1.msra.mxu0 0.0
    %3762 = vmatprep.subr.mxu0 0.0
    %3763 = vmatpush1.msra.mxu0 0.0
    %3764 = vmatprep.subr.mxu0 0.0
    %3765 = vmatpush1.msra.mxu0 0.0
    %3766 = vmatprep.subr.mxu0 0.0
    %3767 = vmatpush1.msra.mxu0 0.0
    %3768 = vmatprep.subr.mxu0 0.0
    %3769 = vmatpush1.msra.mxu0 0.0
    %3770 = vmatprep.subr.mxu0 0.0
    %3771 = vmatpush1.msra.mxu0 0.0
    %3772 = vmatprep.subr.mxu0 0.0
    %3773 = vmatpush1.msra.mxu0 0.0
    %3774 = vmatprep.subr.mxu0 0.0
    %3775 = vmatpush1.msra.mxu0 0.0
    %3776 = vmatprep.subr.mxu0 0.0
    %3777 = vmatpush1.msra.mxu0 %v2694
    %3778 = vmatprep.subr.mxu0 0.0
    %3779 = vmatpush1.msra.mxu0 %v2693
    %3780 = vmatprep.subr.mxu0 0.0
    %3781 = vmatpush1.msra.mxu0 %v2692
    %3782 = vmatprep.subr.mxu0 0.0
    %3783 = vmatpush1.msra.mxu0 %v2691
    %3784 = vmatprep.subr.mxu0 0.0
    %3785 = vmatpush2.msra.mxu0 0.0
    %3786 = vmatprep.subr.mxu0 0.0
    %3787 = vmatpush2.msra.mxu0 0.0
    %3788 = vmatprep.subr.mxu0 0.0
    %3789 = vmatpush2.msra.mxu0 0.0
    %3790 = vmatprep.subr.mxu0 0.0
    %3791 = vmatpush2.msra.mxu0 0.0
    %3792 = vmatprep.subr.mxu0 0.0
    %3793 = vmatpush2.msra.mxu0 0.0
    %3794 = vmatprep.subr.mxu0 0.0
    %3795 = vmatpush2.msra.mxu0 0.0
    %3796 = vmatprep.subr.mxu0 0.0
    %3797 = vmatpush2.msra.mxu0 0.0
    %3798 = vmatprep.subr.mxu0 0.0
    %3799 = vmatpush2.msra.mxu0 0.0
    %3800 = vmatprep.subr.mxu0 0.0
    %3801 = vmatpush2.msra.mxu0 0.0
    %3802 = vmatprep.subr.mxu0 0.0
    %3803 = vmatpush2.msra.mxu0 0.0
    %3804 = vmatprep.subr.mxu0 0.0
    %3805 = vmatpush2.msra.mxu0 0.0
    %3806 = vmatprep.subr.mxu0 0.0
    %3807 = vmatpush2.msra.mxu0 0.0
    %3808 = vmatprep.subr.mxu0 0.0
    %3809 = vmatpush2.msra.mxu0 0.0
    %3810 = vmatprep.subr.mxu0 0.0
    %3811 = vmatpush2.msra.mxu0 0.0
    %3812 = vmatprep.subr.mxu0 0.0
    %3813 = vmatpush2.msra.mxu0 0.0
    %3814 = vmatprep.subr.mxu0 0.0
    %3815 = vmatpush2.msra.mxu0 0.0
    %3816 = vmatprep.mubr.f32.mxu0 0.0
    %3817 = vmatmul.mubr.f32.gmra.mxu0 %v3750
    %v3818 = vpop.f32.mrf.mxu0
    %v3819 = vadd.f32 0.0, %v3818
    %v3820 = vpop.f32.mrf.mxu0
    %3821 = vdwg.mxu0
    %v3822 = vadd.f32 %v2791, %v3819
    %v3823 = vxor.u32 %v3822, 2147483648
    %v3824 = vmul.f32 %v3823, 1.442695
    %v3825 = vpow.pop %v3824
    %v3826 = vadd.f32 %v3825, 1.0
    %v3827 = vrcp.pop %v3826
    %v3828 = vmul.f32 1.0, %v3827
    %v3829 = vadd.f32 %v3819, %v2876
    %3831 = vrot.lane.b32.xlu0 %v3829, 64
    %v3832 = vpop.permute.xlu0 %3831
    %v3834 = vmul.f32 %v3828, %v3832
    %3836 = vrot.lane.b32.xlu0 %v3834, 64
    %v3837 = vpop.permute.xlu0 %3836
    %v3839 = vadd.f32 %v2791, %v3837
    %v3840 = vtanh.pop %v3839
    %v3841 = vsub.f32 1.0, %v3828
    %3843 = vrot.lane.b32.xlu0 %v3840, 96
    %v3844 = vpop.permute.xlu0 %3843
    %v3846 = vmul.f32 %v3841, %v3844
    %v3848 = vmul.f32 %v3828, %v3747
    %v3849 = vadd.f32 %v3846, %v3848
    %3850 = vmatprep.subr.mxu0 0.0
    %3851 = vmatpush1.msra.mxu0 0.0
    %3852 = vmatprep.subr.mxu0 0.0
    %3853 = vmatpush1.msra.mxu0 0.0
    %3854 = vmatprep.subr.mxu0 0.0
    %3855 = vmatpush1.msra.mxu0 0.0
    %3856 = vmatprep.subr.mxu0 0.0
    %3857 = vmatpush1.msra.mxu0 0.0
    %3858 = vmatprep.subr.mxu0 0.0
    %3859 = vmatpush1.msra.mxu0 0.0
    %3860 = vmatprep.subr.mxu0 0.0
    %3861 = vmatpush1.msra.mxu0 0.0
    %3862 = vmatprep.subr.mxu0 0.0
    %3863 = vmatpush1.msra.mxu0 0.0
    %3864 = vmatprep.subr.mxu0 0.0
    %3865 = vmatpush1.msra.mxu0 0.0
    %3866 = vmatprep.subr.mxu0 0.0
    %3867 = vmatpush1.msra.mxu0 0.0
    %3868 = vmatprep.subr.mxu0 0.0
    %3869 = vmatpush1.msra.mxu0 0.0
    %3870 = vmatprep.subr.mxu0 0.0
    %3871 = vmatpush1.msra.mxu0 0.0
    %3872 = vmatprep.subr.mxu0 0.0
    %3873 = vmatpush1.msra.mxu0 0.0
    %3874 = vmatprep.subr.mxu0 0.0
    %3875 = vmatpush1.msra.mxu0 %v2702
    %3876 = vmatprep.subr.mxu0 0.0
    %3877 = vmatpush1.msra.mxu0 %v2701
    %3878 = vmatprep.subr.mxu0 0.0
    %3879 = vmatpush1.msra.mxu0 %v2700
    %3880 = vmatprep.subr.mxu0 0.0
    %3881 = vmatpush1.msra.mxu0 %v2699
    %3882 = vmatprep.subr.mxu0 0.0
    %3883 = vmatpush2.msra.mxu0 0.0
    %3884 = vmatprep.subr.mxu0 0.0
    %3885 = vmatpush2.msra.mxu0 0.0
    %3886 = vmatprep.subr.mxu0 0.0
    %3887 = vmatpush2.msra.mxu0 0.0
    %3888 = vmatprep.subr.mxu0 0.0
    %3889 = vmatpush2.msra.mxu0 0.0
    %3890 = vmatprep.subr.mxu0 0.0
    %3891 = vmatpush2.msra.mxu0 0.0
    %3892 = vmatprep.subr.mxu0 0.0
    %3893 = vmatpush2.msra.mxu0 0.0
    %3894 = vmatprep.subr.mxu0 0.0
    %3895 = vmatpush2.msra.mxu0 0.0
    %3896 = vmatprep.subr.mxu0 0.0
    %3897 = vmatpush2.msra.mxu0 0.0
    %3898 = vmatprep.subr.mxu0 0.0
    %3899 = vmatpush2.msra.mxu0 0.0
    %3900 = vmatprep.subr.mxu0 0.0
    %3901 = vmatpush2.msra.mxu0 0.0
    %3902 = vmatprep.subr.mxu0 0.0
    %3903 = vmatpush2.msra.mxu0 0.0
    %3904 = vmatprep.subr.mxu0 0.0
    %3905 = vmatpush2.msra.mxu0 0.0
    %3906 = vmatprep.subr.mxu0 0.0
    %3907 = vmatpush2.msra.mxu0 0.0
    %3908 = vmatprep.subr.mxu0 0.0
    %3909 = vmatpush2.msra.mxu0 0.0
    %3910 = vmatprep.subr.mxu0 0.0
    %3911 = vmatpush2.msra.mxu0 0.0
    %3912 = vmatprep.subr.mxu0 0.0
    %3913 = vmatpush2.msra.mxu0 0.0
    %3914 = vmatprep.mubr.f32.mxu0 0.0
    %3915 = vmatmul.mubr.f32.gmra.mxu0 %v3750
    %v3916 = vpop.f32.mrf.mxu0
    %v3917 = vadd.f32 %v2710, %v3916
    %v3918 = vpop.f32.mrf.mxu0
    %3919 = vdwg.mxu0
    %3921 = vrot.lane.b32.xlu0 %v3745, 96
    %v3922 = vpop.permute.xlu0 %3921
    %v3923 = vsel %vm59, %v3922, 0
    %3925 = vmatprep.subr.mxu0 0.0
    %3926 = vmatpush1.msra.mxu0 0.0
    %3927 = vmatprep.subr.mxu0 0.0
    %3928 = vmatpush1.msra.mxu0 0.0
    %3929 = vmatprep.subr.mxu0 0.0
    %3930 = vmatpush1.msra.mxu0 0.0
    %3931 = vmatprep.subr.mxu0 0.0
    %3932 = vmatpush1.msra.mxu0 0.0
    %3933 = vmatprep.subr.mxu0 0.0
    %3934 = vmatpush1.msra.mxu0 0.0
    %3935 = vmatprep.subr.mxu0 0.0
    %3936 = vmatpush1.msra.mxu0 0.0
    %3937 = vmatprep.subr.mxu0 0.0
    %3938 = vmatpush1.msra.mxu0 0.0
    %3939 = vmatprep.subr.mxu0 0.0
    %3940 = vmatpush1.msra.mxu0 0.0
    %3941 = vmatprep.subr.mxu0 0.0
    %3942 = vmatpush1.msra.mxu0 0.0
    %3943 = vmatprep.subr.mxu0 0.0
    %3944 = vmatpush1.msra.mxu0 0.0
    %3945 = vmatprep.subr.mxu0 0.0
    %3946 = vmatpush1.msra.mxu0 0.0
    %3947 = vmatprep.subr.mxu0 0.0
    %3948 = vmatpush1.msra.mxu0 0.0
    %3949 = vmatprep.subr.mxu0 0.0
    %3950 = vmatpush1.msra.mxu0 %v2706
    %3951 = vmatprep.subr.mxu0 0.0
    %3952 = vmatpush1.msra.mxu0 %v2705
    %3953 = vmatprep.subr.mxu0 0.0
    %3954 = vmatpush1.msra.mxu0 %v2704
    %3955 = vmatprep.subr.mxu0 0.0
    %3956 = vmatpush1.msra.mxu0 %v2703
    %3957 = vmatprep.subr.mxu0 0.0
    %3958 = vmatpush2.msra.mxu0 0.0
    %3959 = vmatprep.subr.mxu0 0.0
    %3960 = vmatpush2.msra.mxu0 0.0
    %3961 = vmatprep.subr.mxu0 0.0
    %3962 = vmatpush2.msra.mxu0 0.0
    %3963 = vmatprep.subr.mxu0 0.0
    %3964 = vmatpush2.msra.mxu0 0.0
    %3965 = vmatprep.subr.mxu0 0.0
    %3966 = vmatpush2.msra.mxu0 0.0
    %3967 = vmatprep.subr.mxu0 0.0
    %3968 = vmatpush2.msra.mxu0 0.0
    %3969 = vmatprep.subr.mxu0 0.0
    %3970 = vmatpush2.msra.mxu0 0.0
    %3971 = vmatprep.subr.mxu0 0.0
    %3972 = vmatpush2.msra.mxu0 0.0
    %3973 = vmatprep.subr.mxu0 0.0
    %3974 = vmatpush2.msra.mxu0 0.0
    %3975 = vmatprep.subr.mxu0 0.0
    %3976 = vmatpush2.msra.mxu0 0.0
    %3977 = vmatprep.subr.mxu0 0.0
    %3978 = vmatpush2.msra.mxu0 0.0
    %3979 = vmatprep.subr.mxu0 0.0
    %3980 = vmatpush2.msra.mxu0 0.0
    %3981 = vmatprep.subr.mxu0 0.0
    %3982 = vmatpush2.msra.mxu0 0.0
    %3983 = vmatprep.subr.mxu0 0.0
    %3984 = vmatpush2.msra.mxu0 0.0
    %3985 = vmatprep.subr.mxu0 0.0
    %3986 = vmatpush2.msra.mxu0 0.0
    %3987 = vmatprep.subr.mxu0 0.0
    %3988 = vmatpush2.msra.mxu0 0.0
    %3989 = vmatprep.mubr.f32.mxu0 0.0
    %3990 = vmatmul.mubr.f32.gmra.mxu0 %v3923
    %v3991 = vpop.f32.mrf.mxu0
    %v3992 = vadd.f32 0.0, %v3991
    %v3993 = vpop.f32.mrf.mxu0
    %3994 = vdwg.mxu0
    %v3995 = vadd.f32 %v3917, %v3992
    %v3996 = vxor.u32 %v3995, 2147483648
    %v3997 = vmul.f32 %v3996, 1.442695
    %v3998 = vpow.pop %v3997
    %v3999 = vadd.f32 %v3998, 1.0
    %v4000 = vrcp.pop %v3999
    %v4001 = vmul.f32 1.0, %v4000
    %v4002 = vadd.f32 %v3992, %v3162
    %4004 = vrot.lane.b32.xlu0 %v4002, 64
    %v4005 = vpop.permute.xlu0 %4004
    %v4007 = vmul.f32 %v4001, %v4005
    %4009 = vrot.lane.b32.xlu0 %v4007, 64
    %v4010 = vpop.permute.xlu0 %4009
    %v4012 = vadd.f32 %v3917, %v4010
    %v4013 = vtanh.pop %v4012
    %v4014 = vsub.f32 1.0, %v4001
    %4016 = vrot.lane.b32.xlu0 %v4013, 96
    %v4017 = vpop.permute.xlu0 %4016
    %v4019 = vmul.f32 %v4014, %v4017
    %v4020 = vmul.f32 %v4001, %v3745
    %v4021 = vadd.f32 %v4019, %v4020
    %4023 = vrot.lane.b32.xlu0 %v3849, 96
    %v4024 = vpop.permute.xlu0 %4023
    %v4025 = vsel %vm59, %v4024, 0
    %4027 = vmatprep.subr.mxu0 0.0
    %4028 = vmatpush1.msra.mxu0 0.0
    %4029 = vmatprep.subr.mxu0 0.0
    %4030 = vmatpush1.msra.mxu0 0.0
    %4031 = vmatprep.subr.mxu0 0.0
    %4032 = vmatpush1.msra.mxu0 0.0
    %4033 = vmatprep.subr.mxu0 0.0
    %4034 = vmatpush1.msra.mxu0 0.0
    %4035 = vmatprep.subr.mxu0 0.0
    %4036 = vmatpush1.msra.mxu0 0.0
    %4037 = vmatprep.subr.mxu0 0.0
    %4038 = vmatpush1.msra.mxu0 0.0
    %4039 = vmatprep.subr.mxu0 0.0
    %4040 = vmatpush1.msra.mxu0 0.0
    %4041 = vmatprep.subr.mxu0 0.0
    %4042 = vmatpush1.msra.mxu0 0.0
    %4043 = vmatprep.subr.mxu0 0.0
    %4044 = vmatpush1.msra.mxu0 0.0
    %4045 = vmatprep.subr.mxu0 0.0
    %4046 = vmatpush1.msra.mxu0 0.0
    %4047 = vmatprep.subr.mxu0 0.0
    %4048 = vmatpush1.msra.mxu0 0.0
    %4049 = vmatprep.subr.mxu0 0.0
    %4050 = vmatpush1.msra.mxu0 0.0
    %4051 = vmatprep.subr.mxu0 0.0
    %4052 = vmatpush1.msra.mxu0 %v2694
    %4053 = vmatprep.subr.mxu0 0.0
    %4054 = vmatpush1.msra.mxu0 %v2693
    %4055 = vmatprep.subr.mxu0 0.0
    %4056 = vmatpush1.msra.mxu0 %v2692
    %4057 = vmatprep.subr.mxu0 0.0
    %4058 = vmatpush1.msra.mxu0 %v2691
    %4059 = vmatprep.subr.mxu0 0.0
    %4060 = vmatpush2.msra.mxu0 0.0
    %4061 = vmatprep.subr.mxu0 0.0
    %4062 = vmatpush2.msra.mxu0 0.0
    %4063 = vmatprep.subr.mxu0 0.0
    %4064 = vmatpush2.msra.mxu0 0.0
    %4065 = vmatprep.subr.mxu0 0.0
    %4066 = vmatpush2.msra.mxu0 0.0
    %4067 = vmatprep.subr.mxu0 0.0
    %4068 = vmatpush2.msra.mxu0 0.0
    %4069 = vmatprep.subr.mxu0 0.0
    %4070 = vmatpush2.msra.mxu0 0.0
    %4071 = vmatprep.subr.mxu0 0.0
    %4072 = vmatpush2.msra.mxu0 0.0
    %4073 = vmatprep.subr.mxu0 0.0
    %4074 = vmatpush2.msra.mxu0 0.0
    %4075 = vmatprep.subr.mxu0 0.0
    %4076 = vmatpush2.msra.mxu0 0.0
    %4077 = vmatprep.subr.mxu0 0.0
    %4078 = vmatpush2.msra.mxu0 0.0
    %4079 = vmatprep.subr.mxu0 0.0
    %4080 = vmatpush2.msra.mxu0 0.0
    %4081 = vmatprep.subr.mxu0 0.0
    %4082 = vmatpush2.msra.mxu0 0.0
    %4083 = vmatprep.subr.mxu0 0.0
    %4084 = vmatpush2.msra.mxu0 0.0
    %4085 = vmatprep.subr.mxu0 0.0
    %4086 = vmatpush2.msra.mxu0 0.0
    %4087 = vmatprep.subr.mxu0 0.0
    %4088 = vmatpush2.msra.mxu0 0.0
    %4089 = vmatprep.subr.mxu0 0.0
    %4090 = vmatpush2.msra.mxu0 0.0
    %4091 = vmatprep.mubr.f32.mxu0 0.0
    %4092 = vmatmul.mubr.f32.gmra.mxu0 %v4025
    %v4093 = vpop.f32.mrf.mxu0
    %v4094 = vadd.f32 0.0, %v4093
    %v4095 = vpop.f32.mrf.mxu0
    %4096 = vdwg.mxu0
    %v4098 = vrot.slane %v4094, 6
    %v4100 = vadd.f32 %v2791, %v4098
    %v4101 = vxor.u32 %v4100, 2147483648
    %v4102 = vmul.f32 %v4101, 1.442695
    %v4103 = vpow.pop %v4102
    %v4104 = vadd.f32 %v4103, 1.0
    %v4105 = vrcp.pop %v4104
    %v4106 = vmul.f32 1.0, %v4105
    %v4107 = vadd.f32 %v4094, %v2876
    %v4109 = vrot.slane %v4107, 6
    %4110 = vrot.lane.b32.xlu0 %v4109, 64
    %v4111 = vpop.permute.xlu0 %4110
    %v4113 = vmul.f32 %v4106, %v4111
    %4115 = vrot.lane.b32.xlu0 %v4113, 64
    %v4116 = vpop.permute.xlu0 %4115
    %v4118 = vadd.f32 %v2791, %v4116
    %v4119 = vtanh.pop %v4118
    %v4120 = vsub.f32 1.0, %v4106
    %4122 = vrot.lane.b32.xlu0 %v4119, 96
    %v4123 = vpop.permute.xlu0 %4122
    %v4125 = vmul.f32 %v4120, %v4123
    %v4126 = vrot.slane %v3849, 6
    %v4128 = vmul.f32 %v4106, %v4126
    %v4129 = vadd.f32 %v4125, %v4128
    %4130 = vmatprep.subr.mxu0 0.0
    %4131 = vmatpush1.msra.mxu0 0.0
    %4132 = vmatprep.subr.mxu0 0.0
    %4133 = vmatpush1.msra.mxu0 0.0
    %4134 = vmatprep.subr.mxu0 0.0
    %4135 = vmatpush1.msra.mxu0 0.0
    %4136 = vmatprep.subr.mxu0 0.0
    %4137 = vmatpush1.msra.mxu0 0.0
    %4138 = vmatprep.subr.mxu0 0.0
    %4139 = vmatpush1.msra.mxu0 0.0
    %4140 = vmatprep.subr.mxu0 0.0
    %4141 = vmatpush1.msra.mxu0 0.0
    %4142 = vmatprep.subr.mxu0 0.0
    %4143 = vmatpush1.msra.mxu0 0.0
    %4144 = vmatprep.subr.mxu0 0.0
    %4145 = vmatpush1.msra.mxu0 0.0
    %4146 = vmatprep.subr.mxu0 0.0
    %4147 = vmatpush1.msra.mxu0 0.0
    %4148 = vmatprep.subr.mxu0 0.0
    %4149 = vmatpush1.msra.mxu0 0.0
    %4150 = vmatprep.subr.mxu0 0.0
    %4151 = vmatpush1.msra.mxu0 0.0
    %4152 = vmatprep.subr.mxu0 0.0
    %4153 = vmatpush1.msra.mxu0 0.0
    %4154 = vmatprep.subr.mxu0 0.0
    %4155 = vmatpush1.msra.mxu0 %v2702
    %4156 = vmatprep.subr.mxu0 0.0
    %4157 = vmatpush1.msra.mxu0 %v2701
    %4158 = vmatprep.subr.mxu0 0.0
    %4159 = vmatpush1.msra.mxu0 %v2700
    %4160 = vmatprep.subr.mxu0 0.0
    %4161 = vmatpush1.msra.mxu0 %v2699
    %4162 = vmatprep.subr.mxu0 0.0
    %4163 = vmatpush2.msra.mxu0 0.0
    %4164 = vmatprep.subr.mxu0 0.0
    %4165 = vmatpush2.msra.mxu0 0.0
    %4166 = vmatprep.subr.mxu0 0.0
    %4167 = vmatpush2.msra.mxu0 0.0
    %4168 = vmatprep.subr.mxu0 0.0
    %4169 = vmatpush2.msra.mxu0 0.0
    %4170 = vmatprep.subr.mxu0 0.0
    %4171 = vmatpush2.msra.mxu0 0.0
    %4172 = vmatprep.subr.mxu0 0.0
    %4173 = vmatpush2.msra.mxu0 0.0
    %4174 = vmatprep.subr.mxu0 0.0
    %4175 = vmatpush2.msra.mxu0 0.0
    %4176 = vmatprep.subr.mxu0 0.0
    %4177 = vmatpush2.msra.mxu0 0.0
    %4178 = vmatprep.subr.mxu0 0.0
    %4179 = vmatpush2.msra.mxu0 0.0
    %4180 = vmatprep.subr.mxu0 0.0
    %4181 = vmatpush2.msra.mxu0 0.0
    %4182 = vmatprep.subr.mxu0 0.0
    %4183 = vmatpush2.msra.mxu0 0.0
    %4184 = vmatprep.subr.mxu0 0.0
    %4185 = vmatpush2.msra.mxu0 0.0
    %4186 = vmatprep.subr.mxu0 0.0
    %4187 = vmatpush2.msra.mxu0 0.0
    %4188 = vmatprep.subr.mxu0 0.0
    %4189 = vmatpush2.msra.mxu0 0.0
    %4190 = vmatprep.subr.mxu0 0.0
    %4191 = vmatpush2.msra.mxu0 0.0
    %4192 = vmatprep.subr.mxu0 0.0
    %4193 = vmatpush2.msra.mxu0 0.0
    %4194 = vmatprep.mubr.f32.mxu0 0.0
    %4195 = vmatmul.mubr.f32.gmra.mxu0 %v4025
    %v4196 = vpop.f32.mrf.mxu0
    %v4197 = vadd.f32 %v2710, %v4196
    %v4198 = vpop.f32.mrf.mxu0
    %4199 = vdwg.mxu0
    %4201 = vrot.lane.b32.xlu0 %v4021, 96
    %v4202 = vpop.permute.xlu0 %4201
    %v4203 = vsel %vm59, %v4202, 0
    %4205 = vmatprep.subr.mxu0 0.0
    %4206 = vmatpush1.msra.mxu0 0.0
    %4207 = vmatprep.subr.mxu0 0.0
    %4208 = vmatpush1.msra.mxu0 0.0
    %4209 = vmatprep.subr.mxu0 0.0
    %4210 = vmatpush1.msra.mxu0 0.0
    %4211 = vmatprep.subr.mxu0 0.0
    %4212 = vmatpush1.msra.mxu0 0.0
    %4213 = vmatprep.subr.mxu0 0.0
    %4214 = vmatpush1.msra.mxu0 0.0
    %4215 = vmatprep.subr.mxu0 0.0
    %4216 = vmatpush1.msra.mxu0 0.0
    %4217 = vmatprep.subr.mxu0 0.0
    %4218 = vmatpush1.msra.mxu0 0.0
    %4219 = vmatprep.subr.mxu0 0.0
    %4220 = vmatpush1.msra.mxu0 0.0
    %4221 = vmatprep.subr.mxu0 0.0
    %4222 = vmatpush1.msra.mxu0 0.0
    %4223 = vmatprep.subr.mxu0 0.0
    %4224 = vmatpush1.msra.mxu0 0.0
    %4225 = vmatprep.subr.mxu0 0.0
    %4226 = vmatpush1.msra.mxu0 0.0
    %4227 = vmatprep.subr.mxu0 0.0
    %4228 = vmatpush1.msra.mxu0 0.0
    %4229 = vmatprep.subr.mxu0 0.0
    %4230 = vmatpush1.msra.mxu0 %v2706
    %4231 = vmatprep.subr.mxu0 0.0
    %4232 = vmatpush1.msra.mxu0 %v2705
    %4233 = vmatprep.subr.mxu0 0.0
    %4234 = vmatpush1.msra.mxu0 %v2704
    %4235 = vmatprep.subr.mxu0 0.0
    %4236 = vmatpush1.msra.mxu0 %v2703
    %4237 = vmatprep.subr.mxu0 0.0
    %4238 = vmatpush2.msra.mxu0 0.0
    %4239 = vmatprep.subr.mxu0 0.0
    %4240 = vmatpush2.msra.mxu0 0.0
    %4241 = vmatprep.subr.mxu0 0.0
    %4242 = vmatpush2.msra.mxu0 0.0
    %4243 = vmatprep.subr.mxu0 0.0
    %4244 = vmatpush2.msra.mxu0 0.0
    %4245 = vmatprep.subr.mxu0 0.0
    %4246 = vmatpush2.msra.mxu0 0.0
    %4247 = vmatprep.subr.mxu0 0.0
    %4248 = vmatpush2.msra.mxu0 0.0
    %4249 = vmatprep.subr.mxu0 0.0
    %4250 = vmatpush2.msra.mxu0 0.0
    %4251 = vmatprep.subr.mxu0 0.0
    %4252 = vmatpush2.msra.mxu0 0.0
    %4253 = vmatprep.subr.mxu0 0.0
    %4254 = vmatpush2.msra.mxu0 0.0
    %4255 = vmatprep.subr.mxu0 0.0
    %4256 = vmatpush2.msra.mxu0 0.0
    %4257 = vmatprep.subr.mxu0 0.0
    %4258 = vmatpush2.msra.mxu0 0.0
    %4259 = vmatprep.subr.mxu0 0.0
    %4260 = vmatpush2.msra.mxu0 0.0
    %4261 = vmatprep.subr.mxu0 0.0
    %4262 = vmatpush2.msra.mxu0 0.0
    %4263 = vmatprep.subr.mxu0 0.0
    %4264 = vmatpush2.msra.mxu0 0.0
    %4265 = vmatprep.subr.mxu0 0.0
    %4266 = vmatpush2.msra.mxu0 0.0
    %4267 = vmatprep.subr.mxu0 0.0
    %4268 = vmatpush2.msra.mxu0 0.0
    %4269 = vmatprep.mubr.f32.mxu0 0.0
    %4270 = vmatmul.mubr.f32.gmra.mxu0 %v4203
    %v4271 = vpop.f32.mrf.mxu0
    %v4272 = vadd.f32 0.0, %v4271
    %v4273 = vpop.f32.mrf.mxu0
    %4274 = vdwg.mxu0
    %v4275 = vadd.f32 %v4197, %v4272
    %v4276 = vxor.u32 %v4275, 2147483648
    %v4277 = vmul.f32 %v4276, 1.442695
    %v4278 = vpow.pop %v4277
    %v4279 = vadd.f32 %v4278, 1.0
    %v4280 = vrcp.pop %v4279
    %v4281 = vmul.f32 1.0, %v4280
    %v4282 = vadd.f32 %v4272, %v3162
    %4284 = vrot.lane.b32.xlu0 %v4282, 64
    %v4285 = vpop.permute.xlu0 %4284
    %v4287 = vmul.f32 %v4281, %v4285
    %4289 = vrot.lane.b32.xlu0 %v4287, 64
    %v4290 = vpop.permute.xlu0 %4289
    %v4292 = vadd.f32 %v4197, %v4290
    %v4293 = vtanh.pop %v4292
    %v4294 = vsub.f32 1.0, %v4281
    %4296 = vrot.lane.b32.xlu0 %v4293, 96
    %v4297 = vpop.permute.xlu0 %4296
    %v4299 = vmul.f32 %v4294, %v4297
    %v4300 = vmul.f32 %v4281, %v4021
    %v4301 = vadd.f32 %v4299, %v4300
    %v4303 = vrot.slane %v4129, 2
    %4304 = vrot.lane.b32.xlu0 %v4303, 96
    %v4305 = vpop.permute.xlu0 %4304
    %v4306 = vsel %vm59, %v4305, 0
    %4308 = vmatprep.subr.mxu0 0.0
    %4309 = vmatpush1.msra.mxu0 0.0
    %4310 = vmatprep.subr.mxu0 0.0
    %4311 = vmatpush1.msra.mxu0 0.0
    %4312 = vmatprep.subr.mxu0 0.0
    %4313 = vmatpush1.msra.mxu0 0.0
    %4314 = vmatprep.subr.mxu0 0.0
    %4315 = vmatpush1.msra.mxu0 0.0
    %4316 = vmatprep.subr.mxu0 0.0
    %4317 = vmatpush1.msra.mxu0 0.0
    %4318 = vmatprep.subr.mxu0 0.0
    %4319 = vmatpush1.msra.mxu0 0.0
    %4320 = vmatprep.subr.mxu0 0.0
    %4321 = vmatpush1.msra.mxu0 0.0
    %4322 = vmatprep.subr.mxu0 0.0
    %4323 = vmatpush1.msra.mxu0 0.0
    %4324 = vmatprep.subr.mxu0 0.0
    %4325 = vmatpush1.msra.mxu0 0.0
    %4326 = vmatprep.subr.mxu0 0.0
    %4327 = vmatpush1.msra.mxu0 0.0
    %4328 = vmatprep.subr.mxu0 0.0
    %4329 = vmatpush1.msra.mxu0 0.0
    %4330 = vmatprep.subr.mxu0 0.0
    %4331 = vmatpush1.msra.mxu0 0.0
    %4332 = vmatprep.subr.mxu0 0.0
    %4333 = vmatpush1.msra.mxu0 %v2694
    %4334 = vmatprep.subr.mxu0 0.0
    %4335 = vmatpush1.msra.mxu0 %v2693
    %4336 = vmatprep.subr.mxu0 0.0
    %4337 = vmatpush1.msra.mxu0 %v2692
    %4338 = vmatprep.subr.mxu0 0.0
    %4339 = vmatpush1.msra.mxu0 %v2691
    %4340 = vmatprep.subr.mxu0 0.0
    %4341 = vmatpush2.msra.mxu0 0.0
    %4342 = vmatprep.subr.mxu0 0.0
    %4343 = vmatpush2.msra.mxu0 0.0
    %4344 = vmatprep.subr.mxu0 0.0
    %4345 = vmatpush2.msra.mxu0 0.0
    %4346 = vmatprep.subr.mxu0 0.0
    %4347 = vmatpush2.msra.mxu0 0.0
    %4348 = vmatprep.subr.mxu0 0.0
    %4349 = vmatpush2.msra.mxu0 0.0
    %4350 = vmatprep.subr.mxu0 0.0
    %4351 = vmatpush2.msra.mxu0 0.0
    %4352 = vmatprep.subr.mxu0 0.0
    %4353 = vmatpush2.msra.mxu0 0.0
    %4354 = vmatprep.subr.mxu0 0.0
    %4355 = vmatpush2.msra.mxu0 0.0
    %4356 = vmatprep.subr.mxu0 0.0
    %4357 = vmatpush2.msra.mxu0 0.0
    %4358 = vmatprep.subr.mxu0 0.0
    %4359 = vmatpush2.msra.mxu0 0.0
    %4360 = vmatprep.subr.mxu0 0.0
    %4361 = vmatpush2.msra.mxu0 0.0
    %4362 = vmatprep.subr.mxu0 0.0
    %4363 = vmatpush2.msra.mxu0 0.0
    %4364 = vmatprep.subr.mxu0 0.0
    %4365 = vmatpush2.msra.mxu0 0.0
    %4366 = vmatprep.subr.mxu0 0.0
    %4367 = vmatpush2.msra.mxu0 0.0
    %4368 = vmatprep.subr.mxu0 0.0
    %4369 = vmatpush2.msra.mxu0 0.0
    %4370 = vmatprep.subr.mxu0 0.0
    %4371 = vmatpush2.msra.mxu0 0.0
    %4372 = vmatprep.mubr.f32.mxu0 0.0
    %4373 = vmatmul.mubr.f32.gmra.mxu0 %v4306
    %v4374 = vpop.f32.mrf.mxu0
    %v4375 = vadd.f32 0.0, %v4374
    %v4376 = vpop.f32.mrf.mxu0
    %4377 = vdwg.mxu0
    %v4379 = vrot.slane %v4375, 4
    %v4381 = vadd.f32 %v2791, %v4379
    %v4382 = vxor.u32 %v4381, 2147483648
    %v4383 = vmul.f32 %v4382, 1.442695
    %v4384 = vpow.pop %v4383
    %v4385 = vadd.f32 %v4384, 1.0
    %v4386 = vrcp.pop %v4385
    %v4387 = vmul.f32 1.0, %v4386
    %v4388 = vadd.f32 %v4375, %v2876
    %v4390 = vrot.slane %v4388, 4
    %4391 = vrot.lane.b32.xlu0 %v4390, 64
    %v4392 = vpop.permute.xlu0 %4391
    %v4394 = vmul.f32 %v4387, %v4392
    %4396 = vrot.lane.b32.xlu0 %v4394, 64
    %v4397 = vpop.permute.xlu0 %4396
    %v4399 = vadd.f32 %v2791, %v4397
    %v4400 = vtanh.pop %v4399
    %v4401 = vsub.f32 1.0, %v4387
    %4403 = vrot.lane.b32.xlu0 %v4400, 96
    %v4404 = vpop.permute.xlu0 %4403
    %v4406 = vmul.f32 %v4401, %v4404
    %v4407 = vrot.slane %v4129, 6
    %v4409 = vmul.f32 %v4387, %v4407
    %v4410 = vadd.f32 %v4406, %v4409
    %4411 = vmatprep.subr.mxu0 0.0
    %4412 = vmatpush1.msra.mxu0 0.0
    %4413 = vmatprep.subr.mxu0 0.0
    %4414 = vmatpush1.msra.mxu0 0.0
    %4415 = vmatprep.subr.mxu0 0.0
    %4416 = vmatpush1.msra.mxu0 0.0
    %4417 = vmatprep.subr.mxu0 0.0
    %4418 = vmatpush1.msra.mxu0 0.0
    %4419 = vmatprep.subr.mxu0 0.0
    %4420 = vmatpush1.msra.mxu0 0.0
    %4421 = vmatprep.subr.mxu0 0.0
    %4422 = vmatpush1.msra.mxu0 0.0
    %4423 = vmatprep.subr.mxu0 0.0
    %4424 = vmatpush1.msra.mxu0 0.0
    %4425 = vmatprep.subr.mxu0 0.0
    %4426 = vmatpush1.msra.mxu0 0.0
    %4427 = vmatprep.subr.mxu0 0.0
    %4428 = vmatpush1.msra.mxu0 0.0
    %4429 = vmatprep.subr.mxu0 0.0
    %4430 = vmatpush1.msra.mxu0 0.0
    %4431 = vmatprep.subr.mxu0 0.0
    %4432 = vmatpush1.msra.mxu0 0.0
    %4433 = vmatprep.subr.mxu0 0.0
    %4434 = vmatpush1.msra.mxu0 0.0
    %4435 = vmatprep.subr.mxu0 0.0
    %4436 = vmatpush1.msra.mxu0 %v2702
    %4437 = vmatprep.subr.mxu0 0.0
    %4438 = vmatpush1.msra.mxu0 %v2701
    %4439 = vmatprep.subr.mxu0 0.0
    %4440 = vmatpush1.msra.mxu0 %v2700
    %4441 = vmatprep.subr.mxu0 0.0
    %4442 = vmatpush1.msra.mxu0 %v2699
    %4443 = vmatprep.subr.mxu0 0.0
    %4444 = vmatpush2.msra.mxu0 0.0
    %4445 = vmatprep.subr.mxu0 0.0
    %4446 = vmatpush2.msra.mxu0 0.0
    %4447 = vmatprep.subr.mxu0 0.0
    %4448 = vmatpush2.msra.mxu0 0.0
    %4449 = vmatprep.subr.mxu0 0.0
    %4450 = vmatpush2.msra.mxu0 0.0
    %4451 = vmatprep.subr.mxu0 0.0
    %4452 = vmatpush2.msra.mxu0 0.0
    %4453 = vmatprep.subr.mxu0 0.0
    %4454 = vmatpush2.msra.mxu0 0.0
    %4455 = vmatprep.subr.mxu0 0.0
    %4456 = vmatpush2.msra.mxu0 0.0
    %4457 = vmatprep.subr.mxu0 0.0
    %4458 = vmatpush2.msra.mxu0 0.0
    %4459 = vmatprep.subr.mxu0 0.0
    %4460 = vmatpush2.msra.mxu0 0.0
    %4461 = vmatprep.subr.mxu0 0.0
    %4462 = vmatpush2.msra.mxu0 0.0
    %4463 = vmatprep.subr.mxu0 0.0
    %4464 = vmatpush2.msra.mxu0 0.0
    %4465 = vmatprep.subr.mxu0 0.0
    %4466 = vmatpush2.msra.mxu0 0.0
    %4467 = vmatprep.subr.mxu0 0.0
    %4468 = vmatpush2.msra.mxu0 0.0
    %4469 = vmatprep.subr.mxu0 0.0
    %4470 = vmatpush2.msra.mxu0 0.0
    %4471 = vmatprep.subr.mxu0 0.0
    %4472 = vmatpush2.msra.mxu0 0.0
    %4473 = vmatprep.subr.mxu0 0.0
    %4474 = vmatpush2.msra.mxu0 0.0
    %4475 = vmatprep.mubr.f32.mxu0 0.0
    %4476 = vmatmul.mubr.f32.gmra.mxu0 %v4306
    %v4477 = vpop.f32.mrf.mxu0
    %v4478 = vadd.f32 %v2710, %v4477
    %v4479 = vpop.f32.mrf.mxu0
    %4480 = vdwg.mxu0
    %4482 = vrot.lane.b32.xlu0 %v4301, 96
    %v4483 = vpop.permute.xlu0 %4482
    %v4484 = vsel %vm59, %v4483, 0
    %4486 = vmatprep.subr.mxu0 0.0
    %4487 = vmatpush1.msra.mxu0 0.0
    %4488 = vmatprep.subr.mxu0 0.0
    %4489 = vmatpush1.msra.mxu0 0.0
    %4490 = vmatprep.subr.mxu0 0.0
    %4491 = vmatpush1.msra.mxu0 0.0
    %4492 = vmatprep.subr.mxu0 0.0
    %4493 = vmatpush1.msra.mxu0 0.0
    %4494 = vmatprep.subr.mxu0 0.0
    %4495 = vmatpush1.msra.mxu0 0.0
    %4496 = vmatprep.subr.mxu0 0.0
    %4497 = vmatpush1.msra.mxu0 0.0
    %4498 = vmatprep.subr.mxu0 0.0
    %4499 = vmatpush1.msra.mxu0 0.0
    %4500 = vmatprep.subr.mxu0 0.0
    %4501 = vmatpush1.msra.mxu0 0.0
    %4502 = vmatprep.subr.mxu0 0.0
    %4503 = vmatpush1.msra.mxu0 0.0
    %4504 = vmatprep.subr.mxu0 0.0
    %4505 = vmatpush1.msra.mxu0 0.0
    %4506 = vmatprep.subr.mxu0 0.0
    %4507 = vmatpush1.msra.mxu0 0.0
    %4508 = vmatprep.subr.mxu0 0.0
    %4509 = vmatpush1.msra.mxu0 0.0
    %4510 = vmatprep.subr.mxu0 0.0
    %4511 = vmatpush1.msra.mxu0 %v2706
    %4512 = vmatprep.subr.mxu0 0.0
    %4513 = vmatpush1.msra.mxu0 %v2705
    %4514 = vmatprep.subr.mxu0 0.0
    %4515 = vmatpush1.msra.mxu0 %v2704
    %4516 = vmatprep.subr.mxu0 0.0
    %4517 = vmatpush1.msra.mxu0 %v2703
    %4518 = vmatprep.subr.mxu0 0.0
    %4519 = vmatpush2.msra.mxu0 0.0
    %4520 = vmatprep.subr.mxu0 0.0
    %4521 = vmatpush2.msra.mxu0 0.0
    %4522 = vmatprep.subr.mxu0 0.0
    %4523 = vmatpush2.msra.mxu0 0.0
    %4524 = vmatprep.subr.mxu0 0.0
    %4525 = vmatpush2.msra.mxu0 0.0
    %4526 = vmatprep.subr.mxu0 0.0
    %4527 = vmatpush2.msra.mxu0 0.0
    %4528 = vmatprep.subr.mxu0 0.0
    %4529 = vmatpush2.msra.mxu0 0.0
    %4530 = vmatprep.subr.mxu0 0.0
    %4531 = vmatpush2.msra.mxu0 0.0
    %4532 = vmatprep.subr.mxu0 0.0
    %4533 = vmatpush2.msra.mxu0 0.0
    %4534 = vmatprep.subr.mxu0 0.0
    %4535 = vmatpush2.msra.mxu0 0.0
    %4536 = vmatprep.subr.mxu0 0.0
    %4537 = vmatpush2.msra.mxu0 0.0
    %4538 = vmatprep.subr.mxu0 0.0
    %4539 = vmatpush2.msra.mxu0 0.0
    %4540 = vmatprep.subr.mxu0 0.0
    %4541 = vmatpush2.msra.mxu0 0.0
    %4542 = vmatprep.subr.mxu0 0.0
    %4543 = vmatpush2.msra.mxu0 0.0
    %4544 = vmatprep.subr.mxu0 0.0
    %4545 = vmatpush2.msra.mxu0 0.0
    %4546 = vmatprep.subr.mxu0 0.0
    %4547 = vmatpush2.msra.mxu0 0.0
    %4548 = vmatprep.subr.mxu0 0.0
    %4549 = vmatpush2.msra.mxu0 0.0
    %4550 = vmatprep.mubr.f32.mxu0 0.0
    %4551 = vmatmul.mubr.f32.gmra.mxu0 %v4484
    %v4552 = vpop.f32.mrf.mxu0
    %v4553 = vadd.f32 0.0, %v4552
    %v4554 = vpop.f32.mrf.mxu0
    %4555 = vdwg.mxu0
    %v4556 = vadd.f32 %v4478, %v4553
    %v4557 = vxor.u32 %v4556, 2147483648
    %v4558 = vmul.f32 %v4557, 1.442695
    %v4559 = vpow.pop %v4558
    %v4560 = vadd.f32 %v4559, 1.0
    %v4561 = vrcp.pop %v4560
    %v4562 = vmul.f32 1.0, %v4561
    %v4563 = vadd.f32 %v4553, %v3162
    %4565 = vrot.lane.b32.xlu0 %v4563, 64
    %v4566 = vpop.permute.xlu0 %4565
    %v4568 = vmul.f32 %v4562, %v4566
    %4570 = vrot.lane.b32.xlu0 %v4568, 64
    %v4571 = vpop.permute.xlu0 %4570
    %v4573 = vadd.f32 %v4478, %v4571
    %v4574 = vtanh.pop %v4573
    %v4575 = vsub.f32 1.0, %v4562
    %4577 = vrot.lane.b32.xlu0 %v4574, 96
    %v4578 = vpop.permute.xlu0 %4577
    %v4580 = vmul.f32 %v4575, %v4578
    %v4581 = vmul.f32 %v4562, %v4301
    %v4582 = vadd.f32 %v4580, %v4581
    %v4584 = vrot.slane %v4410, 4
    %4585 = vrot.lane.b32.xlu0 %v4584, 96
    %v4586 = vpop.permute.xlu0 %4585
    %v4587 = vsel %vm59, %v4586, 0
    %4589 = vmatprep.subr.mxu0 0.0
    %4590 = vmatpush1.msra.mxu0 0.0
    %4591 = vmatprep.subr.mxu0 0.0
    %4592 = vmatpush1.msra.mxu0 0.0
    %4593 = vmatprep.subr.mxu0 0.0
    %4594 = vmatpush1.msra.mxu0 0.0
    %4595 = vmatprep.subr.mxu0 0.0
    %4596 = vmatpush1.msra.mxu0 0.0
    %4597 = vmatprep.subr.mxu0 0.0
    %4598 = vmatpush1.msra.mxu0 0.0
    %4599 = vmatprep.subr.mxu0 0.0
    %4600 = vmatpush1.msra.mxu0 0.0
    %4601 = vmatprep.subr.mxu0 0.0
    %4602 = vmatpush1.msra.mxu0 0.0
    %4603 = vmatprep.subr.mxu0 0.0
    %4604 = vmatpush1.msra.mxu0 0.0
    %4605 = vmatprep.subr.mxu0 0.0
    %4606 = vmatpush1.msra.mxu0 0.0
    %4607 = vmatprep.subr.mxu0 0.0
    %4608 = vmatpush1.msra.mxu0 0.0
    %4609 = vmatprep.subr.mxu0 0.0
    %4610 = vmatpush1.msra.mxu0 0.0
    %4611 = vmatprep.subr.mxu0 0.0
    %4612 = vmatpush1.msra.mxu0 0.0
    %4613 = vmatprep.subr.mxu0 0.0
    %4614 = vmatpush1.msra.mxu0 %v2694
    %4615 = vmatprep.subr.mxu0 0.0
    %4616 = vmatpush1.msra.mxu0 %v2693
    %4617 = vmatprep.subr.mxu0 0.0
    %4618 = vmatpush1.msra.mxu0 %v2692
    %4619 = vmatprep.subr.mxu0 0.0
    %4620 = vmatpush1.msra.mxu0 %v2691
    %4621 = vmatprep.subr.mxu0 0.0
    %4622 = vmatpush2.msra.mxu0 0.0
    %4623 = vmatprep.subr.mxu0 0.0
    %4624 = vmatpush2.msra.mxu0 0.0
    %4625 = vmatprep.subr.mxu0 0.0
    %4626 = vmatpush2.msra.mxu0 0.0
    %4627 = vmatprep.subr.mxu0 0.0
    %4628 = vmatpush2.msra.mxu0 0.0
    %4629 = vmatprep.subr.mxu0 0.0
    %4630 = vmatpush2.msra.mxu0 0.0
    %4631 = vmatprep.subr.mxu0 0.0
    %4632 = vmatpush2.msra.mxu0 0.0
    %4633 = vmatprep.subr.mxu0 0.0
    %4634 = vmatpush2.msra.mxu0 0.0
    %4635 = vmatprep.subr.mxu0 0.0
    %4636 = vmatpush2.msra.mxu0 0.0
    %4637 = vmatprep.subr.mxu0 0.0
    %4638 = vmatpush2.msra.mxu0 0.0
    %4639 = vmatprep.subr.mxu0 0.0
    %4640 = vmatpush2.msra.mxu0 0.0
    %4641 = vmatprep.subr.mxu0 0.0
    %4642 = vmatpush2.msra.mxu0 0.0
    %4643 = vmatprep.subr.mxu0 0.0
    %4644 = vmatpush2.msra.mxu0 0.0
    %4645 = vmatprep.subr.mxu0 0.0
    %4646 = vmatpush2.msra.mxu0 0.0
    %4647 = vmatprep.subr.mxu0 0.0
    %4648 = vmatpush2.msra.mxu0 0.0
    %4649 = vmatprep.subr.mxu0 0.0
    %4650 = vmatpush2.msra.mxu0 0.0
    %4651 = vmatprep.subr.mxu0 0.0
    %4652 = vmatpush2.msra.mxu0 0.0
    %4653 = vmatprep.mubr.f32.mxu0 0.0
    %4654 = vmatmul.mubr.f32.gmra.mxu0 %v4587
    %v4655 = vpop.f32.mrf.mxu0
    %v4656 = vadd.f32 0.0, %v4655
    %v4657 = vpop.f32.mrf.mxu0
    %4658 = vdwg.mxu0
    %v4660 = vrot.slane %v4656, 2
    %v4662 = vadd.f32 %v2791, %v4660
    %v4663 = vxor.u32 %v4662, 2147483648
    %v4664 = vmul.f32 %v4663, 1.442695
    %v4665 = vpow.pop %v4664
    %v4666 = vadd.f32 %v4665, 1.0
    %v4667 = vrcp.pop %v4666
    %v4668 = vmul.f32 1.0, %v4667
    %v4669 = vadd.f32 %v4656, %v2876
    %v4671 = vrot.slane %v4669, 2
    %4672 = vrot.lane.b32.xlu0 %v4671, 64
    %v4673 = vpop.permute.xlu0 %4672
    %v4675 = vmul.f32 %v4668, %v4673
    %4677 = vrot.lane.b32.xlu0 %v4675, 64
    %v4678 = vpop.permute.xlu0 %4677
    %v4680 = vadd.f32 %v2791, %v4678
    %v4681 = vtanh.pop %v4680
    %v4682 = vsub.f32 1.0, %v4668
    %4684 = vrot.lane.b32.xlu0 %v4681, 96
    %v4685 = vpop.permute.xlu0 %4684
    %v4687 = vmul.f32 %v4682, %v4685
    %v4688 = vrot.slane %v4410, 6
    %v4690 = vmul.f32 %v4668, %v4688
    %v4691 = vadd.f32 %v4687, %v4690
    %4692 = vmatprep.subr.mxu0 0.0
    %4693 = vmatpush1.msra.mxu0 0.0
    %4694 = vmatprep.subr.mxu0 0.0
    %4695 = vmatpush1.msra.mxu0 0.0
    %4696 = vmatprep.subr.mxu0 0.0
    %4697 = vmatpush1.msra.mxu0 0.0
    %4698 = vmatprep.subr.mxu0 0.0
    %4699 = vmatpush1.msra.mxu0 0.0
    %4700 = vmatprep.subr.mxu0 0.0
    %4701 = vmatpush1.msra.mxu0 0.0
    %4702 = vmatprep.subr.mxu0 0.0
    %4703 = vmatpush1.msra.mxu0 0.0
    %4704 = vmatprep.subr.mxu0 0.0
    %4705 = vmatpush1.msra.mxu0 0.0
    %4706 = vmatprep.subr.mxu0 0.0
    %4707 = vmatpush1.msra.mxu0 0.0
    %4708 = vmatprep.subr.mxu0 0.0
    %4709 = vmatpush1.msra.mxu0 0.0
    %4710 = vmatprep.subr.mxu0 0.0
    %4711 = vmatpush1.msra.mxu0 0.0
    %4712 = vmatprep.subr.mxu0 0.0
    %4713 = vmatpush1.msra.mxu0 0.0
    %4714 = vmatprep.subr.mxu0 0.0
    %4715 = vmatpush1.msra.mxu0 0.0
    %4716 = vmatprep.subr.mxu0 0.0
    %4717 = vmatpush1.msra.mxu0 %v2702
    %4718 = vmatprep.subr.mxu0 0.0
    %4719 = vmatpush1.msra.mxu0 %v2701
    %4720 = vmatprep.subr.mxu0 0.0
    %4721 = vmatpush1.msra.mxu0 %v2700
    %4722 = vmatprep.subr.mxu0 0.0
    %4723 = vmatpush1.msra.mxu0 %v2699
    %4724 = vmatprep.subr.mxu0 0.0
    %4725 = vmatpush2.msra.mxu0 0.0
    %4726 = vmatprep.subr.mxu0 0.0
    %4727 = vmatpush2.msra.mxu0 0.0
    %4728 = vmatprep.subr.mxu0 0.0
    %4729 = vmatpush2.msra.mxu0 0.0
    %4730 = vmatprep.subr.mxu0 0.0
    %4731 = vmatpush2.msra.mxu0 0.0
    %4732 = vmatprep.subr.mxu0 0.0
    %4733 = vmatpush2.msra.mxu0 0.0
    %4734 = vmatprep.subr.mxu0 0.0
    %4735 = vmatpush2.msra.mxu0 0.0
    %4736 = vmatprep.subr.mxu0 0.0
    %4737 = vmatpush2.msra.mxu0 0.0
    %4738 = vmatprep.subr.mxu0 0.0
    %4739 = vmatpush2.msra.mxu0 0.0
    %4740 = vmatprep.subr.mxu0 0.0
    %4741 = vmatpush2.msra.mxu0 0.0
    %4742 = vmatprep.subr.mxu0 0.0
    %4743 = vmatpush2.msra.mxu0 0.0
    %4744 = vmatprep.subr.mxu0 0.0
    %4745 = vmatpush2.msra.mxu0 0.0
    %4746 = vmatprep.subr.mxu0 0.0
    %4747 = vmatpush2.msra.mxu0 0.0
    %4748 = vmatprep.subr.mxu0 0.0
    %4749 = vmatpush2.msra.mxu0 0.0
    %4750 = vmatprep.subr.mxu0 0.0
    %4751 = vmatpush2.msra.mxu0 0.0
    %4752 = vmatprep.subr.mxu0 0.0
    %4753 = vmatpush2.msra.mxu0 0.0
    %4754 = vmatprep.subr.mxu0 0.0
    %4755 = vmatpush2.msra.mxu0 0.0
    %4756 = vmatprep.mubr.f32.mxu0 0.0
    %4757 = vmatmul.mubr.f32.gmra.mxu0 %v4587
    %v4758 = vpop.f32.mrf.mxu0
    %v4759 = vadd.f32 %v2710, %v4758
    %v4760 = vpop.f32.mrf.mxu0
    %4761 = vdwg.mxu0
    %4763 = vrot.lane.b32.xlu0 %v4582, 96
    %v4764 = vpop.permute.xlu0 %4763
    %v4765 = vsel %vm59, %v4764, 0
    %4767 = vmatprep.subr.mxu0 0.0
    %4768 = vmatpush1.msra.mxu0 0.0
    %4769 = vmatprep.subr.mxu0 0.0
    %4770 = vmatpush1.msra.mxu0 0.0
    %4771 = vmatprep.subr.mxu0 0.0
    %4772 = vmatpush1.msra.mxu0 0.0
    %4773 = vmatprep.subr.mxu0 0.0
    %4774 = vmatpush1.msra.mxu0 0.0
    %4775 = vmatprep.subr.mxu0 0.0
    %4776 = vmatpush1.msra.mxu0 0.0
    %4777 = vmatprep.subr.mxu0 0.0
    %4778 = vmatpush1.msra.mxu0 0.0
    %4779 = vmatprep.subr.mxu0 0.0
    %4780 = vmatpush1.msra.mxu0 0.0
    %4781 = vmatprep.subr.mxu0 0.0
    %4782 = vmatpush1.msra.mxu0 0.0
    %4783 = vmatprep.subr.mxu0 0.0
    %4784 = vmatpush1.msra.mxu0 0.0
    %4785 = vmatprep.subr.mxu0 0.0
    %4786 = vmatpush1.msra.mxu0 0.0
    %4787 = vmatprep.subr.mxu0 0.0
    %4788 = vmatpush1.msra.mxu0 0.0
    %4789 = vmatprep.subr.mxu0 0.0
    %4790 = vmatpush1.msra.mxu0 0.0
    %4791 = vmatprep.subr.mxu0 0.0
    %4792 = vmatpush1.msra.mxu0 %v2706
    %4793 = vmatprep.subr.mxu0 0.0
    %4794 = vmatpush1.msra.mxu0 %v2705
    %4795 = vmatprep.subr.mxu0 0.0
    %4796 = vmatpush1.msra.mxu0 %v2704
    %4797 = vmatprep.subr.mxu0 0.0
    %4798 = vmatpush1.msra.mxu0 %v2703
    %4799 = vmatprep.subr.mxu0 0.0
    %4800 = vmatpush2.msra.mxu0 0.0
    %4801 = vmatprep.subr.mxu0 0.0
    %4802 = vmatpush2.msra.mxu0 0.0
    %4803 = vmatprep.subr.mxu0 0.0
    %4804 = vmatpush2.msra.mxu0 0.0
    %4805 = vmatprep.subr.mxu0 0.0
    %4806 = vmatpush2.msra.mxu0 0.0
    %4807 = vmatprep.subr.mxu0 0.0
    %4808 = vmatpush2.msra.mxu0 0.0
    %4809 = vmatprep.subr.mxu0 0.0
    %4810 = vmatpush2.msra.mxu0 0.0
    %4811 = vmatprep.subr.mxu0 0.0
    %4812 = vmatpush2.msra.mxu0 0.0
    %4813 = vmatprep.subr.mxu0 0.0
    %4814 = vmatpush2.msra.mxu0 0.0
    %4815 = vmatprep.subr.mxu0 0.0
    %4816 = vmatpush2.msra.mxu0 0.0
    %4817 = vmatprep.subr.mxu0 0.0
    %4818 = vmatpush2.msra.mxu0 0.0
    %4819 = vmatprep.subr.mxu0 0.0
    %4820 = vmatpush2.msra.mxu0 0.0
    %4821 = vmatprep.subr.mxu0 0.0
    %4822 = vmatpush2.msra.mxu0 0.0
    %4823 = vmatprep.subr.mxu0 0.0
    %4824 = vmatpush2.msra.mxu0 0.0
    %4825 = vmatprep.subr.mxu0 0.0
    %4826 = vmatpush2.msra.mxu0 0.0
    %4827 = vmatprep.subr.mxu0 0.0
    %4828 = vmatpush2.msra.mxu0 0.0
    %4829 = vmatprep.subr.mxu0 0.0
    %4830 = vmatpush2.msra.mxu0 0.0
    %4831 = vmatprep.mubr.f32.mxu0 0.0
    %4832 = vmatmul.mubr.f32.gmra.mxu0 %v4765
    %v4833 = vpop.f32.mrf.mxu0
    %v4834 = vadd.f32 0.0, %v4833
    %v4835 = vpop.f32.mrf.mxu0
    %4836 = vdwg.mxu0
    %v4837 = vadd.f32 %v4759, %v4834
    %v4838 = vxor.u32 %v4837, 2147483648
    %v4839 = vmul.f32 %v4838, 1.442695
    %v4840 = vpow.pop %v4839
    %v4841 = vadd.f32 %v4840, 1.0
    %v4842 = vrcp.pop %v4841
    %v4843 = vmul.f32 1.0, %v4842
    %v4844 = vadd.f32 %v4834, %v3162
    %4846 = vrot.lane.b32.xlu0 %v4844, 64
    %v4847 = vpop.permute.xlu0 %4846
    %v4849 = vmul.f32 %v4843, %v4847
    %4851 = vrot.lane.b32.xlu0 %v4849, 64
    %v4852 = vpop.permute.xlu0 %4851
    %v4854 = vadd.f32 %v4759, %v4852
    %v4855 = vtanh.pop %v4854
    %v4856 = vsub.f32 1.0, %v4843
    %4858 = vrot.lane.b32.xlu0 %v4855, 96
    %v4859 = vpop.permute.xlu0 %4858
    %v4861 = vmul.f32 %v4856, %v4859
    %v4862 = vmul.f32 %v4843, %v4582
    %v4863 = vadd.f32 %v4861, %v4862
    %v4865 = vrot.slane %v4691, 6
    %4866 = vrot.lane.b32.xlu0 %v4865, 96
    %v4867 = vpop.permute.xlu0 %4866
    %v4868 = vsel %vm59, %v4867, 0
    %4870 = vmatprep.subr.mxu0 0.0
    %4871 = vmatpush1.msra.mxu0 0.0
    %4872 = vmatprep.subr.mxu0 0.0
    %4873 = vmatpush1.msra.mxu0 0.0
    %4874 = vmatprep.subr.mxu0 0.0
    %4875 = vmatpush1.msra.mxu0 0.0
    %4876 = vmatprep.subr.mxu0 0.0
    %4877 = vmatpush1.msra.mxu0 0.0
    %4878 = vmatprep.subr.mxu0 0.0
    %4879 = vmatpush1.msra.mxu0 0.0
    %4880 = vmatprep.subr.mxu0 0.0
    %4881 = vmatpush1.msra.mxu0 0.0
    %4882 = vmatprep.subr.mxu0 0.0
    %4883 = vmatpush1.msra.mxu0 0.0
    %4884 = vmatprep.subr.mxu0 0.0
    %4885 = vmatpush1.msra.mxu0 0.0
    %4886 = vmatprep.subr.mxu0 0.0
    %4887 = vmatpush1.msra.mxu0 0.0
    %4888 = vmatprep.subr.mxu0 0.0
    %4889 = vmatpush1.msra.mxu0 0.0
    %4890 = vmatprep.subr.mxu0 0.0
    %4891 = vmatpush1.msra.mxu0 0.0
    %4892 = vmatprep.subr.mxu0 0.0
    %4893 = vmatpush1.msra.mxu0 0.0
    %4894 = vmatprep.subr.mxu0 0.0
    %4895 = vmatpush1.msra.mxu0 %v2702
    %4896 = vmatprep.subr.mxu0 0.0
    %4897 = vmatpush1.msra.mxu0 %v2701
    %4898 = vmatprep.subr.mxu0 0.0
    %4899 = vmatpush1.msra.mxu0 %v2700
    %4900 = vmatprep.subr.mxu0 0.0
    %4901 = vmatpush1.msra.mxu0 %v2699
    %4902 = vmatprep.subr.mxu0 0.0
    %4903 = vmatpush2.msra.mxu0 0.0
    %4904 = vmatprep.subr.mxu0 0.0
    %4905 = vmatpush2.msra.mxu0 0.0
    %4906 = vmatprep.subr.mxu0 0.0
    %4907 = vmatpush2.msra.mxu0 0.0
    %4908 = vmatprep.subr.mxu0 0.0
    %4909 = vmatpush2.msra.mxu0 0.0
    %4910 = vmatprep.subr.mxu0 0.0
    %4911 = vmatpush2.msra.mxu0 0.0
    %4912 = vmatprep.subr.mxu0 0.0
    %4913 = vmatpush2.msra.mxu0 0.0
    %4914 = vmatprep.subr.mxu0 0.0
    %4915 = vmatpush2.msra.mxu0 0.0
    %4916 = vmatprep.subr.mxu0 0.0
    %4917 = vmatpush2.msra.mxu0 0.0
    %4918 = vmatprep.subr.mxu0 0.0
    %4919 = vmatpush2.msra.mxu0 0.0
    %4920 = vmatprep.subr.mxu0 0.0
    %4921 = vmatpush2.msra.mxu0 0.0
    %4922 = vmatprep.subr.mxu0 0.0
    %4923 = vmatpush2.msra.mxu0 0.0
    %4924 = vmatprep.subr.mxu0 0.0
    %4925 = vmatpush2.msra.mxu0 0.0
    %4926 = vmatprep.subr.mxu0 0.0
    %4927 = vmatpush2.msra.mxu0 0.0
    %4928 = vmatprep.subr.mxu0 0.0
    %4929 = vmatpush2.msra.mxu0 0.0
    %4930 = vmatprep.subr.mxu0 0.0
    %4931 = vmatpush2.msra.mxu0 0.0
    %4932 = vmatprep.subr.mxu0 0.0
    %4933 = vmatpush2.msra.mxu0 0.0
    %4934 = vmatprep.mubr.f32.mxu0 0.0
    %4935 = vmatmul.mubr.f32.gmra.mxu0 %v4868
    %v4936 = vpop.f32.mrf.mxu0
    %v4937 = vadd.f32 %v2710, %v4936
    %v4938 = vpop.f32.mrf.mxu0
    %4939 = vdwg.mxu0
    %4941 = vrot.lane.b32.xlu0 %v4863, 96
    %v4942 = vpop.permute.xlu0 %4941
    %v4943 = vsel %vm59, %v4942, 0
    %4945 = vmatprep.subr.mxu0 0.0
    %4946 = vmatpush1.msra.mxu0 0.0
    %4947 = vmatprep.subr.mxu0 0.0
    %4948 = vmatpush1.msra.mxu0 0.0
    %4949 = vmatprep.subr.mxu0 0.0
    %4950 = vmatpush1.msra.mxu0 0.0
    %4951 = vmatprep.subr.mxu0 0.0
    %4952 = vmatpush1.msra.mxu0 0.0
    %4953 = vmatprep.subr.mxu0 0.0
    %4954 = vmatpush1.msra.mxu0 0.0
    %4955 = vmatprep.subr.mxu0 0.0
    %4956 = vmatpush1.msra.mxu0 0.0
    %4957 = vmatprep.subr.mxu0 0.0
    %4958 = vmatpush1.msra.mxu0 0.0
    %4959 = vmatprep.subr.mxu0 0.0
    %4960 = vmatpush1.msra.mxu0 0.0
    %4961 = vmatprep.subr.mxu0 0.0
    %4962 = vmatpush1.msra.mxu0 0.0
    %4963 = vmatprep.subr.mxu0 0.0
    %4964 = vmatpush1.msra.mxu0 0.0
    %4965 = vmatprep.subr.mxu0 0.0
    %4966 = vmatpush1.msra.mxu0 0.0
    %4967 = vmatprep.subr.mxu0 0.0
    %4968 = vmatpush1.msra.mxu0 0.0
    %4969 = vmatprep.subr.mxu0 0.0
    %4970 = vmatpush1.msra.mxu0 %v2706
    %4971 = vmatprep.subr.mxu0 0.0
    %4972 = vmatpush1.msra.mxu0 %v2705
    %4973 = vmatprep.subr.mxu0 0.0
    %4974 = vmatpush1.msra.mxu0 %v2704
    %4975 = vmatprep.subr.mxu0 0.0
    %4976 = vmatpush1.msra.mxu0 %v2703
    %4977 = vmatprep.subr.mxu0 0.0
    %4978 = vmatpush2.msra.mxu0 0.0
    %4979 = vmatprep.subr.mxu0 0.0
    %4980 = vmatpush2.msra.mxu0 0.0
    %4981 = vmatprep.subr.mxu0 0.0
    %4982 = vmatpush2.msra.mxu0 0.0
    %4983 = vmatprep.subr.mxu0 0.0
    %4984 = vmatpush2.msra.mxu0 0.0
    %4985 = vmatprep.subr.mxu0 0.0
    %4986 = vmatpush2.msra.mxu0 0.0
    %4987 = vmatprep.subr.mxu0 0.0
    %4988 = vmatpush2.msra.mxu0 0.0
    %4989 = vmatprep.subr.mxu0 0.0
    %4990 = vmatpush2.msra.mxu0 0.0
    %4991 = vmatprep.subr.mxu0 0.0
    %4992 = vmatpush2.msra.mxu0 0.0
    %4993 = vmatprep.subr.mxu0 0.0
    %4994 = vmatpush2.msra.mxu0 0.0
    %4995 = vmatprep.subr.mxu0 0.0
    %4996 = vmatpush2.msra.mxu0 0.0
    %4997 = vmatprep.subr.mxu0 0.0
    %4998 = vmatpush2.msra.mxu0 0.0
    %4999 = vmatprep.subr.mxu0 0.0
    %5000 = vmatpush2.msra.mxu0 0.0
    %5001 = vmatprep.subr.mxu0 0.0
    %5002 = vmatpush2.msra.mxu0 0.0
    %5003 = vmatprep.subr.mxu0 0.0
    %5004 = vmatpush2.msra.mxu0 0.0
    %5005 = vmatprep.subr.mxu0 0.0
    %5006 = vmatpush2.msra.mxu0 0.0
    %5007 = vmatprep.subr.mxu0 0.0
    %5008 = vmatpush2.msra.mxu0 0.0
    %5009 = vmatprep.mubr.f32.mxu0 0.0
    %5010 = vmatmul.mubr.f32.gmra.mxu0 %v4943
    %v5011 = vpop.f32.mrf.mxu0
    %v5012 = vadd.f32 0.0, %v5011
    %v5013 = vpop.f32.mrf.mxu0
    %5014 = vdwg.mxu0
    %v5015 = vadd.f32 %v4937, %v5012
    %v5016 = vxor.u32 %v5015, 2147483648
    %v5017 = vmul.f32 %v5016, 1.442695
    %v5018 = vpow.pop %v5017
    %v5019 = vadd.f32 %v5018, 1.0
    %v5020 = vrcp.pop %v5019
    %v5021 = vmul.f32 1.0, %v5020
    %v5022 = vadd.f32 %v5012, %v3162
    %5024 = vrot.lane.b32.xlu0 %v5022, 64
    %v5025 = vpop.permute.xlu0 %5024
    %v5027 = vmul.f32 %v5021, %v5025
    %5029 = vrot.lane.b32.xlu0 %v5027, 64
    %v5030 = vpop.permute.xlu0 %5029
    %v5032 = vadd.f32 %v4937, %v5030
    %v5033 = vtanh.pop %v5032
    %v5034 = vsub.f32 1.0, %v5021
    %5036 = vrot.lane.b32.xlu0 %v5033, 96
    %v5037 = vpop.permute.xlu0 %5036
    %v5039 = vmul.f32 %v5034, %v5037
    %v5040 = vmul.f32 %v5021, %v4863
    %v5041 = vadd.f32 %v5039, %v5040
    %v5042 = vrot.slane %v3464, 6
    %v5044 = vrot.slane %v3745, 4
    %v5046 = vrot.slane %v4021, 2
    %v5048 = vrot.slane %v4582, 6
    %v5050 = vrot.slane %v4863, 4
    %v5053 = vrot.slane %v5041, 2
    %vm5055 = vcmask 1041408
    %v5056 = vsel %vm5055, %v3183, %v5042
    %v5057 = vsel %vm2615, %v5056, %v5044
    %vm5058 = vcmask 1045504
    %v5059 = vsel %vm5058, %v5057, %v5046
    %v5060 = vsel %vm5055, %v4301, %v5048
    %v5061 = vsel %vm2615, %v5060, %v5050
    %v5062 = vsel %vm5058, %v5061, %v5053
    %v5063 = vld [vmem:[#allocation2 + $0x150] sm:$0xff]
    %v5064 = vld [vmem:[#allocation2 + $0x158] sm:$0xff]
    %v5065 = vld [vmem:[#allocation2 + $0x160] sm:$0xff]
    %v5066 = vld [vmem:[#allocation2 + $0x168] sm:$0xff]
    %v5067 = vlaneseq
    %v5068 = vshrl.u32 %v5067, 7
    %v5069 = vsub.s32 2, %v5068
    %v5070 = vrot.slane %v40, %v5069
    %5073 = vrot.lane.b32.xlu0 %v5059, 96
    %v5074 = vpop.permute.xlu0 %5073
    %5075 = vrot.lane.b32.xlu0 %v5062, 96
    %v5076 = vpop.permute.xlu0 %5075
    %v5077 = vsel %vm59, %v5074, 0
    %v5079 = vsel %vm59, %v5076, 0
    %5081 = vmatprep.subr.mxu0 0.0
    %5082 = vmatpush1.msra.mxu0 0.0
    %5083 = vmatprep.subr.mxu0 0.0
    %5084 = vmatpush1.msra.mxu0 0.0
    %5085 = vmatprep.subr.mxu0 0.0
    %5086 = vmatpush1.msra.mxu0 0.0
    %5087 = vmatprep.subr.mxu0 0.0
    %5088 = vmatpush1.msra.mxu0 0.0
    %5089 = vmatprep.subr.mxu0 0.0
    %5090 = vmatpush1.msra.mxu0 0.0
    %5091 = vmatprep.subr.mxu0 0.0
    %5092 = vmatpush1.msra.mxu0 0.0
    %5093 = vmatprep.subr.mxu0 0.0
    %5094 = vmatpush1.msra.mxu0 0.0
    %5095 = vmatprep.subr.mxu0 0.0
    %5096 = vmatpush1.msra.mxu0 0.0
    %5097 = vmatprep.subr.mxu0 0.0
    %5098 = vmatpush1.msra.mxu0 0.0
    %5099 = vmatprep.subr.mxu0 0.0
    %5100 = vmatpush1.msra.mxu0 0.0
    %5101 = vmatprep.subr.mxu0 0.0
    %5102 = vmatpush1.msra.mxu0 0.0
    %5103 = vmatprep.subr.mxu0 0.0
    %5104 = vmatpush1.msra.mxu0 0.0
    %5105 = vmatprep.subr.mxu0 0.0
    %5106 = vmatpush1.msra.mxu0 %v5066
    %5107 = vmatprep.subr.mxu0 0.0
    %5108 = vmatpush1.msra.mxu0 %v5065
    %5109 = vmatprep.subr.mxu0 0.0
    %5110 = vmatpush1.msra.mxu0 %v5064
    %5111 = vmatprep.subr.mxu0 0.0
    %5112 = vmatpush1.msra.mxu0 %v5063
    %5113 = vmatprep.subr.mxu0 0.0
    %5114 = vmatpush2.msra.mxu0 0.0
    %5115 = vmatprep.subr.mxu0 0.0
    %5116 = vmatpush2.msra.mxu0 0.0
    %5117 = vmatprep.subr.mxu0 0.0
    %5118 = vmatpush2.msra.mxu0 0.0
    %5119 = vmatprep.subr.mxu0 0.0
    %5120 = vmatpush2.msra.mxu0 0.0
    %5121 = vmatprep.subr.mxu0 0.0
    %5122 = vmatpush2.msra.mxu0 0.0
    %5123 = vmatprep.subr.mxu0 0.0
    %5124 = vmatpush2.msra.mxu0 0.0
    %5125 = vmatprep.subr.mxu0 0.0
    %5126 = vmatpush2.msra.mxu0 0.0
    %5127 = vmatprep.subr.mxu0 0.0
    %5128 = vmatpush2.msra.mxu0 0.0
    %5129 = vmatprep.subr.mxu0 0.0
    %5130 = vmatpush2.msra.mxu0 0.0
    %5131 = vmatprep.subr.mxu0 0.0
    %5132 = vmatpush2.msra.mxu0 0.0
    %5133 = vmatprep.subr.mxu0 0.0
    %5134 = vmatpush2.msra.mxu0 0.0
    %5135 = vmatprep.subr.mxu0 0.0
    %5136 = vmatpush2.msra.mxu0 0.0
    %5137 = vmatprep.subr.mxu0 0.0
    %5138 = vmatpush2.msra.mxu0 0.0
    %5139 = vmatprep.subr.mxu0 0.0
    %5140 = vmatpush2.msra.mxu0 0.0
    %5141 = vmatprep.subr.mxu0 0.0
    %5142 = vmatpush2.msra.mxu0 0.0
    %5143 = vmatprep.subr.mxu0 0.0
    %5144 = vmatpush2.msra.mxu0 0.0
    %5145 = vmatprep.mubr.f32.mxu0 0.0
    %5146 = vmatmul.mubr.f32.gmra.mxu0 %v5077
    %v5147 = vpop.f32.mrf.mxu0
    %v5148 = vadd.f32 %v5070, %v5147
    %v5149 = vpop.f32.mrf.mxu0
    %5150 = vmatprep.mubr.f32.mxu0 0.0
    %5151 = vmatmul.mubr.f32.gmra.mxu0 %v5079
    %v5152 = vpop.f32.mrf.mxu0
    %v5153 = vadd.f32 %v5070, %v5152
    %v5154 = vpop.f32.mrf.mxu0
    %5155 = vdwg.mxu0
    %5156 = vmax.xlane.f32.xlu0 %v5148
    %v5157 = vpop.xlane.xlu0 %5156
    %5158 = vmax.xlane.f32.xlu0 %v5153
    %v5159 = vpop.xlane.xlu0 %5158
    %v5160 = vsub.f32 %v5148, %v5157
    %v5161 = vsub.f32 %v5153, %v5159
    %v5162 = vmul.f32 %v5160, 1.442695
    %v5163 = vpow.pop %v5162
    %v5164 = vmul.f32 %v5161, 1.442695
    %v5165 = vpow.pop %v5164
    %5166 = vadd.xlane.f32.xlu0 %v5163
    %v5167 = vpop.xlane.xlu0 %5166
    %5168 = vadd.xlane.f32.xlu0 %v5165
    %v5169 = vpop.xlane.xlu0 %5168
    %v5170 = vlog2.pop %v5167
    %v5171 = vmul.f32 %v5170, 0.6931472
    %v5172 = vlog2.pop %v5169
    %v5173 = vmul.f32 %v5172, 0.6931472
    %v5174 = vsub.f32 %v5160, %v5171
    %v5175 = vsub.f32 %v5161, %v5173
    %5176 = vst [vmem:[#allocation5] sm:$0xff] %v5174
    %5177 = vst [vmem:[#allocation5 + $0x8] sm:$0xff] %v5175
    %vm5178 = vcmask 58368
    %5179 = vst.msk [vmem:[#allocation6] sm:$0x3] %vm5178, %v2585
    %5181 = vrot.lane.b32.xlu0 %v2585, 120
    %v5182 = vpop.permute.xlu0 %5181
    %5184 = vst.msk [vmem:[#allocation8] sm:$0x3] %vm5178, %v5182
    // Predicated region
    $region26: #{cond_vae_forward.1} parent=1 // pred_check
      _
    $region27: #{cond_vae_forward.1} parent=1 // pred_check_branch
      %5186 = sbr.rel (0) target = $region29
    $region28: #{cond_vae_forward.1} parent=1 // pred_region
      %s5188 = ssub.s32 256, 256
      %5189 = vsyncadd [#allocation4], %s5188
      %s5190 = sshll.u32 [#allocation5], 4
      %s5191 = int_to_ptr.vmem [resolvable:$true] %s5190
      %5196 = dma.vmem_to_hbm [thread:$0]  %s5191, 256, %s5, [#allocation4], 128, 128, 8
    $region29: #{cond_vae_forward.1} parent=1 // pred_fallthru
      _
    // Predicated region
    $region30: #{cond_vae_forward.1} parent=1 // pred_check
      _
    $region31: #{cond_vae_forward.1} parent=1 // pred_check_branch
      %5198 = sbr.rel (0) target = $region33
    $region32: #{cond_vae_forward.1} parent=1 // pred_region
      %s5200 = ssub.s32 32, 32
      %5201 = vsyncadd [#allocation7], %s5200
      %s5203 = sshll.u32 [#allocation6], 4
      %s5204 = int_to_ptr.vmem [resolvable:$true] %s5203
      %5206 = dma.vmem_to_hbm [thread:$0]  %s5204, 32, %s6, [#allocation7]
    $region33: #{cond_vae_forward.1} parent=1 // pred_fallthru
      _
    // Predicated region
    $region34: #{cond_vae_forward.1} parent=1 // pred_check
      _
    $region35: #{cond_vae_forward.1} parent=1 // pred_check_branch
      %5208 = sbr.rel (0) target = $region37
    $region36: #{cond_vae_forward.1} parent=1 // pred_region
      %s5210 = ssub.s32 32, 32
      %5211 = vsyncadd [#allocation7], %s5210
      %s5213 = sshll.u32 [#allocation8], 4
      %s5214 = int_to_ptr.vmem [resolvable:$true] %s5213
      %5216 = dma.vmem_to_hbm [thread:$0]  %s5214, 32, %s7, [#allocation7]
    $region37: #{cond_vae_forward.1} parent=1 // pred_fallthru
      _
    // Predicated region
    $region38: #{cond_vae_forward.1} parent=1 // pred_check
      _
    $region39: #{cond_vae_forward.1} parent=1 // pred_check_branch
      %5218 = sbr.rel (0) target = $region41
    $region40: #{cond_vae_forward.1} parent=1 // pred_region
      %5219 = dma.done [#allocation4], 256
    $region41: #{cond_vae_forward.1} parent=1 // pred_fallthru
      _
    // Predicated region
    $region42: #{cond_vae_forward.1} parent=1 // pred_check
      _
    $region43: #{cond_vae_forward.1} parent=1 // pred_check_branch
      %5221 = sbr.rel (0) target = $region45
    $region44: #{cond_vae_forward.1} parent=1 // pred_region
      %5222 = dma.done [#allocation7], 32
    $region45: #{cond_vae_forward.1} parent=1 // pred_fallthru
      _
    // Predicated region
    $region46: #{cond_vae_forward.1} parent=1 // pred_check
      _
    $region47: #{cond_vae_forward.1} parent=1 // pred_check_branch
      %5224 = sbr.rel (0) target = $region49
    $region48: #{cond_vae_forward.1} parent=1 // pred_region
      %5225 = dma.done [#allocation7], 32
    $region49: #{cond_vae_forward.1} parent=1 // pred_fallthru
      _
    %5226 = vsyncpa [#allocation3], 1
    %5227 = vsyncpa [#allocation4], 1
    %5228 = vsyncpa [#allocation7], 1

</llo_original>
